<compile_context>
chip_gen: v5e
topology: v5e:2x2
jax: 0.10.0
libtpu: 0.0.40
codegen_flags: <defaults>
</compile_context>

<pallas_src>
import functools

import jax
import jax.numpy as jnp
from jax.experimental import pallas as pl
from jax.experimental.pallas import tpu as pltpu

nc = 3
ndf = 64
nfeat = 256
N_CLASSES = 1000
NEG_SLOPE = 0.2
BN_EPS = 1e-5

# Static conv configs: (cin, cout, kernel, stride, pad).  First four carry
# BatchNorm + LeakyReLU; the 6x6 conv feeds the fused tail kernel.
_CONV_CFGS = [
    (nc,      ndf,     4, 2, 1),
    (ndf,     ndf * 2, 4, 2, 1),
    (ndf * 2, ndf * 4, 4, 2, 1),
    (ndf * 4, ndf * 8, 4, 2, 1),
]
_CONV5_CFG = (ndf * 8, nfeat, 6, 1, 0)


def _round_up(x, m):
    return (x + m - 1) // m * m


def _largest_tile(dim, limit, step=8):
    """Largest divisor of `dim` that is <= limit and a multiple of `step`."""
    best = min(step, dim)
    t = step
    while t <= min(dim, limit):
        if dim % t == 0:
            best = t
        t += step
    return best


def _pick_tk(K):
    for t in (512, 256, 128):
        if K % t == 0:
            return t
    return K  # small K (e.g. 48): single full-K block, no zero padding


def _pick_tn(N):
    for t in (256, 128):
        if N % t == 0:
            return t
    return N  # small N (e.g. 64): full-dim block


# ----------------------------------------------------------------------------
# Kernel 1: fused conv-as-matmul for layers 1-4
#   out = LeakyReLU((A @ W_scaled) + shift)   (BN scale folded into W at init)
# ----------------------------------------------------------------------------
def _conv_mm_kernel(a_ref, b_ref, shift_ref, o_ref, acc_ref, *, slope):
    @pl.when(pl.program_id(2) == 0)
    def _():
        acc_ref[...] = jnp.zeros_like(acc_ref)

    acc_ref[...] += jnp.dot(a_ref[...], b_ref[...],
                            preferred_element_type=jnp.float32)

    @pl.when(pl.program_id(2) == pl.num_programs(2) - 1)
    def _():
        y = acc_ref[...] + shift_ref[...]
        y = jnp.where(y >= 0, y, slope * y)          # LeakyReLU(0.2)
        o_ref[...] = y.astype(o_ref.dtype)


def _im2col(x_nhwc, kh, kw, stride, pad):
    # TODO(synk): im2col is still XLA glue; the stride-2 gathers are not
    # expressible in a BlockSpec index_map without pre-splitting phases.
    N, H, W, C = x_nhwc.shape
    xp = jnp.pad(x_nhwc, ((0, 0), (pad, pad), (pad, pad), (0, 0)))
    OH = (H + 2 * pad - kh) // stride + 1
    OW = (W + 2 * pad - kw) // stride + 1
    patches = []
    for i in range(kh):
        for j in range(kw):
            patches.append(
                xp[:, i:i + stride * OH:stride, j:j + stride * OW:stride, :])
    p = jnp.stack(patches, axis=3)  # (N, OH, OW, kh*kw, C), order (kh, kw, c)
    return p.reshape(N * OH * OW, kh * kw * C), OH, OW


def conv_bn_lrelu(x_nhwc, w2, shift, *, k, stride, pad):
    """x: (N,H,W,Cin) bf16; w2: (k*k*Cin, Cout) bf16 (BN scale folded);
    shift: (1, Cout) f32.  Returns (N,OH,OW,Cout) bf16."""
    Nb = x_nhwc.shape[0]
    patches, OH, OW = _im2col(x_nhwc, k, k, stride, pad)   # bf16
    M, K = patches.shape
    Kw, Cout = w2.shape
    assert K == Kw

    Mp = _round_up(M, 8)
    if Mp != M:
        patches = jnp.pad(patches, ((0, Mp - M), (0, 0)))
    tm = _largest_tile(Mp, 256)
    tk = _pick_tk(K)
    tn = _pick_tn(Cout)

    out = pl.pallas_call(
        functools.partial(_conv_mm_kernel, slope=NEG_SLOPE),
        out_shape=jax.ShapeDtypeStruct((Mp, Cout), jnp.bfloat16),
        grid_spec=pltpu.PrefetchScalarGridSpec(
            num_scalar_prefetch=0,
            grid=(Mp // tm, Cout // tn, K // tk),
            in_specs=[
                pl.BlockSpec((tm, tk), lambda i, j, kk: (i, kk)),
                pl.BlockSpec((tk, tn), lambda i, j, kk: (kk, j)),
                pl.BlockSpec((1, tn), lambda i, j, kk: (0, j)),
            ],
            out_specs=pl.BlockSpec((tm, tn), lambda i, j, kk: (i, j)),
            scratch_shapes=[pltpu.VMEM((tm, tn), jnp.float32)],
        ),
        compiler_params=pltpu.CompilerParams(
            dimension_semantics=("parallel", "parallel", "arbitrary")),
    )(patches, w2, shift)

    out = out[:M]
    return out.reshape(Nb, OH, OW, Cout)


# ----------------------------------------------------------------------------
# Kernel 2: fused tail = 6x6 conv (features) + Linear head (logits)
#   features = A @ W5 ; logits = features @ Wlin + blin
# ----------------------------------------------------------------------------
def _tail_kernel(a_ref, w5_ref, lw_ref, lb_ref, feat_ref, logits_ref, acc_ref):
    kk = pl.program_id(0)

    @pl.when(kk == 0)
    def _():
        acc_ref[...] = jnp.zeros_like(acc_ref)

    acc_ref[...] += jnp.dot(a_ref[...], w5_ref[...],
                            preferred_element_type=jnp.float32)

    @pl.when(kk == pl.num_programs(0) - 1)
    def _():
        feat = acc_ref[...]
        feat_ref[...] = feat.astype(feat_ref.dtype)
        logits = jnp.dot(feat.astype(jnp.bfloat16), lw_ref[...],
                         preferred_element_type=jnp.float32)
        logits_ref[...] = (logits + lb_ref[...]).astype(logits_ref.dtype)


def tail_conv_linear(x_nhwc, w5, lin_w, lin_b, *, k):
    """x: (N,6,6,512) bf16; w5: (18432, nfeat) bf16; lin_w: (nfeat, Np) bf16;
    lin_b: (1, Np) f32.  Returns (features (N,nfeat) f32, logits (N,Np) f32)."""
    patches, OH, OW = _im2col(x_nhwc, k, k, 1, 0)
    assert OH == 1 and OW == 1, (OH, OW)
    M, K = patches.shape
    Mp = _round_up(M, 8)
    if Mp != M:
        patches = jnp.pad(patches, ((0, Mp - M), (0, 0)))
    tk = _pick_tk(K)
    Nf = w5.shape[1]
    Nl = lin_w.shape[1]

    feats, logits = pl.pallas_call(
        _tail_kernel,
        out_shape=(jax.ShapeDtypeStruct((Mp, Nf), jnp.float32),
                   jax.ShapeDtypeStruct((Mp, Nl), jnp.float32)),
        grid_spec=pltpu.PrefetchScalarGridSpec(
            num_scalar_prefetch=0,
            grid=(K // tk,),
            in_specs=[
                pl.BlockSpec((Mp, tk), lambda kk: (0, kk)),
                pl.BlockSpec((tk, Nf), lambda kk: (kk, 0)),
                pl.BlockSpec((Nf, Nl), lambda kk: (0, 0)),   # resident Linear W
                pl.BlockSpec((1, Nl), lambda kk: (0, 0)),
            ],
            out_specs=(pl.BlockSpec((Mp, Nf), lambda kk: (0, 0)),
                       pl.BlockSpec((Mp, Nl), lambda kk: (0, 0))),
            scratch_shapes=[pltpu.VMEM((Mp, Nf), jnp.float32)],
        ),
        compiler_params=pltpu.CompilerParams(
            dimension_semantics=("arbitrary",)),
    )(patches, w5, lin_w, lin_b)

    return feats[:M], logits[:M]


# ----------------------------------------------------------------------------
# Parameters: deterministic synthetic init + one-time (hoisted) preprocessing
# ----------------------------------------------------------------------------
def init_raw_params(key):
    raw = {"convs": []}
    for (cin, cout, k, _, _) in _CONV_CFGS:
        key, wk, gk, bk, mk, vk = jax.random.split(key, 6)
        raw["convs"].append(dict(
            w=jax.random.normal(wk, (cout, cin, k, k), jnp.float32) * 0.02,
            gamma=1.0 + 0.1 * jax.random.normal(gk, (cout,), jnp.float32),
            beta=0.1 * jax.random.normal(bk, (cout,), jnp.float32),
            rmean=0.1 * jax.random.normal(mk, (cout,), jnp.float32),
            rvar=jnp.abs(1.0 + 0.1 * jax.random.normal(vk, (cout,), jnp.float32)),
        ))
    cin5, cout5, k5, _, _ = _CONV5_CFG
    key, wk = jax.random.split(key)
    raw["w5"] = jax.random.normal(wk, (cout5, cin5, k5, k5), jnp.float32) * 0.02
    key, wk, bk = jax.random.split(key, 3)
    # nn.Linear(nfeat, 1000), stored already transposed as (nfeat, 1000)
    raw["lin_w"] = jax.random.normal(wk, (nfeat, N_CLASSES), jnp.float32) * 0.02
    raw["lin_b"] = 0.01 * jax.random.normal(bk, (N_CLASSES,), jnp.float32)
    return raw


def prepare_params(raw):
    """One-time weight prep (hoisted out of the forward path): transpose to
    (KH*KW*Cin, Cout), fold BN scale into the weight columns, pad the Linear
    output dim to a lane multiple, cast everything to bf16."""
    prep = {"convs": []}
    for layer in raw["convs"]:
        w = layer["w"]
        cout, cin, kh, kw = w.shape
        scale = layer["gamma"] / jnp.sqrt(layer["rvar"] + BN_EPS)
        shift = layer["beta"] - layer["rmean"] * scale
        w2 = jnp.transpose(w, (2, 3, 1, 0)).reshape(kh * kw * cin, cout)
        prep["convs"].append(dict(
            w=(w2 * scale[None, :]).astype(jnp.bfloat16),
            shift=shift.reshape(1, cout).astype(jnp.float32),
        ))
    w5 = raw["w5"]
    cout, cin, kh, kw = w5.shape
    prep["w5"] = (jnp.transpose(w5, (2, 3, 1, 0))
                  .reshape(kh * kw * cin, cout).astype(jnp.bfloat16))
    np_ = _round_up(N_CLASSES, 128)
    prep["lin_w"] = jnp.pad(raw["lin_w"],
                            ((0, 0), (0, np_ - N_CLASSES))).astype(jnp.bfloat16)
    prep["lin_b"] = jnp.pad(raw["lin_b"],
                            (0, np_ - N_CLASSES)).reshape(1, np_).astype(jnp.float32)
    return prep


def discriminator_forward(prep, x_nchw):
    # Accept PyTorch NCHW, compute in NHWC with bf16 activations.
    x = jnp.transpose(x_nchw, (0, 2, 3, 1)).astype(jnp.bfloat16)
    for (cin, cout, k, s, p), layer in zip(_CONV_CFGS, prep["convs"]):
        x = conv_bn_lrelu(x, layer["w"], layer["shift"], k=k, stride=s, pad=p)
        # TODO(synk): Dropout2d(0.3) is identity in inference mode (no RNG).
    features, logits = tail_conv_linear(
        x, prep["w5"], prep["lin_w"], prep["lin_b"], k=_CONV5_CFG[2])
    return features, logits[:, :N_CLASSES]


if __name__ == "__main__":
    key = jax.random.PRNGKey(0)
    pkey, xkey = jax.random.split(key)
    raw = init_raw_params(pkey)
    prep = prepare_params(raw)   # hoisted, runs once

    # The final Conv2d(512, 256, 6, 1, 0) requires 96x96 inputs to yield 1x1
    # spatial features (96 -> 48 -> 24 -> 12 -> 6 -> 1). Batch kept small.
    x = jax.random.normal(xkey, (2, nc, 96, 96), jnp.float32)

    fwd = jax.jit(discriminator_forward)
    features, logits = fwd(prep, x)
    features, logits = jax.block_until_ready((features, logits))

    assert features.shape == (2, nfeat), features.shape
    assert logits.shape == (2, N_CLASSES), logits.shape
    assert bool(jnp.isfinite(features).all()) and bool(jnp.isfinite(logits).all())
    print("KERNEL_OK")
</pallas_src>

<mosaic_0001>
module attributes {stable_mosaic.version = 11 : i64} {
  func.func @_conv_mm_kernel(%arg0: i32, %arg1: i32, %arg2: i32, %arg3: memref<256x48xbf16, #tpu.memory_space<vmem>>, %arg4: memref<48x64xbf16, #tpu.memory_space<vmem>>, %arg5: memref<1x64xf32, #tpu.memory_space<vmem>>, %arg6: memref<256x64xbf16, #tpu.memory_space<vmem>>, %arg7: memref<256x64xf32, #tpu.memory_space<vmem>>) attributes {dimension_semantics = [#tpu.dimension_semantics<parallel>, #tpu.dimension_semantics<parallel>, #tpu.dimension_semantics<arbitrary>], iteration_bounds = array<i64: 18, 1, 1>, scalar_prefetch = 0 : i64, scratch_operands = 1 : i64, tpu.core_type = #tpu.core_type<tc>, window_params = [{transform_indices = @transform_0, window_bounds = array<i64: 256, 48>}, {transform_indices = @transform_1, window_bounds = array<i64: 48, 64>}, {transform_indices = @transform_2, window_bounds = array<i64: 1, 64>}, {transform_indices = @transform_3, window_bounds = array<i64: 256, 64>}]} {
    %c0_i32 = arith.constant 0 : i32
    %0 = arith.cmpi eq, %arg2, %c0_i32 : i32
    %1 = arith.extui %0 : i1 to i32
    %c0_i32_0 = arith.constant 0 : i32
    %2 = arith.cmpi ne, %1, %c0_i32_0 : i32
    scf.if %2 {
      %cst_10 = arith.constant 0.000000e+00 : f32
      %12 = vector.broadcast %cst_10 : f32 to vector<256x64xf32>
      %c0_11 = arith.constant 0 : index
      %c0_12 = arith.constant 0 : index
      %13 = vector.load %arg7[%c0_11, %c0_12] : memref<256x64xf32, #tpu.memory_space<vmem>>, vector<256x64xf32>
      tpu.vector_store %arg7[%c0_11, %c0_12], %12 {strides = array<i32>} : memref<256x64xf32, #tpu.memory_space<vmem>>, vector<256x64xf32>,
    } else {
    }
    %c0 = arith.constant 0 : index
    %c0_1 = arith.constant 0 : index
    %3 = vector.load %arg7[%c0, %c0_1] : memref<256x64xf32, #tpu.memory_space<vmem>>, vector<256x64xf32>
    %c0_2 = arith.constant 0 : index
    %c0_3 = arith.constant 0 : index
    %4 = vector.load %arg3[%c0_2, %c0_3] : memref<256x48xbf16, #tpu.memory_space<vmem>>, vector<256x48xbf16>
    %c0_4 = arith.constant 0 : index
    %c0_5 = arith.constant 0 : index
    %5 = vector.load %arg4[%c0_4, %c0_5] : memref<48x64xbf16, #tpu.memory_space<vmem>>, vector<48x64xbf16>
    %cst = arith.constant dense<0.000000e+00> : vector<256x64xf32>
    %6 = tpu.matmul %4, %5, %cst {dimension_numbers = #tpu.dot_dimension_numbers<[1], [0], [0], [1], [0, 0, 1, 1], [], []>} : vector<256x48xbf16>, vector<48x64xbf16>, vector<256x64xf32> -> vector<256x64xf32>
    %7 = arith.addf %3, %6 : vector<256x64xf32>
    %c0_6 = arith.constant 0 : index
    %c0_7 = arith.constant 0 : index
    %8 = vector.load %arg7[%c0_6, %c0_7] : memref<256x64xf32, #tpu.memory_space<vmem>>, vector<256x64xf32>
    tpu.vector_store %arg7[%c0_6, %c0_7], %7 {strides = array<i32>} : memref<256x64xf32, #tpu.memory_space<vmem>>, vector<256x64xf32>,
    %c0_i32_8 = arith.constant 0 : i32
    %9 = arith.cmpi eq, %arg2, %c0_i32_8 : i32
    %10 = arith.extui %9 : i1 to i32
    %c0_i32_9 = arith.constant 0 : i32
    %11 = arith.cmpi ne, %10, %c0_i32_9 : i32
    scf.if %11 {
      %c0_10 = arith.constant 0 : index
      %c0_11 = arith.constant 0 : index
      %12 = vector.load %arg7[%c0_10, %c0_11] : memref<256x64xf32, #tpu.memory_space<vmem>>, vector<256x64xf32>
      %c0_12 = arith.constant 0 : index
      %c0_13 = arith.constant 0 : index
      %13 = vector.load %arg5[%c0_12, %c0_13] : memref<1x64xf32, #tpu.memory_space<vmem>>, vector<1x64xf32>
      %14 = vector.broadcast %13 : vector<1x64xf32> to vector<256x64xf32>
      %15 = arith.addf %12, %14 : vector<256x64xf32>
      %cst_14 = arith.constant 0.000000e+00 : f32
      %16 = vector.broadcast %cst_14 : f32 to vector<256x64xf32>
      %17 = arith.cmpf oge, %15, %16 : vector<256x64xf32>
      %cst_15 = arith.constant 2.000000e-01 : f32
      %18 = vector.broadcast %cst_15 : f32 to vector<256x64xf32>
      %19 = arith.mulf %18, %15 : vector<256x64xf32>
      %20 = arith.select %17, %15, %19 : vector<256x64xi1>, vector<256x64xf32>
      %21 = arith.truncf %20 : vector<256x64xf32> to vector<256x64xbf16>
      %c0_16 = arith.constant 0 : index
      %c0_17 = arith.constant 0 : index
      %22 = vector.load %arg6[%c0_16, %c0_17] : memref<256x64xbf16, #tpu.memory_space<vmem>>, vector<256x64xbf16>
      tpu.vector_store %arg6[%c0_16, %c0_17], %21 {strides = array<i32>} : memref<256x64xbf16, #tpu.memory_space<vmem>>, vector<256x64xbf16>,
    } else {
    }
    return
  }
  func.func @transform_0(%arg0: i32, %arg1: i32, %arg2: i32) -> (i32, i32) {
    %c0_i32 = arith.constant 0 : i32
    return %arg0, %arg2 : i32, i32
  }
  func.func @transform_1(%arg0: i32, %arg1: i32, %arg2: i32) -> (i32, i32) {
    %c0_i32 = arith.constant 0 : i32
    return %arg2, %arg1 : i32, i32
  }
  func.func @transform_2(%arg0: i32, %arg1: i32, %arg2: i32) -> (i32, i32) {
    %c0_i32 = arith.constant 0 : i32
    %c0_i32_0 = arith.constant 0 : i32
    return %c0_i32, %arg1 : i32, i32
  }
  func.func @transform_3(%arg0: i32, %arg1: i32, %arg2: i32) -> (i32, i32) {
    %c0_i32 = arith.constant 0 : i32
    return %arg0, %arg1 : i32, i32
  }
}

module attributes {stable_mosaic.version = 11 : i64} {
  func.func @_conv_mm_kernel(%arg0: i32, %arg1: i32, %arg2: i32, %arg3: memref<192x512xbf16, #tpu.memory_space<vmem>>, %arg4: memref<512x128xbf16, #tpu.memory_space<vmem>>, %arg5: memref<1x128xf32, #tpu.memory_space<vmem>>, %arg6: memref<192x128xbf16, #tpu.memory_space<vmem>>, %arg7: memref<192x128xf32, #tpu.memory_space<vmem>>) attributes {dimension_semantics = [#tpu.dimension_semantics<parallel>, #tpu.dimension_semantics<parallel>, #tpu.dimension_semantics<arbitrary>], iteration_bounds = array<i64: 6, 1, 2>, scalar_prefetch = 0 : i64, scratch_operands = 1 : i64, tpu.core_type = #tpu.core_type<tc>, window_params = [{transform_indices = @transform_0, window_bounds = array<i64: 192, 512>}, {transform_indices = @transform_1, window_bounds = array<i64: 512, 128>}, {transform_indices = @transform_2, window_bounds = array<i64: 1, 128>}, {transform_indices = @transform_3, window_bounds = array<i64: 192, 128>}]} {
    %c0_i32 = arith.constant 0 : i32
    %0 = arith.cmpi eq, %arg2, %c0_i32 : i32
    %1 = arith.extui %0 : i1 to i32
    %c0_i32_0 = arith.constant 0 : i32
    %2 = arith.cmpi ne, %1, %c0_i32_0 : i32
    scf.if %2 {
      %cst_9 = arith.constant 0.000000e+00 : f32
      %12 = vector.broadcast %cst_9 : f32 to vector<192x128xf32>
      %c0_10 = arith.constant 0 : index
      %c0_11 = arith.constant 0 : index
      %13 = vector.load %arg7[%c0_10, %c0_11] : memref<192x128xf32, #tpu.memory_space<vmem>>, vector<192x128xf32>
      tpu.vector_store %arg7[%c0_10, %c0_11], %12 {strides = array<i32>} : memref<192x128xf32, #tpu.memory_space<vmem>>, vector<192x128xf32>,
    } else {
    }
    %c0 = arith.constant 0 : index
    %c0_1 = arith.constant 0 : index
    %3 = vector.load %arg7[%c0, %c0_1] : memref<192x128xf32, #tpu.memory_space<vmem>>, vector<192x128xf32>
    %c0_2 = arith.constant 0 : index
    %c0_3 = arith.constant 0 : index
    %4 = vector.load %arg3[%c0_2, %c0_3] : memref<192x512xbf16, #tpu.memory_space<vmem>>, vector<192x512xbf16>
    %c0_4 = arith.constant 0 : index
    %c0_5 = arith.constant 0 : index
    %5 = vector.load %arg4[%c0_4, %c0_5] : memref<512x128xbf16, #tpu.memory_space<vmem>>, vector<512x128xbf16>
    %cst = arith.constant dense<0.000000e+00> : vector<192x128xf32>
    %6 = tpu.matmul %4, %5, %cst {dimension_numbers = #tpu.dot_dimension_numbers<[1], [0], [0], [1], [0, 0, 1, 1], [], []>} : vector<192x512xbf16>, vector<512x128xbf16>, vector<192x128xf32> -> vector<192x128xf32>
    %7 = arith.addf %3, %6 : vector<192x128xf32>
    %c0_6 = arith.constant 0 : index
    %c0_7 = arith.constant 0 : index
    %8 = vector.load %arg7[%c0_6, %c0_7] : memref<192x128xf32, #tpu.memory_space<vmem>>, vector<192x128xf32>
    tpu.vector_store %arg7[%c0_6, %c0_7], %7 {strides = array<i32>} : memref<192x128xf32, #tpu.memory_space<vmem>>, vector<192x128xf32>,
    %c1_i32 = arith.constant 1 : i32
    %9 = arith.cmpi eq, %arg2, %c1_i32 : i32
    %10 = arith.extui %9 : i1 to i32
    %c0_i32_8 = arith.constant 0 : i32
    %11 = arith.cmpi ne, %10, %c0_i32_8 : i32
    scf.if %11 {
      %c0_9 = arith.constant 0 : index
      %c0_10 = arith.constant 0 : index
      %12 = vector.load %arg7[%c0_9, %c0_10] : memref<192x128xf32, #tpu.memory_space<vmem>>, vector<192x128xf32>
      %c0_11 = arith.constant 0 : index
      %c0_12 = arith.constant 0 : index
      %13 = vector.load %arg5[%c0_11, %c0_12] : memref<1x128xf32, #tpu.memory_space<vmem>>, vector<1x128xf32>
      %14 = vector.broadcast %13 : vector<1x128xf32> to vector<192x128xf32>
      %15 = arith.addf %12, %14 : vector<192x128xf32>
      %cst_13 = arith.constant 0.000000e+00 : f32
      %16 = vector.broadcast %cst_13 : f32 to vector<192x128xf32>
      %17 = arith.cmpf oge, %15, %16 : vector<192x128xf32>
      %cst_14 = arith.constant 2.000000e-01 : f32
      %18 = vector.broadcast %cst_14 : f32 to vector<192x128xf32>
      %19 = arith.mulf %18, %15 : vector<192x128xf32>
      %20 = arith.select %17, %15, %19 : vector<192x128xi1>, vector<192x128xf32>
      %21 = arith.truncf %20 : vector<192x128xf32> to vector<192x128xbf16>
      %c0_15 = arith.constant 0 : index
      %c0_16 = arith.constant 0 : index
      %22 = vector.load %arg6[%c0_15, %c0_16] : memref<192x128xbf16, #tpu.memory_space<vmem>>, vector<192x128xbf16>
      tpu.vector_store %arg6[%c0_15, %c0_16], %21 {strides = array<i32>} : memref<192x128xbf16, #tpu.memory_space<vmem>>, vector<192x128xbf16>,
    } else {
    }
    return
  }
  func.func @transform_0(%arg0: i32, %arg1: i32, %arg2: i32) -> (i32, i32) {
    %c0_i32 = arith.constant 0 : i32
    return %arg0, %arg2 : i32, i32
  }
  func.func @transform_1(%arg0: i32, %arg1: i32, %arg2: i32) -> (i32, i32) {
    %c0_i32 = arith.constant 0 : i32
    return %arg2, %arg1 : i32, i32
  }
  func.func @transform_2(%arg0: i32, %arg1: i32, %arg2: i32) -> (i32, i32) {
    %c0_i32 = arith.constant 0 : i32
    %c0_i32_0 = arith.constant 0 : i32
    return %c0_i32, %arg1 : i32, i32
  }
  func.func @transform_3(%arg0: i32, %arg1: i32, %arg2: i32) -> (i32, i32) {
    %c0_i32 = arith.constant 0 : i32
    return %arg0, %arg1 : i32, i32
  }
}

module attributes {stable_mosaic.version = 11 : i64} {
  func.func @_conv_mm_kernel(%arg0: i32, %arg1: i32, %arg2: i32, %arg3: memref<144x512xbf16, #tpu.memory_space<vmem>>, %arg4: memref<512x256xbf16, #tpu.memory_space<vmem>>, %arg5: memref<1x256xf32, #tpu.memory_space<vmem>>, %arg6: memref<144x256xbf16, #tpu.memory_space<vmem>>, %arg7: memref<144x256xf32, #tpu.memory_space<vmem>>) attributes {dimension_semantics = [#tpu.dimension_semantics<parallel>, #tpu.dimension_semantics<parallel>, #tpu.dimension_semantics<arbitrary>], iteration_bounds = array<i64: 2, 1, 4>, scalar_prefetch = 0 : i64, scratch_operands = 1 : i64, tpu.core_type = #tpu.core_type<tc>, window_params = [{transform_indices = @transform_0, window_bounds = array<i64: 144, 512>}, {transform_indices = @transform_1, window_bounds = array<i64: 512, 256>}, {transform_indices = @transform_2, window_bounds = array<i64: 1, 256>}, {transform_indices = @transform_3, window_bounds = array<i64: 144, 256>}]} {
    %c0_i32 = arith.constant 0 : i32
    %0 = arith.cmpi eq, %arg2, %c0_i32 : i32
    %1 = arith.extui %0 : i1 to i32
    %c0_i32_0 = arith.constant 0 : i32
    %2 = arith.cmpi ne, %1, %c0_i32_0 : i32
    scf.if %2 {
      %cst_9 = arith.constant 0.000000e+00 : f32
      %12 = vector.broadcast %cst_9 : f32 to vector<144x256xf32>
      %c0_10 = arith.constant 0 : index
      %c0_11 = arith.constant 0 : index
      %13 = vector.load %arg7[%c0_10, %c0_11] : memref<144x256xf32, #tpu.memory_space<vmem>>, vector<144x256xf32>
      tpu.vector_store %arg7[%c0_10, %c0_11], %12 {strides = array<i32>} : memref<144x256xf32, #tpu.memory_space<vmem>>, vector<144x256xf32>,
    } else {
    }
    %c0 = arith.constant 0 : index
    %c0_1 = arith.constant 0 : index
    %3 = vector.load %arg7[%c0, %c0_1] : memref<144x256xf32, #tpu.memory_space<vmem>>, vector<144x256xf32>
    %c0_2 = arith.constant 0 : index
    %c0_3 = arith.constant 0 : index
    %4 = vector.load %arg3[%c0_2, %c0_3] : memref<144x512xbf16, #tpu.memory_space<vmem>>, vector<144x512xbf16>
    %c0_4 = arith.constant 0 : index
    %c0_5 = arith.constant 0 : index
    %5 = vector.load %arg4[%c0_4, %c0_5] : memref<512x256xbf16, #tpu.memory_space<vmem>>, vector<512x256xbf16>
    %cst = arith.constant dense<0.000000e+00> : vector<144x256xf32>
    %6 = tpu.matmul %4, %5, %cst {dimension_numbers = #tpu.dot_dimension_numbers<[1], [0], [0], [1], [0, 0, 1, 1], [], []>} : vector<144x512xbf16>, vector<512x256xbf16>, vector<144x256xf32> -> vector<144x256xf32>
    %7 = arith.addf %3, %6 : vector<144x256xf32>
    %c0_6 = arith.constant 0 : index
    %c0_7 = arith.constant 0 : index
    %8 = vector.load %arg7[%c0_6, %c0_7] : memref<144x256xf32, #tpu.memory_space<vmem>>, vector<144x256xf32>
    tpu.vector_store %arg7[%c0_6, %c0_7], %7 {strides = array<i32>} : memref<144x256xf32, #tpu.memory_space<vmem>>, vector<144x256xf32>,
    %c3_i32 = arith.constant 3 : i32
    %9 = arith.cmpi eq, %arg2, %c3_i32 : i32
    %10 = arith.extui %9 : i1 to i32
    %c0_i32_8 = arith.constant 0 : i32
    %11 = arith.cmpi ne, %10, %c0_i32_8 : i32
    scf.if %11 {
      %c0_9 = arith.constant 0 : index
      %c0_10 = arith.constant 0 : index
      %12 = vector.load %arg7[%c0_9, %c0_10] : memref<144x256xf32, #tpu.memory_space<vmem>>, vector<144x256xf32>
      %c0_11 = arith.constant 0 : index
      %c0_12 = arith.constant 0 : index
      %13 = vector.load %arg5[%c0_11, %c0_12] : memref<1x256xf32, #tpu.memory_space<vmem>>, vector<1x256xf32>
      %14 = vector.broadcast %13 : vector<1x256xf32> to vector<144x256xf32>
      %15 = arith.addf %12, %14 : vector<144x256xf32>
      %cst_13 = arith.constant 0.000000e+00 : f32
      %16 = vector.broadcast %cst_13 : f32 to vector<144x256xf32>
      %17 = arith.cmpf oge, %15, %16 : vector<144x256xf32>
      %cst_14 = arith.constant 2.000000e-01 : f32
      %18 = vector.broadcast %cst_14 : f32 to vector<144x256xf32>
      %19 = arith.mulf %18, %15 : vector<144x256xf32>
      %20 = arith.select %17, %15, %19 : vector<144x256xi1>, vector<144x256xf32>
      %21 = arith.truncf %20 : vector<144x256xf32> to vector<144x256xbf16>
      %c0_15 = arith.constant 0 : index
      %c0_16 = arith.constant 0 : index
      %22 = vector.load %arg6[%c0_15, %c0_16] : memref<144x256xbf16, #tpu.memory_space<vmem>>, vector<144x256xbf16>
      tpu.vector_store %arg6[%c0_15, %c0_16], %21 {strides = array<i32>} : memref<144x256xbf16, #tpu.memory_space<vmem>>, vector<144x256xbf16>,
    } else {
    }
    return
  }
  func.func @transform_0(%arg0: i32, %arg1: i32, %arg2: i32) -> (i32, i32) {
    %c0_i32 = arith.constant 0 : i32
    return %arg0, %arg2 : i32, i32
  }
  func.func @transform_1(%arg0: i32, %arg1: i32, %arg2: i32) -> (i32, i32) {
    %c0_i32 = arith.constant 0 : i32
    return %arg2, %arg1 : i32, i32
  }
  func.func @transform_2(%arg0: i32, %arg1: i32, %arg2: i32) -> (i32, i32) {
    %c0_i32 = arith.constant 0 : i32
    %c0_i32_0 = arith.constant 0 : i32
    return %c0_i32, %arg1 : i32, i32
  }
  func.func @transform_3(%arg0: i32, %arg1: i32, %arg2: i32) -> (i32, i32) {
    %c0_i32 = arith.constant 0 : i32
    return %arg0, %arg1 : i32, i32
  }
}

module attributes {stable_mosaic.version = 11 : i64} {
  func.func @_conv_mm_kernel(%arg0: i32, %arg1: i32, %arg2: i32, %arg3: memref<72x512xbf16, #tpu.memory_space<vmem>>, %arg4: memref<512x256xbf16, #tpu.memory_space<vmem>>, %arg5: memref<1x256xf32, #tpu.memory_space<vmem>>, %arg6: memref<72x256xbf16, #tpu.memory_space<vmem>>, %arg7: memref<72x256xf32, #tpu.memory_space<vmem>>) attributes {dimension_semantics = [#tpu.dimension_semantics<parallel>, #tpu.dimension_semantics<parallel>, #tpu.dimension_semantics<arbitrary>], iteration_bounds = array<i64: 1, 2, 8>, scalar_prefetch = 0 : i64, scratch_operands = 1 : i64, tpu.core_type = #tpu.core_type<tc>, window_params = [{transform_indices = @transform_0, window_bounds = array<i64: 72, 512>}, {transform_indices = @transform_1, window_bounds = array<i64: 512, 256>}, {transform_indices = @transform_2, window_bounds = array<i64: 1, 256>}, {transform_indices = @transform_3, window_bounds = array<i64: 72, 256>}]} {
    %c0_i32 = arith.constant 0 : i32
    %0 = arith.cmpi eq, %arg2, %c0_i32 : i32
    %1 = arith.extui %0 : i1 to i32
    %c0_i32_0 = arith.constant 0 : i32
    %2 = arith.cmpi ne, %1, %c0_i32_0 : i32
    scf.if %2 {
      %cst_9 = arith.constant 0.000000e+00 : f32
      %12 = vector.broadcast %cst_9 : f32 to vector<72x256xf32>
      %c0_10 = arith.constant 0 : index
      %c0_11 = arith.constant 0 : index
      %13 = vector.load %arg7[%c0_10, %c0_11] : memref<72x256xf32, #tpu.memory_space<vmem>>, vector<72x256xf32>
      tpu.vector_store %arg7[%c0_10, %c0_11], %12 {strides = array<i32>} : memref<72x256xf32, #tpu.memory_space<vmem>>, vector<72x256xf32>,
    } else {
    }
    %c0 = arith.constant 0 : index
    %c0_1 = arith.constant 0 : index
    %3 = vector.load %arg7[%c0, %c0_1] : memref<72x256xf32, #tpu.memory_space<vmem>>, vector<72x256xf32>
    %c0_2 = arith.constant 0 : index
    %c0_3 = arith.constant 0 : index
    %4 = vector.load %arg3[%c0_2, %c0_3] : memref<72x512xbf16, #tpu.memory_space<vmem>>, vector<72x512xbf16>
    %c0_4 = arith.constant 0 : index
    %c0_5 = arith.constant 0 : index
    %5 = vector.load %arg4[%c0_4, %c0_5] : memref<512x256xbf16, #tpu.memory_space<vmem>>, vector<512x256xbf16>
    %cst = arith.constant dense<0.000000e+00> : vector<72x256xf32>
    %6 = tpu.matmul %4, %5, %cst {dimension_numbers = #tpu.dot_dimension_numbers<[1], [0], [0], [1], [0, 0, 1, 1], [], []>} : vector<72x512xbf16>, vector<512x256xbf16>, vector<72x256xf32> -> vector<72x256xf32>
    %7 = arith.addf %3, %6 : vector<72x256xf32>
    %c0_6 = arith.constant 0 : index
    %c0_7 = arith.constant 0 : index
    %8 = vector.load %arg7[%c0_6, %c0_7] : memref<72x256xf32, #tpu.memory_space<vmem>>, vector<72x256xf32>
    tpu.vector_store %arg7[%c0_6, %c0_7], %7 {strides = array<i32>} : memref<72x256xf32, #tpu.memory_space<vmem>>, vector<72x256xf32>,
    %c7_i32 = arith.constant 7 : i32
    %9 = arith.cmpi eq, %arg2, %c7_i32 : i32
    %10 = arith.extui %9 : i1 to i32
    %c0_i32_8 = arith.constant 0 : i32
    %11 = arith.cmpi ne, %10, %c0_i32_8 : i32
    scf.if %11 {
      %c0_9 = arith.constant 0 : index
      %c0_10 = arith.constant 0 : index
      %12 = vector.load %arg7[%c0_9, %c0_10] : memref<72x256xf32, #tpu.memory_space<vmem>>, vector<72x256xf32>
      %c0_11 = arith.constant 0 : index
      %c0_12 = arith.constant 0 : index
      %13 = vector.load %arg5[%c0_11, %c0_12] : memref<1x256xf32, #tpu.memory_space<vmem>>, vector<1x256xf32>
      %14 = vector.broadcast %13 : vector<1x256xf32> to vector<72x256xf32>
      %15 = arith.addf %12, %14 : vector<72x256xf32>
      %cst_13 = arith.constant 0.000000e+00 : f32
      %16 = vector.broadcast %cst_13 : f32 to vector<72x256xf32>
      %17 = arith.cmpf oge, %15, %16 : vector<72x256xf32>
      %cst_14 = arith.constant 2.000000e-01 : f32
      %18 = vector.broadcast %cst_14 : f32 to vector<72x256xf32>
      %19 = arith.mulf %18, %15 : vector<72x256xf32>
      %20 = arith.select %17, %15, %19 : vector<72x256xi1>, vector<72x256xf32>
      %21 = arith.truncf %20 : vector<72x256xf32> to vector<72x256xbf16>
      %c0_15 = arith.constant 0 : index
      %c0_16 = arith.constant 0 : index
      %22 = vector.load %arg6[%c0_15, %c0_16] : memref<72x256xbf16, #tpu.memory_space<vmem>>, vector<72x256xbf16>
      tpu.vector_store %arg6[%c0_15, %c0_16], %21 {strides = array<i32>} : memref<72x256xbf16, #tpu.memory_space<vmem>>, vector<72x256xbf16>,
    } else {
    }
    return
  }
  func.func @transform_0(%arg0: i32, %arg1: i32, %arg2: i32) -> (i32, i32) {
    %c0_i32 = arith.constant 0 : i32
    return %arg0, %arg2 : i32, i32
  }
  func.func @transform_1(%arg0: i32, %arg1: i32, %arg2: i32) -> (i32, i32) {
    %c0_i32 = arith.constant 0 : i32
    return %arg2, %arg1 : i32, i32
  }
  func.func @transform_2(%arg0: i32, %arg1: i32, %arg2: i32) -> (i32, i32) {
    %c0_i32 = arith.constant 0 : i32
    %c0_i32_0 = arith.constant 0 : i32
    return %c0_i32, %arg1 : i32, i32
  }
  func.func @transform_3(%arg0: i32, %arg1: i32, %arg2: i32) -> (i32, i32) {
    %c0_i32 = arith.constant 0 : i32
    return %arg0, %arg1 : i32, i32
  }
}

module attributes {stable_mosaic.version = 11 : i64} {
  func.func @_tail_kernel(%arg0: i32, %arg1: memref<8x512xbf16, #tpu.memory_space<vmem>>, %arg2: memref<512x256xbf16, #tpu.memory_space<vmem>>, %arg3: memref<256x1024xbf16, #tpu.memory_space<vmem>>, %arg4: memref<1x1024xf32, #tpu.memory_space<vmem>>, %arg5: memref<8x256xf32, #tpu.memory_space<vmem>>, %arg6: memref<8x1024xf32, #tpu.memory_space<vmem>>, %arg7: memref<8x256xf32, #tpu.memory_space<vmem>>) attributes {dimension_semantics = [#tpu.dimension_semantics<arbitrary>], iteration_bounds = array<i64: 36>, scalar_prefetch = 0 : i64, scratch_operands = 1 : i64, tpu.core_type = #tpu.core_type<tc>, window_params = [{transform_indices = @transform_0, window_bounds = array<i64: 8, 512>}, {transform_indices = @transform_1, window_bounds = array<i64: 512, 256>}, {pipeline_mode = #tpu.pipeline_mode<synchronous>, transform_indices = @transform_2, window_bounds = array<i64: 256, 1024>}, {pipeline_mode = #tpu.pipeline_mode<synchronous>, transform_indices = @transform_3, window_bounds = array<i64: 1, 1024>}, {pipeline_mode = #tpu.pipeline_mode<synchronous>, transform_indices = @transform_4, window_bounds = array<i64: 8, 256>}, {pipeline_mode = #tpu.pipeline_mode<synchronous>, transform_indices = @transform_5, window_bounds = array<i64: 8, 1024>}]} {
    %c0_i32 = arith.constant 0 : i32
    %0 = arith.cmpi eq, %arg0, %c0_i32 : i32
    %1 = arith.extui %0 : i1 to i32
    %c0_i32_0 = arith.constant 0 : i32
    %2 = arith.cmpi ne, %1, %c0_i32_0 : i32
    scf.if %2 {
      %cst_9 = arith.constant 0.000000e+00 : f32
      %12 = vector.broadcast %cst_9 : f32 to vector<8x256xf32>
      %c0_10 = arith.constant 0 : index
      %c0_11 = arith.constant 0 : index
      %13 = vector.load %arg7[%c0_10, %c0_11] : memref<8x256xf32, #tpu.memory_space<vmem>>, vector<8x256xf32>
      tpu.vector_store %arg7[%c0_10, %c0_11], %12 {strides = array<i32>} : memref<8x256xf32, #tpu.memory_space<vmem>>, vector<8x256xf32>,
    } else {
    }
    %c0 = arith.constant 0 : index
    %c0_1 = arith.constant 0 : index
    %3 = vector.load %arg7[%c0, %c0_1] : memref<8x256xf32, #tpu.memory_space<vmem>>, vector<8x256xf32>
    %c0_2 = arith.constant 0 : index
    %c0_3 = arith.constant 0 : index
    %4 = vector.load %arg1[%c0_2, %c0_3] : memref<8x512xbf16, #tpu.memory_space<vmem>>, vector<8x512xbf16>
    %c0_4 = arith.constant 0 : index
    %c0_5 = arith.constant 0 : index
    %5 = vector.load %arg2[%c0_4, %c0_5] : memref<512x256xbf16, #tpu.memory_space<vmem>>, vector<512x256xbf16>
    %cst = arith.constant dense<0.000000e+00> : vector<8x256xf32>
    %6 = tpu.matmul %4, %5, %cst {dimension_numbers = #tpu.dot_dimension_numbers<[1], [0], [0], [1], [0, 0, 1, 1], [], []>} : vector<8x512xbf16>, vector<512x256xbf16>, vector<8x256xf32> -> vector<8x256xf32>
    %7 = arith.addf %3, %6 : vector<8x256xf32>
    %c0_6 = arith.constant 0 : index
    %c0_7 = arith.constant 0 : index
    %8 = vector.load %arg7[%c0_6, %c0_7] : memref<8x256xf32, #tpu.memory_space<vmem>>, vector<8x256xf32>
    tpu.vector_store %arg7[%c0_6, %c0_7], %7 {strides = array<i32>} : memref<8x256xf32, #tpu.memory_space<vmem>>, vector<8x256xf32>,
    %c35_i32 = arith.constant 35 : i32
    %9 = arith.cmpi eq, %arg0, %c35_i32 : i32
    %10 = arith.extui %9 : i1 to i32
    %c0_i32_8 = arith.constant 0 : i32
    %11 = arith.cmpi ne, %10, %c0_i32_8 : i32
    scf.if %11 {
      %c0_9 = arith.constant 0 : index
      %c0_10 = arith.constant 0 : index
      %12 = vector.load %arg7[%c0_9, %c0_10] : memref<8x256xf32, #tpu.memory_space<vmem>>, vector<8x256xf32>
      %c0_11 = arith.constant 0 : index
      %c0_12 = arith.constant 0 : index
      %13 = vector.load %arg5[%c0_11, %c0_12] : memref<8x256xf32, #tpu.memory_space<vmem>>, vector<8x256xf32>
      tpu.vector_store %arg5[%c0_11, %c0_12], %12 {strides = array<i32>} : memref<8x256xf32, #tpu.memory_space<vmem>>, vector<8x256xf32>,
      %14 = arith.truncf %12 : vector<8x256xf32> to vector<8x256xbf16>
      %c0_13 = arith.constant 0 : index
      %c0_14 = arith.constant 0 : index
      %15 = vector.load %arg3[%c0_13, %c0_14] : memref<256x1024xbf16, #tpu.memory_space<vmem>>, vector<256x1024xbf16>
      %cst_15 = arith.constant dense<0.000000e+00> : vector<8x1024xf32>
      %16 = tpu.matmul %14, %15, %cst_15 {dimension_numbers = #tpu.dot_dimension_numbers<[1], [0], [0], [1], [0, 0, 1, 1], [], []>} : vector<8x256xbf16>, vector<256x1024xbf16>, vector<8x1024xf32> -> vector<8x1024xf32>
      %c0_16 = arith.constant 0 : index
      %c0_17 = arith.constant 0 : index
      %17 = vector.load %arg4[%c0_16, %c0_17] : memref<1x1024xf32, #tpu.memory_space<vmem>>, vector<1x1024xf32>
      %18 = vector.broadcast %17 : vector<1x1024xf32> to vector<8x1024xf32>
      %19 = arith.addf %16, %18 : vector<8x1024xf32>
      %c0_18 = arith.constant 0 : index
      %c0_19 = arith.constant 0 : index
      %20 = vector.load %arg6[%c0_18, %c0_19] : memref<8x1024xf32, #tpu.memory_space<vmem>>, vector<8x1024xf32>
      tpu.vector_store %arg6[%c0_18, %c0_19], %19 {strides = array<i32>} : memref<8x1024xf32, #tpu.memory_space<vmem>>, vector<8x1024xf32>,
    } else {
    }
    return
  }
  func.func @transform_0(%arg0: i32) -> (i32, i32) {
    %c0_i32 = arith.constant 0 : i32
    %c0_i32_0 = arith.constant 0 : i32
    return %c0_i32, %arg0 : i32, i32
  }
  func.func @transform_1(%arg0: i32) -> (i32, i32) {
    %c0_i32 = arith.constant 0 : i32
    %c0_i32_0 = arith.constant 0 : i32
    return %arg0, %c0_i32 : i32, i32
  }
  func.func @transform_2(%arg0: i32) -> (i32, i32) {
    %c0_i32 = arith.constant 0 : i32
    %c0_i32_0 = arith.constant 0 : i32
    %c0_i32_1 = arith.constant 0 : i32
    return %c0_i32, %c0_i32_0 : i32, i32
  }
  func.func @transform_3(%arg0: i32) -> (i32, i32) {
    %c0_i32 = arith.constant 0 : i32
    %c0_i32_0 = arith.constant 0 : i32
    %c0_i32_1 = arith.constant 0 : i32
    return %c0_i32, %c0_i32_0 : i32, i32
  }
  func.func @transform_4(%arg0: i32) -> (i32, i32) {
    %c0_i32 = arith.constant 0 : i32
    %c0_i32_0 = arith.constant 0 : i32
    %c0_i32_1 = arith.constant 0 : i32
    return %c0_i32, %c0_i32_0 : i32, i32
  }
  func.func @transform_5(%arg0: i32) -> (i32, i32) {
    %c0_i32 = arith.constant 0 : i32
    %c0_i32_0 = arith.constant 0 : i32
    %c0_i32_1 = arith.constant 0 : i32
    return %c0_i32, %c0_i32_0 : i32, i32
  }
}

</mosaic_0001>

<llo_original>
// kernel: discriminator_forward.5
$region0: #{discriminator_forward.5}
  #allocation0 [shape = 'u32[]', space=smem, size = 0x4, offset = 0x4, fixed_abs, tag = 'smem constant byte address 0x4 - core index']
  #allocation1 [shape = 'u32[72,128]{1,0:T(1,128)}', space=vmem, size = 0x9000, scoped, tag = 'internal scratch']
  #allocation2 [shape = 'f32[256,64]{1,0:T(8,128)}', space=vmem, size = 0x20000, scoped, tag = 'scratch operand']
  %s0 = inlined_call_operand.vmem [shape: bf16[4608,48], index: 0, kind: input, shape index: {}]
  %s1 = inlined_call_operand.vmem [shape: bf16[48,64], index: 1, kind: input, shape index: {}]
  %s2 = inlined_call_operand.vmem [shape: f32[1,64], index: 2, kind: input, shape index: {}]
  %s3 = inlined_call_operand.vmem [shape: bf16[4608,64], index: 3, kind: output, shape index: {}]
  %s4 = sld [smem:[#allocation0]]
  $region53: #{discriminator_forward.5} parent=0
    _
  %s6 = ssub.s32 1, %s4
  %s7 = scalar_select 0, %s6, %s4
  loop: start=0, step=1, limit=20
  $region2: #{discriminator_forward.5} parent=0 // loop_pre_header
    _
  $region3: #{discriminator_forward.5} parent=0 // loop_header
    %s9 = sphi 0, %s13
    %p10 = scmp.ge.s32.totalorder %s9, 20
    %s16 = sphi 0, %s35
    %s17 = sphi 0, %s31
    %s18 = sphi 0, %s27
    %s19 = sphi 0, %s16
    %s20 = sphi 0, %s17
    %s21 = sphi 0, %s18
    %s22 = sphi 0, %s19
    %s23 = sphi 0, %s20
    %s24 = sphi 0, %s21
    %s40 = sphi 0, %s42
    %s43 = sphi 0, %s40
    %s44 = sphi 0, %s43
    %s60 = sphi 0, %s44
    %s68 = sphi 0, %s70
    %s71 = sphi 0, %s68
    %s72 = sphi 0, %s71
    %s88 = sphi 0, %s72
    %s94 = sphi 0, %s96
    %s97 = sphi 0, %s94
    %s98 = sphi 0, %s97
    %s114 = sphi 0, %s98
    %s122 = sphi 0, %s124
    %s125 = sphi 0, %s122
    %s126 = sphi 0, %s125
    %s142 = sphi 0, %s126
  $region4: #{discriminator_forward.5} parent=0 // loop_header_branch
    %12 = sbr.rel (%p10) target = $region8
  $region5: #{discriminator_forward.5} parent=0 // loop_body
    %s14 = ssub.s32 %s9, 1
    %s15 = ssub.s32 %s9, 2
    %s25 = sadd.s32 1, %s18
    %p26 = scmp.ge.s32.totalorder %s25, 1
    %s27 = scalar_select %p26, 0, %s25
    %s28 = sadd.s32 1, %s17
    %s29 = scalar_select %p26, %s28, %s17
    %p30 = scmp.ge.s32.totalorder %s29, 1
    %s31 = scalar_select %p30, 0, %s29
    %s32 = sadd.s32 1, %s16
    %s33 = scalar_select %p30, %s32, %s16
    %p34 = scmp.ge.s32.totalorder %s33, 18
    %s35 = scalar_select %p34, 0, %s33
    %s36 = ssub.s32 %s16, %s35
    %s37 = ssub.s32 %s18, %s27
    %s38 = sor.u32 %s36, %s37
    %p39 = scmp.eq.s32.totalorder %s38, 0
    %s41 = sadd.s32 %s40, 1
    %s42 = scalar_select %p39, %s40, %s41
    %p45 = pneg %p39
    %p46 = scmp.eq.s32.totalorder %s9, 17
    %p47 = por %p45, %p46
    %p48 = scmp.ne.s32.totalorder %s40, %s43
    %p49 = scmp.eq.s32.totalorder %s9, 0
    %p50 = por %p48, %p49
    %p51 = scmp.ne.s32.totalorder %s40, %s43
    %p52 = scmp.eq.s32.totalorder %s14, 17
    %p53 = por %p51, %p52
    %p54 = scmp.ne.s32.totalorder %s43, %s44
    %p55 = scmp.eq.s32.totalorder %s14, 0
    %p56 = por %p54, %p55
    %p57 = scmp.ne.s32.totalorder %s43, %s44
    %p58 = scmp.eq.s32.totalorder %s15, 17
    %p59 = por %p57, %p58
    %p61 = scmp.ne.s32.totalorder %s44, %s60
    %p62 = scmp.eq.s32.totalorder %s15, 0
    %p63 = por %p61, %p62
    %s64 = ssub.s32 %s18, %s27
    %s65 = ssub.s32 %s17, %s31
    %s66 = sor.u32 %s64, %s65
    %p67 = scmp.eq.s32.totalorder %s66, 0
    %s69 = sadd.s32 %s68, 1
    %s70 = scalar_select %p67, %s68, %s69
    %p73 = pneg %p67
    %p74 = scmp.eq.s32.totalorder %s9, 17
    %p75 = por %p73, %p74
    %p76 = scmp.ne.s32.totalorder %s68, %s71
    %p77 = scmp.eq.s32.totalorder %s9, 0
    %p78 = por %p76, %p77
    %p79 = scmp.ne.s32.totalorder %s68, %s71
    %p80 = scmp.eq.s32.totalorder %s14, 17
    %p81 = por %p79, %p80
    %p82 = scmp.ne.s32.totalorder %s71, %s72
    %p83 = scmp.eq.s32.totalorder %s14, 0
    %p84 = por %p82, %p83
    %p85 = scmp.ne.s32.totalorder %s71, %s72
    %p86 = scmp.eq.s32.totalorder %s15, 17
    %p87 = por %p85, %p86
    %p89 = scmp.ne.s32.totalorder %s72, %s88
    %p90 = scmp.eq.s32.totalorder %s15, 0
    %p91 = por %p89, %p90
    %s92 = ssub.s32 %s17, %s31
    %p93 = scmp.eq.s32.totalorder %s92, 0
    %s95 = sadd.s32 %s94, 1
    %s96 = scalar_select %p93, %s94, %s95
    %p99 = pneg %p93
    %p100 = scmp.eq.s32.totalorder %s9, 17
    %p101 = por %p99, %p100
    %p102 = scmp.ne.s32.totalorder %s94, %s97
    %p103 = scmp.eq.s32.totalorder %s9, 0
    %p104 = por %p102, %p103
    %p105 = scmp.ne.s32.totalorder %s94, %s97
    %p106 = scmp.eq.s32.totalorder %s14, 17
    %p107 = por %p105, %p106
    %p108 = scmp.ne.s32.totalorder %s97, %s98
    %p109 = scmp.eq.s32.totalorder %s14, 0
    %p110 = por %p108, %p109
    %p111 = scmp.ne.s32.totalorder %s97, %s98
    %p112 = scmp.eq.s32.totalorder %s15, 17
    %p113 = por %p111, %p112
    %p115 = scmp.ne.s32.totalorder %s98, %s114
    %p116 = scmp.eq.s32.totalorder %s15, 0
    %p117 = por %p115, %p116
    %s118 = ssub.s32 %s16, %s35
    %s119 = ssub.s32 %s17, %s31
    %s120 = sor.u32 %s118, %s119
    %p121 = scmp.eq.s32.totalorder %s120, 0
    %s123 = sadd.s32 %s122, 1
    %s124 = scalar_select %p121, %s122, %s123
    %p127 = pneg %p121
    %p128 = scmp.eq.s32.totalorder %s9, 17
    %p129 = por %p127, %p128
    %p130 = scmp.ne.s32.totalorder %s122, %s125
    %p131 = scmp.eq.s32.totalorder %s9, 0
    %p132 = por %p130, %p131
    %p133 = scmp.ne.s32.totalorder %s122, %s125
    %p134 = scmp.eq.s32.totalorder %s14, 17
    %p135 = por %p133, %p134
    %p136 = scmp.ne.s32.totalorder %s125, %s126
    %p137 = scmp.eq.s32.totalorder %s14, 0
    %p138 = por %p136, %p137
    %p139 = scmp.ne.s32.totalorder %s125, %s126
    %p140 = scmp.eq.s32.totalorder %s15, 17
    %p141 = por %p139, %p140
    %p143 = scmp.ne.s32.totalorder %s126, %s142
    %p144 = scmp.eq.s32.totalorder %s15, 0
    %p145 = por %p143, %p144
    %p146 = scmp.le.s32.totalorder 1, %s9
    %p147 = scmp.lt.s32.totalorder %s9, 19
    %p148 = pnand %p146, %p147
    %p149 = pneg %p148
    // Predicated region
    $region9: #{discriminator_forward.5} parent=5 // pred_check
      _
    $region10: #{discriminator_forward.5} parent=5 // pred_check_branch
      %151 = sbr.rel (%p148) target = $region12
    $region11: #{discriminator_forward.5} parent=5 // pred_region
      %s152 = ssub.s32 %s9, 1
      // Predicated region
      $region13: #{discriminator_forward.5} parent=11 // pred_check
        %p153 = pneg %p84
      $region14: #{discriminator_forward.5} parent=11 // pred_check_branch
        %155 = sbr.rel (%p153) target = $region16
      $region15: #{discriminator_forward.5} parent=11 // pred_region
        %s156 = smul.u32 6, %s21
        %p157 = scmp.lt.s32.totalorder %s156, 5
        %s158 = scalar_select %p157, %s156, 5
        %p159 = scmp.lt.s32.totalorder %s20, 0
        %s160 = scalar_select %p159, %s20, 0
        %s161 = sadd.s32 %s160, %s158
        %s162 = smul.addr %s161, 4
        %s163 = scalar_lea.vmem %s1, %s162
        %s164 = smul.u32 6, %s21
      $region16: #{discriminator_forward.5} parent=11 // pred_fallthru
        _
      // Predicated region
      $region17: #{discriminator_forward.5} parent=11 // pred_check
        %p165 = pneg %p110
      $region18: #{discriminator_forward.5} parent=11 // pred_check_branch
        %167 = sbr.rel (%p165) target = $region20
      $region19: #{discriminator_forward.5} parent=11 // pred_region
        %p168 = scmp.lt.s32.totalorder %s20, 0
        %s169 = scalar_select %p168, %s20, 0
        %s170 = scalar_lea.vmem %s2, %s169
      $region20: #{discriminator_forward.5} parent=11 // pred_fallthru
        _
    $region12: #{discriminator_forward.5} parent=5 // pred_fallthru
      _
    %p171 = scmp.lt.s32.totalorder %s9, 18
    // Predicated region
    $region21: #{discriminator_forward.5} parent=5 // pred_check
      %p172 = pneg %p171
    $region22: #{discriminator_forward.5} parent=5 // pred_check_branch
      %174 = sbr.rel (%p172) target = $region24
    $region23: #{discriminator_forward.5} parent=5 // pred_region
      // Predicated region
      $region25: #{discriminator_forward.5} parent=23 // pred_check
        %p175 = pneg %p50
      $region26: #{discriminator_forward.5} parent=23 // pred_check_branch
        %177 = sbr.rel (%p175) target = $region28
      $region27: #{discriminator_forward.5} parent=23 // pred_region
        %s178 = smul.u32 32, %s16
        %p179 = scmp.lt.s32.totalorder %s178, 575
        %s180 = scalar_select %p179, %s178, 575
        %p181 = scmp.lt.s32.totalorder %s18, 0
        %s182 = scalar_select %p181, %s18, 0
        %s183 = sadd.s32 %s182, %s180
        %s184 = smul.addr %s183, 4
        %s185 = scalar_lea.vmem %s0, %s184
        %s186 = smul.u32 32, %s16
      $region28: #{discriminator_forward.5} parent=23 // pred_fallthru
        _
    $region24: #{discriminator_forward.5} parent=5 // pred_fallthru
      _
    %p187 = scmp.le.s32.totalorder 1, %s9
    %p188 = scmp.lt.s32.totalorder %s9, 19
    %p189 = pnand %p187, %p188
    %p190 = pneg %p189
    // Predicated region
    $region29: #{discriminator_forward.5} parent=5 // pred_check
      _
    $region30: #{discriminator_forward.5} parent=5 // pred_check_branch
      %192 = sbr.rel (%p189) target = $region32
    $region31: #{discriminator_forward.5} parent=5 // pred_region
      %s193 = ssub.s32 %s9, 1
      %s194 = smul.u32 32, %s19
      %p195 = scmp.lt.s32.totalorder %s194, 575
      %s196 = scalar_select %p195, %s194, 575
      %p197 = scmp.lt.s32.totalorder %s21, 0
      %s198 = scalar_select %p197, %s21, 0
      %s199 = sadd.s32 %s198, %s196
      %s200 = smul.addr %s199, 4
      %s201 = scalar_lea.vmem %s0, %s200
      %p202 = pneg %p56
      %p203 = pneg %p53
      %s204 = smul.u32 6, %s21
      %p205 = scmp.lt.s32.totalorder %s204, 5
      %s206 = scalar_select %p205, %s204, 5
      %p207 = scmp.lt.s32.totalorder %s20, 0
      %s208 = scalar_select %p207, %s20, 0
      %s209 = sadd.s32 %s208, %s206
      %s210 = smul.addr %s209, 4
      %s211 = scalar_lea.vmem %s1, %s210
      %p212 = pneg %p84
      %p213 = pneg %p81
      %p214 = scmp.lt.s32.totalorder %s20, 0
      %s215 = scalar_select %p214, %s20, 0
      %s216 = scalar_lea.vmem %s2, %s215
      %p217 = pneg %p110
      %p218 = pneg %p107
      %p219 = pneg %p138
      %p220 = pneg %p135
      %s221 = smul.u32 32, %s19
      %p222 = scmp.lt.s32.totalorder %s221, 575
      %s223 = scalar_select %p222, %s221, 575
      %p224 = scmp.lt.s32.totalorder %s20, 0
      %s225 = scalar_select %p224, %s20, 0
      %s226 = sadd.s32 %s225, %s223
      %s227 = smul.addr %s226, 4
      %s228 = scalar_lea.vmem %s3, %s227
      %s229 = smul.u32 32, %s19
      %p230 = scmp.lt.s32.totalorder %s229, 575
      %s231 = scalar_select %p230, %s229, 575
      %p232 = scmp.lt.s32.totalorder %s21, 0
      %s233 = scalar_select %p232, %s21, 0
      %s234 = sadd.s32 %s233, %s231
      %s235 = smul.addr %s234, 4
      %s236 = scalar_lea.vmem %s0, %s235
      %s237 = smul.u32 32, %s19
      %s238 = smul.u32 6, %s21
      %p239 = scmp.lt.s32.totalorder %s238, 5
      %s240 = scalar_select %p239, %s238, 5
      %p241 = scmp.lt.s32.totalorder %s20, 0
      %s242 = scalar_select %p241, %s20, 0
      %s243 = sadd.s32 %s242, %s240
      %s244 = smul.addr %s243, 4
      %s245 = scalar_lea.vmem %s1, %s244
      %s246 = smul.u32 6, %s21
      %p247 = scmp.lt.s32.totalorder %s20, 0
      %s248 = scalar_select %p247, %s20, 0
      %s249 = scalar_lea.vmem %s2, %s248
      %s250 = smul.u32 32, %s19
      %p251 = scmp.lt.s32.totalorder %s250, 575
      %s252 = scalar_select %p251, %s250, 575
      %p253 = scmp.lt.s32.totalorder %s20, 0
      %s254 = scalar_select %p253, %s20, 0
      %s255 = sadd.s32 %s254, %s252
      %s256 = smul.addr %s255, 4
      %s257 = scalar_lea.vmem %s3, %s256
      %s258 = smul.u32 32, %s19
      %p260 = scmp.eq.s32.totalorder %s21, 0
      // Predicated region
      $region33: #{discriminator_forward.5} parent=31 // pred_check
        %p261 = pneg %p260
      $region34: #{discriminator_forward.5} parent=31 // pred_check_branch
        %263 = sbr.rel (%p261) target = $region36
      $region35: #{discriminator_forward.5} parent=31 // pred_region
        %vm264 = vcmask 523264
        %265 = vst.msk [vmem:[#allocation2] sm:$0xff] %vm264, 0.0
        %266 = vst.msk [vmem:[#allocation2 + $0x8] sm:$0xff] %vm264, 0.0
        %267 = vst.msk [vmem:[#allocation2 + $0x10] sm:$0xff] %vm264, 0.0
        %268 = vst.msk [vmem:[#allocation2 + $0x18] sm:$0xff] %vm264, 0.0
        %269 = vst.msk [vmem:[#allocation2 + $0x20] sm:$0xff] %vm264, 0.0
        %270 = vst.msk [vmem:[#allocation2 + $0x28] sm:$0xff] %vm264, 0.0
        %271 = vst.msk [vmem:[#allocation2 + $0x30] sm:$0xff] %vm264, 0.0
        %272 = vst.msk [vmem:[#allocation2 + $0x38] sm:$0xff] %vm264, 0.0
        %273 = vst.msk [vmem:[#allocation2 + $0x40] sm:$0xff] %vm264, 0.0
        %274 = vst.msk [vmem:[#allocation2 + $0x48] sm:$0xff] %vm264, 0.0
        %275 = vst.msk [vmem:[#allocation2 + $0x50] sm:$0xff] %vm264, 0.0
        %276 = vst.msk [vmem:[#allocation2 + $0x58] sm:$0xff] %vm264, 0.0
        %277 = vst.msk [vmem:[#allocation2 + $0x60] sm:$0xff] %vm264, 0.0
        %278 = vst.msk [vmem:[#allocation2 + $0x68] sm:$0xff] %vm264, 0.0
        %279 = vst.msk [vmem:[#allocation2 + $0x70] sm:$0xff] %vm264, 0.0
        %280 = vst.msk [vmem:[#allocation2 + $0x78] sm:$0xff] %vm264, 0.0
        %281 = vst.msk [vmem:[#allocation2 + $0x80] sm:$0xff] %vm264, 0.0
        %282 = vst.msk [vmem:[#allocation2 + $0x88] sm:$0xff] %vm264, 0.0
        %283 = vst.msk [vmem:[#allocation2 + $0x90] sm:$0xff] %vm264, 0.0
        %284 = vst.msk [vmem:[#allocation2 + $0x98] sm:$0xff] %vm264, 0.0
        %285 = vst.msk [vmem:[#allocation2 + $0xa0] sm:$0xff] %vm264, 0.0
        %286 = vst.msk [vmem:[#allocation2 + $0xa8] sm:$0xff] %vm264, 0.0
        %287 = vst.msk [vmem:[#allocation2 + $0xb0] sm:$0xff] %vm264, 0.0
        %288 = vst.msk [vmem:[#allocation2 + $0xb8] sm:$0xff] %vm264, 0.0
        %289 = vst.msk [vmem:[#allocation2 + $0xc0] sm:$0xff] %vm264, 0.0
        %290 = vst.msk [vmem:[#allocation2 + $0xc8] sm:$0xff] %vm264, 0.0
        %291 = vst.msk [vmem:[#allocation2 + $0xd0] sm:$0xff] %vm264, 0.0
        %292 = vst.msk [vmem:[#allocation2 + $0xd8] sm:$0xff] %vm264, 0.0
        %293 = vst.msk [vmem:[#allocation2 + $0xe0] sm:$0xff] %vm264, 0.0
        %294 = vst.msk [vmem:[#allocation2 + $0xe8] sm:$0xff] %vm264, 0.0
        %295 = vst.msk [vmem:[#allocation2 + $0xf0] sm:$0xff] %vm264, 0.0
        %296 = vst.msk [vmem:[#allocation2 + $0xf8] sm:$0xff] %vm264, 0.0
      $region36: #{discriminator_forward.5} parent=31 // pred_fallthru
        _
      %v297 = vld [vmem:[#allocation2] sm:$0xff]
      %v298 = vld [vmem:[#allocation2 + $0x8] sm:$0xff]
      %v299 = vld [vmem:[#allocation2 + $0x10] sm:$0xff]
      %v300 = vld [vmem:[#allocation2 + $0x18] sm:$0xff]
      %v301 = vld [vmem:[#allocation2 + $0x20] sm:$0xff]
      %v302 = vld [vmem:[#allocation2 + $0x28] sm:$0xff]
      %v303 = vld [vmem:[#allocation2 + $0x30] sm:$0xff]
      %v304 = vld [vmem:[#allocation2 + $0x38] sm:$0xff]
      %v305 = vld [vmem:[#allocation2 + $0x40] sm:$0xff]
      %v306 = vld [vmem:[#allocation2 + $0x48] sm:$0xff]
      %v307 = vld [vmem:[#allocation2 + $0x50] sm:$0xff]
      %v308 = vld [vmem:[#allocation2 + $0x58] sm:$0xff]
      %v309 = vld [vmem:[#allocation2 + $0x60] sm:$0xff]
      %v310 = vld [vmem:[#allocation2 + $0x68] sm:$0xff]
      %v311 = vld [vmem:[#allocation2 + $0x70] sm:$0xff]
      %v312 = vld [vmem:[#allocation2 + $0x78] sm:$0xff]
      %v313 = vld [vmem:[#allocation2 + $0x80] sm:$0xff]
      %v314 = vld [vmem:[#allocation2 + $0x88] sm:$0xff]
      %v315 = vld [vmem:[#allocation2 + $0x90] sm:$0xff]
      %v316 = vld [vmem:[#allocation2 + $0x98] sm:$0xff]
      %v317 = vld [vmem:[#allocation2 + $0xa0] sm:$0xff]
      %v318 = vld [vmem:[#allocation2 + $0xa8] sm:$0xff]
      %v319 = vld [vmem:[#allocation2 + $0xb0] sm:$0xff]
      %v320 = vld [vmem:[#allocation2 + $0xb8] sm:$0xff]
      %v321 = vld [vmem:[#allocation2 + $0xc0] sm:$0xff]
      %v322 = vld [vmem:[#allocation2 + $0xc8] sm:$0xff]
      %v323 = vld [vmem:[#allocation2 + $0xd0] sm:$0xff]
      %v324 = vld [vmem:[#allocation2 + $0xd8] sm:$0xff]
      %v325 = vld [vmem:[#allocation2 + $0xe0] sm:$0xff]
      %v326 = vld [vmem:[#allocation2 + $0xe8] sm:$0xff]
      %v327 = vld [vmem:[#allocation2 + $0xf0] sm:$0xff]
      %v328 = vld [vmem:[#allocation2 + $0xf8] sm:$0xff]
      %v329 = vld [vmem:[%s236] sm:$0xf]
      %v330 = vld [vmem:[%s236 + $0x4] sm:$0xf]
      %v331 = vld [vmem:[%s236 + $0x8] sm:$0xf]
      %v332 = vld [vmem:[%s236 + $0xc] sm:$0xf]
      %v333 = vld [vmem:[%s236 + $0x10] sm:$0xf]
      %v334 = vld [vmem:[%s236 + $0x14] sm:$0xf]
      %v335 = vld [vmem:[%s236 + $0x18] sm:$0xf]
      %v336 = vld [vmem:[%s236 + $0x1c] sm:$0xf]
      %v337 = vld [vmem:[%s236 + $0x20] sm:$0xf]
      %v338 = vld [vmem:[%s236 + $0x24] sm:$0xf]
      %v339 = vld [vmem:[%s236 + $0x28] sm:$0xf]
      %v340 = vld [vmem:[%s236 + $0x2c] sm:$0xf]
      %v341 = vld [vmem:[%s236 + $0x30] sm:$0xf]
      %v342 = vld [vmem:[%s236 + $0x34] sm:$0xf]
      %v343 = vld [vmem:[%s236 + $0x38] sm:$0xf]
      %v344 = vld [vmem:[%s236 + $0x3c] sm:$0xf]
      %v345 = vld [vmem:[%s236 + $0x40] sm:$0xf]
      %v346 = vld [vmem:[%s236 + $0x44] sm:$0xf]
      %v347 = vld [vmem:[%s236 + $0x48] sm:$0xf]
      %v348 = vld [vmem:[%s236 + $0x4c] sm:$0xf]
      %v349 = vld [vmem:[%s236 + $0x50] sm:$0xf]
      %v350 = vld [vmem:[%s236 + $0x54] sm:$0xf]
      %v351 = vld [vmem:[%s236 + $0x58] sm:$0xf]
      %v352 = vld [vmem:[%s236 + $0x5c] sm:$0xf]
      %v353 = vld [vmem:[%s236 + $0x60] sm:$0xf]
      %v354 = vld [vmem:[%s236 + $0x64] sm:$0xf]
      %v355 = vld [vmem:[%s236 + $0x68] sm:$0xf]
      %v356 = vld [vmem:[%s236 + $0x6c] sm:$0xf]
      %v357 = vld [vmem:[%s236 + $0x70] sm:$0xf]
      %v358 = vld [vmem:[%s236 + $0x74] sm:$0xf]
      %v359 = vld [vmem:[%s236 + $0x78] sm:$0xf]
      %v360 = vld [vmem:[%s236 + $0x7c] sm:$0xf]
      %v361 = vld [vmem:[%s245] sm:$0xf]
      %v362 = vld [vmem:[%s245 + $0x4] sm:$0xf]
      %v363 = vld [vmem:[%s245 + $0x8] sm:$0xf]
      %v364 = vld [vmem:[%s245 + $0xc] sm:$0xf]
      %v365 = vld [vmem:[%s245 + $0x10] sm:$0xf]
      %v366 = vld [vmem:[%s245 + $0x14] sm:$0xf]
      %v399 = vunpack.c.l.b16 %v329
      %v400 = vunpack.c.l.b16 %v330
      %v401 = vunpack.c.l.b16 %v331
      %v402 = vunpack.c.l.b16 %v332
      %v403 = vunpack.c.l.b16 %v333
      %v404 = vunpack.c.l.b16 %v334
      %v405 = vunpack.c.l.b16 %v335
      %v406 = vunpack.c.l.b16 %v336
      %v407 = vunpack.c.l.b16 %v337
      %v408 = vunpack.c.l.b16 %v338
      %v409 = vunpack.c.l.b16 %v339
      %v410 = vunpack.c.l.b16 %v340
      %v411 = vunpack.c.l.b16 %v341
      %v412 = vunpack.c.l.b16 %v342
      %v413 = vunpack.c.l.b16 %v343
      %v414 = vunpack.c.l.b16 %v344
      %v415 = vunpack.c.l.b16 %v345
      %v416 = vunpack.c.l.b16 %v346
      %v417 = vunpack.c.l.b16 %v347
      %v418 = vunpack.c.l.b16 %v348
      %v419 = vunpack.c.l.b16 %v349
      %v420 = vunpack.c.l.b16 %v350
      %v421 = vunpack.c.l.b16 %v351
      %v422 = vunpack.c.l.b16 %v352
      %v423 = vunpack.c.l.b16 %v353
      %v424 = vunpack.c.l.b16 %v354
      %v425 = vunpack.c.l.b16 %v355
      %v426 = vunpack.c.l.b16 %v356
      %v427 = vunpack.c.l.b16 %v357
      %v428 = vunpack.c.l.b16 %v358
      %v429 = vunpack.c.l.b16 %v359
      %v430 = vunpack.c.l.b16 %v360
      %v431 = vpack.c.b16 %v400, %v399
      %v432 = vpack.c.b16 %v402, %v401
      %v433 = vpack.c.b16 %v404, %v403
      %v434 = vpack.c.b16 %v406, %v405
      %v435 = vpack.c.b16 %v408, %v407
      %v436 = vpack.c.b16 %v410, %v409
      %v437 = vpack.c.b16 %v412, %v411
      %v438 = vpack.c.b16 %v414, %v413
      %v439 = vpack.c.b16 %v416, %v415
      %v440 = vpack.c.b16 %v418, %v417
      %v441 = vpack.c.b16 %v420, %v419
      %v442 = vpack.c.b16 %v422, %v421
      %v443 = vpack.c.b16 %v424, %v423
      %v444 = vpack.c.b16 %v426, %v425
      %v445 = vpack.c.b16 %v428, %v427
      %v446 = vpack.c.b16 %v430, %v429
      %v453 = vunpack.c.l.b16 %v361
      %v454 = vunpack.c.l.b16 %v362
      %v455 = vunpack.c.l.b16 %v363
      %v456 = vunpack.c.l.b16 %v364
      %v457 = vunpack.c.l.b16 %v365
      %v458 = vunpack.c.l.b16 %v366
      %v459 = vpack.c.b16 %v454, %v453
      %v460 = vpack.c.b16 %v456, %v455
      %v461 = vpack.c.b16 %v458, %v457
      %vm465 = vcmask 392192
      %v467 = vsel %vm465, %v431, 0
      %v470 = vsel %vm465, %v432, 0
      %v473 = vsel %vm465, %v433, 0
      %v476 = vsel %vm465, %v434, 0
      %v479 = vsel %vm465, %v435, 0
      %v482 = vsel %vm465, %v436, 0
      %v485 = vsel %vm465, %v437, 0
      %v488 = vsel %vm465, %v438, 0
      %v491 = vsel %vm465, %v439, 0
      %v494 = vsel %vm465, %v440, 0
      %v497 = vsel %vm465, %v441, 0
      %v500 = vsel %vm465, %v442, 0
      %v503 = vsel %vm465, %v443, 0
      %v506 = vsel %vm465, %v444, 0
      %v509 = vsel %vm465, %v445, 0
      %v512 = vsel %vm465, %v446, 0
      %514 = vmatpush.bf16.msra.mxu0 0
      %515 = vmatpush.bf16.msra.mxu0 0
      %516 = vmatpush.bf16.msra.mxu0 0
      %517 = vmatpush.bf16.msra.mxu0 0
      %518 = vmatpush.bf16.msra.mxu0 0
      %519 = vmatpush.bf16.msra.mxu0 %v461
      %520 = vmatpush.bf16.msra.mxu0 %v460
      %521 = vmatpush.bf16.msra.mxu0 %v459
      %522 = vmatmul.bf16.gmra.mxu0 %v467
      %v523 = vpop.f32.mrf.mxu0
      %v524 = vadd.f32 0.0, %v523
      %v525 = vpop.f32.mrf.mxu0
      %v526 = vadd.f32 0.0, %v525
      %527 = vmatmul.bf16.gmra.mxu0 %v470
      %v528 = vpop.f32.mrf.mxu0
      %v529 = vadd.f32 0.0, %v528
      %v530 = vpop.f32.mrf.mxu0
      %v531 = vadd.f32 0.0, %v530
      %532 = vmatmul.bf16.gmra.mxu0 %v473
      %v533 = vpop.f32.mrf.mxu0
      %v534 = vadd.f32 0.0, %v533
      %v535 = vpop.f32.mrf.mxu0
      %v536 = vadd.f32 0.0, %v535
      %537 = vmatmul.bf16.gmra.mxu0 %v476
      %v538 = vpop.f32.mrf.mxu0
      %v539 = vadd.f32 0.0, %v538
      %v540 = vpop.f32.mrf.mxu0
      %v541 = vadd.f32 0.0, %v540
      %542 = vmatmul.bf16.gmra.mxu0 %v479
      %v543 = vpop.f32.mrf.mxu0
      %v544 = vadd.f32 0.0, %v543
      %v545 = vpop.f32.mrf.mxu0
      %v546 = vadd.f32 0.0, %v545
      %547 = vmatmul.bf16.gmra.mxu0 %v482
      %v548 = vpop.f32.mrf.mxu0
      %v549 = vadd.f32 0.0, %v548
      %v550 = vpop.f32.mrf.mxu0
      %v551 = vadd.f32 0.0, %v550
      %552 = vmatmul.bf16.gmra.mxu0 %v485
      %v553 = vpop.f32.mrf.mxu0
      %v554 = vadd.f32 0.0, %v553
      %v555 = vpop.f32.mrf.mxu0
      %v556 = vadd.f32 0.0, %v555
      %557 = vmatmul.bf16.gmra.mxu0 %v488
      %v558 = vpop.f32.mrf.mxu0
      %v559 = vadd.f32 0.0, %v558
      %v560 = vpop.f32.mrf.mxu0
      %v561 = vadd.f32 0.0, %v560
      %562 = vmatmul.bf16.gmra.mxu0 %v491
      %v563 = vpop.f32.mrf.mxu0
      %v564 = vadd.f32 0.0, %v563
      %v565 = vpop.f32.mrf.mxu0
      %v566 = vadd.f32 0.0, %v565
      %567 = vmatmul.bf16.gmra.mxu0 %v494
      %v568 = vpop.f32.mrf.mxu0
      %v569 = vadd.f32 0.0, %v568
      %v570 = vpop.f32.mrf.mxu0
      %v571 = vadd.f32 0.0, %v570
      %572 = vmatmul.bf16.gmra.mxu0 %v497
      %v573 = vpop.f32.mrf.mxu0
      %v574 = vadd.f32 0.0, %v573
      %v575 = vpop.f32.mrf.mxu0
      %v576 = vadd.f32 0.0, %v575
      %577 = vmatmul.bf16.gmra.mxu0 %v500
      %v578 = vpop.f32.mrf.mxu0
      %v579 = vadd.f32 0.0, %v578
      %v580 = vpop.f32.mrf.mxu0
      %v581 = vadd.f32 0.0, %v580
      %582 = vmatmul.bf16.gmra.mxu0 %v503
      %v583 = vpop.f32.mrf.mxu0
      %v584 = vadd.f32 0.0, %v583
      %v585 = vpop.f32.mrf.mxu0
      %v586 = vadd.f32 0.0, %v585
      %587 = vmatmul.bf16.gmra.mxu0 %v506
      %v588 = vpop.f32.mrf.mxu0
      %v589 = vadd.f32 0.0, %v588
      %v590 = vpop.f32.mrf.mxu0
      %v591 = vadd.f32 0.0, %v590
      %592 = vmatmul.bf16.gmra.mxu0 %v509
      %v593 = vpop.f32.mrf.mxu0
      %v594 = vadd.f32 0.0, %v593
      %v595 = vpop.f32.mrf.mxu0
      %v596 = vadd.f32 0.0, %v595
      %597 = vmatmul.bf16.gmra.mxu0 %v512
      %v598 = vpop.f32.mrf.mxu0
      %v599 = vadd.f32 0.0, %v598
      %v600 = vpop.f32.mrf.mxu0
      %v601 = vadd.f32 0.0, %v600
      %602 = vdwg.mxu0
      %v603 = vadd.f32 %v297, %v524
      %v604 = vadd.f32 %v298, %v526
      %v605 = vadd.f32 %v299, %v529
      %v606 = vadd.f32 %v300, %v531
      %v607 = vadd.f32 %v301, %v534
      %v608 = vadd.f32 %v302, %v536
      %v609 = vadd.f32 %v303, %v539
      %v610 = vadd.f32 %v304, %v541
      %v611 = vadd.f32 %v305, %v544
      %v612 = vadd.f32 %v306, %v546
      %v613 = vadd.f32 %v307, %v549
      %v614 = vadd.f32 %v308, %v551
      %v615 = vadd.f32 %v309, %v554
      %v616 = vadd.f32 %v310, %v556
      %v617 = vadd.f32 %v311, %v559
      %v618 = vadd.f32 %v312, %v561
      %v619 = vadd.f32 %v313, %v564
      %v620 = vadd.f32 %v314, %v566
      %v621 = vadd.f32 %v315, %v569
      %v622 = vadd.f32 %v316, %v571
      %v623 = vadd.f32 %v317, %v574
      %v624 = vadd.f32 %v318, %v576
      %v625 = vadd.f32 %v319, %v579
      %v626 = vadd.f32 %v320, %v581
      %v627 = vadd.f32 %v321, %v584
      %v628 = vadd.f32 %v322, %v586
      %v629 = vadd.f32 %v323, %v589
      %v630 = vadd.f32 %v324, %v591
      %v631 = vadd.f32 %v325, %v594
      %v632 = vadd.f32 %v326, %v596
      %v633 = vadd.f32 %v327, %v599
      %v634 = vadd.f32 %v328, %v601
      %vm635 = vcmask 523264
      %636 = vst.msk [vmem:[#allocation2] sm:$0xff] %vm635, %v603
      %637 = vst.msk [vmem:[#allocation2 + $0x8] sm:$0xff] %vm635, %v604
      %638 = vst.msk [vmem:[#allocation2 + $0x10] sm:$0xff] %vm635, %v605
      %639 = vst.msk [vmem:[#allocation2 + $0x18] sm:$0xff] %vm635, %v606
      %640 = vst.msk [vmem:[#allocation2 + $0x20] sm:$0xff] %vm635, %v607
      %641 = vst.msk [vmem:[#allocation2 + $0x28] sm:$0xff] %vm635, %v608
      %642 = vst.msk [vmem:[#allocation2 + $0x30] sm:$0xff] %vm635, %v609
      %643 = vst.msk [vmem:[#allocation2 + $0x38] sm:$0xff] %vm635, %v610
      %644 = vst.msk [vmem:[#allocation2 + $0x40] sm:$0xff] %vm635, %v611
      %645 = vst.msk [vmem:[#allocation2 + $0x48] sm:$0xff] %vm635, %v612
      %646 = vst.msk [vmem:[#allocation2 + $0x50] sm:$0xff] %vm635, %v613
      %647 = vst.msk [vmem:[#allocation2 + $0x58] sm:$0xff] %vm635, %v614
      %648 = vst.msk [vmem:[#allocation2 + $0x60] sm:$0xff] %vm635, %v615
      %649 = vst.msk [vmem:[#allocation2 + $0x68] sm:$0xff] %vm635, %v616
      %650 = vst.msk [vmem:[#allocation2 + $0x70] sm:$0xff] %vm635, %v617
      %651 = vst.msk [vmem:[#allocation2 + $0x78] sm:$0xff] %vm635, %v618
      %652 = vst.msk [vmem:[#allocation2 + $0x80] sm:$0xff] %vm635, %v619
      %653 = vst.msk [vmem:[#allocation2 + $0x88] sm:$0xff] %vm635, %v620
      %654 = vst.msk [vmem:[#allocation2 + $0x90] sm:$0xff] %vm635, %v621
      %655 = vst.msk [vmem:[#allocation2 + $0x98] sm:$0xff] %vm635, %v622
      %656 = vst.msk [vmem:[#allocation2 + $0xa0] sm:$0xff] %vm635, %v623
      %657 = vst.msk [vmem:[#allocation2 + $0xa8] sm:$0xff] %vm635, %v624
      %658 = vst.msk [vmem:[#allocation2 + $0xb0] sm:$0xff] %vm635, %v625
      %659 = vst.msk [vmem:[#allocation2 + $0xb8] sm:$0xff] %vm635, %v626
      %660 = vst.msk [vmem:[#allocation2 + $0xc0] sm:$0xff] %vm635, %v627
      %661 = vst.msk [vmem:[#allocation2 + $0xc8] sm:$0xff] %vm635, %v628
      %662 = vst.msk [vmem:[#allocation2 + $0xd0] sm:$0xff] %vm635, %v629
      %663 = vst.msk [vmem:[#allocation2 + $0xd8] sm:$0xff] %vm635, %v630
      %664 = vst.msk [vmem:[#allocation2 + $0xe0] sm:$0xff] %vm635, %v631
      %665 = vst.msk [vmem:[#allocation2 + $0xe8] sm:$0xff] %vm635, %v632
      %666 = vst.msk [vmem:[#allocation2 + $0xf0] sm:$0xff] %vm635, %v633
      %667 = vst.msk [vmem:[#allocation2 + $0xf8] sm:$0xff] %vm635, %v634
      // Predicated region
      $region37: #{discriminator_forward.5} parent=31 // pred_check
        %p668 = pneg %p260
      $region38: #{discriminator_forward.5} parent=31 // pred_check_branch
        %670 = sbr.rel (%p668) target = $region40
      $region39: #{discriminator_forward.5} parent=31 // pred_region
        %v671 = vld [vmem:[#allocation2] sm:$0xff]
        %v672 = vld [vmem:[#allocation2 + $0x8] sm:$0xff]
        %v673 = vld [vmem:[#allocation2 + $0x10] sm:$0xff]
        %v674 = vld [vmem:[#allocation2 + $0x18] sm:$0xff]
        %v675 = vld [vmem:[#allocation2 + $0x20] sm:$0xff]
        %v676 = vld [vmem:[#allocation2 + $0x28] sm:$0xff]
        %v677 = vld [vmem:[#allocation2 + $0x30] sm:$0xff]
        %v678 = vld [vmem:[#allocation2 + $0x38] sm:$0xff]
        %v679 = vld [vmem:[#allocation2 + $0x40] sm:$0xff]
        %v680 = vld [vmem:[#allocation2 + $0x48] sm:$0xff]
        %v681 = vld [vmem:[#allocation2 + $0x50] sm:$0xff]
        %v682 = vld [vmem:[#allocation2 + $0x58] sm:$0xff]
        %v683 = vld [vmem:[#allocation2 + $0x60] sm:$0xff]
        %v684 = vld [vmem:[#allocation2 + $0x68] sm:$0xff]
        %v685 = vld [vmem:[#allocation2 + $0x70] sm:$0xff]
        %v686 = vld [vmem:[#allocation2 + $0x78] sm:$0xff]
        %v687 = vld [vmem:[#allocation2 + $0x80] sm:$0xff]
        %v688 = vld [vmem:[#allocation2 + $0x88] sm:$0xff]
        %v689 = vld [vmem:[#allocation2 + $0x90] sm:$0xff]
        %v690 = vld [vmem:[#allocation2 + $0x98] sm:$0xff]
        %v691 = vld [vmem:[#allocation2 + $0xa0] sm:$0xff]
        %v692 = vld [vmem:[#allocation2 + $0xa8] sm:$0xff]
        %v693 = vld [vmem:[#allocation2 + $0xb0] sm:$0xff]
        %v694 = vld [vmem:[#allocation2 + $0xb8] sm:$0xff]
        %v695 = vld [vmem:[#allocation2 + $0xc0] sm:$0xff]
        %v696 = vld [vmem:[#allocation2 + $0xc8] sm:$0xff]
        %v697 = vld [vmem:[#allocation2 + $0xd0] sm:$0xff]
        %v698 = vld [vmem:[#allocation2 + $0xd8] sm:$0xff]
        %v699 = vld [vmem:[#allocation2 + $0xe0] sm:$0xff]
        %v700 = vld [vmem:[#allocation2 + $0xe8] sm:$0xff]
        %v701 = vld [vmem:[#allocation2 + $0xf0] sm:$0xff]
        %v702 = vld [vmem:[#allocation2 + $0xf8] sm:$0xff]
        %v703 = vld [vmem:[%s249] sm:$0x1]
        %v705 = vperm.slane %v703, 0
        %v707 = vadd.f32 %v671, %v705
        %v708 = vadd.f32 %v672, %v705
        %v709 = vadd.f32 %v673, %v705
        %v710 = vadd.f32 %v674, %v705
        %v711 = vadd.f32 %v675, %v705
        %v712 = vadd.f32 %v676, %v705
        %v713 = vadd.f32 %v677, %v705
        %v714 = vadd.f32 %v678, %v705
        %v715 = vadd.f32 %v679, %v705
        %v716 = vadd.f32 %v680, %v705
        %v717 = vadd.f32 %v681, %v705
        %v718 = vadd.f32 %v682, %v705
        %v719 = vadd.f32 %v683, %v705
        %v720 = vadd.f32 %v684, %v705
        %v721 = vadd.f32 %v685, %v705
        %v722 = vadd.f32 %v686, %v705
        %v723 = vadd.f32 %v687, %v705
        %v724 = vadd.f32 %v688, %v705
        %v725 = vadd.f32 %v689, %v705
        %v726 = vadd.f32 %v690, %v705
        %v727 = vadd.f32 %v691, %v705
        %v728 = vadd.f32 %v692, %v705
        %v729 = vadd.f32 %v693, %v705
        %v730 = vadd.f32 %v694, %v705
        %v731 = vadd.f32 %v695, %v705
        %v732 = vadd.f32 %v696, %v705
        %v733 = vadd.f32 %v697, %v705
        %v734 = vadd.f32 %v698, %v705
        %v735 = vadd.f32 %v699, %v705
        %v736 = vadd.f32 %v700, %v705
        %v737 = vadd.f32 %v701, %v705
        %v738 = vadd.f32 %v702, %v705
        %vm739 = vcmp.ge.f32.partialorder %v707, 0.0
        %vm740 = vcmp.ge.f32.partialorder %v708, 0.0
        %vm741 = vcmp.ge.f32.partialorder %v709, 0.0
        %vm742 = vcmp.ge.f32.partialorder %v710, 0.0
        %vm743 = vcmp.ge.f32.partialorder %v711, 0.0
        %vm744 = vcmp.ge.f32.partialorder %v712, 0.0
        %vm745 = vcmp.ge.f32.partialorder %v713, 0.0
        %vm746 = vcmp.ge.f32.partialorder %v714, 0.0
        %vm747 = vcmp.ge.f32.partialorder %v715, 0.0
        %vm748 = vcmp.ge.f32.partialorder %v716, 0.0
        %vm749 = vcmp.ge.f32.partialorder %v717, 0.0
        %vm750 = vcmp.ge.f32.partialorder %v718, 0.0
        %vm751 = vcmp.ge.f32.partialorder %v719, 0.0
        %vm752 = vcmp.ge.f32.partialorder %v720, 0.0
        %vm753 = vcmp.ge.f32.partialorder %v721, 0.0
        %vm754 = vcmp.ge.f32.partialorder %v722, 0.0
        %vm755 = vcmp.ge.f32.partialorder %v723, 0.0
        %vm756 = vcmp.ge.f32.partialorder %v724, 0.0
        %vm757 = vcmp.ge.f32.partialorder %v725, 0.0
        %vm758 = vcmp.ge.f32.partialorder %v726, 0.0
        %vm759 = vcmp.ge.f32.partialorder %v727, 0.0
        %vm760 = vcmp.ge.f32.partialorder %v728, 0.0
        %vm761 = vcmp.ge.f32.partialorder %v729, 0.0
        %vm762 = vcmp.ge.f32.partialorder %v730, 0.0
        %vm763 = vcmp.ge.f32.partialorder %v731, 0.0
        %vm764 = vcmp.ge.f32.partialorder %v732, 0.0
        %vm765 = vcmp.ge.f32.partialorder %v733, 0.0
        %vm766 = vcmp.ge.f32.partialorder %v734, 0.0
        %vm767 = vcmp.ge.f32.partialorder %v735, 0.0
        %vm768 = vcmp.ge.f32.partialorder %v736, 0.0
        %vm769 = vcmp.ge.f32.partialorder %v737, 0.0
        %vm770 = vcmp.ge.f32.partialorder %v738, 0.0
        %v771 = vmul.f32 %v707, 0.2
        %v772 = vmul.f32 %v708, 0.2
        %v773 = vmul.f32 %v709, 0.2
        %v774 = vmul.f32 %v710, 0.2
        %v775 = vmul.f32 %v711, 0.2
        %v776 = vmul.f32 %v712, 0.2
        %v777 = vmul.f32 %v713, 0.2
        %v778 = vmul.f32 %v714, 0.2
        %v779 = vmul.f32 %v715, 0.2
        %v780 = vmul.f32 %v716, 0.2
        %v781 = vmul.f32 %v717, 0.2
        %v782 = vmul.f32 %v718, 0.2
        %v783 = vmul.f32 %v719, 0.2
        %v784 = vmul.f32 %v720, 0.2
        %v785 = vmul.f32 %v721, 0.2
        %v786 = vmul.f32 %v722, 0.2
        %v787 = vmul.f32 %v723, 0.2
        %v788 = vmul.f32 %v724, 0.2
        %v789 = vmul.f32 %v725, 0.2
        %v790 = vmul.f32 %v726, 0.2
        %v791 = vmul.f32 %v727, 0.2
        %v792 = vmul.f32 %v728, 0.2
        %v793 = vmul.f32 %v729, 0.2
        %v794 = vmul.f32 %v730, 0.2
        %v795 = vmul.f32 %v731, 0.2
        %v796 = vmul.f32 %v732, 0.2
        %v797 = vmul.f32 %v733, 0.2
        %v798 = vmul.f32 %v734, 0.2
        %v799 = vmul.f32 %v735, 0.2
        %v800 = vmul.f32 %v736, 0.2
        %v801 = vmul.f32 %v737, 0.2
        %v802 = vmul.f32 %v738, 0.2
        %v803 = vsel %vm739, %v707, %v771
        %v804 = vsel %vm740, %v708, %v772
        %v805 = vsel %vm741, %v709, %v773
        %v806 = vsel %vm742, %v710, %v774
        %v807 = vsel %vm743, %v711, %v775
        %v808 = vsel %vm744, %v712, %v776
        %v809 = vsel %vm745, %v713, %v777
        %v810 = vsel %vm746, %v714, %v778
        %v811 = vsel %vm747, %v715, %v779
        %v812 = vsel %vm748, %v716, %v780
        %v813 = vsel %vm749, %v717, %v781
        %v814 = vsel %vm750, %v718, %v782
        %v815 = vsel %vm751, %v719, %v783
        %v816 = vsel %vm752, %v720, %v784
        %v817 = vsel %vm753, %v721, %v785
        %v818 = vsel %vm754, %v722, %v786
        %v819 = vsel %vm755, %v723, %v787
        %v820 = vsel %vm756, %v724, %v788
        %v821 = vsel %vm757, %v725, %v789
        %v822 = vsel %vm758, %v726, %v790
        %v823 = vsel %vm759, %v727, %v791
        %v824 = vsel %vm760, %v728, %v792
        %v825 = vsel %vm761, %v729, %v793
        %v826 = vsel %vm762, %v730, %v794
        %v827 = vsel %vm763, %v731, %v795
        %v828 = vsel %vm764, %v732, %v796
        %v829 = vsel %vm765, %v733, %v797
        %v830 = vsel %vm766, %v734, %v798
        %v831 = vsel %vm767, %v735, %v799
        %v832 = vsel %vm768, %v736, %v800
        %v833 = vsel %vm769, %v737, %v801
        %v834 = vsel %vm770, %v738, %v802
        %v835 = vpack.c.bf16 %v803, %v803
        %v836 = vpack.c.bf16 %v804, %v804
        %v837 = vpack.c.bf16 %v805, %v805
        %v838 = vpack.c.bf16 %v806, %v806
        %v839 = vpack.c.bf16 %v807, %v807
        %v840 = vpack.c.bf16 %v808, %v808
        %v841 = vpack.c.bf16 %v809, %v809
        %v842 = vpack.c.bf16 %v810, %v810
        %v843 = vpack.c.bf16 %v811, %v811
        %v844 = vpack.c.bf16 %v812, %v812
        %v845 = vpack.c.bf16 %v813, %v813
        %v846 = vpack.c.bf16 %v814, %v814
        %v847 = vpack.c.bf16 %v815, %v815
        %v848 = vpack.c.bf16 %v816, %v816
        %v849 = vpack.c.bf16 %v817, %v817
        %v850 = vpack.c.bf16 %v818, %v818
        %v851 = vpack.c.bf16 %v819, %v819
        %v852 = vpack.c.bf16 %v820, %v820
        %v853 = vpack.c.bf16 %v821, %v821
        %v854 = vpack.c.bf16 %v822, %v822
        %v855 = vpack.c.bf16 %v823, %v823
        %v856 = vpack.c.bf16 %v824, %v824
        %v857 = vpack.c.bf16 %v825, %v825
        %v858 = vpack.c.bf16 %v826, %v826
        %v859 = vpack.c.bf16 %v827, %v827
        %v860 = vpack.c.bf16 %v828, %v828
        %v861 = vpack.c.bf16 %v829, %v829
        %v862 = vpack.c.bf16 %v830, %v830
        %v863 = vpack.c.bf16 %v831, %v831
        %v864 = vpack.c.bf16 %v832, %v832
        %v865 = vpack.c.bf16 %v833, %v833
        %v866 = vpack.c.bf16 %v834, %v834
        %vm867 = vcmask 519168
        %868 = vst.msk [vmem:[%s257] sm:$0xf] %vm867, %v835
        %869 = vst.msk [vmem:[%s257 + $0x4] sm:$0xf] %vm867, %v836
        %870 = vst.msk [vmem:[%s257 + $0x8] sm:$0xf] %vm867, %v837
        %871 = vst.msk [vmem:[%s257 + $0xc] sm:$0xf] %vm867, %v838
        %872 = vst.msk [vmem:[%s257 + $0x10] sm:$0xf] %vm867, %v839
        %873 = vst.msk [vmem:[%s257 + $0x14] sm:$0xf] %vm867, %v840
        %874 = vst.msk [vmem:[%s257 + $0x18] sm:$0xf] %vm867, %v841
        %875 = vst.msk [vmem:[%s257 + $0x1c] sm:$0xf] %vm867, %v842
        %876 = vst.msk [vmem:[%s257 + $0x20] sm:$0xf] %vm867, %v843
        %877 = vst.msk [vmem:[%s257 + $0x24] sm:$0xf] %vm867, %v844
        %878 = vst.msk [vmem:[%s257 + $0x28] sm:$0xf] %vm867, %v845
        %879 = vst.msk [vmem:[%s257 + $0x2c] sm:$0xf] %vm867, %v846
        %880 = vst.msk [vmem:[%s257 + $0x30] sm:$0xf] %vm867, %v847
        %881 = vst.msk [vmem:[%s257 + $0x34] sm:$0xf] %vm867, %v848
        %882 = vst.msk [vmem:[%s257 + $0x38] sm:$0xf] %vm867, %v849
        %883 = vst.msk [vmem:[%s257 + $0x3c] sm:$0xf] %vm867, %v850
        %884 = vst.msk [vmem:[%s257 + $0x40] sm:$0xf] %vm867, %v851
        %885 = vst.msk [vmem:[%s257 + $0x44] sm:$0xf] %vm867, %v852
        %886 = vst.msk [vmem:[%s257 + $0x48] sm:$0xf] %vm867, %v853
        %887 = vst.msk [vmem:[%s257 + $0x4c] sm:$0xf] %vm867, %v854
        %888 = vst.msk [vmem:[%s257 + $0x50] sm:$0xf] %vm867, %v855
        %889 = vst.msk [vmem:[%s257 + $0x54] sm:$0xf] %vm867, %v856
        %890 = vst.msk [vmem:[%s257 + $0x58] sm:$0xf] %vm867, %v857
        %891 = vst.msk [vmem:[%s257 + $0x5c] sm:$0xf] %vm867, %v858
        %892 = vst.msk [vmem:[%s257 + $0x60] sm:$0xf] %vm867, %v859
        %893 = vst.msk [vmem:[%s257 + $0x64] sm:$0xf] %vm867, %v860
        %894 = vst.msk [vmem:[%s257 + $0x68] sm:$0xf] %vm867, %v861
        %895 = vst.msk [vmem:[%s257 + $0x6c] sm:$0xf] %vm867, %v862
        %896 = vst.msk [vmem:[%s257 + $0x70] sm:$0xf] %vm867, %v863
        %897 = vst.msk [vmem:[%s257 + $0x74] sm:$0xf] %vm867, %v864
        %898 = vst.msk [vmem:[%s257 + $0x78] sm:$0xf] %vm867, %v865
        %899 = vst.msk [vmem:[%s257 + $0x7c] sm:$0xf] %vm867, %v866
      $region40: #{discriminator_forward.5} parent=31 // pred_fallthru
        _
      %s900 = smul.u32 32, %s19
      %p901 = scmp.lt.s32.totalorder %s900, 575
      %s902 = scalar_select %p901, %s900, 575
      %p903 = scmp.lt.s32.totalorder %s20, 0
      %s904 = scalar_select %p903, %s20, 0
      %s905 = sadd.s32 %s904, %s902
      %s906 = smul.addr %s905, 4
      %s907 = scalar_lea.vmem %s3, %s906
      // Predicated region
      $region41: #{discriminator_forward.5} parent=31 // pred_check
        %p908 = pneg %p135
      $region42: #{discriminator_forward.5} parent=31 // pred_check_branch
        %910 = sbr.rel (%p908) target = $region44
      $region43: #{discriminator_forward.5} parent=31 // pred_region
        %s911 = smul.u32 32, %s19
      $region44: #{discriminator_forward.5} parent=31 // pred_fallthru
        _
    $region32: #{discriminator_forward.5} parent=5 // pred_fallthru
      _
    %p912 = scmp.le.s32.totalorder 2, %s9
    // Predicated region
    $region45: #{discriminator_forward.5} parent=5 // pred_check
      %p913 = pneg %p912
    $region46: #{discriminator_forward.5} parent=5 // pred_check_branch
      %915 = sbr.rel (%p913) target = $region48
    $region47: #{discriminator_forward.5} parent=5 // pred_region
      %s916 = ssub.s32 %s9, 2
      // Predicated region
      $region49: #{discriminator_forward.5} parent=47 // pred_check
        %p917 = pneg %p141
      $region50: #{discriminator_forward.5} parent=47 // pred_check_branch
        %919 = sbr.rel (%p917) target = $region52
      $region51: #{discriminator_forward.5} parent=47 // pred_region
        %s920 = smul.u32 32, %s22
        %p921 = scmp.lt.s32.totalorder %s920, 575
        %s922 = scalar_select %p921, %s920, 575
        %p923 = scmp.lt.s32.totalorder %s23, 0
        %s924 = scalar_select %p923, %s23, 0
        %s925 = sadd.s32 %s924, %s922
        %s926 = smul.addr %s925, 4
        %s927 = scalar_lea.vmem %s3, %s926
      $region52: #{discriminator_forward.5} parent=47 // pred_fallthru
        _
    $region48: #{discriminator_forward.5} parent=5 // pred_fallthru
      _
  $region6: #{discriminator_forward.5} parent=0 // loop_footer
    %s13 = sadd.s32 1, %s9
  $region7: #{discriminator_forward.5} parent=0 // loop_footer_branch
    %8 = sbr.rel target = $region3
  $region8: #{discriminator_forward.5} parent=0 // loop_exit
    _

// kernel: discriminator_forward.6
$region0: #{discriminator_forward.6}
  #allocation0 [shape = 'u32[]', space=smem, size = 0x4, offset = 0x4, fixed_abs, tag = 'smem constant byte address 0x4 - core index']
  #allocation1 [shape = 'u32[72,128]{1,0:T(1,128)}', space=vmem, size = 0x9000, scoped, tag = 'internal scratch']
  #allocation2 [shape = 'f32[192,128]{1,0:T(8,128)}', space=vmem, size = 0x18000, scoped, tag = 'scratch operand']
  %s0 = inlined_call_operand.vmem [shape: bf16[1152,1024], index: 0, kind: input, shape index: {}]
  %s1 = inlined_call_operand.vmem [shape: bf16[1024,128], index: 1, kind: input, shape index: {}]
  %s2 = inlined_call_operand.vmem [shape: f32[1,128], index: 2, kind: input, shape index: {}]
  %s3 = inlined_call_operand.vmem [shape: bf16[1152,128], index: 3, kind: output, shape index: {}]
  %s4 = sld [smem:[#allocation0]]
  $region76: #{discriminator_forward.6} parent=0
    _
  %s6 = ssub.s32 1, %s4
  %s7 = scalar_select 0, %s6, %s4
  $region1: #{discriminator_forward.6} parent=0
    #allocation3 [shape = 'u8[393216]{0}', space=vmem, size = 0x60000, scoped, tag = 'input window, operand 0']
    loop: start=0, step=1, limit=14
    $region2: #{discriminator_forward.6} parent=1 // loop_pre_header
      _
    $region3: #{discriminator_forward.6} parent=1 // loop_header
      %s9 = sphi 0, %s13
      %p10 = scmp.ge.s32.totalorder %s9, 14
      %s16 = sphi 0, %s35
      %s17 = sphi 0, %s31
      %s18 = sphi 0, %s27
      %s19 = sphi 0, %s16
      %s20 = sphi 0, %s17
      %s21 = sphi 0, %s18
      %s22 = sphi 0, %s19
      %s23 = sphi 0, %s20
      %s24 = sphi 0, %s21
      %s40 = sphi 0, %s42
      %s43 = sphi 0, %s40
      %s44 = sphi 0, %s43
      %s60 = sphi 0, %s44
      %s68 = sphi 0, %s70
      %s71 = sphi 0, %s68
      %s72 = sphi 0, %s71
      %s88 = sphi 0, %s72
      %s94 = sphi 0, %s96
      %s97 = sphi 0, %s94
      %s98 = sphi 0, %s97
      %s114 = sphi 0, %s98
      %s122 = sphi 0, %s124
      %s125 = sphi 0, %s122
      %s126 = sphi 0, %s125
      %s142 = sphi 0, %s126
    $region4: #{discriminator_forward.6} parent=1 // loop_header_branch
      %12 = sbr.rel (%p10) target = $region8
    $region5: #{discriminator_forward.6} parent=1 // loop_body
      %s14 = ssub.s32 %s9, 1
      %s15 = ssub.s32 %s9, 2
      %s25 = sadd.s32 1, %s18
      %p26 = scmp.ge.s32.totalorder %s25, 2
      %s27 = scalar_select %p26, 0, %s25
      %s28 = sadd.s32 1, %s17
      %s29 = scalar_select %p26, %s28, %s17
      %p30 = scmp.ge.s32.totalorder %s29, 1
      %s31 = scalar_select %p30, 0, %s29
      %s32 = sadd.s32 1, %s16
      %s33 = scalar_select %p30, %s32, %s16
      %p34 = scmp.ge.s32.totalorder %s33, 6
      %s35 = scalar_select %p34, 0, %s33
      %s36 = ssub.s32 %s16, %s35
      %s37 = ssub.s32 %s18, %s27
      %s38 = sor.u32 %s36, %s37
      %p39 = scmp.eq.s32.totalorder %s38, 0
      %s41 = sadd.s32 %s40, 1
      %s42 = scalar_select %p39, %s40, %s41
      %p45 = pneg %p39
      %p46 = scmp.eq.s32.totalorder %s9, 11
      %p47 = por %p45, %p46
      %p48 = scmp.ne.s32.totalorder %s40, %s43
      %p49 = scmp.eq.s32.totalorder %s9, 0
      %p50 = por %p48, %p49
      %p51 = scmp.ne.s32.totalorder %s40, %s43
      %p52 = scmp.eq.s32.totalorder %s14, 11
      %p53 = por %p51, %p52
      %p54 = scmp.ne.s32.totalorder %s43, %s44
      %p55 = scmp.eq.s32.totalorder %s14, 0
      %p56 = por %p54, %p55
      %p57 = scmp.ne.s32.totalorder %s43, %s44
      %p58 = scmp.eq.s32.totalorder %s15, 11
      %p59 = por %p57, %p58
      %p61 = scmp.ne.s32.totalorder %s44, %s60
      %p62 = scmp.eq.s32.totalorder %s15, 0
      %p63 = por %p61, %p62
      %s64 = ssub.s32 %s18, %s27
      %s65 = ssub.s32 %s17, %s31
      %s66 = sor.u32 %s64, %s65
      %p67 = scmp.eq.s32.totalorder %s66, 0
      %s69 = sadd.s32 %s68, 1
      %s70 = scalar_select %p67, %s68, %s69
      %p73 = pneg %p67
      %p74 = scmp.eq.s32.totalorder %s9, 11
      %p75 = por %p73, %p74
      %p76 = scmp.ne.s32.totalorder %s68, %s71
      %p77 = scmp.eq.s32.totalorder %s9, 0
      %p78 = por %p76, %p77
      %p79 = scmp.ne.s32.totalorder %s68, %s71
      %p80 = scmp.eq.s32.totalorder %s14, 11
      %p81 = por %p79, %p80
      %p82 = scmp.ne.s32.totalorder %s71, %s72
      %p83 = scmp.eq.s32.totalorder %s14, 0
      %p84 = por %p82, %p83
      %p85 = scmp.ne.s32.totalorder %s71, %s72
      %p86 = scmp.eq.s32.totalorder %s15, 11
      %p87 = por %p85, %p86
      %p89 = scmp.ne.s32.totalorder %s72, %s88
      %p90 = scmp.eq.s32.totalorder %s15, 0
      %p91 = por %p89, %p90
      %s92 = ssub.s32 %s17, %s31
      %p93 = scmp.eq.s32.totalorder %s92, 0
      %s95 = sadd.s32 %s94, 1
      %s96 = scalar_select %p93, %s94, %s95
      %p99 = pneg %p93
      %p100 = scmp.eq.s32.totalorder %s9, 11
      %p101 = por %p99, %p100
      %p102 = scmp.ne.s32.totalorder %s94, %s97
      %p103 = scmp.eq.s32.totalorder %s9, 0
      %p104 = por %p102, %p103
      %p105 = scmp.ne.s32.totalorder %s94, %s97
      %p106 = scmp.eq.s32.totalorder %s14, 11
      %p107 = por %p105, %p106
      %p108 = scmp.ne.s32.totalorder %s97, %s98
      %p109 = scmp.eq.s32.totalorder %s14, 0
      %p110 = por %p108, %p109
      %p111 = scmp.ne.s32.totalorder %s97, %s98
      %p112 = scmp.eq.s32.totalorder %s15, 11
      %p113 = por %p111, %p112
      %p115 = scmp.ne.s32.totalorder %s98, %s114
      %p116 = scmp.eq.s32.totalorder %s15, 0
      %p117 = por %p115, %p116
      %s118 = ssub.s32 %s16, %s35
      %s119 = ssub.s32 %s17, %s31
      %s120 = sor.u32 %s118, %s119
      %p121 = scmp.eq.s32.totalorder %s120, 0
      %s123 = sadd.s32 %s122, 1
      %s124 = scalar_select %p121, %s122, %s123
      %p127 = pneg %p121
      %p128 = scmp.eq.s32.totalorder %s9, 11
      %p129 = por %p127, %p128
      %p130 = scmp.ne.s32.totalorder %s122, %s125
      %p131 = scmp.eq.s32.totalorder %s9, 0
      %p132 = por %p130, %p131
      %p133 = scmp.ne.s32.totalorder %s122, %s125
      %p134 = scmp.eq.s32.totalorder %s14, 11
      %p135 = por %p133, %p134
      %p136 = scmp.ne.s32.totalorder %s125, %s126
      %p137 = scmp.eq.s32.totalorder %s14, 0
      %p138 = por %p136, %p137
      %p139 = scmp.ne.s32.totalorder %s125, %s126
      %p140 = scmp.eq.s32.totalorder %s15, 11
      %p141 = por %p139, %p140
      %p143 = scmp.ne.s32.totalorder %s126, %s142
      %p144 = scmp.eq.s32.totalorder %s15, 0
      %p145 = por %p143, %p144
      %p146 = scmp.le.s32.totalorder 1, %s9
      %p147 = scmp.lt.s32.totalorder %s9, 13
      %p148 = pnand %p146, %p147
      %p149 = pneg %p148
      // Predicated region
      $region9: #{discriminator_forward.6} parent=5 // pred_check
        _
      $region10: #{discriminator_forward.6} parent=5 // pred_check_branch
        %151 = sbr.rel (%p148) target = $region12
      $region11: #{discriminator_forward.6} parent=5 // pred_region
        %s152 = ssub.s32 %s9, 1
        // Predicated region
        $region13: #{discriminator_forward.6} parent=11 // pred_check
          %p153 = pneg %p110
        $region14: #{discriminator_forward.6} parent=11 // pred_check_branch
          %155 = sbr.rel (%p153) target = $region16
        $region15: #{discriminator_forward.6} parent=11 // pred_region
          %p156 = scmp.lt.s32.totalorder %s20, 0
          %s157 = scalar_select %p156, %s20, 0
          %s158 = scalar_lea.vmem %s2, %s157
        $region16: #{discriminator_forward.6} parent=11 // pred_fallthru
          _
      $region12: #{discriminator_forward.6} parent=5 // pred_fallthru
        _
      %p159 = scmp.lt.s32.totalorder %s9, 12
      // Predicated region
      $region17: #{discriminator_forward.6} parent=5 // pred_check
        %p160 = pneg %p159
      $region18: #{discriminator_forward.6} parent=5 // pred_check_branch
        %162 = sbr.rel (%p160) target = $region20
      $region19: #{discriminator_forward.6} parent=5 // pred_region
        // Predicated region
        $region21: #{discriminator_forward.6} parent=19 // pred_check
          %p163 = pneg %p50
        $region22: #{discriminator_forward.6} parent=19 // pred_check_branch
          %165 = sbr.rel (%p163) target = $region24
        $region23: #{discriminator_forward.6} parent=19 // pred_region
          %s166 = sand.u32 %s40, 1
          %s167 = sand.u32 %s40, 1
          %s168 = smul.addr %s167, 384
          %s169 = scalar_lea.vmem [#allocation3], %s168
          %s170 = smul.u32 24, %s16
          %s171 = smul.u32 4, %s18
          %s172 = smul.addr %s170, 8
          %s173 = sadd.s32 %s171, %s172
          %s174 = smul.addr %s173, 4
          %s175 = scalar_lea.vmem %s0, %s174
          // Predicated region
          $region25: #{discriminator_forward.6} parent=23 // pred_check
            _
          $region26: #{discriminator_forward.6} parent=23 // pred_check_branch
            %177 = sbr.rel (0) target = $region28
          $region27: #{discriminator_forward.6} parent=23 // pred_region
            // Predicated region
            $region29: #{discriminator_forward.6} parent=27 // pred_check
              _
            $region30: #{discriminator_forward.6} parent=27 // pred_check_branch
              %179 = sbr.rel (0) target = $region32
            $region31: #{discriminator_forward.6} parent=27 // pred_region
              loop: start=0, step=1, limit=1
              $region33: #{discriminator_forward.6} parent=31 // loop_pre_header
                _
              $region34: #{discriminator_forward.6} parent=31 // loop_header
                %s181 = sphi 0, %s185
                %p182 = scmp.ge.s32.totalorder %s181, 1
                %s186 = sphi %s175, %s175
                %s187 = sphi %s169, %s169
              $region35: #{discriminator_forward.6} parent=31 // loop_header_branch
                %184 = sbr.rel (%p182) target = $region39
              $region36: #{discriminator_forward.6} parent=31 // loop_body
                %v188 = vld [vmem:[%s186] sm:$0xff]
                %189 = vst [vmem:[%s187] sm:$0xff] %v188
                %v190 = vld [vmem:[%s186 + $0x8] sm:$0xff]
                %191 = vst [vmem:[%s187 + $0x8] sm:$0xff] %v190
                %v192 = vld [vmem:[%s186 + $0x20] sm:$0xff]
                %193 = vst [vmem:[%s187 + $0x10] sm:$0xff] %v192
                %v194 = vld [vmem:[%s186 + $0x28] sm:$0xff]
                %195 = vst [vmem:[%s187 + $0x18] sm:$0xff] %v194
                %v196 = vld [vmem:[%s186 + $0x40] sm:$0xff]
                %197 = vst [vmem:[%s187 + $0x20] sm:$0xff] %v196
                %v198 = vld [vmem:[%s186 + $0x48] sm:$0xff]
                %199 = vst [vmem:[%s187 + $0x28] sm:$0xff] %v198
                %v200 = vld [vmem:[%s186 + $0x60] sm:$0xff]
                %201 = vst [vmem:[%s187 + $0x30] sm:$0xff] %v200
                %v202 = vld [vmem:[%s186 + $0x68] sm:$0xff]
                %203 = vst [vmem:[%s187 + $0x38] sm:$0xff] %v202
                %v204 = vld [vmem:[%s186 + $0x80] sm:$0xff]
                %205 = vst [vmem:[%s187 + $0x40] sm:$0xff] %v204
                %v206 = vld [vmem:[%s186 + $0x88] sm:$0xff]
                %207 = vst [vmem:[%s187 + $0x48] sm:$0xff] %v206
                %v208 = vld [vmem:[%s186 + $0xa0] sm:$0xff]
                %209 = vst [vmem:[%s187 + $0x50] sm:$0xff] %v208
                %v210 = vld [vmem:[%s186 + $0xa8] sm:$0xff]
                %211 = vst [vmem:[%s187 + $0x58] sm:$0xff] %v210
                %v212 = vld [vmem:[%s186 + $0xc0] sm:$0xff]
                %213 = vst [vmem:[%s187 + $0x60] sm:$0xff] %v212
                %v214 = vld [vmem:[%s186 + $0xc8] sm:$0xff]
                %215 = vst [vmem:[%s187 + $0x68] sm:$0xff] %v214
                %v216 = vld [vmem:[%s186 + $0xe0] sm:$0xff]
                %217 = vst [vmem:[%s187 + $0x70] sm:$0xff] %v216
                %v218 = vld [vmem:[%s186 + $0xe8] sm:$0xff]
                %219 = vst [vmem:[%s187 + $0x78] sm:$0xff] %v218
                %v220 = vld [vmem:[%s186 + $0x100] sm:$0xff]
                %221 = vst [vmem:[%s187 + $0x80] sm:$0xff] %v220
                %v222 = vld [vmem:[%s186 + $0x108] sm:$0xff]
                %223 = vst [vmem:[%s187 + $0x88] sm:$0xff] %v222
                %v224 = vld [vmem:[%s186 + $0x120] sm:$0xff]
                %225 = vst [vmem:[%s187 + $0x90] sm:$0xff] %v224
                %v226 = vld [vmem:[%s186 + $0x128] sm:$0xff]
                %227 = vst [vmem:[%s187 + $0x98] sm:$0xff] %v226
                %v228 = vld [vmem:[%s186 + $0x140] sm:$0xff]
                %229 = vst [vmem:[%s187 + $0xa0] sm:$0xff] %v228
                %v230 = vld [vmem:[%s186 + $0x148] sm:$0xff]
                %231 = vst [vmem:[%s187 + $0xa8] sm:$0xff] %v230
                %v232 = vld [vmem:[%s186 + $0x160] sm:$0xff]
                %233 = vst [vmem:[%s187 + $0xb0] sm:$0xff] %v232
                %v234 = vld [vmem:[%s186 + $0x168] sm:$0xff]
                %235 = vst [vmem:[%s187 + $0xb8] sm:$0xff] %v234
                %v236 = vld [vmem:[%s186 + $0x180] sm:$0xff]
                %237 = vst [vmem:[%s187 + $0xc0] sm:$0xff] %v236
                %v238 = vld [vmem:[%s186 + $0x188] sm:$0xff]
                %239 = vst [vmem:[%s187 + $0xc8] sm:$0xff] %v238
                %v240 = vld [vmem:[%s186 + $0x1a0] sm:$0xff]
                %241 = vst [vmem:[%s187 + $0xd0] sm:$0xff] %v240
                %v242 = vld [vmem:[%s186 + $0x1a8] sm:$0xff]
                %243 = vst [vmem:[%s187 + $0xd8] sm:$0xff] %v242
                %v244 = vld [vmem:[%s186 + $0x1c0] sm:$0xff]
                %245 = vst [vmem:[%s187 + $0xe0] sm:$0xff] %v244
                %v246 = vld [vmem:[%s186 + $0x1c8] sm:$0xff]
                %247 = vst [vmem:[%s187 + $0xe8] sm:$0xff] %v246
                %v248 = vld [vmem:[%s186 + $0x1e0] sm:$0xff]
                %249 = vst [vmem:[%s187 + $0xf0] sm:$0xff] %v248
                %v250 = vld [vmem:[%s186 + $0x1e8] sm:$0xff]
                %251 = vst [vmem:[%s187 + $0xf8] sm:$0xff] %v250
                %v252 = vld [vmem:[%s186 + $0x200] sm:$0xff]
                %253 = vst [vmem:[%s187 + $0x100] sm:$0xff] %v252
                %v254 = vld [vmem:[%s186 + $0x208] sm:$0xff]
                %255 = vst [vmem:[%s187 + $0x108] sm:$0xff] %v254
                %v256 = vld [vmem:[%s186 + $0x220] sm:$0xff]
                %257 = vst [vmem:[%s187 + $0x110] sm:$0xff] %v256
                %v258 = vld [vmem:[%s186 + $0x228] sm:$0xff]
                %259 = vst [vmem:[%s187 + $0x118] sm:$0xff] %v258
                %v260 = vld [vmem:[%s186 + $0x240] sm:$0xff]
                %261 = vst [vmem:[%s187 + $0x120] sm:$0xff] %v260
                %v262 = vld [vmem:[%s186 + $0x248] sm:$0xff]
                %263 = vst [vmem:[%s187 + $0x128] sm:$0xff] %v262
                %v264 = vld [vmem:[%s186 + $0x260] sm:$0xff]
                %265 = vst [vmem:[%s187 + $0x130] sm:$0xff] %v264
                %v266 = vld [vmem:[%s186 + $0x268] sm:$0xff]
                %267 = vst [vmem:[%s187 + $0x138] sm:$0xff] %v266
                %v268 = vld [vmem:[%s186 + $0x280] sm:$0xff]
                %269 = vst [vmem:[%s187 + $0x140] sm:$0xff] %v268
                %v270 = vld [vmem:[%s186 + $0x288] sm:$0xff]
                %271 = vst [vmem:[%s187 + $0x148] sm:$0xff] %v270
                %v272 = vld [vmem:[%s186 + $0x2a0] sm:$0xff]
                %273 = vst [vmem:[%s187 + $0x150] sm:$0xff] %v272
                %v274 = vld [vmem:[%s186 + $0x2a8] sm:$0xff]
                %275 = vst [vmem:[%s187 + $0x158] sm:$0xff] %v274
                %v276 = vld [vmem:[%s186 + $0x2c0] sm:$0xff]
                %277 = vst [vmem:[%s187 + $0x160] sm:$0xff] %v276
                %v278 = vld [vmem:[%s186 + $0x2c8] sm:$0xff]
                %279 = vst [vmem:[%s187 + $0x168] sm:$0xff] %v278
                %v280 = vld [vmem:[%s186 + $0x2e0] sm:$0xff]
                %281 = vst [vmem:[%s187 + $0x170] sm:$0xff] %v280
                %v282 = vld [vmem:[%s186 + $0x2e8] sm:$0xff]
                %283 = vst [vmem:[%s187 + $0x178] sm:$0xff] %v282
              $region37: #{discriminator_forward.6} parent=31 // loop_footer
                %s185 = sadd.s32 1, %s181
              $region38: #{discriminator_forward.6} parent=31 // loop_footer_branch
                %180 = sbr.rel target = $region34
              $region39: #{discriminator_forward.6} parent=31 // loop_exit
                _
            $region32: #{discriminator_forward.6} parent=27 // pred_fallthru
              _
            // Predicated region
            $region40: #{discriminator_forward.6} parent=27 // pred_check
              _
            $region41: #{discriminator_forward.6} parent=27 // pred_check_branch
              %285 = sbr.rel target = $region43
            $region42: #{discriminator_forward.6} parent=27 // pred_region
              _
            $region43: #{discriminator_forward.6} parent=27 // pred_fallthru
              _
          $region28: #{discriminator_forward.6} parent=23 // pred_fallthru
            _
          %286 = vnop
        $region24: #{discriminator_forward.6} parent=19 // pred_fallthru
          _
        // Predicated region
        $region44: #{discriminator_forward.6} parent=19 // pred_check
          %p287 = pneg %p78
        $region45: #{discriminator_forward.6} parent=19 // pred_check_branch
          %289 = sbr.rel (%p287) target = $region47
        $region46: #{discriminator_forward.6} parent=19 // pred_region
          %s290 = smul.u32 64, %s18
          %p291 = scmp.lt.s32.totalorder %s290, 127
          %s292 = scalar_select %p291, %s290, 127
          %p293 = scmp.lt.s32.totalorder %s17, 0
          %s294 = scalar_select %p293, %s17, 0
          %s295 = sadd.s32 %s294, %s292
          %s296 = smul.addr %s295, 4
          %s297 = scalar_lea.vmem %s1, %s296
          %s298 = smul.u32 64, %s18
        $region47: #{discriminator_forward.6} parent=19 // pred_fallthru
          _
      $region20: #{discriminator_forward.6} parent=5 // pred_fallthru
        _
      %p299 = scmp.le.s32.totalorder 1, %s9
      %p300 = scmp.lt.s32.totalorder %s9, 13
      %p301 = pnand %p299, %p300
      %p302 = pneg %p301
      // Predicated region
      $region48: #{discriminator_forward.6} parent=5 // pred_check
        _
      $region49: #{discriminator_forward.6} parent=5 // pred_check_branch
        %304 = sbr.rel (%p301) target = $region51
      $region50: #{discriminator_forward.6} parent=5 // pred_region
        %s305 = ssub.s32 %s9, 1
        %s306 = sand.u32 %s43, 1
        %s307 = sand.u32 %s43, 1
        %s308 = smul.addr %s307, 384
        %s309 = scalar_lea.vmem [#allocation3], %s308
        // Predicated region
        $region52: #{discriminator_forward.6} parent=50 // pred_check
          %p310 = pneg %p56
        $region53: #{discriminator_forward.6} parent=50 // pred_check_branch
          %312 = sbr.rel (%p310) target = $region55
        $region54: #{discriminator_forward.6} parent=50 // pred_region
          _
        $region55: #{discriminator_forward.6} parent=50 // pred_fallthru
          _
        %s313 = sand.u32 %s43, 1
        %s314 = sand.u32 %s43, 1
        %s315 = smul.addr %s314, 384
        %s316 = scalar_lea.vmem [#allocation3], %s315
        %p317 = pneg %p56
        %p318 = pneg %p53
        %s319 = smul.u32 64, %s21
        %p320 = scmp.lt.s32.totalorder %s319, 127
        %s321 = scalar_select %p320, %s319, 127
        %p322 = scmp.lt.s32.totalorder %s20, 0
        %s323 = scalar_select %p322, %s20, 0
        %s324 = sadd.s32 %s323, %s321
        %s325 = smul.addr %s324, 4
        %s326 = scalar_lea.vmem %s1, %s325
        %p327 = pneg %p84
        %p328 = pneg %p81
        %p329 = scmp.lt.s32.totalorder %s20, 0
        %s330 = scalar_select %p329, %s20, 0
        %s331 = scalar_lea.vmem %s2, %s330
        %p332 = pneg %p110
        %p333 = pneg %p107
        %p334 = pneg %p138
        %p335 = pneg %p135
        %s336 = smul.u32 24, %s19
        %p337 = scmp.lt.s32.totalorder %s336, 143
        %s338 = scalar_select %p337, %s336, 143
        %p339 = scmp.lt.s32.totalorder %s20, 0
        %s340 = scalar_select %p339, %s20, 0
        %s341 = sadd.s32 %s340, %s338
        %s342 = smul.addr %s341, 4
        %s343 = scalar_lea.vmem %s3, %s342
        %s344 = smul.u32 24, %s19
        %s345 = smul.u32 4, %s21
        %s346 = smul.u32 64, %s21
        %p347 = scmp.lt.s32.totalorder %s346, 127
        %s348 = scalar_select %p347, %s346, 127
        %p349 = scmp.lt.s32.totalorder %s20, 0
        %s350 = scalar_select %p349, %s20, 0
        %s351 = sadd.s32 %s350, %s348
        %s352 = smul.addr %s351, 4
        %s353 = scalar_lea.vmem %s1, %s352
        %s354 = smul.u32 64, %s21
        %p355 = scmp.lt.s32.totalorder %s20, 0
        %s356 = scalar_select %p355, %s20, 0
        %s357 = scalar_lea.vmem %s2, %s356
        %s358 = smul.u32 24, %s19
        %p359 = scmp.lt.s32.totalorder %s358, 143
        %s360 = scalar_select %p359, %s358, 143
        %p361 = scmp.lt.s32.totalorder %s20, 0
        %s362 = scalar_select %p361, %s20, 0
        %s363 = sadd.s32 %s362, %s360
        %s364 = smul.addr %s363, 4
        %s365 = scalar_lea.vmem %s3, %s364
        %s366 = smul.u32 24, %s19
        %p367 = scmp.eq.s32.totalorder %s21, 0
        // Predicated region
        $region56: #{discriminator_forward.6} parent=50 // pred_check
          %p368 = pneg %p367
        $region57: #{discriminator_forward.6} parent=50 // pred_check_branch
          %370 = sbr.rel (%p368) target = $region59
        $region58: #{discriminator_forward.6} parent=50 // pred_region
          %371 = vst [vmem:[#allocation2] sm:$0xff] 0.0
          %372 = vst [vmem:[#allocation2 + $0x8] sm:$0xff] 0.0
          %373 = vst [vmem:[#allocation2 + $0x10] sm:$0xff] 0.0
          %374 = vst [vmem:[#allocation2 + $0x18] sm:$0xff] 0.0
          %375 = vst [vmem:[#allocation2 + $0x20] sm:$0xff] 0.0
          %376 = vst [vmem:[#allocation2 + $0x28] sm:$0xff] 0.0
          %377 = vst [vmem:[#allocation2 + $0x30] sm:$0xff] 0.0
          %378 = vst [vmem:[#allocation2 + $0x38] sm:$0xff] 0.0
          %379 = vst [vmem:[#allocation2 + $0x40] sm:$0xff] 0.0
          %380 = vst [vmem:[#allocation2 + $0x48] sm:$0xff] 0.0
          %381 = vst [vmem:[#allocation2 + $0x50] sm:$0xff] 0.0
          %382 = vst [vmem:[#allocation2 + $0x58] sm:$0xff] 0.0
          %383 = vst [vmem:[#allocation2 + $0x60] sm:$0xff] 0.0
          %384 = vst [vmem:[#allocation2 + $0x68] sm:$0xff] 0.0
          %385 = vst [vmem:[#allocation2 + $0x70] sm:$0xff] 0.0
          %386 = vst [vmem:[#allocation2 + $0x78] sm:$0xff] 0.0
          %387 = vst [vmem:[#allocation2 + $0x80] sm:$0xff] 0.0
          %388 = vst [vmem:[#allocation2 + $0x88] sm:$0xff] 0.0
          %389 = vst [vmem:[#allocation2 + $0x90] sm:$0xff] 0.0
          %390 = vst [vmem:[#allocation2 + $0x98] sm:$0xff] 0.0
          %391 = vst [vmem:[#allocation2 + $0xa0] sm:$0xff] 0.0
          %392 = vst [vmem:[#allocation2 + $0xa8] sm:$0xff] 0.0
          %393 = vst [vmem:[#allocation2 + $0xb0] sm:$0xff] 0.0
          %394 = vst [vmem:[#allocation2 + $0xb8] sm:$0xff] 0.0
        $region59: #{discriminator_forward.6} parent=50 // pred_fallthru
          _
        %v395 = vld [vmem:[#allocation2] sm:$0xff]
        %v396 = vld [vmem:[#allocation2 + $0x8] sm:$0xff]
        %v397 = vld [vmem:[#allocation2 + $0x10] sm:$0xff]
        %v398 = vld [vmem:[#allocation2 + $0x18] sm:$0xff]
        %v399 = vld [vmem:[#allocation2 + $0x20] sm:$0xff]
        %v400 = vld [vmem:[#allocation2 + $0x28] sm:$0xff]
        %v401 = vld [vmem:[#allocation2 + $0x30] sm:$0xff]
        %v402 = vld [vmem:[#allocation2 + $0x38] sm:$0xff]
        %v403 = vld [vmem:[#allocation2 + $0x40] sm:$0xff]
        %v404 = vld [vmem:[#allocation2 + $0x48] sm:$0xff]
        %v405 = vld [vmem:[#allocation2 + $0x50] sm:$0xff]
        %v406 = vld [vmem:[#allocation2 + $0x58] sm:$0xff]
        %v407 = vld [vmem:[#allocation2 + $0x60] sm:$0xff]
        %v408 = vld [vmem:[#allocation2 + $0x68] sm:$0xff]
        %v409 = vld [vmem:[#allocation2 + $0x70] sm:$0xff]
        %v410 = vld [vmem:[#allocation2 + $0x78] sm:$0xff]
        %v411 = vld [vmem:[#allocation2 + $0x80] sm:$0xff]
        %v412 = vld [vmem:[#allocation2 + $0x88] sm:$0xff]
        %v413 = vld [vmem:[#allocation2 + $0x90] sm:$0xff]
        %v414 = vld [vmem:[#allocation2 + $0x98] sm:$0xff]
        %v415 = vld [vmem:[#allocation2 + $0xa0] sm:$0xff]
        %v416 = vld [vmem:[#allocation2 + $0xa8] sm:$0xff]
        %v417 = vld [vmem:[#allocation2 + $0xb0] sm:$0xff]
        %v418 = vld [vmem:[#allocation2 + $0xb8] sm:$0xff]
        %v419 = vld [vmem:[%s309] sm:$0xff]
        %v420 = vld [vmem:[%s309 + $0x8] sm:$0xff]
        %v421 = vld [vmem:[%s309 + $0x10] sm:$0xff]
        %v422 = vld [vmem:[%s309 + $0x18] sm:$0xff]
        %v423 = vld [vmem:[%s309 + $0x20] sm:$0xff]
        %v424 = vld [vmem:[%s309 + $0x28] sm:$0xff]
        %v425 = vld [vmem:[%s309 + $0x30] sm:$0xff]
        %v426 = vld [vmem:[%s309 + $0x38] sm:$0xff]
        %v427 = vld [vmem:[%s309 + $0x40] sm:$0xff]
        %v428 = vld [vmem:[%s309 + $0x48] sm:$0xff]
        %v429 = vld [vmem:[%s309 + $0x50] sm:$0xff]
        %v430 = vld [vmem:[%s309 + $0x58] sm:$0xff]
        %v431 = vld [vmem:[%s309 + $0x60] sm:$0xff]
        %v432 = vld [vmem:[%s309 + $0x68] sm:$0xff]
        %v433 = vld [vmem:[%s309 + $0x70] sm:$0xff]
        %v434 = vld [vmem:[%s309 + $0x78] sm:$0xff]
        %v435 = vld [vmem:[%s309 + $0x80] sm:$0xff]
        %v436 = vld [vmem:[%s309 + $0x88] sm:$0xff]
        %v437 = vld [vmem:[%s309 + $0x90] sm:$0xff]
        %v438 = vld [vmem:[%s309 + $0x98] sm:$0xff]
        %v439 = vld [vmem:[%s309 + $0xa0] sm:$0xff]
        %v440 = vld [vmem:[%s309 + $0xa8] sm:$0xff]
        %v441 = vld [vmem:[%s309 + $0xb0] sm:$0xff]
        %v442 = vld [vmem:[%s309 + $0xb8] sm:$0xff]
        %v443 = vld [vmem:[%s309 + $0xc0] sm:$0xff]
        %v444 = vld [vmem:[%s309 + $0xc8] sm:$0xff]
        %v445 = vld [vmem:[%s309 + $0xd0] sm:$0xff]
        %v446 = vld [vmem:[%s309 + $0xd8] sm:$0xff]
        %v447 = vld [vmem:[%s309 + $0xe0] sm:$0xff]
        %v448 = vld [vmem:[%s309 + $0xe8] sm:$0xff]
        %v449 = vld [vmem:[%s309 + $0xf0] sm:$0xff]
        %v450 = vld [vmem:[%s309 + $0xf8] sm:$0xff]
        %v451 = vld [vmem:[%s309 + $0x100] sm:$0xff]
        %v452 = vld [vmem:[%s309 + $0x108] sm:$0xff]
        %v453 = vld [vmem:[%s309 + $0x110] sm:$0xff]
        %v454 = vld [vmem:[%s309 + $0x118] sm:$0xff]
        %v455 = vld [vmem:[%s309 + $0x120] sm:$0xff]
        %v456 = vld [vmem:[%s309 + $0x128] sm:$0xff]
        %v457 = vld [vmem:[%s309 + $0x130] sm:$0xff]
        %v458 = vld [vmem:[%s309 + $0x138] sm:$0xff]
        %v459 = vld [vmem:[%s309 + $0x140] sm:$0xff]
        %v460 = vld [vmem:[%s309 + $0x148] sm:$0xff]
        %v461 = vld [vmem:[%s309 + $0x150] sm:$0xff]
        %v462 = vld [vmem:[%s309 + $0x158] sm:$0xff]
        %v463 = vld [vmem:[%s309 + $0x160] sm:$0xff]
        %v464 = vld [vmem:[%s309 + $0x168] sm:$0xff]
        %v465 = vld [vmem:[%s309 + $0x170] sm:$0xff]
        %v466 = vld [vmem:[%s309 + $0x178] sm:$0xff]
        %v467 = vld [vmem:[%s353] sm:$0xf]
        %v468 = vld [vmem:[%s353 + $0x4] sm:$0xf]
        %v469 = vld [vmem:[%s353 + $0x8] sm:$0xf]
        %v470 = vld [vmem:[%s353 + $0xc] sm:$0xf]
        %v471 = vld [vmem:[%s353 + $0x10] sm:$0xf]
        %v472 = vld [vmem:[%s353 + $0x14] sm:$0xf]
        %v473 = vld [vmem:[%s353 + $0x18] sm:$0xf]
        %v474 = vld [vmem:[%s353 + $0x1c] sm:$0xf]
        %v475 = vld [vmem:[%s353 + $0x20] sm:$0xf]
        %v476 = vld [vmem:[%s353 + $0x24] sm:$0xf]
        %v477 = vld [vmem:[%s353 + $0x28] sm:$0xf]
        %v478 = vld [vmem:[%s353 + $0x2c] sm:$0xf]
        %v479 = vld [vmem:[%s353 + $0x30] sm:$0xf]
        %v480 = vld [vmem:[%s353 + $0x34] sm:$0xf]
        %v481 = vld [vmem:[%s353 + $0x38] sm:$0xf]
        %v482 = vld [vmem:[%s353 + $0x3c] sm:$0xf]
        %v483 = vld [vmem:[%s353 + $0x40] sm:$0xf]
        %v484 = vld [vmem:[%s353 + $0x44] sm:$0xf]
        %v485 = vld [vmem:[%s353 + $0x48] sm:$0xf]
        %v486 = vld [vmem:[%s353 + $0x4c] sm:$0xf]
        %v487 = vld [vmem:[%s353 + $0x50] sm:$0xf]
        %v488 = vld [vmem:[%s353 + $0x54] sm:$0xf]
        %v489 = vld [vmem:[%s353 + $0x58] sm:$0xf]
        %v490 = vld [vmem:[%s353 + $0x5c] sm:$0xf]
        %v491 = vld [vmem:[%s353 + $0x60] sm:$0xf]
        %v492 = vld [vmem:[%s353 + $0x64] sm:$0xf]
        %v493 = vld [vmem:[%s353 + $0x68] sm:$0xf]
        %v494 = vld [vmem:[%s353 + $0x6c] sm:$0xf]
        %v495 = vld [vmem:[%s353 + $0x70] sm:$0xf]
        %v496 = vld [vmem:[%s353 + $0x74] sm:$0xf]
        %v497 = vld [vmem:[%s353 + $0x78] sm:$0xf]
        %v498 = vld [vmem:[%s353 + $0x7c] sm:$0xf]
        %v499 = vld [vmem:[%s353 + $0x80] sm:$0xf]
        %v500 = vld [vmem:[%s353 + $0x84] sm:$0xf]
        %v501 = vld [vmem:[%s353 + $0x88] sm:$0xf]
        %v502 = vld [vmem:[%s353 + $0x8c] sm:$0xf]
        %v503 = vld [vmem:[%s353 + $0x90] sm:$0xf]
        %v504 = vld [vmem:[%s353 + $0x94] sm:$0xf]
        %v505 = vld [vmem:[%s353 + $0x98] sm:$0xf]
        %v506 = vld [vmem:[%s353 + $0x9c] sm:$0xf]
        %v507 = vld [vmem:[%s353 + $0xa0] sm:$0xf]
        %v508 = vld [vmem:[%s353 + $0xa4] sm:$0xf]
        %v509 = vld [vmem:[%s353 + $0xa8] sm:$0xf]
        %v510 = vld [vmem:[%s353 + $0xac] sm:$0xf]
        %v511 = vld [vmem:[%s353 + $0xb0] sm:$0xf]
        %v512 = vld [vmem:[%s353 + $0xb4] sm:$0xf]
        %v513 = vld [vmem:[%s353 + $0xb8] sm:$0xf]
        %v514 = vld [vmem:[%s353 + $0xbc] sm:$0xf]
        %v515 = vld [vmem:[%s353 + $0xc0] sm:$0xf]
        %v516 = vld [vmem:[%s353 + $0xc4] sm:$0xf]
        %v517 = vld [vmem:[%s353 + $0xc8] sm:$0xf]
        %v518 = vld [vmem:[%s353 + $0xcc] sm:$0xf]
        %v519 = vld [vmem:[%s353 + $0xd0] sm:$0xf]
        %v520 = vld [vmem:[%s353 + $0xd4] sm:$0xf]
        %v521 = vld [vmem:[%s353 + $0xd8] sm:$0xf]
        %v522 = vld [vmem:[%s353 + $0xdc] sm:$0xf]
        %v523 = vld [vmem:[%s353 + $0xe0] sm:$0xf]
        %v524 = vld [vmem:[%s353 + $0xe4] sm:$0xf]
        %v525 = vld [vmem:[%s353 + $0xe8] sm:$0xf]
        %v526 = vld [vmem:[%s353 + $0xec] sm:$0xf]
        %v527 = vld [vmem:[%s353 + $0xf0] sm:$0xf]
        %v528 = vld [vmem:[%s353 + $0xf4] sm:$0xf]
        %v529 = vld [vmem:[%s353 + $0xf8] sm:$0xf]
        %v530 = vld [vmem:[%s353 + $0xfc] sm:$0xf]
        %v579 = vunpack.c.l.b16 %v419
        %v580 = vunpack.c.h.b16 %v419
        %v581 = vunpack.c.l.b16 %v420
        %v582 = vunpack.c.h.b16 %v420
        %v583 = vunpack.c.l.b16 %v421
        %v584 = vunpack.c.h.b16 %v421
        %v585 = vunpack.c.l.b16 %v422
        %v586 = vunpack.c.h.b16 %v422
        %v587 = vunpack.c.l.b16 %v423
        %v588 = vunpack.c.h.b16 %v423
        %v589 = vunpack.c.l.b16 %v424
        %v590 = vunpack.c.h.b16 %v424
        %v591 = vunpack.c.l.b16 %v425
        %v592 = vunpack.c.h.b16 %v425
        %v593 = vunpack.c.l.b16 %v426
        %v594 = vunpack.c.h.b16 %v426
        %v595 = vunpack.c.l.b16 %v427
        %v596 = vunpack.c.h.b16 %v427
        %v597 = vunpack.c.l.b16 %v428
        %v598 = vunpack.c.h.b16 %v428
        %v599 = vunpack.c.l.b16 %v429
        %v600 = vunpack.c.h.b16 %v429
        %v601 = vunpack.c.l.b16 %v430
        %v602 = vunpack.c.h.b16 %v430
        %v603 = vunpack.c.l.b16 %v431
        %v604 = vunpack.c.h.b16 %v431
        %v605 = vunpack.c.l.b16 %v432
        %v606 = vunpack.c.h.b16 %v432
        %v607 = vunpack.c.l.b16 %v433
        %v608 = vunpack.c.h.b16 %v433
        %v609 = vunpack.c.l.b16 %v434
        %v610 = vunpack.c.h.b16 %v434
        %v611 = vunpack.c.l.b16 %v435
        %v612 = vunpack.c.h.b16 %v435
        %v613 = vunpack.c.l.b16 %v436
        %v614 = vunpack.c.h.b16 %v436
        %v615 = vunpack.c.l.b16 %v437
        %v616 = vunpack.c.h.b16 %v437
        %v617 = vunpack.c.l.b16 %v438
        %v618 = vunpack.c.h.b16 %v438
        %v619 = vunpack.c.l.b16 %v439
        %v620 = vunpack.c.h.b16 %v439
        %v621 = vunpack.c.l.b16 %v440
        %v622 = vunpack.c.h.b16 %v440
        %v623 = vunpack.c.l.b16 %v441
        %v624 = vunpack.c.h.b16 %v441
        %v625 = vunpack.c.l.b16 %v442
        %v626 = vunpack.c.h.b16 %v442
        %v627 = vunpack.c.l.b16 %v443
        %v628 = vunpack.c.h.b16 %v443
        %v629 = vunpack.c.l.b16 %v444
        %v630 = vunpack.c.h.b16 %v444
        %v631 = vunpack.c.l.b16 %v445
        %v632 = vunpack.c.h.b16 %v445
        %v633 = vunpack.c.l.b16 %v446
        %v634 = vunpack.c.h.b16 %v446
        %v635 = vunpack.c.l.b16 %v447
        %v636 = vunpack.c.h.b16 %v447
        %v637 = vunpack.c.l.b16 %v448
        %v638 = vunpack.c.h.b16 %v448
        %v639 = vunpack.c.l.b16 %v449
        %v640 = vunpack.c.h.b16 %v449
        %v641 = vunpack.c.l.b16 %v450
        %v642 = vunpack.c.h.b16 %v450
        %v643 = vunpack.c.l.b16 %v451
        %v644 = vunpack.c.h.b16 %v451
        %v645 = vunpack.c.l.b16 %v452
        %v646 = vunpack.c.h.b16 %v452
        %v647 = vunpack.c.l.b16 %v453
        %v648 = vunpack.c.h.b16 %v453
        %v649 = vunpack.c.l.b16 %v454
        %v650 = vunpack.c.h.b16 %v454
        %v651 = vunpack.c.l.b16 %v455
        %v652 = vunpack.c.h.b16 %v455
        %v653 = vunpack.c.l.b16 %v456
        %v654 = vunpack.c.h.b16 %v456
        %v655 = vunpack.c.l.b16 %v457
        %v656 = vunpack.c.h.b16 %v457
        %v657 = vunpack.c.l.b16 %v458
        %v658 = vunpack.c.h.b16 %v458
        %v659 = vunpack.c.l.b16 %v459
        %v660 = vunpack.c.h.b16 %v459
        %v661 = vunpack.c.l.b16 %v460
        %v662 = vunpack.c.h.b16 %v460
        %v663 = vunpack.c.l.b16 %v461
        %v664 = vunpack.c.h.b16 %v461
        %v665 = vunpack.c.l.b16 %v462
        %v666 = vunpack.c.h.b16 %v462
        %v667 = vunpack.c.l.b16 %v463
        %v668 = vunpack.c.h.b16 %v463
        %v669 = vunpack.c.l.b16 %v464
        %v670 = vunpack.c.h.b16 %v464
        %v671 = vunpack.c.l.b16 %v465
        %v672 = vunpack.c.h.b16 %v465
        %v673 = vunpack.c.l.b16 %v466
        %v674 = vunpack.c.h.b16 %v466
        %v675 = vpack.c.b16 %v583, %v579
        %v676 = vpack.c.b16 %v584, %v580
        %v677 = vpack.c.b16 %v585, %v581
        %v678 = vpack.c.b16 %v586, %v582
        %v679 = vpack.c.b16 %v591, %v587
        %v680 = vpack.c.b16 %v592, %v588
        %v681 = vpack.c.b16 %v593, %v589
        %v682 = vpack.c.b16 %v594, %v590
        %v683 = vpack.c.b16 %v599, %v595
        %v684 = vpack.c.b16 %v600, %v596
        %v685 = vpack.c.b16 %v601, %v597
        %v686 = vpack.c.b16 %v602, %v598
        %v687 = vpack.c.b16 %v607, %v603
        %v688 = vpack.c.b16 %v608, %v604
        %v689 = vpack.c.b16 %v609, %v605
        %v690 = vpack.c.b16 %v610, %v606
        %v691 = vpack.c.b16 %v615, %v611
        %v692 = vpack.c.b16 %v616, %v612
        %v693 = vpack.c.b16 %v617, %v613
        %v694 = vpack.c.b16 %v618, %v614
        %v695 = vpack.c.b16 %v623, %v619
        %v696 = vpack.c.b16 %v624, %v620
        %v697 = vpack.c.b16 %v625, %v621
        %v698 = vpack.c.b16 %v626, %v622
        %v699 = vpack.c.b16 %v631, %v627
        %v700 = vpack.c.b16 %v632, %v628
        %v701 = vpack.c.b16 %v633, %v629
        %v702 = vpack.c.b16 %v634, %v630
        %v703 = vpack.c.b16 %v639, %v635
        %v704 = vpack.c.b16 %v640, %v636
        %v705 = vpack.c.b16 %v641, %v637
        %v706 = vpack.c.b16 %v642, %v638
        %v707 = vpack.c.b16 %v647, %v643
        %v708 = vpack.c.b16 %v648, %v644
        %v709 = vpack.c.b16 %v649, %v645
        %v710 = vpack.c.b16 %v650, %v646
        %v711 = vpack.c.b16 %v655, %v651
        %v712 = vpack.c.b16 %v656, %v652
        %v713 = vpack.c.b16 %v657, %v653
        %v714 = vpack.c.b16 %v658, %v654
        %v715 = vpack.c.b16 %v663, %v659
        %v716 = vpack.c.b16 %v664, %v660
        %v717 = vpack.c.b16 %v665, %v661
        %v718 = vpack.c.b16 %v666, %v662
        %v719 = vpack.c.b16 %v671, %v667
        %v720 = vpack.c.b16 %v672, %v668
        %v721 = vpack.c.b16 %v673, %v669
        %v722 = vpack.c.b16 %v674, %v670
        %v835 = vunpack.c.l.b16 %v467
        %v836 = vunpack.c.l.b16 %v468
        %v837 = vunpack.c.l.b16 %v469
        %v838 = vunpack.c.l.b16 %v470
        %v839 = vunpack.c.l.b16 %v471
        %v840 = vunpack.c.l.b16 %v472
        %v841 = vunpack.c.l.b16 %v473
        %v842 = vunpack.c.l.b16 %v474
        %v843 = vunpack.c.l.b16 %v475
        %v844 = vunpack.c.l.b16 %v476
        %v845 = vunpack.c.l.b16 %v477
        %v846 = vunpack.c.l.b16 %v478
        %v847 = vunpack.c.l.b16 %v479
        %v848 = vunpack.c.l.b16 %v480
        %v849 = vunpack.c.l.b16 %v481
        %v850 = vunpack.c.l.b16 %v482
        %v851 = vunpack.c.l.b16 %v483
        %v852 = vunpack.c.l.b16 %v484
        %v853 = vunpack.c.l.b16 %v485
        %v854 = vunpack.c.l.b16 %v486
        %v855 = vunpack.c.l.b16 %v487
        %v856 = vunpack.c.l.b16 %v488
        %v857 = vunpack.c.l.b16 %v489
        %v858 = vunpack.c.l.b16 %v490
        %v859 = vunpack.c.l.b16 %v491
        %v860 = vunpack.c.l.b16 %v492
        %v861 = vunpack.c.l.b16 %v493
        %v862 = vunpack.c.l.b16 %v494
        %v863 = vunpack.c.l.b16 %v495
        %v864 = vunpack.c.l.b16 %v496
        %v865 = vunpack.c.l.b16 %v497
        %v866 = vunpack.c.l.b16 %v498
        %v867 = vunpack.c.l.b16 %v499
        %v868 = vunpack.c.l.b16 %v500
        %v869 = vunpack.c.l.b16 %v501
        %v870 = vunpack.c.l.b16 %v502
        %v871 = vunpack.c.l.b16 %v503
        %v872 = vunpack.c.l.b16 %v504
        %v873 = vunpack.c.l.b16 %v505
        %v874 = vunpack.c.l.b16 %v506
        %v875 = vunpack.c.l.b16 %v507
        %v876 = vunpack.c.l.b16 %v508
        %v877 = vunpack.c.l.b16 %v509
        %v878 = vunpack.c.l.b16 %v510
        %v879 = vunpack.c.l.b16 %v511
        %v880 = vunpack.c.l.b16 %v512
        %v881 = vunpack.c.l.b16 %v513
        %v882 = vunpack.c.l.b16 %v514
        %v883 = vunpack.c.l.b16 %v515
        %v884 = vunpack.c.l.b16 %v516
        %v885 = vunpack.c.l.b16 %v517
        %v886 = vunpack.c.l.b16 %v518
        %v887 = vunpack.c.l.b16 %v519
        %v888 = vunpack.c.l.b16 %v520
        %v889 = vunpack.c.l.b16 %v521
        %v890 = vunpack.c.l.b16 %v522
        %v891 = vunpack.c.l.b16 %v523
        %v892 = vunpack.c.l.b16 %v524
        %v893 = vunpack.c.l.b16 %v525
        %v894 = vunpack.c.l.b16 %v526
        %v895 = vunpack.c.l.b16 %v527
        %v896 = vunpack.c.l.b16 %v528
        %v897 = vunpack.c.l.b16 %v529
        %v898 = vunpack.c.l.b16 %v530
        %v899 = vpack.c.b16 %v836, %v835
        %v900 = vpack.c.b16 %v838, %v837
        %v901 = vpack.c.b16 %v840, %v839
        %v902 = vpack.c.b16 %v842, %v841
        %v903 = vpack.c.b16 %v844, %v843
        %v904 = vpack.c.b16 %v846, %v845
        %v905 = vpack.c.b16 %v848, %v847
        %v906 = vpack.c.b16 %v850, %v849
        %v907 = vpack.c.b16 %v852, %v851
        %v908 = vpack.c.b16 %v854, %v853
        %v909 = vpack.c.b16 %v856, %v855
        %v910 = vpack.c.b16 %v858, %v857
        %v911 = vpack.c.b16 %v860, %v859
        %v912 = vpack.c.b16 %v862, %v861
        %v913 = vpack.c.b16 %v864, %v863
        %v914 = vpack.c.b16 %v866, %v865
        %v915 = vpack.c.b16 %v868, %v867
        %v916 = vpack.c.b16 %v870, %v869
        %v917 = vpack.c.b16 %v872, %v871
        %v918 = vpack.c.b16 %v874, %v873
        %v919 = vpack.c.b16 %v876, %v875
        %v920 = vpack.c.b16 %v878, %v877
        %v921 = vpack.c.b16 %v880, %v879
        %v922 = vpack.c.b16 %v882, %v881
        %v923 = vpack.c.b16 %v884, %v883
        %v924 = vpack.c.b16 %v886, %v885
        %v925 = vpack.c.b16 %v888, %v887
        %v926 = vpack.c.b16 %v890, %v889
        %v927 = vpack.c.b16 %v892, %v891
        %v928 = vpack.c.b16 %v894, %v893
        %v929 = vpack.c.b16 %v896, %v895
        %v930 = vpack.c.b16 %v898, %v897
        %963 = vmatpush.bf16.msra.mxu0 %v906
        %964 = vmatpush.bf16.msra.mxu0 %v905
        %965 = vmatpush.bf16.msra.mxu0 %v904
        %966 = vmatpush.bf16.msra.mxu0 %v903
        %967 = vmatpush.bf16.msra.mxu0 %v902
        %968 = vmatpush.bf16.msra.mxu0 %v901
        %969 = vmatpush.bf16.msra.mxu0 %v900
        %970 = vmatpush.bf16.msra.mxu0 %v899
        %971 = vmatmul.bf16.gmra.mxu0 %v675
        %v972 = vpop.f32.mrf.mxu0
        %v973 = vadd.f32 0.0, %v972
        %v974 = vpop.f32.mrf.mxu0
        %v975 = vadd.f32 0.0, %v974
        %976 = vmatmul.bf16.gmra.mxu0 %v679
        %v977 = vpop.f32.mrf.mxu0
        %v978 = vadd.f32 0.0, %v977
        %v979 = vpop.f32.mrf.mxu0
        %v980 = vadd.f32 0.0, %v979
        %981 = vmatmul.bf16.gmra.mxu0 %v683
        %v982 = vpop.f32.mrf.mxu0
        %v983 = vadd.f32 0.0, %v982
        %v984 = vpop.f32.mrf.mxu0
        %v985 = vadd.f32 0.0, %v984
        %986 = vmatmul.bf16.gmra.mxu0 %v687
        %v987 = vpop.f32.mrf.mxu0
        %v988 = vadd.f32 0.0, %v987
        %v989 = vpop.f32.mrf.mxu0
        %v990 = vadd.f32 0.0, %v989
        %991 = vmatmul.bf16.gmra.mxu0 %v691
        %v992 = vpop.f32.mrf.mxu0
        %v993 = vadd.f32 0.0, %v992
        %v994 = vpop.f32.mrf.mxu0
        %v995 = vadd.f32 0.0, %v994
        %996 = vmatmul.bf16.gmra.mxu0 %v695
        %v997 = vpop.f32.mrf.mxu0
        %v998 = vadd.f32 0.0, %v997
        %v999 = vpop.f32.mrf.mxu0
        %v1000 = vadd.f32 0.0, %v999
        %1001 = vmatmul.bf16.gmra.mxu0 %v699
        %v1002 = vpop.f32.mrf.mxu0
        %v1003 = vadd.f32 0.0, %v1002
        %v1004 = vpop.f32.mrf.mxu0
        %v1005 = vadd.f32 0.0, %v1004
        %1006 = vmatmul.bf16.gmra.mxu0 %v703
        %v1007 = vpop.f32.mrf.mxu0
        %v1008 = vadd.f32 0.0, %v1007
        %v1009 = vpop.f32.mrf.mxu0
        %v1010 = vadd.f32 0.0, %v1009
        %1011 = vmatmul.bf16.gmra.mxu0 %v707
        %v1012 = vpop.f32.mrf.mxu0
        %v1013 = vadd.f32 0.0, %v1012
        %v1014 = vpop.f32.mrf.mxu0
        %v1015 = vadd.f32 0.0, %v1014
        %1016 = vmatmul.bf16.gmra.mxu0 %v711
        %v1017 = vpop.f32.mrf.mxu0
        %v1018 = vadd.f32 0.0, %v1017
        %v1019 = vpop.f32.mrf.mxu0
        %v1020 = vadd.f32 0.0, %v1019
        %1021 = vmatmul.bf16.gmra.mxu0 %v715
        %v1022 = vpop.f32.mrf.mxu0
        %v1023 = vadd.f32 0.0, %v1022
        %v1024 = vpop.f32.mrf.mxu0
        %v1025 = vadd.f32 0.0, %v1024
        %1026 = vmatmul.bf16.gmra.mxu0 %v719
        %v1027 = vpop.f32.mrf.mxu0
        %v1028 = vadd.f32 0.0, %v1027
        %v1029 = vpop.f32.mrf.mxu0
        %v1030 = vadd.f32 0.0, %v1029
        %1031 = vdwg.mxu0
        %1032 = vmatpush.bf16.msra.mxu0 %v914
        %1033 = vmatpush.bf16.msra.mxu0 %v913
        %1034 = vmatpush.bf16.msra.mxu0 %v912
        %1035 = vmatpush.bf16.msra.mxu0 %v911
        %1036 = vmatpush.bf16.msra.mxu0 %v910
        %1037 = vmatpush.bf16.msra.mxu0 %v909
        %1038 = vmatpush.bf16.msra.mxu0 %v908
        %1039 = vmatpush.bf16.msra.mxu0 %v907
        %1040 = vmatmul.bf16.gmra.mxu0 %v676
        %v1041 = vpop.f32.mrf.mxu0
        %v1042 = vadd.f32 %v973, %v1041
        %v1043 = vpop.f32.mrf.mxu0
        %v1044 = vadd.f32 %v975, %v1043
        %1045 = vmatmul.bf16.gmra.mxu0 %v680
        %v1046 = vpop.f32.mrf.mxu0
        %v1047 = vadd.f32 %v978, %v1046
        %v1048 = vpop.f32.mrf.mxu0
        %v1049 = vadd.f32 %v980, %v1048
        %1050 = vmatmul.bf16.gmra.mxu0 %v684
        %v1051 = vpop.f32.mrf.mxu0
        %v1052 = vadd.f32 %v983, %v1051
        %v1053 = vpop.f32.mrf.mxu0
        %v1054 = vadd.f32 %v985, %v1053
        %1055 = vmatmul.bf16.gmra.mxu0 %v688
        %v1056 = vpop.f32.mrf.mxu0
        %v1057 = vadd.f32 %v988, %v1056
        %v1058 = vpop.f32.mrf.mxu0
        %v1059 = vadd.f32 %v990, %v1058
        %1060 = vmatmul.bf16.gmra.mxu0 %v692
        %v1061 = vpop.f32.mrf.mxu0
        %v1062 = vadd.f32 %v993, %v1061
        %v1063 = vpop.f32.mrf.mxu0
        %v1064 = vadd.f32 %v995, %v1063
        %1065 = vmatmul.bf16.gmra.mxu0 %v696
        %v1066 = vpop.f32.mrf.mxu0
        %v1067 = vadd.f32 %v998, %v1066
        %v1068 = vpop.f32.mrf.mxu0
        %v1069 = vadd.f32 %v1000, %v1068
        %1070 = vmatmul.bf16.gmra.mxu0 %v700
        %v1071 = vpop.f32.mrf.mxu0
        %v1072 = vadd.f32 %v1003, %v1071
        %v1073 = vpop.f32.mrf.mxu0
        %v1074 = vadd.f32 %v1005, %v1073
        %1075 = vmatmul.bf16.gmra.mxu0 %v704
        %v1076 = vpop.f32.mrf.mxu0
        %v1077 = vadd.f32 %v1008, %v1076
        %v1078 = vpop.f32.mrf.mxu0
        %v1079 = vadd.f32 %v1010, %v1078
        %1080 = vmatmul.bf16.gmra.mxu0 %v708
        %v1081 = vpop.f32.mrf.mxu0
        %v1082 = vadd.f32 %v1013, %v1081
        %v1083 = vpop.f32.mrf.mxu0
        %v1084 = vadd.f32 %v1015, %v1083
        %1085 = vmatmul.bf16.gmra.mxu0 %v712
        %v1086 = vpop.f32.mrf.mxu0
        %v1087 = vadd.f32 %v1018, %v1086
        %v1088 = vpop.f32.mrf.mxu0
        %v1089 = vadd.f32 %v1020, %v1088
        %1090 = vmatmul.bf16.gmra.mxu0 %v716
        %v1091 = vpop.f32.mrf.mxu0
        %v1092 = vadd.f32 %v1023, %v1091
        %v1093 = vpop.f32.mrf.mxu0
        %v1094 = vadd.f32 %v1025, %v1093
        %1095 = vmatmul.bf16.gmra.mxu0 %v720
        %v1096 = vpop.f32.mrf.mxu0
        %v1097 = vadd.f32 %v1028, %v1096
        %v1098 = vpop.f32.mrf.mxu0
        %v1099 = vadd.f32 %v1030, %v1098
        %1100 = vdwg.mxu0
        %1101 = vmatpush.bf16.msra.mxu0 %v922
        %1102 = vmatpush.bf16.msra.mxu0 %v921
        %1103 = vmatpush.bf16.msra.mxu0 %v920
        %1104 = vmatpush.bf16.msra.mxu0 %v919
        %1105 = vmatpush.bf16.msra.mxu0 %v918
        %1106 = vmatpush.bf16.msra.mxu0 %v917
        %1107 = vmatpush.bf16.msra.mxu0 %v916
        %1108 = vmatpush.bf16.msra.mxu0 %v915
        %1109 = vmatmul.bf16.gmra.mxu0 %v677
        %v1110 = vpop.f32.mrf.mxu0
        %v1111 = vadd.f32 %v1042, %v1110
        %v1112 = vpop.f32.mrf.mxu0
        %v1113 = vadd.f32 %v1044, %v1112
        %1114 = vmatmul.bf16.gmra.mxu0 %v681
        %v1115 = vpop.f32.mrf.mxu0
        %v1116 = vadd.f32 %v1047, %v1115
        %v1117 = vpop.f32.mrf.mxu0
        %v1118 = vadd.f32 %v1049, %v1117
        %1119 = vmatmul.bf16.gmra.mxu0 %v685
        %v1120 = vpop.f32.mrf.mxu0
        %v1121 = vadd.f32 %v1052, %v1120
        %v1122 = vpop.f32.mrf.mxu0
        %v1123 = vadd.f32 %v1054, %v1122
        %1124 = vmatmul.bf16.gmra.mxu0 %v689
        %v1125 = vpop.f32.mrf.mxu0
        %v1126 = vadd.f32 %v1057, %v1125
        %v1127 = vpop.f32.mrf.mxu0
        %v1128 = vadd.f32 %v1059, %v1127
        %1129 = vmatmul.bf16.gmra.mxu0 %v693
        %v1130 = vpop.f32.mrf.mxu0
        %v1131 = vadd.f32 %v1062, %v1130
        %v1132 = vpop.f32.mrf.mxu0
        %v1133 = vadd.f32 %v1064, %v1132
        %1134 = vmatmul.bf16.gmra.mxu0 %v697
        %v1135 = vpop.f32.mrf.mxu0
        %v1136 = vadd.f32 %v1067, %v1135
        %v1137 = vpop.f32.mrf.mxu0
        %v1138 = vadd.f32 %v1069, %v1137
        %1139 = vmatmul.bf16.gmra.mxu0 %v701
        %v1140 = vpop.f32.mrf.mxu0
        %v1141 = vadd.f32 %v1072, %v1140
        %v1142 = vpop.f32.mrf.mxu0
        %v1143 = vadd.f32 %v1074, %v1142
        %1144 = vmatmul.bf16.gmra.mxu0 %v705
        %v1145 = vpop.f32.mrf.mxu0
        %v1146 = vadd.f32 %v1077, %v1145
        %v1147 = vpop.f32.mrf.mxu0
        %v1148 = vadd.f32 %v1079, %v1147
        %1149 = vmatmul.bf16.gmra.mxu0 %v709
        %v1150 = vpop.f32.mrf.mxu0
        %v1151 = vadd.f32 %v1082, %v1150
        %v1152 = vpop.f32.mrf.mxu0
        %v1153 = vadd.f32 %v1084, %v1152
        %1154 = vmatmul.bf16.gmra.mxu0 %v713
        %v1155 = vpop.f32.mrf.mxu0
        %v1156 = vadd.f32 %v1087, %v1155
        %v1157 = vpop.f32.mrf.mxu0
        %v1158 = vadd.f32 %v1089, %v1157
        %1159 = vmatmul.bf16.gmra.mxu0 %v717
        %v1160 = vpop.f32.mrf.mxu0
        %v1161 = vadd.f32 %v1092, %v1160
        %v1162 = vpop.f32.mrf.mxu0
        %v1163 = vadd.f32 %v1094, %v1162
        %1164 = vmatmul.bf16.gmra.mxu0 %v721
        %v1165 = vpop.f32.mrf.mxu0
        %v1166 = vadd.f32 %v1097, %v1165
        %v1167 = vpop.f32.mrf.mxu0
        %v1168 = vadd.f32 %v1099, %v1167
        %1169 = vdwg.mxu0
        %1170 = vmatpush.bf16.msra.mxu0 %v930
        %1171 = vmatpush.bf16.msra.mxu0 %v929
        %1172 = vmatpush.bf16.msra.mxu0 %v928
        %1173 = vmatpush.bf16.msra.mxu0 %v927
        %1174 = vmatpush.bf16.msra.mxu0 %v926
        %1175 = vmatpush.bf16.msra.mxu0 %v925
        %1176 = vmatpush.bf16.msra.mxu0 %v924
        %1177 = vmatpush.bf16.msra.mxu0 %v923
        %1178 = vmatmul.bf16.gmra.mxu0 %v678
        %v1179 = vpop.f32.mrf.mxu0
        %v1180 = vadd.f32 %v1111, %v1179
        %v1181 = vpop.f32.mrf.mxu0
        %v1182 = vadd.f32 %v1113, %v1181
        %1183 = vmatmul.bf16.gmra.mxu0 %v682
        %v1184 = vpop.f32.mrf.mxu0
        %v1185 = vadd.f32 %v1116, %v1184
        %v1186 = vpop.f32.mrf.mxu0
        %v1187 = vadd.f32 %v1118, %v1186
        %1188 = vmatmul.bf16.gmra.mxu0 %v686
        %v1189 = vpop.f32.mrf.mxu0
        %v1190 = vadd.f32 %v1121, %v1189
        %v1191 = vpop.f32.mrf.mxu0
        %v1192 = vadd.f32 %v1123, %v1191
        %1193 = vmatmul.bf16.gmra.mxu0 %v690
        %v1194 = vpop.f32.mrf.mxu0
        %v1195 = vadd.f32 %v1126, %v1194
        %v1196 = vpop.f32.mrf.mxu0
        %v1197 = vadd.f32 %v1128, %v1196
        %1198 = vmatmul.bf16.gmra.mxu0 %v694
        %v1199 = vpop.f32.mrf.mxu0
        %v1200 = vadd.f32 %v1131, %v1199
        %v1201 = vpop.f32.mrf.mxu0
        %v1202 = vadd.f32 %v1133, %v1201
        %1203 = vmatmul.bf16.gmra.mxu0 %v698
        %v1204 = vpop.f32.mrf.mxu0
        %v1205 = vadd.f32 %v1136, %v1204
        %v1206 = vpop.f32.mrf.mxu0
        %v1207 = vadd.f32 %v1138, %v1206
        %1208 = vmatmul.bf16.gmra.mxu0 %v702
        %v1209 = vpop.f32.mrf.mxu0
        %v1210 = vadd.f32 %v1141, %v1209
        %v1211 = vpop.f32.mrf.mxu0
        %v1212 = vadd.f32 %v1143, %v1211
        %1213 = vmatmul.bf16.gmra.mxu0 %v706
        %v1214 = vpop.f32.mrf.mxu0
        %v1215 = vadd.f32 %v1146, %v1214
        %v1216 = vpop.f32.mrf.mxu0
        %v1217 = vadd.f32 %v1148, %v1216
        %1218 = vmatmul.bf16.gmra.mxu0 %v710
        %v1219 = vpop.f32.mrf.mxu0
        %v1220 = vadd.f32 %v1151, %v1219
        %v1221 = vpop.f32.mrf.mxu0
        %v1222 = vadd.f32 %v1153, %v1221
        %1223 = vmatmul.bf16.gmra.mxu0 %v714
        %v1224 = vpop.f32.mrf.mxu0
        %v1225 = vadd.f32 %v1156, %v1224
        %v1226 = vpop.f32.mrf.mxu0
        %v1227 = vadd.f32 %v1158, %v1226
        %1228 = vmatmul.bf16.gmra.mxu0 %v718
        %v1229 = vpop.f32.mrf.mxu0
        %v1230 = vadd.f32 %v1161, %v1229
        %v1231 = vpop.f32.mrf.mxu0
        %v1232 = vadd.f32 %v1163, %v1231
        %1233 = vmatmul.bf16.gmra.mxu0 %v722
        %v1234 = vpop.f32.mrf.mxu0
        %v1235 = vadd.f32 %v1166, %v1234
        %v1236 = vpop.f32.mrf.mxu0
        %v1237 = vadd.f32 %v1168, %v1236
        %1238 = vdwg.mxu0
        %v1239 = vadd.f32 %v395, %v1180
        %v1240 = vadd.f32 %v396, %v1182
        %v1241 = vadd.f32 %v397, %v1185
        %v1242 = vadd.f32 %v398, %v1187
        %v1243 = vadd.f32 %v399, %v1190
        %v1244 = vadd.f32 %v400, %v1192
        %v1245 = vadd.f32 %v401, %v1195
        %v1246 = vadd.f32 %v402, %v1197
        %v1247 = vadd.f32 %v403, %v1200
        %v1248 = vadd.f32 %v404, %v1202
        %v1249 = vadd.f32 %v405, %v1205
        %v1250 = vadd.f32 %v406, %v1207
        %v1251 = vadd.f32 %v407, %v1210
        %v1252 = vadd.f32 %v408, %v1212
        %v1253 = vadd.f32 %v409, %v1215
        %v1254 = vadd.f32 %v410, %v1217
        %v1255 = vadd.f32 %v411, %v1220
        %v1256 = vadd.f32 %v412, %v1222
        %v1257 = vadd.f32 %v413, %v1225
        %v1258 = vadd.f32 %v414, %v1227
        %v1259 = vadd.f32 %v415, %v1230
        %v1260 = vadd.f32 %v416, %v1232
        %v1261 = vadd.f32 %v417, %v1235
        %v1262 = vadd.f32 %v418, %v1237
        %1263 = vst [vmem:[#allocation2] sm:$0xff] %v1239
        %1264 = vst [vmem:[#allocation2 + $0x8] sm:$0xff] %v1240
        %1265 = vst [vmem:[#allocation2 + $0x10] sm:$0xff] %v1241
        %1266 = vst [vmem:[#allocation2 + $0x18] sm:$0xff] %v1242
        %1267 = vst [vmem:[#allocation2 + $0x20] sm:$0xff] %v1243
        %1268 = vst [vmem:[#allocation2 + $0x28] sm:$0xff] %v1244
        %1269 = vst [vmem:[#allocation2 + $0x30] sm:$0xff] %v1245
        %1270 = vst [vmem:[#allocation2 + $0x38] sm:$0xff] %v1246
        %1271 = vst [vmem:[#allocation2 + $0x40] sm:$0xff] %v1247
        %1272 = vst [vmem:[#allocation2 + $0x48] sm:$0xff] %v1248
        %1273 = vst [vmem:[#allocation2 + $0x50] sm:$0xff] %v1249
        %1274 = vst [vmem:[#allocation2 + $0x58] sm:$0xff] %v1250
        %1275 = vst [vmem:[#allocation2 + $0x60] sm:$0xff] %v1251
        %1276 = vst [vmem:[#allocation2 + $0x68] sm:$0xff] %v1252
        %1277 = vst [vmem:[#allocation2 + $0x70] sm:$0xff] %v1253
        %1278 = vst [vmem:[#allocation2 + $0x78] sm:$0xff] %v1254
        %1279 = vst [vmem:[#allocation2 + $0x80] sm:$0xff] %v1255
        %1280 = vst [vmem:[#allocation2 + $0x88] sm:$0xff] %v1256
        %1281 = vst [vmem:[#allocation2 + $0x90] sm:$0xff] %v1257
        %1282 = vst [vmem:[#allocation2 + $0x98] sm:$0xff] %v1258
        %1283 = vst [vmem:[#allocation2 + $0xa0] sm:$0xff] %v1259
        %1284 = vst [vmem:[#allocation2 + $0xa8] sm:$0xff] %v1260
        %1285 = vst [vmem:[#allocation2 + $0xb0] sm:$0xff] %v1261
        %1286 = vst [vmem:[#allocation2 + $0xb8] sm:$0xff] %v1262
        %p1287 = scmp.eq.s32.totalorder %s21, 1
        // Predicated region
        $region60: #{discriminator_forward.6} parent=50 // pred_check
          %p1288 = pneg %p1287
        $region61: #{discriminator_forward.6} parent=50 // pred_check_branch
          %1290 = sbr.rel (%p1288) target = $region63
        $region62: #{discriminator_forward.6} parent=50 // pred_region
          %v1291 = vld [vmem:[#allocation2] sm:$0xff]
          %v1292 = vld [vmem:[#allocation2 + $0x8] sm:$0xff]
          %v1293 = vld [vmem:[#allocation2 + $0x10] sm:$0xff]
          %v1294 = vld [vmem:[#allocation2 + $0x18] sm:$0xff]
          %v1295 = vld [vmem:[#allocation2 + $0x20] sm:$0xff]
          %v1296 = vld [vmem:[#allocation2 + $0x28] sm:$0xff]
          %v1297 = vld [vmem:[#allocation2 + $0x30] sm:$0xff]
          %v1298 = vld [vmem:[#allocation2 + $0x38] sm:$0xff]
          %v1299 = vld [vmem:[#allocation2 + $0x40] sm:$0xff]
          %v1300 = vld [vmem:[#allocation2 + $0x48] sm:$0xff]
          %v1301 = vld [vmem:[#allocation2 + $0x50] sm:$0xff]
          %v1302 = vld [vmem:[#allocation2 + $0x58] sm:$0xff]
          %v1303 = vld [vmem:[#allocation2 + $0x60] sm:$0xff]
          %v1304 = vld [vmem:[#allocation2 + $0x68] sm:$0xff]
          %v1305 = vld [vmem:[#allocation2 + $0x70] sm:$0xff]
          %v1306 = vld [vmem:[#allocation2 + $0x78] sm:$0xff]
          %v1307 = vld [vmem:[#allocation2 + $0x80] sm:$0xff]
          %v1308 = vld [vmem:[#allocation2 + $0x88] sm:$0xff]
          %v1309 = vld [vmem:[#allocation2 + $0x90] sm:$0xff]
          %v1310 = vld [vmem:[#allocation2 + $0x98] sm:$0xff]
          %v1311 = vld [vmem:[#allocation2 + $0xa0] sm:$0xff]
          %v1312 = vld [vmem:[#allocation2 + $0xa8] sm:$0xff]
          %v1313 = vld [vmem:[#allocation2 + $0xb0] sm:$0xff]
          %v1314 = vld [vmem:[#allocation2 + $0xb8] sm:$0xff]
          %v1315 = vld [vmem:[%s357] sm:$0x1]
          %v1317 = vperm.slane %v1315, 0
          %v1319 = vadd.f32 %v1291, %v1317
          %v1320 = vadd.f32 %v1292, %v1317
          %v1321 = vadd.f32 %v1293, %v1317
          %v1322 = vadd.f32 %v1294, %v1317
          %v1323 = vadd.f32 %v1295, %v1317
          %v1324 = vadd.f32 %v1296, %v1317
          %v1325 = vadd.f32 %v1297, %v1317
          %v1326 = vadd.f32 %v1298, %v1317
          %v1327 = vadd.f32 %v1299, %v1317
          %v1328 = vadd.f32 %v1300, %v1317
          %v1329 = vadd.f32 %v1301, %v1317
          %v1330 = vadd.f32 %v1302, %v1317
          %v1331 = vadd.f32 %v1303, %v1317
          %v1332 = vadd.f32 %v1304, %v1317
          %v1333 = vadd.f32 %v1305, %v1317
          %v1334 = vadd.f32 %v1306, %v1317
          %v1335 = vadd.f32 %v1307, %v1317
          %v1336 = vadd.f32 %v1308, %v1317
          %v1337 = vadd.f32 %v1309, %v1317
          %v1338 = vadd.f32 %v1310, %v1317
          %v1339 = vadd.f32 %v1311, %v1317
          %v1340 = vadd.f32 %v1312, %v1317
          %v1341 = vadd.f32 %v1313, %v1317
          %v1342 = vadd.f32 %v1314, %v1317
          %vm1343 = vcmp.ge.f32.partialorder %v1319, 0.0
          %vm1344 = vcmp.ge.f32.partialorder %v1320, 0.0
          %vm1345 = vcmp.ge.f32.partialorder %v1321, 0.0
          %vm1346 = vcmp.ge.f32.partialorder %v1322, 0.0
          %vm1347 = vcmp.ge.f32.partialorder %v1323, 0.0
          %vm1348 = vcmp.ge.f32.partialorder %v1324, 0.0
          %vm1349 = vcmp.ge.f32.partialorder %v1325, 0.0
          %vm1350 = vcmp.ge.f32.partialorder %v1326, 0.0
          %vm1351 = vcmp.ge.f32.partialorder %v1327, 0.0
          %vm1352 = vcmp.ge.f32.partialorder %v1328, 0.0
          %vm1353 = vcmp.ge.f32.partialorder %v1329, 0.0
          %vm1354 = vcmp.ge.f32.partialorder %v1330, 0.0
          %vm1355 = vcmp.ge.f32.partialorder %v1331, 0.0
          %vm1356 = vcmp.ge.f32.partialorder %v1332, 0.0
          %vm1357 = vcmp.ge.f32.partialorder %v1333, 0.0
          %vm1358 = vcmp.ge.f32.partialorder %v1334, 0.0
          %vm1359 = vcmp.ge.f32.partialorder %v1335, 0.0
          %vm1360 = vcmp.ge.f32.partialorder %v1336, 0.0
          %vm1361 = vcmp.ge.f32.partialorder %v1337, 0.0
          %vm1362 = vcmp.ge.f32.partialorder %v1338, 0.0
          %vm1363 = vcmp.ge.f32.partialorder %v1339, 0.0
          %vm1364 = vcmp.ge.f32.partialorder %v1340, 0.0
          %vm1365 = vcmp.ge.f32.partialorder %v1341, 0.0
          %vm1366 = vcmp.ge.f32.partialorder %v1342, 0.0
          %v1367 = vmul.f32 %v1319, 0.2
          %v1368 = vmul.f32 %v1320, 0.2
          %v1369 = vmul.f32 %v1321, 0.2
          %v1370 = vmul.f32 %v1322, 0.2
          %v1371 = vmul.f32 %v1323, 0.2
          %v1372 = vmul.f32 %v1324, 0.2
          %v1373 = vmul.f32 %v1325, 0.2
          %v1374 = vmul.f32 %v1326, 0.2
          %v1375 = vmul.f32 %v1327, 0.2
          %v1376 = vmul.f32 %v1328, 0.2
          %v1377 = vmul.f32 %v1329, 0.2
          %v1378 = vmul.f32 %v1330, 0.2
          %v1379 = vmul.f32 %v1331, 0.2
          %v1380 = vmul.f32 %v1332, 0.2
          %v1381 = vmul.f32 %v1333, 0.2
          %v1382 = vmul.f32 %v1334, 0.2
          %v1383 = vmul.f32 %v1335, 0.2
          %v1384 = vmul.f32 %v1336, 0.2
          %v1385 = vmul.f32 %v1337, 0.2
          %v1386 = vmul.f32 %v1338, 0.2
          %v1387 = vmul.f32 %v1339, 0.2
          %v1388 = vmul.f32 %v1340, 0.2
          %v1389 = vmul.f32 %v1341, 0.2
          %v1390 = vmul.f32 %v1342, 0.2
          %v1391 = vsel %vm1343, %v1319, %v1367
          %v1392 = vsel %vm1344, %v1320, %v1368
          %v1393 = vsel %vm1345, %v1321, %v1369
          %v1394 = vsel %vm1346, %v1322, %v1370
          %v1395 = vsel %vm1347, %v1323, %v1371
          %v1396 = vsel %vm1348, %v1324, %v1372
          %v1397 = vsel %vm1349, %v1325, %v1373
          %v1398 = vsel %vm1350, %v1326, %v1374
          %v1399 = vsel %vm1351, %v1327, %v1375
          %v1400 = vsel %vm1352, %v1328, %v1376
          %v1401 = vsel %vm1353, %v1329, %v1377
          %v1402 = vsel %vm1354, %v1330, %v1378
          %v1403 = vsel %vm1355, %v1331, %v1379
          %v1404 = vsel %vm1356, %v1332, %v1380
          %v1405 = vsel %vm1357, %v1333, %v1381
          %v1406 = vsel %vm1358, %v1334, %v1382
          %v1407 = vsel %vm1359, %v1335, %v1383
          %v1408 = vsel %vm1360, %v1336, %v1384
          %v1409 = vsel %vm1361, %v1337, %v1385
          %v1410 = vsel %vm1362, %v1338, %v1386
          %v1411 = vsel %vm1363, %v1339, %v1387
          %v1412 = vsel %vm1364, %v1340, %v1388
          %v1413 = vsel %vm1365, %v1341, %v1389
          %v1414 = vsel %vm1366, %v1342, %v1390
          %v1415 = vpack.c.bf16 %v1391, %v1391
          %v1416 = vpack.c.bf16 %v1392, %v1392
          %v1417 = vpack.c.bf16 %v1393, %v1393
          %v1418 = vpack.c.bf16 %v1394, %v1394
          %v1419 = vpack.c.bf16 %v1395, %v1395
          %v1420 = vpack.c.bf16 %v1396, %v1396
          %v1421 = vpack.c.bf16 %v1397, %v1397
          %v1422 = vpack.c.bf16 %v1398, %v1398
          %v1423 = vpack.c.bf16 %v1399, %v1399
          %v1424 = vpack.c.bf16 %v1400, %v1400
          %v1425 = vpack.c.bf16 %v1401, %v1401
          %v1426 = vpack.c.bf16 %v1402, %v1402
          %v1427 = vpack.c.bf16 %v1403, %v1403
          %v1428 = vpack.c.bf16 %v1404, %v1404
          %v1429 = vpack.c.bf16 %v1405, %v1405
          %v1430 = vpack.c.bf16 %v1406, %v1406
          %v1431 = vpack.c.bf16 %v1407, %v1407
          %v1432 = vpack.c.bf16 %v1408, %v1408
          %v1433 = vpack.c.bf16 %v1409, %v1409
          %v1434 = vpack.c.bf16 %v1410, %v1410
          %v1435 = vpack.c.bf16 %v1411, %v1411
          %v1436 = vpack.c.bf16 %v1412, %v1412
          %v1437 = vpack.c.bf16 %v1413, %v1413
          %v1438 = vpack.c.bf16 %v1414, %v1414
          %1439 = vst [vmem:[%s365] sm:$0xf] %v1415
          %1440 = vst [vmem:[%s365 + $0x4] sm:$0xf] %v1416
          %1441 = vst [vmem:[%s365 + $0x8] sm:$0xf] %v1417
          %1442 = vst [vmem:[%s365 + $0xc] sm:$0xf] %v1418
          %1443 = vst [vmem:[%s365 + $0x10] sm:$0xf] %v1419
          %1444 = vst [vmem:[%s365 + $0x14] sm:$0xf] %v1420
          %1445 = vst [vmem:[%s365 + $0x18] sm:$0xf] %v1421
          %1446 = vst [vmem:[%s365 + $0x1c] sm:$0xf] %v1422
          %1447 = vst [vmem:[%s365 + $0x20] sm:$0xf] %v1423
          %1448 = vst [vmem:[%s365 + $0x24] sm:$0xf] %v1424
          %1449 = vst [vmem:[%s365 + $0x28] sm:$0xf] %v1425
          %1450 = vst [vmem:[%s365 + $0x2c] sm:$0xf] %v1426
          %1451 = vst [vmem:[%s365 + $0x30] sm:$0xf] %v1427
          %1452 = vst [vmem:[%s365 + $0x34] sm:$0xf] %v1428
          %1453 = vst [vmem:[%s365 + $0x38] sm:$0xf] %v1429
          %1454 = vst [vmem:[%s365 + $0x3c] sm:$0xf] %v1430
          %1455 = vst [vmem:[%s365 + $0x40] sm:$0xf] %v1431
          %1456 = vst [vmem:[%s365 + $0x44] sm:$0xf] %v1432
          %1457 = vst [vmem:[%s365 + $0x48] sm:$0xf] %v1433
          %1458 = vst [vmem:[%s365 + $0x4c] sm:$0xf] %v1434
          %1459 = vst [vmem:[%s365 + $0x50] sm:$0xf] %v1435
          %1460 = vst [vmem:[%s365 + $0x54] sm:$0xf] %v1436
          %1461 = vst [vmem:[%s365 + $0x58] sm:$0xf] %v1437
          %1462 = vst [vmem:[%s365 + $0x5c] sm:$0xf] %v1438
        $region63: #{discriminator_forward.6} parent=50 // pred_fallthru
          _
        %s1463 = smul.u32 24, %s19
        %p1464 = scmp.lt.s32.totalorder %s1463, 143
        %s1465 = scalar_select %p1464, %s1463, 143
        %p1466 = scmp.lt.s32.totalorder %s20, 0
        %s1467 = scalar_select %p1466, %s20, 0
        %s1468 = sadd.s32 %s1467, %s1465
        %s1469 = smul.addr %s1468, 4
        %s1470 = scalar_lea.vmem %s3, %s1469
        // Predicated region
        $region64: #{discriminator_forward.6} parent=50 // pred_check
          %p1471 = pneg %p135
        $region65: #{discriminator_forward.6} parent=50 // pred_check_branch
          %1473 = sbr.rel (%p1471) target = $region67
        $region66: #{discriminator_forward.6} parent=50 // pred_region
          %s1474 = smul.u32 24, %s19
        $region67: #{discriminator_forward.6} parent=50 // pred_fallthru
          _
      $region51: #{discriminator_forward.6} parent=5 // pred_fallthru
        _
      %p1475 = scmp.le.s32.totalorder 2, %s9
      // Predicated region
      $region68: #{discriminator_forward.6} parent=5 // pred_check
        %p1476 = pneg %p1475
      $region69: #{discriminator_forward.6} parent=5 // pred_check_branch
        %1478 = sbr.rel (%p1476) target = $region71
      $region70: #{discriminator_forward.6} parent=5 // pred_region
        %s1479 = ssub.s32 %s9, 2
        // Predicated region
        $region72: #{discriminator_forward.6} parent=70 // pred_check
          %p1480 = pneg %p141
        $region73: #{discriminator_forward.6} parent=70 // pred_check_branch
          %1482 = sbr.rel (%p1480) target = $region75
        $region74: #{discriminator_forward.6} parent=70 // pred_region
          %s1483 = smul.u32 24, %s22
          %p1484 = scmp.lt.s32.totalorder %s1483, 143
          %s1485 = scalar_select %p1484, %s1483, 143
          %p1486 = scmp.lt.s32.totalorder %s23, 0
          %s1487 = scalar_select %p1486, %s23, 0
          %s1488 = sadd.s32 %s1487, %s1485
          %s1489 = smul.addr %s1488, 4
          %s1490 = scalar_lea.vmem %s3, %s1489
        $region75: #{discriminator_forward.6} parent=70 // pred_fallthru
          _
      $region71: #{discriminator_forward.6} parent=5 // pred_fallthru
        _
    $region6: #{discriminator_forward.6} parent=1 // loop_footer
      %s13 = sadd.s32 1, %s9
    $region7: #{discriminator_forward.6} parent=1 // loop_footer_branch
      %8 = sbr.rel target = $region3
    $region8: #{discriminator_forward.6} parent=1 // loop_exit
      _

// kernel: discriminator_forward.7
$region0: #{discriminator_forward.7}
  #allocation0 [shape = 'u32[]', space=smem, size = 0x4, offset = 0x4, fixed_abs, tag = 'smem constant byte address 0x4 - core index']
  #allocation1 [shape = 'u32[72,128]{1,0:T(1,128)}', space=vmem, size = 0x9000, scoped, tag = 'internal scratch']
  #allocation2 [shape = 'f32[144,256]{1,0:T(8,128)}', space=vmem, size = 0x24000, scoped, tag = 'scratch operand']
  %s0 = inlined_call_operand.vmem [shape: bf16[288,2048], index: 0, kind: input, shape index: {}]
  %s1 = inlined_call_operand.vmem [shape: bf16[2048,256], index: 1, kind: input, shape index: {}]
  %s2 = inlined_call_operand.vmem [shape: f32[1,256], index: 2, kind: input, shape index: {}]
  %s3 = inlined_call_operand.vmem [shape: bf16[288,256], index: 3, kind: output, shape index: {}]
  %s4 = sld [smem:[#allocation0]]
  $region76: #{discriminator_forward.7} parent=0
    _
  %s6 = ssub.s32 1, %s4
  %s7 = scalar_select 0, %s6, %s4
  $region1: #{discriminator_forward.7} parent=0
    #allocation3 [shape = 'u8[294912]{0}', space=vmem, size = 0x48000, scoped, tag = 'input window, operand 0']
    loop: start=0, step=1, limit=10
    $region2: #{discriminator_forward.7} parent=1 // loop_pre_header
      _
    $region3: #{discriminator_forward.7} parent=1 // loop_header
      %s9 = sphi 0, %s13
      %p10 = scmp.ge.s32.totalorder %s9, 10
      %s16 = sphi 0, %s35
      %s17 = sphi 0, %s31
      %s18 = sphi 0, %s27
      %s19 = sphi 0, %s16
      %s20 = sphi 0, %s17
      %s21 = sphi 0, %s18
      %s22 = sphi 0, %s19
      %s23 = sphi 0, %s20
      %s24 = sphi 0, %s21
      %s40 = sphi 0, %s42
      %s43 = sphi 0, %s40
      %s44 = sphi 0, %s43
      %s60 = sphi 0, %s44
      %s68 = sphi 0, %s70
      %s71 = sphi 0, %s68
      %s72 = sphi 0, %s71
      %s88 = sphi 0, %s72
      %s94 = sphi 0, %s96
      %s97 = sphi 0, %s94
      %s98 = sphi 0, %s97
      %s114 = sphi 0, %s98
      %s122 = sphi 0, %s124
      %s125 = sphi 0, %s122
      %s126 = sphi 0, %s125
      %s142 = sphi 0, %s126
    $region4: #{discriminator_forward.7} parent=1 // loop_header_branch
      %12 = sbr.rel (%p10) target = $region8
    $region5: #{discriminator_forward.7} parent=1 // loop_body
      %s14 = ssub.s32 %s9, 1
      %s15 = ssub.s32 %s9, 2
      %s25 = sadd.s32 1, %s18
      %p26 = scmp.ge.s32.totalorder %s25, 4
      %s27 = scalar_select %p26, 0, %s25
      %s28 = sadd.s32 1, %s17
      %s29 = scalar_select %p26, %s28, %s17
      %p30 = scmp.ge.s32.totalorder %s29, 1
      %s31 = scalar_select %p30, 0, %s29
      %s32 = sadd.s32 1, %s16
      %s33 = scalar_select %p30, %s32, %s16
      %p34 = scmp.ge.s32.totalorder %s33, 2
      %s35 = scalar_select %p34, 0, %s33
      %s36 = ssub.s32 %s16, %s35
      %s37 = ssub.s32 %s18, %s27
      %s38 = sor.u32 %s36, %s37
      %p39 = scmp.eq.s32.totalorder %s38, 0
      %s41 = sadd.s32 %s40, 1
      %s42 = scalar_select %p39, %s40, %s41
      %p45 = pneg %p39
      %p46 = scmp.eq.s32.totalorder %s9, 7
      %p47 = por %p45, %p46
      %p48 = scmp.ne.s32.totalorder %s40, %s43
      %p49 = scmp.eq.s32.totalorder %s9, 0
      %p50 = por %p48, %p49
      %p51 = scmp.ne.s32.totalorder %s40, %s43
      %p52 = scmp.eq.s32.totalorder %s14, 7
      %p53 = por %p51, %p52
      %p54 = scmp.ne.s32.totalorder %s43, %s44
      %p55 = scmp.eq.s32.totalorder %s14, 0
      %p56 = por %p54, %p55
      %p57 = scmp.ne.s32.totalorder %s43, %s44
      %p58 = scmp.eq.s32.totalorder %s15, 7
      %p59 = por %p57, %p58
      %p61 = scmp.ne.s32.totalorder %s44, %s60
      %p62 = scmp.eq.s32.totalorder %s15, 0
      %p63 = por %p61, %p62
      %s64 = ssub.s32 %s18, %s27
      %s65 = ssub.s32 %s17, %s31
      %s66 = sor.u32 %s64, %s65
      %p67 = scmp.eq.s32.totalorder %s66, 0
      %s69 = sadd.s32 %s68, 1
      %s70 = scalar_select %p67, %s68, %s69
      %p73 = pneg %p67
      %p74 = scmp.eq.s32.totalorder %s9, 7
      %p75 = por %p73, %p74
      %p76 = scmp.ne.s32.totalorder %s68, %s71
      %p77 = scmp.eq.s32.totalorder %s9, 0
      %p78 = por %p76, %p77
      %p79 = scmp.ne.s32.totalorder %s68, %s71
      %p80 = scmp.eq.s32.totalorder %s14, 7
      %p81 = por %p79, %p80
      %p82 = scmp.ne.s32.totalorder %s71, %s72
      %p83 = scmp.eq.s32.totalorder %s14, 0
      %p84 = por %p82, %p83
      %p85 = scmp.ne.s32.totalorder %s71, %s72
      %p86 = scmp.eq.s32.totalorder %s15, 7
      %p87 = por %p85, %p86
      %p89 = scmp.ne.s32.totalorder %s72, %s88
      %p90 = scmp.eq.s32.totalorder %s15, 0
      %p91 = por %p89, %p90
      %s92 = ssub.s32 %s17, %s31
      %p93 = scmp.eq.s32.totalorder %s92, 0
      %s95 = sadd.s32 %s94, 1
      %s96 = scalar_select %p93, %s94, %s95
      %p99 = pneg %p93
      %p100 = scmp.eq.s32.totalorder %s9, 7
      %p101 = por %p99, %p100
      %p102 = scmp.ne.s32.totalorder %s94, %s97
      %p103 = scmp.eq.s32.totalorder %s9, 0
      %p104 = por %p102, %p103
      %p105 = scmp.ne.s32.totalorder %s94, %s97
      %p106 = scmp.eq.s32.totalorder %s14, 7
      %p107 = por %p105, %p106
      %p108 = scmp.ne.s32.totalorder %s97, %s98
      %p109 = scmp.eq.s32.totalorder %s14, 0
      %p110 = por %p108, %p109
      %p111 = scmp.ne.s32.totalorder %s97, %s98
      %p112 = scmp.eq.s32.totalorder %s15, 7
      %p113 = por %p111, %p112
      %p115 = scmp.ne.s32.totalorder %s98, %s114
      %p116 = scmp.eq.s32.totalorder %s15, 0
      %p117 = por %p115, %p116
      %s118 = ssub.s32 %s16, %s35
      %s119 = ssub.s32 %s17, %s31
      %s120 = sor.u32 %s118, %s119
      %p121 = scmp.eq.s32.totalorder %s120, 0
      %s123 = sadd.s32 %s122, 1
      %s124 = scalar_select %p121, %s122, %s123
      %p127 = pneg %p121
      %p128 = scmp.eq.s32.totalorder %s9, 7
      %p129 = por %p127, %p128
      %p130 = scmp.ne.s32.totalorder %s122, %s125
      %p131 = scmp.eq.s32.totalorder %s9, 0
      %p132 = por %p130, %p131
      %p133 = scmp.ne.s32.totalorder %s122, %s125
      %p134 = scmp.eq.s32.totalorder %s14, 7
      %p135 = por %p133, %p134
      %p136 = scmp.ne.s32.totalorder %s125, %s126
      %p137 = scmp.eq.s32.totalorder %s14, 0
      %p138 = por %p136, %p137
      %p139 = scmp.ne.s32.totalorder %s125, %s126
      %p140 = scmp.eq.s32.totalorder %s15, 7
      %p141 = por %p139, %p140
      %p143 = scmp.ne.s32.totalorder %s126, %s142
      %p144 = scmp.eq.s32.totalorder %s15, 0
      %p145 = por %p143, %p144
      %p146 = scmp.le.s32.totalorder 1, %s9
      %p147 = scmp.lt.s32.totalorder %s9, 9
      %p148 = pnand %p146, %p147
      %p149 = pneg %p148
      // Predicated region
      $region9: #{discriminator_forward.7} parent=5 // pred_check
        _
      $region10: #{discriminator_forward.7} parent=5 // pred_check_branch
        %151 = sbr.rel (%p148) target = $region12
      $region11: #{discriminator_forward.7} parent=5 // pred_region
        %s152 = ssub.s32 %s9, 1
        // Predicated region
        $region13: #{discriminator_forward.7} parent=11 // pred_check
          %p153 = pneg %p110
        $region14: #{discriminator_forward.7} parent=11 // pred_check_branch
          %155 = sbr.rel (%p153) target = $region16
        $region15: #{discriminator_forward.7} parent=11 // pred_region
          %s156 = smul.u32 2, %s20
          %p157 = scmp.lt.s32.totalorder %s156, 1
          %s158 = scalar_select %p157, %s156, 1
          %s159 = scalar_lea.vmem %s2, %s158
          %s160 = smul.u32 2, %s20
        $region16: #{discriminator_forward.7} parent=11 // pred_fallthru
          _
      $region12: #{discriminator_forward.7} parent=5 // pred_fallthru
        _
      %p161 = scmp.lt.s32.totalorder %s9, 8
      // Predicated region
      $region17: #{discriminator_forward.7} parent=5 // pred_check
        %p162 = pneg %p161
      $region18: #{discriminator_forward.7} parent=5 // pred_check_branch
        %164 = sbr.rel (%p162) target = $region20
      $region19: #{discriminator_forward.7} parent=5 // pred_region
        // Predicated region
        $region21: #{discriminator_forward.7} parent=19 // pred_check
          %p165 = pneg %p50
        $region22: #{discriminator_forward.7} parent=19 // pred_check_branch
          %167 = sbr.rel (%p165) target = $region24
        $region23: #{discriminator_forward.7} parent=19 // pred_region
          %s168 = sand.u32 %s40, 1
          %s169 = sand.u32 %s40, 1
          %s170 = smul.addr %s169, 288
          %s171 = scalar_lea.vmem [#allocation3], %s170
          %s172 = smul.u32 18, %s16
          %s173 = smul.u32 4, %s18
          %s174 = smul.addr %s172, 16
          %s175 = sadd.s32 %s173, %s174
          %s176 = smul.addr %s175, 4
          %s177 = scalar_lea.vmem %s0, %s176
          // Predicated region
          $region25: #{discriminator_forward.7} parent=23 // pred_check
            _
          $region26: #{discriminator_forward.7} parent=23 // pred_check_branch
            %179 = sbr.rel (0) target = $region28
          $region27: #{discriminator_forward.7} parent=23 // pred_region
            // Predicated region
            $region29: #{discriminator_forward.7} parent=27 // pred_check
              _
            $region30: #{discriminator_forward.7} parent=27 // pred_check_branch
              %181 = sbr.rel (0) target = $region32
            $region31: #{discriminator_forward.7} parent=27 // pred_region
              loop: start=0, step=1, limit=1
              $region33: #{discriminator_forward.7} parent=31 // loop_pre_header
                _
              $region34: #{discriminator_forward.7} parent=31 // loop_header
                %s183 = sphi 0, %s187
                %p184 = scmp.ge.s32.totalorder %s183, 1
                %s188 = sphi %s177, %s177
                %s189 = sphi %s171, %s171
              $region35: #{discriminator_forward.7} parent=31 // loop_header_branch
                %186 = sbr.rel (%p184) target = $region39
              $region36: #{discriminator_forward.7} parent=31 // loop_body
                %v190 = vld [vmem:[%s188] sm:$0xff]
                %191 = vst [vmem:[%s189] sm:$0xff] %v190
                %v192 = vld [vmem:[%s188 + $0x8] sm:$0xff]
                %193 = vst [vmem:[%s189 + $0x8] sm:$0xff] %v192
                %v194 = vld [vmem:[%s188 + $0x40] sm:$0xff]
                %195 = vst [vmem:[%s189 + $0x10] sm:$0xff] %v194
                %v196 = vld [vmem:[%s188 + $0x48] sm:$0xff]
                %197 = vst [vmem:[%s189 + $0x18] sm:$0xff] %v196
                %v198 = vld [vmem:[%s188 + $0x80] sm:$0xff]
                %199 = vst [vmem:[%s189 + $0x20] sm:$0xff] %v198
                %v200 = vld [vmem:[%s188 + $0x88] sm:$0xff]
                %201 = vst [vmem:[%s189 + $0x28] sm:$0xff] %v200
                %v202 = vld [vmem:[%s188 + $0xc0] sm:$0xff]
                %203 = vst [vmem:[%s189 + $0x30] sm:$0xff] %v202
                %v204 = vld [vmem:[%s188 + $0xc8] sm:$0xff]
                %205 = vst [vmem:[%s189 + $0x38] sm:$0xff] %v204
                %v206 = vld [vmem:[%s188 + $0x100] sm:$0xff]
                %207 = vst [vmem:[%s189 + $0x40] sm:$0xff] %v206
                %v208 = vld [vmem:[%s188 + $0x108] sm:$0xff]
                %209 = vst [vmem:[%s189 + $0x48] sm:$0xff] %v208
                %v210 = vld [vmem:[%s188 + $0x140] sm:$0xff]
                %211 = vst [vmem:[%s189 + $0x50] sm:$0xff] %v210
                %v212 = vld [vmem:[%s188 + $0x148] sm:$0xff]
                %213 = vst [vmem:[%s189 + $0x58] sm:$0xff] %v212
                %v214 = vld [vmem:[%s188 + $0x180] sm:$0xff]
                %215 = vst [vmem:[%s189 + $0x60] sm:$0xff] %v214
                %v216 = vld [vmem:[%s188 + $0x188] sm:$0xff]
                %217 = vst [vmem:[%s189 + $0x68] sm:$0xff] %v216
                %v218 = vld [vmem:[%s188 + $0x1c0] sm:$0xff]
                %219 = vst [vmem:[%s189 + $0x70] sm:$0xff] %v218
                %v220 = vld [vmem:[%s188 + $0x1c8] sm:$0xff]
                %221 = vst [vmem:[%s189 + $0x78] sm:$0xff] %v220
                %v222 = vld [vmem:[%s188 + $0x200] sm:$0xff]
                %223 = vst [vmem:[%s189 + $0x80] sm:$0xff] %v222
                %v224 = vld [vmem:[%s188 + $0x208] sm:$0xff]
                %225 = vst [vmem:[%s189 + $0x88] sm:$0xff] %v224
                %v226 = vld [vmem:[%s188 + $0x240] sm:$0xff]
                %227 = vst [vmem:[%s189 + $0x90] sm:$0xff] %v226
                %v228 = vld [vmem:[%s188 + $0x248] sm:$0xff]
                %229 = vst [vmem:[%s189 + $0x98] sm:$0xff] %v228
                %v230 = vld [vmem:[%s188 + $0x280] sm:$0xff]
                %231 = vst [vmem:[%s189 + $0xa0] sm:$0xff] %v230
                %v232 = vld [vmem:[%s188 + $0x288] sm:$0xff]
                %233 = vst [vmem:[%s189 + $0xa8] sm:$0xff] %v232
                %v234 = vld [vmem:[%s188 + $0x2c0] sm:$0xff]
                %235 = vst [vmem:[%s189 + $0xb0] sm:$0xff] %v234
                %v236 = vld [vmem:[%s188 + $0x2c8] sm:$0xff]
                %237 = vst [vmem:[%s189 + $0xb8] sm:$0xff] %v236
                %v238 = vld [vmem:[%s188 + $0x300] sm:$0xff]
                %239 = vst [vmem:[%s189 + $0xc0] sm:$0xff] %v238
                %v240 = vld [vmem:[%s188 + $0x308] sm:$0xff]
                %241 = vst [vmem:[%s189 + $0xc8] sm:$0xff] %v240
                %v242 = vld [vmem:[%s188 + $0x340] sm:$0xff]
                %243 = vst [vmem:[%s189 + $0xd0] sm:$0xff] %v242
                %v244 = vld [vmem:[%s188 + $0x348] sm:$0xff]
                %245 = vst [vmem:[%s189 + $0xd8] sm:$0xff] %v244
                %v246 = vld [vmem:[%s188 + $0x380] sm:$0xff]
                %247 = vst [vmem:[%s189 + $0xe0] sm:$0xff] %v246
                %v248 = vld [vmem:[%s188 + $0x388] sm:$0xff]
                %249 = vst [vmem:[%s189 + $0xe8] sm:$0xff] %v248
                %v250 = vld [vmem:[%s188 + $0x3c0] sm:$0xff]
                %251 = vst [vmem:[%s189 + $0xf0] sm:$0xff] %v250
                %v252 = vld [vmem:[%s188 + $0x3c8] sm:$0xff]
                %253 = vst [vmem:[%s189 + $0xf8] sm:$0xff] %v252
                %v254 = vld [vmem:[%s188 + $0x400] sm:$0xff]
                %255 = vst [vmem:[%s189 + $0x100] sm:$0xff] %v254
                %v256 = vld [vmem:[%s188 + $0x408] sm:$0xff]
                %257 = vst [vmem:[%s189 + $0x108] sm:$0xff] %v256
                %v258 = vld [vmem:[%s188 + $0x440] sm:$0xff]
                %259 = vst [vmem:[%s189 + $0x110] sm:$0xff] %v258
                %v260 = vld [vmem:[%s188 + $0x448] sm:$0xff]
                %261 = vst [vmem:[%s189 + $0x118] sm:$0xff] %v260
              $region37: #{discriminator_forward.7} parent=31 // loop_footer
                %s187 = sadd.s32 1, %s183
              $region38: #{discriminator_forward.7} parent=31 // loop_footer_branch
                %182 = sbr.rel target = $region34
              $region39: #{discriminator_forward.7} parent=31 // loop_exit
                _
            $region32: #{discriminator_forward.7} parent=27 // pred_fallthru
              _
            // Predicated region
            $region40: #{discriminator_forward.7} parent=27 // pred_check
              _
            $region41: #{discriminator_forward.7} parent=27 // pred_check_branch
              %263 = sbr.rel target = $region43
            $region42: #{discriminator_forward.7} parent=27 // pred_region
              _
            $region43: #{discriminator_forward.7} parent=27 // pred_fallthru
              _
          $region28: #{discriminator_forward.7} parent=23 // pred_fallthru
            _
          %264 = vnop
        $region24: #{discriminator_forward.7} parent=19 // pred_fallthru
          _
        // Predicated region
        $region44: #{discriminator_forward.7} parent=19 // pred_check
          %p265 = pneg %p78
        $region45: #{discriminator_forward.7} parent=19 // pred_check_branch
          %267 = sbr.rel (%p265) target = $region47
        $region46: #{discriminator_forward.7} parent=19 // pred_region
          %s268 = smul.u32 64, %s18
          %s269 = smul.u32 2, %s17
          %p270 = scmp.lt.s32.totalorder %s268, 255
          %s271 = scalar_select %p270, %s268, 255
          %p272 = scmp.lt.s32.totalorder %s269, 1
          %s273 = scalar_select %p272, %s269, 1
          %s274 = smul.addr %s271, 2
          %s275 = sadd.s32 %s273, %s274
          %s276 = smul.addr %s275, 4
          %s277 = scalar_lea.vmem %s1, %s276
          %s278 = smul.u32 64, %s18
          %s279 = smul.u32 2, %s17
        $region47: #{discriminator_forward.7} parent=19 // pred_fallthru
          _
      $region20: #{discriminator_forward.7} parent=5 // pred_fallthru
        _
      %p280 = scmp.le.s32.totalorder 1, %s9
      %p281 = scmp.lt.s32.totalorder %s9, 9
      %p282 = pnand %p280, %p281
      %p283 = pneg %p282
      // Predicated region
      $region48: #{discriminator_forward.7} parent=5 // pred_check
        _
      $region49: #{discriminator_forward.7} parent=5 // pred_check_branch
        %285 = sbr.rel (%p282) target = $region51
      $region50: #{discriminator_forward.7} parent=5 // pred_region
        %s286 = ssub.s32 %s9, 1
        %s287 = sand.u32 %s43, 1
        %s288 = sand.u32 %s43, 1
        %s289 = smul.addr %s288, 288
        %s290 = scalar_lea.vmem [#allocation3], %s289
        // Predicated region
        $region52: #{discriminator_forward.7} parent=50 // pred_check
          %p291 = pneg %p56
        $region53: #{discriminator_forward.7} parent=50 // pred_check_branch
          %293 = sbr.rel (%p291) target = $region55
        $region54: #{discriminator_forward.7} parent=50 // pred_region
          _
        $region55: #{discriminator_forward.7} parent=50 // pred_fallthru
          _
        %s294 = sand.u32 %s43, 1
        %s295 = sand.u32 %s43, 1
        %s296 = smul.addr %s295, 288
        %s297 = scalar_lea.vmem [#allocation3], %s296
        %p298 = pneg %p56
        %p299 = pneg %p53
        %s300 = smul.u32 64, %s21
        %s301 = smul.u32 2, %s20
        %p302 = scmp.lt.s32.totalorder %s300, 255
        %s303 = scalar_select %p302, %s300, 255
        %p304 = scmp.lt.s32.totalorder %s301, 1
        %s305 = scalar_select %p304, %s301, 1
        %s306 = smul.addr %s303, 2
        %s307 = sadd.s32 %s305, %s306
        %s308 = smul.addr %s307, 4
        %s309 = scalar_lea.vmem %s1, %s308
        %p310 = pneg %p84
        %p311 = pneg %p81
        %s312 = smul.u32 2, %s20
        %p313 = scmp.lt.s32.totalorder %s312, 1
        %s314 = scalar_select %p313, %s312, 1
        %s315 = scalar_lea.vmem %s2, %s314
        %p316 = pneg %p110
        %p317 = pneg %p107
        %p318 = pneg %p138
        %p319 = pneg %p135
        %s320 = smul.u32 18, %s19
        %s321 = smul.u32 2, %s20
        %p322 = scmp.lt.s32.totalorder %s320, 35
        %s323 = scalar_select %p322, %s320, 35
        %p324 = scmp.lt.s32.totalorder %s321, 1
        %s325 = scalar_select %p324, %s321, 1
        %s326 = smul.addr %s323, 2
        %s327 = sadd.s32 %s325, %s326
        %s328 = smul.addr %s327, 4
        %s329 = scalar_lea.vmem %s3, %s328
        %s330 = smul.u32 18, %s19
        %s331 = smul.u32 4, %s21
        %s332 = smul.u32 64, %s21
        %s333 = smul.u32 2, %s20
        %p334 = scmp.lt.s32.totalorder %s332, 255
        %s335 = scalar_select %p334, %s332, 255
        %p336 = scmp.lt.s32.totalorder %s333, 1
        %s337 = scalar_select %p336, %s333, 1
        %s338 = smul.addr %s335, 2
        %s339 = sadd.s32 %s337, %s338
        %s340 = smul.addr %s339, 4
        %s341 = scalar_lea.vmem %s1, %s340
        %s342 = smul.u32 64, %s21
        %s343 = smul.u32 2, %s20
        %s344 = smul.u32 2, %s20
        %p345 = scmp.lt.s32.totalorder %s344, 1
        %s346 = scalar_select %p345, %s344, 1
        %s347 = scalar_lea.vmem %s2, %s346
        %s348 = smul.u32 2, %s20
        %s349 = smul.u32 18, %s19
        %s350 = smul.u32 2, %s20
        %p351 = scmp.lt.s32.totalorder %s349, 35
        %s352 = scalar_select %p351, %s349, 35
        %p353 = scmp.lt.s32.totalorder %s350, 1
        %s354 = scalar_select %p353, %s350, 1
        %s355 = smul.addr %s352, 2
        %s356 = sadd.s32 %s354, %s355
        %s357 = smul.addr %s356, 4
        %s358 = scalar_lea.vmem %s3, %s357
        %s359 = smul.u32 18, %s19
        %s360 = smul.u32 2, %s20
        %p361 = scmp.eq.s32.totalorder %s21, 0
        // Predicated region
        $region56: #{discriminator_forward.7} parent=50 // pred_check
          %p362 = pneg %p361
        $region57: #{discriminator_forward.7} parent=50 // pred_check_branch
          %364 = sbr.rel (%p362) target = $region59
        $region58: #{discriminator_forward.7} parent=50 // pred_region
          %365 = vst [vmem:[#allocation2] sm:$0xff] 0.0
          %366 = vst [vmem:[#allocation2 + $0x8] sm:$0xff] 0.0
          %367 = vst [vmem:[#allocation2 + $0x10] sm:$0xff] 0.0
          %368 = vst [vmem:[#allocation2 + $0x18] sm:$0xff] 0.0
          %369 = vst [vmem:[#allocation2 + $0x20] sm:$0xff] 0.0
          %370 = vst [vmem:[#allocation2 + $0x28] sm:$0xff] 0.0
          %371 = vst [vmem:[#allocation2 + $0x30] sm:$0xff] 0.0
          %372 = vst [vmem:[#allocation2 + $0x38] sm:$0xff] 0.0
          %373 = vst [vmem:[#allocation2 + $0x40] sm:$0xff] 0.0
          %374 = vst [vmem:[#allocation2 + $0x48] sm:$0xff] 0.0
          %375 = vst [vmem:[#allocation2 + $0x50] sm:$0xff] 0.0
          %376 = vst [vmem:[#allocation2 + $0x58] sm:$0xff] 0.0
          %377 = vst [vmem:[#allocation2 + $0x60] sm:$0xff] 0.0
          %378 = vst [vmem:[#allocation2 + $0x68] sm:$0xff] 0.0
          %379 = vst [vmem:[#allocation2 + $0x70] sm:$0xff] 0.0
          %380 = vst [vmem:[#allocation2 + $0x78] sm:$0xff] 0.0
          %381 = vst [vmem:[#allocation2 + $0x80] sm:$0xff] 0.0
          %382 = vst [vmem:[#allocation2 + $0x88] sm:$0xff] 0.0
          %383 = vst [vmem:[#allocation2 + $0x90] sm:$0xff] 0.0
          %384 = vst [vmem:[#allocation2 + $0x98] sm:$0xff] 0.0
          %385 = vst [vmem:[#allocation2 + $0xa0] sm:$0xff] 0.0
          %386 = vst [vmem:[#allocation2 + $0xa8] sm:$0xff] 0.0
          %387 = vst [vmem:[#allocation2 + $0xb0] sm:$0xff] 0.0
          %388 = vst [vmem:[#allocation2 + $0xb8] sm:$0xff] 0.0
          %389 = vst [vmem:[#allocation2 + $0xc0] sm:$0xff] 0.0
          %390 = vst [vmem:[#allocation2 + $0xc8] sm:$0xff] 0.0
          %391 = vst [vmem:[#allocation2 + $0xd0] sm:$0xff] 0.0
          %392 = vst [vmem:[#allocation2 + $0xd8] sm:$0xff] 0.0
          %393 = vst [vmem:[#allocation2 + $0xe0] sm:$0xff] 0.0
          %394 = vst [vmem:[#allocation2 + $0xe8] sm:$0xff] 0.0
          %395 = vst [vmem:[#allocation2 + $0xf0] sm:$0xff] 0.0
          %396 = vst [vmem:[#allocation2 + $0xf8] sm:$0xff] 0.0
          %397 = vst [vmem:[#allocation2 + $0x100] sm:$0xff] 0.0
          %398 = vst [vmem:[#allocation2 + $0x108] sm:$0xff] 0.0
          %399 = vst [vmem:[#allocation2 + $0x110] sm:$0xff] 0.0
          %400 = vst [vmem:[#allocation2 + $0x118] sm:$0xff] 0.0
        $region59: #{discriminator_forward.7} parent=50 // pred_fallthru
          _
        %v401 = vld [vmem:[#allocation2] sm:$0xff]
        %v402 = vld [vmem:[#allocation2 + $0x8] sm:$0xff]
        %v403 = vld [vmem:[#allocation2 + $0x10] sm:$0xff]
        %v404 = vld [vmem:[#allocation2 + $0x18] sm:$0xff]
        %v405 = vld [vmem:[#allocation2 + $0x20] sm:$0xff]
        %v406 = vld [vmem:[#allocation2 + $0x28] sm:$0xff]
        %v407 = vld [vmem:[#allocation2 + $0x30] sm:$0xff]
        %v408 = vld [vmem:[#allocation2 + $0x38] sm:$0xff]
        %v409 = vld [vmem:[#allocation2 + $0x40] sm:$0xff]
        %v410 = vld [vmem:[#allocation2 + $0x48] sm:$0xff]
        %v411 = vld [vmem:[#allocation2 + $0x50] sm:$0xff]
        %v412 = vld [vmem:[#allocation2 + $0x58] sm:$0xff]
        %v413 = vld [vmem:[#allocation2 + $0x60] sm:$0xff]
        %v414 = vld [vmem:[#allocation2 + $0x68] sm:$0xff]
        %v415 = vld [vmem:[#allocation2 + $0x70] sm:$0xff]
        %v416 = vld [vmem:[#allocation2 + $0x78] sm:$0xff]
        %v417 = vld [vmem:[#allocation2 + $0x80] sm:$0xff]
        %v418 = vld [vmem:[#allocation2 + $0x88] sm:$0xff]
        %v419 = vld [vmem:[#allocation2 + $0x90] sm:$0xff]
        %v420 = vld [vmem:[#allocation2 + $0x98] sm:$0xff]
        %v421 = vld [vmem:[#allocation2 + $0xa0] sm:$0xff]
        %v422 = vld [vmem:[#allocation2 + $0xa8] sm:$0xff]
        %v423 = vld [vmem:[#allocation2 + $0xb0] sm:$0xff]
        %v424 = vld [vmem:[#allocation2 + $0xb8] sm:$0xff]
        %v425 = vld [vmem:[#allocation2 + $0xc0] sm:$0xff]
        %v426 = vld [vmem:[#allocation2 + $0xc8] sm:$0xff]
        %v427 = vld [vmem:[#allocation2 + $0xd0] sm:$0xff]
        %v428 = vld [vmem:[#allocation2 + $0xd8] sm:$0xff]
        %v429 = vld [vmem:[#allocation2 + $0xe0] sm:$0xff]
        %v430 = vld [vmem:[#allocation2 + $0xe8] sm:$0xff]
        %v431 = vld [vmem:[#allocation2 + $0xf0] sm:$0xff]
        %v432 = vld [vmem:[#allocation2 + $0xf8] sm:$0xff]
        %v433 = vld [vmem:[#allocation2 + $0x100] sm:$0xff]
        %v434 = vld [vmem:[#allocation2 + $0x108] sm:$0xff]
        %v435 = vld [vmem:[#allocation2 + $0x110] sm:$0xff]
        %v436 = vld [vmem:[#allocation2 + $0x118] sm:$0xff]
        %v437 = vld [vmem:[%s290] sm:$0xff]
        %v438 = vld [vmem:[%s290 + $0x8] sm:$0xff]
        %v439 = vld [vmem:[%s290 + $0x10] sm:$0xff]
        %v440 = vld [vmem:[%s290 + $0x18] sm:$0xff]
        %v441 = vld [vmem:[%s290 + $0x20] sm:$0xff]
        %v442 = vld [vmem:[%s290 + $0x28] sm:$0xff]
        %v443 = vld [vmem:[%s290 + $0x30] sm:$0xff]
        %v444 = vld [vmem:[%s290 + $0x38] sm:$0xff]
        %v445 = vld [vmem:[%s290 + $0x40] sm:$0xff]
        %v446 = vld [vmem:[%s290 + $0x48] sm:$0xff]
        %v447 = vld [vmem:[%s290 + $0x50] sm:$0xff]
        %v448 = vld [vmem:[%s290 + $0x58] sm:$0xff]
        %v449 = vld [vmem:[%s290 + $0x60] sm:$0xff]
        %v450 = vld [vmem:[%s290 + $0x68] sm:$0xff]
        %v451 = vld [vmem:[%s290 + $0x70] sm:$0xff]
        %v452 = vld [vmem:[%s290 + $0x78] sm:$0xff]
        %v453 = vld [vmem:[%s290 + $0x80] sm:$0xff]
        %v454 = vld [vmem:[%s290 + $0x88] sm:$0xff]
        %v455 = vld [vmem:[%s290 + $0x90] sm:$0xff]
        %v456 = vld [vmem:[%s290 + $0x98] sm:$0xff]
        %v457 = vld [vmem:[%s290 + $0xa0] sm:$0xff]
        %v458 = vld [vmem:[%s290 + $0xa8] sm:$0xff]
        %v459 = vld [vmem:[%s290 + $0xb0] sm:$0xff]
        %v460 = vld [vmem:[%s290 + $0xb8] sm:$0xff]
        %v461 = vld [vmem:[%s290 + $0xc0] sm:$0xff]
        %v462 = vld [vmem:[%s290 + $0xc8] sm:$0xff]
        %v463 = vld [vmem:[%s290 + $0xd0] sm:$0xff]
        %v464 = vld [vmem:[%s290 + $0xd8] sm:$0xff]
        %v465 = vld [vmem:[%s290 + $0xe0] sm:$0xff]
        %v466 = vld [vmem:[%s290 + $0xe8] sm:$0xff]
        %v467 = vld [vmem:[%s290 + $0xf0] sm:$0xff]
        %v468 = vld [vmem:[%s290 + $0xf8] sm:$0xff]
        %v469 = vld [vmem:[%s290 + $0x100] sm:$0xff]
        %v470 = vld [vmem:[%s290 + $0x108] sm:$0xff]
        %v471 = vld [vmem:[%s290 + $0x110] sm:$0xff]
        %v472 = vld [vmem:[%s290 + $0x118] sm:$0xff]
        %v473 = vld [vmem:[%s341] sm:$0xff]
        %v474 = vld [vmem:[%s341 + $0x8] sm:$0xff]
        %v475 = vld [vmem:[%s341 + $0x10] sm:$0xff]
        %v476 = vld [vmem:[%s341 + $0x18] sm:$0xff]
        %v477 = vld [vmem:[%s341 + $0x20] sm:$0xff]
        %v478 = vld [vmem:[%s341 + $0x28] sm:$0xff]
        %v479 = vld [vmem:[%s341 + $0x30] sm:$0xff]
        %v480 = vld [vmem:[%s341 + $0x38] sm:$0xff]
        %v481 = vld [vmem:[%s341 + $0x40] sm:$0xff]
        %v482 = vld [vmem:[%s341 + $0x48] sm:$0xff]
        %v483 = vld [vmem:[%s341 + $0x50] sm:$0xff]
        %v484 = vld [vmem:[%s341 + $0x58] sm:$0xff]
        %v485 = vld [vmem:[%s341 + $0x60] sm:$0xff]
        %v486 = vld [vmem:[%s341 + $0x68] sm:$0xff]
        %v487 = vld [vmem:[%s341 + $0x70] sm:$0xff]
        %v488 = vld [vmem:[%s341 + $0x78] sm:$0xff]
        %v489 = vld [vmem:[%s341 + $0x80] sm:$0xff]
        %v490 = vld [vmem:[%s341 + $0x88] sm:$0xff]
        %v491 = vld [vmem:[%s341 + $0x90] sm:$0xff]
        %v492 = vld [vmem:[%s341 + $0x98] sm:$0xff]
        %v493 = vld [vmem:[%s341 + $0xa0] sm:$0xff]
        %v494 = vld [vmem:[%s341 + $0xa8] sm:$0xff]
        %v495 = vld [vmem:[%s341 + $0xb0] sm:$0xff]
        %v496 = vld [vmem:[%s341 + $0xb8] sm:$0xff]
        %v497 = vld [vmem:[%s341 + $0xc0] sm:$0xff]
        %v498 = vld [vmem:[%s341 + $0xc8] sm:$0xff]
        %v499 = vld [vmem:[%s341 + $0xd0] sm:$0xff]
        %v500 = vld [vmem:[%s341 + $0xd8] sm:$0xff]
        %v501 = vld [vmem:[%s341 + $0xe0] sm:$0xff]
        %v502 = vld [vmem:[%s341 + $0xe8] sm:$0xff]
        %v503 = vld [vmem:[%s341 + $0xf0] sm:$0xff]
        %v504 = vld [vmem:[%s341 + $0xf8] sm:$0xff]
        %v505 = vld [vmem:[%s341 + $0x100] sm:$0xff]
        %v506 = vld [vmem:[%s341 + $0x108] sm:$0xff]
        %v507 = vld [vmem:[%s341 + $0x110] sm:$0xff]
        %v508 = vld [vmem:[%s341 + $0x118] sm:$0xff]
        %v509 = vld [vmem:[%s341 + $0x120] sm:$0xff]
        %v510 = vld [vmem:[%s341 + $0x128] sm:$0xff]
        %v511 = vld [vmem:[%s341 + $0x130] sm:$0xff]
        %v512 = vld [vmem:[%s341 + $0x138] sm:$0xff]
        %v513 = vld [vmem:[%s341 + $0x140] sm:$0xff]
        %v514 = vld [vmem:[%s341 + $0x148] sm:$0xff]
        %v515 = vld [vmem:[%s341 + $0x150] sm:$0xff]
        %v516 = vld [vmem:[%s341 + $0x158] sm:$0xff]
        %v517 = vld [vmem:[%s341 + $0x160] sm:$0xff]
        %v518 = vld [vmem:[%s341 + $0x168] sm:$0xff]
        %v519 = vld [vmem:[%s341 + $0x170] sm:$0xff]
        %v520 = vld [vmem:[%s341 + $0x178] sm:$0xff]
        %v521 = vld [vmem:[%s341 + $0x180] sm:$0xff]
        %v522 = vld [vmem:[%s341 + $0x188] sm:$0xff]
        %v523 = vld [vmem:[%s341 + $0x190] sm:$0xff]
        %v524 = vld [vmem:[%s341 + $0x198] sm:$0xff]
        %v525 = vld [vmem:[%s341 + $0x1a0] sm:$0xff]
        %v526 = vld [vmem:[%s341 + $0x1a8] sm:$0xff]
        %v527 = vld [vmem:[%s341 + $0x1b0] sm:$0xff]
        %v528 = vld [vmem:[%s341 + $0x1b8] sm:$0xff]
        %v529 = vld [vmem:[%s341 + $0x1c0] sm:$0xff]
        %v530 = vld [vmem:[%s341 + $0x1c8] sm:$0xff]
        %v531 = vld [vmem:[%s341 + $0x1d0] sm:$0xff]
        %v532 = vld [vmem:[%s341 + $0x1d8] sm:$0xff]
        %v533 = vld [vmem:[%s341 + $0x1e0] sm:$0xff]
        %v534 = vld [vmem:[%s341 + $0x1e8] sm:$0xff]
        %v535 = vld [vmem:[%s341 + $0x1f0] sm:$0xff]
        %v536 = vld [vmem:[%s341 + $0x1f8] sm:$0xff]
        %v573 = vunpack.c.l.b16 %v437
        %v574 = vunpack.c.h.b16 %v437
        %v575 = vunpack.c.l.b16 %v438
        %v576 = vunpack.c.h.b16 %v438
        %v577 = vunpack.c.l.b16 %v439
        %v578 = vunpack.c.h.b16 %v439
        %v579 = vunpack.c.l.b16 %v440
        %v580 = vunpack.c.h.b16 %v440
        %v581 = vunpack.c.l.b16 %v441
        %v582 = vunpack.c.h.b16 %v441
        %v583 = vunpack.c.l.b16 %v442
        %v584 = vunpack.c.h.b16 %v442
        %v585 = vunpack.c.l.b16 %v443
        %v586 = vunpack.c.h.b16 %v443
        %v587 = vunpack.c.l.b16 %v444
        %v588 = vunpack.c.h.b16 %v444
        %v589 = vunpack.c.l.b16 %v445
        %v590 = vunpack.c.h.b16 %v445
        %v591 = vunpack.c.l.b16 %v446
        %v592 = vunpack.c.h.b16 %v446
        %v593 = vunpack.c.l.b16 %v447
        %v594 = vunpack.c.h.b16 %v447
        %v595 = vunpack.c.l.b16 %v448
        %v596 = vunpack.c.h.b16 %v448
        %v597 = vunpack.c.l.b16 %v449
        %v598 = vunpack.c.h.b16 %v449
        %v599 = vunpack.c.l.b16 %v450
        %v600 = vunpack.c.h.b16 %v450
        %v601 = vunpack.c.l.b16 %v451
        %v602 = vunpack.c.h.b16 %v451
        %v603 = vunpack.c.l.b16 %v452
        %v604 = vunpack.c.h.b16 %v452
        %v605 = vunpack.c.l.b16 %v453
        %v606 = vunpack.c.h.b16 %v453
        %v607 = vunpack.c.l.b16 %v454
        %v608 = vunpack.c.h.b16 %v454
        %v609 = vunpack.c.l.b16 %v455
        %v610 = vunpack.c.h.b16 %v455
        %v611 = vunpack.c.l.b16 %v456
        %v612 = vunpack.c.h.b16 %v456
        %v613 = vunpack.c.l.b16 %v457
        %v614 = vunpack.c.h.b16 %v457
        %v615 = vunpack.c.l.b16 %v458
        %v616 = vunpack.c.h.b16 %v458
        %v617 = vunpack.c.l.b16 %v459
        %v618 = vunpack.c.h.b16 %v459
        %v619 = vunpack.c.l.b16 %v460
        %v620 = vunpack.c.h.b16 %v460
        %v621 = vunpack.c.l.b16 %v461
        %v622 = vunpack.c.h.b16 %v461
        %v623 = vunpack.c.l.b16 %v462
        %v624 = vunpack.c.h.b16 %v462
        %v625 = vunpack.c.l.b16 %v463
        %v626 = vunpack.c.h.b16 %v463
        %v627 = vunpack.c.l.b16 %v464
        %v628 = vunpack.c.h.b16 %v464
        %v629 = vunpack.c.l.b16 %v465
        %v630 = vunpack.c.h.b16 %v465
        %v631 = vunpack.c.l.b16 %v466
        %v632 = vunpack.c.h.b16 %v466
        %v633 = vunpack.c.l.b16 %v467
        %v634 = vunpack.c.h.b16 %v467
        %v635 = vunpack.c.l.b16 %v468
        %v636 = vunpack.c.h.b16 %v468
        %v637 = vunpack.c.l.b16 %v469
        %v638 = vunpack.c.h.b16 %v469
        %v639 = vunpack.c.l.b16 %v470
        %v640 = vunpack.c.h.b16 %v470
        %v641 = vunpack.c.l.b16 %v471
        %v642 = vunpack.c.h.b16 %v471
        %v643 = vunpack.c.l.b16 %v472
        %v644 = vunpack.c.h.b16 %v472
        %v645 = vpack.c.b16 %v577, %v573
        %v646 = vpack.c.b16 %v578, %v574
        %v647 = vpack.c.b16 %v579, %v575
        %v648 = vpack.c.b16 %v580, %v576
        %v649 = vpack.c.b16 %v585, %v581
        %v650 = vpack.c.b16 %v586, %v582
        %v651 = vpack.c.b16 %v587, %v583
        %v652 = vpack.c.b16 %v588, %v584
        %v653 = vpack.c.b16 %v593, %v589
        %v654 = vpack.c.b16 %v594, %v590
        %v655 = vpack.c.b16 %v595, %v591
        %v656 = vpack.c.b16 %v596, %v592
        %v657 = vpack.c.b16 %v601, %v597
        %v658 = vpack.c.b16 %v602, %v598
        %v659 = vpack.c.b16 %v603, %v599
        %v660 = vpack.c.b16 %v604, %v600
        %v661 = vpack.c.b16 %v609, %v605
        %v662 = vpack.c.b16 %v610, %v606
        %v663 = vpack.c.b16 %v611, %v607
        %v664 = vpack.c.b16 %v612, %v608
        %v665 = vpack.c.b16 %v617, %v613
        %v666 = vpack.c.b16 %v618, %v614
        %v667 = vpack.c.b16 %v619, %v615
        %v668 = vpack.c.b16 %v620, %v616
        %v669 = vpack.c.b16 %v625, %v621
        %v670 = vpack.c.b16 %v626, %v622
        %v671 = vpack.c.b16 %v627, %v623
        %v672 = vpack.c.b16 %v628, %v624
        %v673 = vpack.c.b16 %v633, %v629
        %v674 = vpack.c.b16 %v634, %v630
        %v675 = vpack.c.b16 %v635, %v631
        %v676 = vpack.c.b16 %v636, %v632
        %v677 = vpack.c.b16 %v641, %v637
        %v678 = vpack.c.b16 %v642, %v638
        %v679 = vpack.c.b16 %v643, %v639
        %v680 = vpack.c.b16 %v644, %v640
        %v781 = vunpack.c.l.b16 %v473
        %v782 = vunpack.c.h.b16 %v473
        %v783 = vunpack.c.l.b16 %v474
        %v784 = vunpack.c.h.b16 %v474
        %v785 = vunpack.c.l.b16 %v475
        %v786 = vunpack.c.h.b16 %v475
        %v787 = vunpack.c.l.b16 %v476
        %v788 = vunpack.c.h.b16 %v476
        %v789 = vunpack.c.l.b16 %v477
        %v790 = vunpack.c.h.b16 %v477
        %v791 = vunpack.c.l.b16 %v478
        %v792 = vunpack.c.h.b16 %v478
        %v793 = vunpack.c.l.b16 %v479
        %v794 = vunpack.c.h.b16 %v479
        %v795 = vunpack.c.l.b16 %v480
        %v796 = vunpack.c.h.b16 %v480
        %v797 = vunpack.c.l.b16 %v481
        %v798 = vunpack.c.h.b16 %v481
        %v799 = vunpack.c.l.b16 %v482
        %v800 = vunpack.c.h.b16 %v482
        %v801 = vunpack.c.l.b16 %v483
        %v802 = vunpack.c.h.b16 %v483
        %v803 = vunpack.c.l.b16 %v484
        %v804 = vunpack.c.h.b16 %v484
        %v805 = vunpack.c.l.b16 %v485
        %v806 = vunpack.c.h.b16 %v485
        %v807 = vunpack.c.l.b16 %v486
        %v808 = vunpack.c.h.b16 %v486
        %v809 = vunpack.c.l.b16 %v487
        %v810 = vunpack.c.h.b16 %v487
        %v811 = vunpack.c.l.b16 %v488
        %v812 = vunpack.c.h.b16 %v488
        %v813 = vunpack.c.l.b16 %v489
        %v814 = vunpack.c.h.b16 %v489
        %v815 = vunpack.c.l.b16 %v490
        %v816 = vunpack.c.h.b16 %v490
        %v817 = vunpack.c.l.b16 %v491
        %v818 = vunpack.c.h.b16 %v491
        %v819 = vunpack.c.l.b16 %v492
        %v820 = vunpack.c.h.b16 %v492
        %v821 = vunpack.c.l.b16 %v493
        %v822 = vunpack.c.h.b16 %v493
        %v823 = vunpack.c.l.b16 %v494
        %v824 = vunpack.c.h.b16 %v494
        %v825 = vunpack.c.l.b16 %v495
        %v826 = vunpack.c.h.b16 %v495
        %v827 = vunpack.c.l.b16 %v496
        %v828 = vunpack.c.h.b16 %v496
        %v829 = vunpack.c.l.b16 %v497
        %v830 = vunpack.c.h.b16 %v497
        %v831 = vunpack.c.l.b16 %v498
        %v832 = vunpack.c.h.b16 %v498
        %v833 = vunpack.c.l.b16 %v499
        %v834 = vunpack.c.h.b16 %v499
        %v835 = vunpack.c.l.b16 %v500
        %v836 = vunpack.c.h.b16 %v500
        %v837 = vunpack.c.l.b16 %v501
        %v838 = vunpack.c.h.b16 %v501
        %v839 = vunpack.c.l.b16 %v502
        %v840 = vunpack.c.h.b16 %v502
        %v841 = vunpack.c.l.b16 %v503
        %v842 = vunpack.c.h.b16 %v503
        %v843 = vunpack.c.l.b16 %v504
        %v844 = vunpack.c.h.b16 %v504
        %v845 = vunpack.c.l.b16 %v505
        %v846 = vunpack.c.h.b16 %v505
        %v847 = vunpack.c.l.b16 %v506
        %v848 = vunpack.c.h.b16 %v506
        %v849 = vunpack.c.l.b16 %v507
        %v850 = vunpack.c.h.b16 %v507
        %v851 = vunpack.c.l.b16 %v508
        %v852 = vunpack.c.h.b16 %v508
        %v853 = vunpack.c.l.b16 %v509
        %v854 = vunpack.c.h.b16 %v509
        %v855 = vunpack.c.l.b16 %v510
        %v856 = vunpack.c.h.b16 %v510
        %v857 = vunpack.c.l.b16 %v511
        %v858 = vunpack.c.h.b16 %v511
        %v859 = vunpack.c.l.b16 %v512
        %v860 = vunpack.c.h.b16 %v512
        %v861 = vunpack.c.l.b16 %v513
        %v862 = vunpack.c.h.b16 %v513
        %v863 = vunpack.c.l.b16 %v514
        %v864 = vunpack.c.h.b16 %v514
        %v865 = vunpack.c.l.b16 %v515
        %v866 = vunpack.c.h.b16 %v515
        %v867 = vunpack.c.l.b16 %v516
        %v868 = vunpack.c.h.b16 %v516
        %v869 = vunpack.c.l.b16 %v517
        %v870 = vunpack.c.h.b16 %v517
        %v871 = vunpack.c.l.b16 %v518
        %v872 = vunpack.c.h.b16 %v518
        %v873 = vunpack.c.l.b16 %v519
        %v874 = vunpack.c.h.b16 %v519
        %v875 = vunpack.c.l.b16 %v520
        %v876 = vunpack.c.h.b16 %v520
        %v877 = vunpack.c.l.b16 %v521
        %v878 = vunpack.c.h.b16 %v521
        %v879 = vunpack.c.l.b16 %v522
        %v880 = vunpack.c.h.b16 %v522
        %v881 = vunpack.c.l.b16 %v523
        %v882 = vunpack.c.h.b16 %v523
        %v883 = vunpack.c.l.b16 %v524
        %v884 = vunpack.c.h.b16 %v524
        %v885 = vunpack.c.l.b16 %v525
        %v886 = vunpack.c.h.b16 %v525
        %v887 = vunpack.c.l.b16 %v526
        %v888 = vunpack.c.h.b16 %v526
        %v889 = vunpack.c.l.b16 %v527
        %v890 = vunpack.c.h.b16 %v527
        %v891 = vunpack.c.l.b16 %v528
        %v892 = vunpack.c.h.b16 %v528
        %v893 = vunpack.c.l.b16 %v529
        %v894 = vunpack.c.h.b16 %v529
        %v895 = vunpack.c.l.b16 %v530
        %v896 = vunpack.c.h.b16 %v530
        %v897 = vunpack.c.l.b16 %v531
        %v898 = vunpack.c.h.b16 %v531
        %v899 = vunpack.c.l.b16 %v532
        %v900 = vunpack.c.h.b16 %v532
        %v901 = vunpack.c.l.b16 %v533
        %v902 = vunpack.c.h.b16 %v533
        %v903 = vunpack.c.l.b16 %v534
        %v904 = vunpack.c.h.b16 %v534
        %v905 = vunpack.c.l.b16 %v535
        %v906 = vunpack.c.h.b16 %v535
        %v907 = vunpack.c.l.b16 %v536
        %v908 = vunpack.c.h.b16 %v536
        %v909 = vpack.c.b16 %v783, %v781
        %v910 = vpack.c.b16 %v784, %v782
        %v911 = vpack.c.b16 %v787, %v785
        %v912 = vpack.c.b16 %v788, %v786
        %v913 = vpack.c.b16 %v791, %v789
        %v914 = vpack.c.b16 %v792, %v790
        %v915 = vpack.c.b16 %v795, %v793
        %v916 = vpack.c.b16 %v796, %v794
        %v917 = vpack.c.b16 %v799, %v797
        %v918 = vpack.c.b16 %v800, %v798
        %v919 = vpack.c.b16 %v803, %v801
        %v920 = vpack.c.b16 %v804, %v802
        %v921 = vpack.c.b16 %v807, %v805
        %v922 = vpack.c.b16 %v808, %v806
        %v923 = vpack.c.b16 %v811, %v809
        %v924 = vpack.c.b16 %v812, %v810
        %v925 = vpack.c.b16 %v815, %v813
        %v926 = vpack.c.b16 %v816, %v814
        %v927 = vpack.c.b16 %v819, %v817
        %v928 = vpack.c.b16 %v820, %v818
        %v929 = vpack.c.b16 %v823, %v821
        %v930 = vpack.c.b16 %v824, %v822
        %v931 = vpack.c.b16 %v827, %v825
        %v932 = vpack.c.b16 %v828, %v826
        %v933 = vpack.c.b16 %v831, %v829
        %v934 = vpack.c.b16 %v832, %v830
        %v935 = vpack.c.b16 %v835, %v833
        %v936 = vpack.c.b16 %v836, %v834
        %v937 = vpack.c.b16 %v839, %v837
        %v938 = vpack.c.b16 %v840, %v838
        %v939 = vpack.c.b16 %v843, %v841
        %v940 = vpack.c.b16 %v844, %v842
        %v941 = vpack.c.b16 %v847, %v845
        %v942 = vpack.c.b16 %v848, %v846
        %v943 = vpack.c.b16 %v851, %v849
        %v944 = vpack.c.b16 %v852, %v850
        %v945 = vpack.c.b16 %v855, %v853
        %v946 = vpack.c.b16 %v856, %v854
        %v947 = vpack.c.b16 %v859, %v857
        %v948 = vpack.c.b16 %v860, %v858
        %v949 = vpack.c.b16 %v863, %v861
        %v950 = vpack.c.b16 %v864, %v862
        %v951 = vpack.c.b16 %v867, %v865
        %v952 = vpack.c.b16 %v868, %v866
        %v953 = vpack.c.b16 %v871, %v869
        %v954 = vpack.c.b16 %v872, %v870
        %v955 = vpack.c.b16 %v875, %v873
        %v956 = vpack.c.b16 %v876, %v874
        %v957 = vpack.c.b16 %v879, %v877
        %v958 = vpack.c.b16 %v880, %v878
        %v959 = vpack.c.b16 %v883, %v881
        %v960 = vpack.c.b16 %v884, %v882
        %v961 = vpack.c.b16 %v887, %v885
        %v962 = vpack.c.b16 %v888, %v886
        %v963 = vpack.c.b16 %v891, %v889
        %v964 = vpack.c.b16 %v892, %v890
        %v965 = vpack.c.b16 %v895, %v893
        %v966 = vpack.c.b16 %v896, %v894
        %v967 = vpack.c.b16 %v899, %v897
        %v968 = vpack.c.b16 %v900, %v898
        %v969 = vpack.c.b16 %v903, %v901
        %v970 = vpack.c.b16 %v904, %v902
        %v971 = vpack.c.b16 %v907, %v905
        %v972 = vpack.c.b16 %v908, %v906
        %1037 = vmatpush.bf16.msra.mxu0 %v923
        %1038 = vmatpush.bf16.msra.mxu0 %v921
        %1039 = vmatpush.bf16.msra.mxu0 %v919
        %1040 = vmatpush.bf16.msra.mxu0 %v917
        %1041 = vmatpush.bf16.msra.mxu0 %v915
        %1042 = vmatpush.bf16.msra.mxu0 %v913
        %1043 = vmatpush.bf16.msra.mxu0 %v911
        %1044 = vmatpush.bf16.msra.mxu0 %v909
        %1045 = vmatmul.bf16.gmra.mxu0 %v645
        %v1046 = vpop.f32.mrf.mxu0
        %v1047 = vadd.f32 0.0, %v1046
        %v1048 = vpop.f32.mrf.mxu0
        %v1049 = vadd.f32 0.0, %v1048
        %1050 = vmatmul.bf16.gmra.mxu0 %v649
        %v1051 = vpop.f32.mrf.mxu0
        %v1052 = vadd.f32 0.0, %v1051
        %v1053 = vpop.f32.mrf.mxu0
        %v1054 = vadd.f32 0.0, %v1053
        %1055 = vmatmul.bf16.gmra.mxu0 %v653
        %v1056 = vpop.f32.mrf.mxu0
        %v1057 = vadd.f32 0.0, %v1056
        %v1058 = vpop.f32.mrf.mxu0
        %v1059 = vadd.f32 0.0, %v1058
        %1060 = vmatmul.bf16.gmra.mxu0 %v657
        %v1061 = vpop.f32.mrf.mxu0
        %v1062 = vadd.f32 0.0, %v1061
        %v1063 = vpop.f32.mrf.mxu0
        %v1064 = vadd.f32 0.0, %v1063
        %1065 = vmatmul.bf16.gmra.mxu0 %v661
        %v1066 = vpop.f32.mrf.mxu0
        %v1067 = vadd.f32 0.0, %v1066
        %v1068 = vpop.f32.mrf.mxu0
        %v1069 = vadd.f32 0.0, %v1068
        %1070 = vmatmul.bf16.gmra.mxu0 %v665
        %v1071 = vpop.f32.mrf.mxu0
        %v1072 = vadd.f32 0.0, %v1071
        %v1073 = vpop.f32.mrf.mxu0
        %v1074 = vadd.f32 0.0, %v1073
        %1075 = vmatmul.bf16.gmra.mxu0 %v669
        %v1076 = vpop.f32.mrf.mxu0
        %v1077 = vadd.f32 0.0, %v1076
        %v1078 = vpop.f32.mrf.mxu0
        %v1079 = vadd.f32 0.0, %v1078
        %1080 = vmatmul.bf16.gmra.mxu0 %v673
        %v1081 = vpop.f32.mrf.mxu0
        %v1082 = vadd.f32 0.0, %v1081
        %v1083 = vpop.f32.mrf.mxu0
        %v1084 = vadd.f32 0.0, %v1083
        %1085 = vmatmul.bf16.gmra.mxu0 %v677
        %v1086 = vpop.f32.mrf.mxu0
        %v1087 = vadd.f32 0.0, %v1086
        %v1088 = vpop.f32.mrf.mxu0
        %v1089 = vadd.f32 0.0, %v1088
        %1090 = vdwg.mxu0
        %1091 = vmatpush.bf16.msra.mxu0 %v939
        %1092 = vmatpush.bf16.msra.mxu0 %v937
        %1093 = vmatpush.bf16.msra.mxu0 %v935
        %1094 = vmatpush.bf16.msra.mxu0 %v933
        %1095 = vmatpush.bf16.msra.mxu0 %v931
        %1096 = vmatpush.bf16.msra.mxu0 %v929
        %1097 = vmatpush.bf16.msra.mxu0 %v927
        %1098 = vmatpush.bf16.msra.mxu0 %v925
        %1099 = vmatmul.bf16.gmra.mxu0 %v646
        %v1100 = vpop.f32.mrf.mxu0
        %v1101 = vadd.f32 %v1047, %v1100
        %v1102 = vpop.f32.mrf.mxu0
        %v1103 = vadd.f32 %v1049, %v1102
        %1104 = vmatmul.bf16.gmra.mxu0 %v650
        %v1105 = vpop.f32.mrf.mxu0
        %v1106 = vadd.f32 %v1052, %v1105
        %v1107 = vpop.f32.mrf.mxu0
        %v1108 = vadd.f32 %v1054, %v1107
        %1109 = vmatmul.bf16.gmra.mxu0 %v654
        %v1110 = vpop.f32.mrf.mxu0
        %v1111 = vadd.f32 %v1057, %v1110
        %v1112 = vpop.f32.mrf.mxu0
        %v1113 = vadd.f32 %v1059, %v1112
        %1114 = vmatmul.bf16.gmra.mxu0 %v658
        %v1115 = vpop.f32.mrf.mxu0
        %v1116 = vadd.f32 %v1062, %v1115
        %v1117 = vpop.f32.mrf.mxu0
        %v1118 = vadd.f32 %v1064, %v1117
        %1119 = vmatmul.bf16.gmra.mxu0 %v662
        %v1120 = vpop.f32.mrf.mxu0
        %v1121 = vadd.f32 %v1067, %v1120
        %v1122 = vpop.f32.mrf.mxu0
        %v1123 = vadd.f32 %v1069, %v1122
        %1124 = vmatmul.bf16.gmra.mxu0 %v666
        %v1125 = vpop.f32.mrf.mxu0
        %v1126 = vadd.f32 %v1072, %v1125
        %v1127 = vpop.f32.mrf.mxu0
        %v1128 = vadd.f32 %v1074, %v1127
        %1129 = vmatmul.bf16.gmra.mxu0 %v670
        %v1130 = vpop.f32.mrf.mxu0
        %v1131 = vadd.f32 %v1077, %v1130
        %v1132 = vpop.f32.mrf.mxu0
        %v1133 = vadd.f32 %v1079, %v1132
        %1134 = vmatmul.bf16.gmra.mxu0 %v674
        %v1135 = vpop.f32.mrf.mxu0
        %v1136 = vadd.f32 %v1082, %v1135
        %v1137 = vpop.f32.mrf.mxu0
        %v1138 = vadd.f32 %v1084, %v1137
        %1139 = vmatmul.bf16.gmra.mxu0 %v678
        %v1140 = vpop.f32.mrf.mxu0
        %v1141 = vadd.f32 %v1087, %v1140
        %v1142 = vpop.f32.mrf.mxu0
        %v1143 = vadd.f32 %v1089, %v1142
        %1144 = vdwg.mxu0
        %1145 = vmatpush.bf16.msra.mxu0 %v955
        %1146 = vmatpush.bf16.msra.mxu0 %v953
        %1147 = vmatpush.bf16.msra.mxu0 %v951
        %1148 = vmatpush.bf16.msra.mxu0 %v949
        %1149 = vmatpush.bf16.msra.mxu0 %v947
        %1150 = vmatpush.bf16.msra.mxu0 %v945
        %1151 = vmatpush.bf16.msra.mxu0 %v943
        %1152 = vmatpush.bf16.msra.mxu0 %v941
        %1153 = vmatmul.bf16.gmra.mxu0 %v647
        %v1154 = vpop.f32.mrf.mxu0
        %v1155 = vadd.f32 %v1101, %v1154
        %v1156 = vpop.f32.mrf.mxu0
        %v1157 = vadd.f32 %v1103, %v1156
        %1158 = vmatmul.bf16.gmra.mxu0 %v651
        %v1159 = vpop.f32.mrf.mxu0
        %v1160 = vadd.f32 %v1106, %v1159
        %v1161 = vpop.f32.mrf.mxu0
        %v1162 = vadd.f32 %v1108, %v1161
        %1163 = vmatmul.bf16.gmra.mxu0 %v655
        %v1164 = vpop.f32.mrf.mxu0
        %v1165 = vadd.f32 %v1111, %v1164
        %v1166 = vpop.f32.mrf.mxu0
        %v1167 = vadd.f32 %v1113, %v1166
        %1168 = vmatmul.bf16.gmra.mxu0 %v659
        %v1169 = vpop.f32.mrf.mxu0
        %v1170 = vadd.f32 %v1116, %v1169
        %v1171 = vpop.f32.mrf.mxu0
        %v1172 = vadd.f32 %v1118, %v1171
        %1173 = vmatmul.bf16.gmra.mxu0 %v663
        %v1174 = vpop.f32.mrf.mxu0
        %v1175 = vadd.f32 %v1121, %v1174
        %v1176 = vpop.f32.mrf.mxu0
        %v1177 = vadd.f32 %v1123, %v1176
        %1178 = vmatmul.bf16.gmra.mxu0 %v667
        %v1179 = vpop.f32.mrf.mxu0
        %v1180 = vadd.f32 %v1126, %v1179
        %v1181 = vpop.f32.mrf.mxu0
        %v1182 = vadd.f32 %v1128, %v1181
        %1183 = vmatmul.bf16.gmra.mxu0 %v671
        %v1184 = vpop.f32.mrf.mxu0
        %v1185 = vadd.f32 %v1131, %v1184
        %v1186 = vpop.f32.mrf.mxu0
        %v1187 = vadd.f32 %v1133, %v1186
        %1188 = vmatmul.bf16.gmra.mxu0 %v675
        %v1189 = vpop.f32.mrf.mxu0
        %v1190 = vadd.f32 %v1136, %v1189
        %v1191 = vpop.f32.mrf.mxu0
        %v1192 = vadd.f32 %v1138, %v1191
        %1193 = vmatmul.bf16.gmra.mxu0 %v679
        %v1194 = vpop.f32.mrf.mxu0
        %v1195 = vadd.f32 %v1141, %v1194
        %v1196 = vpop.f32.mrf.mxu0
        %v1197 = vadd.f32 %v1143, %v1196
        %1198 = vdwg.mxu0
        %1199 = vmatpush.bf16.msra.mxu0 %v971
        %1200 = vmatpush.bf16.msra.mxu0 %v969
        %1201 = vmatpush.bf16.msra.mxu0 %v967
        %1202 = vmatpush.bf16.msra.mxu0 %v965
        %1203 = vmatpush.bf16.msra.mxu0 %v963
        %1204 = vmatpush.bf16.msra.mxu0 %v961
        %1205 = vmatpush.bf16.msra.mxu0 %v959
        %1206 = vmatpush.bf16.msra.mxu0 %v957
        %1207 = vmatmul.bf16.gmra.mxu0 %v648
        %v1208 = vpop.f32.mrf.mxu0
        %v1209 = vadd.f32 %v1155, %v1208
        %v1210 = vpop.f32.mrf.mxu0
        %v1211 = vadd.f32 %v1157, %v1210
        %1212 = vmatmul.bf16.gmra.mxu0 %v652
        %v1213 = vpop.f32.mrf.mxu0
        %v1214 = vadd.f32 %v1160, %v1213
        %v1215 = vpop.f32.mrf.mxu0
        %v1216 = vadd.f32 %v1162, %v1215
        %1217 = vmatmul.bf16.gmra.mxu0 %v656
        %v1218 = vpop.f32.mrf.mxu0
        %v1219 = vadd.f32 %v1165, %v1218
        %v1220 = vpop.f32.mrf.mxu0
        %v1221 = vadd.f32 %v1167, %v1220
        %1222 = vmatmul.bf16.gmra.mxu0 %v660
        %v1223 = vpop.f32.mrf.mxu0
        %v1224 = vadd.f32 %v1170, %v1223
        %v1225 = vpop.f32.mrf.mxu0
        %v1226 = vadd.f32 %v1172, %v1225
        %1227 = vmatmul.bf16.gmra.mxu0 %v664
        %v1228 = vpop.f32.mrf.mxu0
        %v1229 = vadd.f32 %v1175, %v1228
        %v1230 = vpop.f32.mrf.mxu0
        %v1231 = vadd.f32 %v1177, %v1230
        %1232 = vmatmul.bf16.gmra.mxu0 %v668
        %v1233 = vpop.f32.mrf.mxu0
        %v1234 = vadd.f32 %v1180, %v1233
        %v1235 = vpop.f32.mrf.mxu0
        %v1236 = vadd.f32 %v1182, %v1235
        %1237 = vmatmul.bf16.gmra.mxu0 %v672
        %v1238 = vpop.f32.mrf.mxu0
        %v1239 = vadd.f32 %v1185, %v1238
        %v1240 = vpop.f32.mrf.mxu0
        %v1241 = vadd.f32 %v1187, %v1240
        %1242 = vmatmul.bf16.gmra.mxu0 %v676
        %v1243 = vpop.f32.mrf.mxu0
        %v1244 = vadd.f32 %v1190, %v1243
        %v1245 = vpop.f32.mrf.mxu0
        %v1246 = vadd.f32 %v1192, %v1245
        %1247 = vmatmul.bf16.gmra.mxu0 %v680
        %v1248 = vpop.f32.mrf.mxu0
        %v1249 = vadd.f32 %v1195, %v1248
        %v1250 = vpop.f32.mrf.mxu0
        %v1251 = vadd.f32 %v1197, %v1250
        %1252 = vdwg.mxu0
        %1253 = vmatpush.bf16.msra.mxu0 %v924
        %1254 = vmatpush.bf16.msra.mxu0 %v922
        %1255 = vmatpush.bf16.msra.mxu0 %v920
        %1256 = vmatpush.bf16.msra.mxu0 %v918
        %1257 = vmatpush.bf16.msra.mxu0 %v916
        %1258 = vmatpush.bf16.msra.mxu0 %v914
        %1259 = vmatpush.bf16.msra.mxu0 %v912
        %1260 = vmatpush.bf16.msra.mxu0 %v910
        %1261 = vmatmul.bf16.gmra.mxu0 %v645
        %v1262 = vpop.f32.mrf.mxu0
        %v1263 = vadd.f32 0.0, %v1262
        %v1264 = vpop.f32.mrf.mxu0
        %v1265 = vadd.f32 0.0, %v1264
        %1266 = vmatmul.bf16.gmra.mxu0 %v649
        %v1267 = vpop.f32.mrf.mxu0
        %v1268 = vadd.f32 0.0, %v1267
        %v1269 = vpop.f32.mrf.mxu0
        %v1270 = vadd.f32 0.0, %v1269
        %1271 = vmatmul.bf16.gmra.mxu0 %v653
        %v1272 = vpop.f32.mrf.mxu0
        %v1273 = vadd.f32 0.0, %v1272
        %v1274 = vpop.f32.mrf.mxu0
        %v1275 = vadd.f32 0.0, %v1274
        %1276 = vmatmul.bf16.gmra.mxu0 %v657
        %v1277 = vpop.f32.mrf.mxu0
        %v1278 = vadd.f32 0.0, %v1277
        %v1279 = vpop.f32.mrf.mxu0
        %v1280 = vadd.f32 0.0, %v1279
        %1281 = vmatmul.bf16.gmra.mxu0 %v661
        %v1282 = vpop.f32.mrf.mxu0
        %v1283 = vadd.f32 0.0, %v1282
        %v1284 = vpop.f32.mrf.mxu0
        %v1285 = vadd.f32 0.0, %v1284
        %1286 = vmatmul.bf16.gmra.mxu0 %v665
        %v1287 = vpop.f32.mrf.mxu0
        %v1288 = vadd.f32 0.0, %v1287
        %v1289 = vpop.f32.mrf.mxu0
        %v1290 = vadd.f32 0.0, %v1289
        %1291 = vmatmul.bf16.gmra.mxu0 %v669
        %v1292 = vpop.f32.mrf.mxu0
        %v1293 = vadd.f32 0.0, %v1292
        %v1294 = vpop.f32.mrf.mxu0
        %v1295 = vadd.f32 0.0, %v1294
        %1296 = vmatmul.bf16.gmra.mxu0 %v673
        %v1297 = vpop.f32.mrf.mxu0
        %v1298 = vadd.f32 0.0, %v1297
        %v1299 = vpop.f32.mrf.mxu0
        %v1300 = vadd.f32 0.0, %v1299
        %1301 = vmatmul.bf16.gmra.mxu0 %v677
        %v1302 = vpop.f32.mrf.mxu0
        %v1303 = vadd.f32 0.0, %v1302
        %v1304 = vpop.f32.mrf.mxu0
        %v1305 = vadd.f32 0.0, %v1304
        %1306 = vdwg.mxu0
        %1307 = vmatpush.bf16.msra.mxu0 %v940
        %1308 = vmatpush.bf16.msra.mxu0 %v938
        %1309 = vmatpush.bf16.msra.mxu0 %v936
        %1310 = vmatpush.bf16.msra.mxu0 %v934
        %1311 = vmatpush.bf16.msra.mxu0 %v932
        %1312 = vmatpush.bf16.msra.mxu0 %v930
        %1313 = vmatpush.bf16.msra.mxu0 %v928
        %1314 = vmatpush.bf16.msra.mxu0 %v926
        %1315 = vmatmul.bf16.gmra.mxu0 %v646
        %v1316 = vpop.f32.mrf.mxu0
        %v1317 = vadd.f32 %v1263, %v1316
        %v1318 = vpop.f32.mrf.mxu0
        %v1319 = vadd.f32 %v1265, %v1318
        %1320 = vmatmul.bf16.gmra.mxu0 %v650
        %v1321 = vpop.f32.mrf.mxu0
        %v1322 = vadd.f32 %v1268, %v1321
        %v1323 = vpop.f32.mrf.mxu0
        %v1324 = vadd.f32 %v1270, %v1323
        %1325 = vmatmul.bf16.gmra.mxu0 %v654
        %v1326 = vpop.f32.mrf.mxu0
        %v1327 = vadd.f32 %v1273, %v1326
        %v1328 = vpop.f32.mrf.mxu0
        %v1329 = vadd.f32 %v1275, %v1328
        %1330 = vmatmul.bf16.gmra.mxu0 %v658
        %v1331 = vpop.f32.mrf.mxu0
        %v1332 = vadd.f32 %v1278, %v1331
        %v1333 = vpop.f32.mrf.mxu0
        %v1334 = vadd.f32 %v1280, %v1333
        %1335 = vmatmul.bf16.gmra.mxu0 %v662
        %v1336 = vpop.f32.mrf.mxu0
        %v1337 = vadd.f32 %v1283, %v1336
        %v1338 = vpop.f32.mrf.mxu0
        %v1339 = vadd.f32 %v1285, %v1338
        %1340 = vmatmul.bf16.gmra.mxu0 %v666
        %v1341 = vpop.f32.mrf.mxu0
        %v1342 = vadd.f32 %v1288, %v1341
        %v1343 = vpop.f32.mrf.mxu0
        %v1344 = vadd.f32 %v1290, %v1343
        %1345 = vmatmul.bf16.gmra.mxu0 %v670
        %v1346 = vpop.f32.mrf.mxu0
        %v1347 = vadd.f32 %v1293, %v1346
        %v1348 = vpop.f32.mrf.mxu0
        %v1349 = vadd.f32 %v1295, %v1348
        %1350 = vmatmul.bf16.gmra.mxu0 %v674
        %v1351 = vpop.f32.mrf.mxu0
        %v1352 = vadd.f32 %v1298, %v1351
        %v1353 = vpop.f32.mrf.mxu0
        %v1354 = vadd.f32 %v1300, %v1353
        %1355 = vmatmul.bf16.gmra.mxu0 %v678
        %v1356 = vpop.f32.mrf.mxu0
        %v1357 = vadd.f32 %v1303, %v1356
        %v1358 = vpop.f32.mrf.mxu0
        %v1359 = vadd.f32 %v1305, %v1358
        %1360 = vdwg.mxu0
        %1361 = vmatpush.bf16.msra.mxu0 %v956
        %1362 = vmatpush.bf16.msra.mxu0 %v954
        %1363 = vmatpush.bf16.msra.mxu0 %v952
        %1364 = vmatpush.bf16.msra.mxu0 %v950
        %1365 = vmatpush.bf16.msra.mxu0 %v948
        %1366 = vmatpush.bf16.msra.mxu0 %v946
        %1367 = vmatpush.bf16.msra.mxu0 %v944
        %1368 = vmatpush.bf16.msra.mxu0 %v942
        %1369 = vmatmul.bf16.gmra.mxu0 %v647
        %v1370 = vpop.f32.mrf.mxu0
        %v1371 = vadd.f32 %v1317, %v1370
        %v1372 = vpop.f32.mrf.mxu0
        %v1373 = vadd.f32 %v1319, %v1372
        %1374 = vmatmul.bf16.gmra.mxu0 %v651
        %v1375 = vpop.f32.mrf.mxu0
        %v1376 = vadd.f32 %v1322, %v1375
        %v1377 = vpop.f32.mrf.mxu0
        %v1378 = vadd.f32 %v1324, %v1377
        %1379 = vmatmul.bf16.gmra.mxu0 %v655
        %v1380 = vpop.f32.mrf.mxu0
        %v1381 = vadd.f32 %v1327, %v1380
        %v1382 = vpop.f32.mrf.mxu0
        %v1383 = vadd.f32 %v1329, %v1382
        %1384 = vmatmul.bf16.gmra.mxu0 %v659
        %v1385 = vpop.f32.mrf.mxu0
        %v1386 = vadd.f32 %v1332, %v1385
        %v1387 = vpop.f32.mrf.mxu0
        %v1388 = vadd.f32 %v1334, %v1387
        %1389 = vmatmul.bf16.gmra.mxu0 %v663
        %v1390 = vpop.f32.mrf.mxu0
        %v1391 = vadd.f32 %v1337, %v1390
        %v1392 = vpop.f32.mrf.mxu0
        %v1393 = vadd.f32 %v1339, %v1392
        %1394 = vmatmul.bf16.gmra.mxu0 %v667
        %v1395 = vpop.f32.mrf.mxu0
        %v1396 = vadd.f32 %v1342, %v1395
        %v1397 = vpop.f32.mrf.mxu0
        %v1398 = vadd.f32 %v1344, %v1397
        %1399 = vmatmul.bf16.gmra.mxu0 %v671
        %v1400 = vpop.f32.mrf.mxu0
        %v1401 = vadd.f32 %v1347, %v1400
        %v1402 = vpop.f32.mrf.mxu0
        %v1403 = vadd.f32 %v1349, %v1402
        %1404 = vmatmul.bf16.gmra.mxu0 %v675
        %v1405 = vpop.f32.mrf.mxu0
        %v1406 = vadd.f32 %v1352, %v1405
        %v1407 = vpop.f32.mrf.mxu0
        %v1408 = vadd.f32 %v1354, %v1407
        %1409 = vmatmul.bf16.gmra.mxu0 %v679
        %v1410 = vpop.f32.mrf.mxu0
        %v1411 = vadd.f32 %v1357, %v1410
        %v1412 = vpop.f32.mrf.mxu0
        %v1413 = vadd.f32 %v1359, %v1412
        %1414 = vdwg.mxu0
        %1415 = vmatpush.bf16.msra.mxu0 %v972
        %1416 = vmatpush.bf16.msra.mxu0 %v970
        %1417 = vmatpush.bf16.msra.mxu0 %v968
        %1418 = vmatpush.bf16.msra.mxu0 %v966
        %1419 = vmatpush.bf16.msra.mxu0 %v964
        %1420 = vmatpush.bf16.msra.mxu0 %v962
        %1421 = vmatpush.bf16.msra.mxu0 %v960
        %1422 = vmatpush.bf16.msra.mxu0 %v958
        %1423 = vmatmul.bf16.gmra.mxu0 %v648
        %v1424 = vpop.f32.mrf.mxu0
        %v1425 = vadd.f32 %v1371, %v1424
        %v1426 = vpop.f32.mrf.mxu0
        %v1427 = vadd.f32 %v1373, %v1426
        %1428 = vmatmul.bf16.gmra.mxu0 %v652
        %v1429 = vpop.f32.mrf.mxu0
        %v1430 = vadd.f32 %v1376, %v1429
        %v1431 = vpop.f32.mrf.mxu0
        %v1432 = vadd.f32 %v1378, %v1431
        %1433 = vmatmul.bf16.gmra.mxu0 %v656
        %v1434 = vpop.f32.mrf.mxu0
        %v1435 = vadd.f32 %v1381, %v1434
        %v1436 = vpop.f32.mrf.mxu0
        %v1437 = vadd.f32 %v1383, %v1436
        %1438 = vmatmul.bf16.gmra.mxu0 %v660
        %v1439 = vpop.f32.mrf.mxu0
        %v1440 = vadd.f32 %v1386, %v1439
        %v1441 = vpop.f32.mrf.mxu0
        %v1442 = vadd.f32 %v1388, %v1441
        %1443 = vmatmul.bf16.gmra.mxu0 %v664
        %v1444 = vpop.f32.mrf.mxu0
        %v1445 = vadd.f32 %v1391, %v1444
        %v1446 = vpop.f32.mrf.mxu0
        %v1447 = vadd.f32 %v1393, %v1446
        %1448 = vmatmul.bf16.gmra.mxu0 %v668
        %v1449 = vpop.f32.mrf.mxu0
        %v1450 = vadd.f32 %v1396, %v1449
        %v1451 = vpop.f32.mrf.mxu0
        %v1452 = vadd.f32 %v1398, %v1451
        %1453 = vmatmul.bf16.gmra.mxu0 %v672
        %v1454 = vpop.f32.mrf.mxu0
        %v1455 = vadd.f32 %v1401, %v1454
        %v1456 = vpop.f32.mrf.mxu0
        %v1457 = vadd.f32 %v1403, %v1456
        %1458 = vmatmul.bf16.gmra.mxu0 %v676
        %v1459 = vpop.f32.mrf.mxu0
        %v1460 = vadd.f32 %v1406, %v1459
        %v1461 = vpop.f32.mrf.mxu0
        %v1462 = vadd.f32 %v1408, %v1461
        %1463 = vmatmul.bf16.gmra.mxu0 %v680
        %v1464 = vpop.f32.mrf.mxu0
        %v1465 = vadd.f32 %v1411, %v1464
        %v1466 = vpop.f32.mrf.mxu0
        %v1467 = vadd.f32 %v1413, %v1466
        %1468 = vdwg.mxu0
        %v1469 = vadd.f32 %v401, %v1209
        %v1470 = vadd.f32 %v402, %v1425
        %v1471 = vadd.f32 %v403, %v1211
        %v1472 = vadd.f32 %v404, %v1427
        %v1473 = vadd.f32 %v405, %v1214
        %v1474 = vadd.f32 %v406, %v1430
        %v1475 = vadd.f32 %v407, %v1216
        %v1476 = vadd.f32 %v408, %v1432
        %v1477 = vadd.f32 %v409, %v1219
        %v1478 = vadd.f32 %v410, %v1435
        %v1479 = vadd.f32 %v411, %v1221
        %v1480 = vadd.f32 %v412, %v1437
        %v1481 = vadd.f32 %v413, %v1224
        %v1482 = vadd.f32 %v414, %v1440
        %v1483 = vadd.f32 %v415, %v1226
        %v1484 = vadd.f32 %v416, %v1442
        %v1485 = vadd.f32 %v417, %v1229
        %v1486 = vadd.f32 %v418, %v1445
        %v1487 = vadd.f32 %v419, %v1231
        %v1488 = vadd.f32 %v420, %v1447
        %v1489 = vadd.f32 %v421, %v1234
        %v1490 = vadd.f32 %v422, %v1450
        %v1491 = vadd.f32 %v423, %v1236
        %v1492 = vadd.f32 %v424, %v1452
        %v1493 = vadd.f32 %v425, %v1239
        %v1494 = vadd.f32 %v426, %v1455
        %v1495 = vadd.f32 %v427, %v1241
        %v1496 = vadd.f32 %v428, %v1457
        %v1497 = vadd.f32 %v429, %v1244
        %v1498 = vadd.f32 %v430, %v1460
        %v1499 = vadd.f32 %v431, %v1246
        %v1500 = vadd.f32 %v432, %v1462
        %v1501 = vadd.f32 %v433, %v1249
        %v1502 = vadd.f32 %v434, %v1465
        %v1503 = vadd.f32 %v435, %v1251
        %v1504 = vadd.f32 %v436, %v1467
        %1505 = vst [vmem:[#allocation2] sm:$0xff] %v1469
        %1506 = vst [vmem:[#allocation2 + $0x8] sm:$0xff] %v1470
        %1507 = vst [vmem:[#allocation2 + $0x10] sm:$0xff] %v1471
        %1508 = vst [vmem:[#allocation2 + $0x18] sm:$0xff] %v1472
        %1509 = vst [vmem:[#allocation2 + $0x20] sm:$0xff] %v1473
        %1510 = vst [vmem:[#allocation2 + $0x28] sm:$0xff] %v1474
        %1511 = vst [vmem:[#allocation2 + $0x30] sm:$0xff] %v1475
        %1512 = vst [vmem:[#allocation2 + $0x38] sm:$0xff] %v1476
        %1513 = vst [vmem:[#allocation2 + $0x40] sm:$0xff] %v1477
        %1514 = vst [vmem:[#allocation2 + $0x48] sm:$0xff] %v1478
        %1515 = vst [vmem:[#allocation2 + $0x50] sm:$0xff] %v1479
        %1516 = vst [vmem:[#allocation2 + $0x58] sm:$0xff] %v1480
        %1517 = vst [vmem:[#allocation2 + $0x60] sm:$0xff] %v1481
        %1518 = vst [vmem:[#allocation2 + $0x68] sm:$0xff] %v1482
        %1519 = vst [vmem:[#allocation2 + $0x70] sm:$0xff] %v1483
        %1520 = vst [vmem:[#allocation2 + $0x78] sm:$0xff] %v1484
        %1521 = vst [vmem:[#allocation2 + $0x80] sm:$0xff] %v1485
        %1522 = vst [vmem:[#allocation2 + $0x88] sm:$0xff] %v1486
        %1523 = vst [vmem:[#allocation2 + $0x90] sm:$0xff] %v1487
        %1524 = vst [vmem:[#allocation2 + $0x98] sm:$0xff] %v1488
        %1525 = vst [vmem:[#allocation2 + $0xa0] sm:$0xff] %v1489
        %1526 = vst [vmem:[#allocation2 + $0xa8] sm:$0xff] %v1490
        %1527 = vst [vmem:[#allocation2 + $0xb0] sm:$0xff] %v1491
        %1528 = vst [vmem:[#allocation2 + $0xb8] sm:$0xff] %v1492
        %1529 = vst [vmem:[#allocation2 + $0xc0] sm:$0xff] %v1493
        %1530 = vst [vmem:[#allocation2 + $0xc8] sm:$0xff] %v1494
        %1531 = vst [vmem:[#allocation2 + $0xd0] sm:$0xff] %v1495
        %1532 = vst [vmem:[#allocation2 + $0xd8] sm:$0xff] %v1496
        %1533 = vst [vmem:[#allocation2 + $0xe0] sm:$0xff] %v1497
        %1534 = vst [vmem:[#allocation2 + $0xe8] sm:$0xff] %v1498
        %1535 = vst [vmem:[#allocation2 + $0xf0] sm:$0xff] %v1499
        %1536 = vst [vmem:[#allocation2 + $0xf8] sm:$0xff] %v1500
        %1537 = vst [vmem:[#allocation2 + $0x100] sm:$0xff] %v1501
        %1538 = vst [vmem:[#allocation2 + $0x108] sm:$0xff] %v1502
        %1539 = vst [vmem:[#allocation2 + $0x110] sm:$0xff] %v1503
        %1540 = vst [vmem:[#allocation2 + $0x118] sm:$0xff] %v1504
        %p1541 = scmp.eq.s32.totalorder %s21, 3
        // Predicated region
        $region60: #{discriminator_forward.7} parent=50 // pred_check
          %p1542 = pneg %p1541
        $region61: #{discriminator_forward.7} parent=50 // pred_check_branch
          %1544 = sbr.rel (%p1542) target = $region63
        $region62: #{discriminator_forward.7} parent=50 // pred_region
          %v1545 = vld [vmem:[#allocation2] sm:$0xff]
          %v1546 = vld [vmem:[#allocation2 + $0x8] sm:$0xff]
          %v1547 = vld [vmem:[#allocation2 + $0x10] sm:$0xff]
          %v1548 = vld [vmem:[#allocation2 + $0x18] sm:$0xff]
          %v1549 = vld [vmem:[#allocation2 + $0x20] sm:$0xff]
          %v1550 = vld [vmem:[#allocation2 + $0x28] sm:$0xff]
          %v1551 = vld [vmem:[#allocation2 + $0x30] sm:$0xff]
          %v1552 = vld [vmem:[#allocation2 + $0x38] sm:$0xff]
          %v1553 = vld [vmem:[#allocation2 + $0x40] sm:$0xff]
          %v1554 = vld [vmem:[#allocation2 + $0x48] sm:$0xff]
          %v1555 = vld [vmem:[#allocation2 + $0x50] sm:$0xff]
          %v1556 = vld [vmem:[#allocation2 + $0x58] sm:$0xff]
          %v1557 = vld [vmem:[#allocation2 + $0x60] sm:$0xff]
          %v1558 = vld [vmem:[#allocation2 + $0x68] sm:$0xff]
          %v1559 = vld [vmem:[#allocation2 + $0x70] sm:$0xff]
          %v1560 = vld [vmem:[#allocation2 + $0x78] sm:$0xff]
          %v1561 = vld [vmem:[#allocation2 + $0x80] sm:$0xff]
          %v1562 = vld [vmem:[#allocation2 + $0x88] sm:$0xff]
          %v1563 = vld [vmem:[#allocation2 + $0x90] sm:$0xff]
          %v1564 = vld [vmem:[#allocation2 + $0x98] sm:$0xff]
          %v1565 = vld [vmem:[#allocation2 + $0xa0] sm:$0xff]
          %v1566 = vld [vmem:[#allocation2 + $0xa8] sm:$0xff]
          %v1567 = vld [vmem:[#allocation2 + $0xb0] sm:$0xff]
          %v1568 = vld [vmem:[#allocation2 + $0xb8] sm:$0xff]
          %v1569 = vld [vmem:[#allocation2 + $0xc0] sm:$0xff]
          %v1570 = vld [vmem:[#allocation2 + $0xc8] sm:$0xff]
          %v1571 = vld [vmem:[#allocation2 + $0xd0] sm:$0xff]
          %v1572 = vld [vmem:[#allocation2 + $0xd8] sm:$0xff]
          %v1573 = vld [vmem:[#allocation2 + $0xe0] sm:$0xff]
          %v1574 = vld [vmem:[#allocation2 + $0xe8] sm:$0xff]
          %v1575 = vld [vmem:[#allocation2 + $0xf0] sm:$0xff]
          %v1576 = vld [vmem:[#allocation2 + $0xf8] sm:$0xff]
          %v1577 = vld [vmem:[#allocation2 + $0x100] sm:$0xff]
          %v1578 = vld [vmem:[#allocation2 + $0x108] sm:$0xff]
          %v1579 = vld [vmem:[#allocation2 + $0x110] sm:$0xff]
          %v1580 = vld [vmem:[#allocation2 + $0x118] sm:$0xff]
          %v1581 = vld [vmem:[%s347] sm:$0x3]
          %v1583 = vperm.slane %v1581, 0
          %v1584 = vperm.slane %v1581, 1
          %v1587 = vadd.f32 %v1545, %v1583
          %v1588 = vadd.f32 %v1546, %v1584
          %v1589 = vadd.f32 %v1547, %v1583
          %v1590 = vadd.f32 %v1548, %v1584
          %v1591 = vadd.f32 %v1549, %v1583
          %v1592 = vadd.f32 %v1550, %v1584
          %v1593 = vadd.f32 %v1551, %v1583
          %v1594 = vadd.f32 %v1552, %v1584
          %v1595 = vadd.f32 %v1553, %v1583
          %v1596 = vadd.f32 %v1554, %v1584
          %v1597 = vadd.f32 %v1555, %v1583
          %v1598 = vadd.f32 %v1556, %v1584
          %v1599 = vadd.f32 %v1557, %v1583
          %v1600 = vadd.f32 %v1558, %v1584
          %v1601 = vadd.f32 %v1559, %v1583
          %v1602 = vadd.f32 %v1560, %v1584
          %v1603 = vadd.f32 %v1561, %v1583
          %v1604 = vadd.f32 %v1562, %v1584
          %v1605 = vadd.f32 %v1563, %v1583
          %v1606 = vadd.f32 %v1564, %v1584
          %v1607 = vadd.f32 %v1565, %v1583
          %v1608 = vadd.f32 %v1566, %v1584
          %v1609 = vadd.f32 %v1567, %v1583
          %v1610 = vadd.f32 %v1568, %v1584
          %v1611 = vadd.f32 %v1569, %v1583
          %v1612 = vadd.f32 %v1570, %v1584
          %v1613 = vadd.f32 %v1571, %v1583
          %v1614 = vadd.f32 %v1572, %v1584
          %v1615 = vadd.f32 %v1573, %v1583
          %v1616 = vadd.f32 %v1574, %v1584
          %v1617 = vadd.f32 %v1575, %v1583
          %v1618 = vadd.f32 %v1576, %v1584
          %v1619 = vadd.f32 %v1577, %v1583
          %v1620 = vadd.f32 %v1578, %v1584
          %v1621 = vadd.f32 %v1579, %v1583
          %v1622 = vadd.f32 %v1580, %v1584
          %vm1623 = vcmp.ge.f32.partialorder %v1587, 0.0
          %vm1624 = vcmp.ge.f32.partialorder %v1588, 0.0
          %vm1625 = vcmp.ge.f32.partialorder %v1589, 0.0
          %vm1626 = vcmp.ge.f32.partialorder %v1590, 0.0
          %vm1627 = vcmp.ge.f32.partialorder %v1591, 0.0
          %vm1628 = vcmp.ge.f32.partialorder %v1592, 0.0
          %vm1629 = vcmp.ge.f32.partialorder %v1593, 0.0
          %vm1630 = vcmp.ge.f32.partialorder %v1594, 0.0
          %vm1631 = vcmp.ge.f32.partialorder %v1595, 0.0
          %vm1632 = vcmp.ge.f32.partialorder %v1596, 0.0
          %vm1633 = vcmp.ge.f32.partialorder %v1597, 0.0
          %vm1634 = vcmp.ge.f32.partialorder %v1598, 0.0
          %vm1635 = vcmp.ge.f32.partialorder %v1599, 0.0
          %vm1636 = vcmp.ge.f32.partialorder %v1600, 0.0
          %vm1637 = vcmp.ge.f32.partialorder %v1601, 0.0
          %vm1638 = vcmp.ge.f32.partialorder %v1602, 0.0
          %vm1639 = vcmp.ge.f32.partialorder %v1603, 0.0
          %vm1640 = vcmp.ge.f32.partialorder %v1604, 0.0
          %vm1641 = vcmp.ge.f32.partialorder %v1605, 0.0
          %vm1642 = vcmp.ge.f32.partialorder %v1606, 0.0
          %vm1643 = vcmp.ge.f32.partialorder %v1607, 0.0
          %vm1644 = vcmp.ge.f32.partialorder %v1608, 0.0
          %vm1645 = vcmp.ge.f32.partialorder %v1609, 0.0
          %vm1646 = vcmp.ge.f32.partialorder %v1610, 0.0
          %vm1647 = vcmp.ge.f32.partialorder %v1611, 0.0
          %vm1648 = vcmp.ge.f32.partialorder %v1612, 0.0
          %vm1649 = vcmp.ge.f32.partialorder %v1613, 0.0
          %vm1650 = vcmp.ge.f32.partialorder %v1614, 0.0
          %vm1651 = vcmp.ge.f32.partialorder %v1615, 0.0
          %vm1652 = vcmp.ge.f32.partialorder %v1616, 0.0
          %vm1653 = vcmp.ge.f32.partialorder %v1617, 0.0
          %vm1654 = vcmp.ge.f32.partialorder %v1618, 0.0
          %vm1655 = vcmp.ge.f32.partialorder %v1619, 0.0
          %vm1656 = vcmp.ge.f32.partialorder %v1620, 0.0
          %vm1657 = vcmp.ge.f32.partialorder %v1621, 0.0
          %vm1658 = vcmp.ge.f32.partialorder %v1622, 0.0
          %v1659 = vmul.f32 %v1587, 0.2
          %v1660 = vmul.f32 %v1588, 0.2
          %v1661 = vmul.f32 %v1589, 0.2
          %v1662 = vmul.f32 %v1590, 0.2
          %v1663 = vmul.f32 %v1591, 0.2
          %v1664 = vmul.f32 %v1592, 0.2
          %v1665 = vmul.f32 %v1593, 0.2
          %v1666 = vmul.f32 %v1594, 0.2
          %v1667 = vmul.f32 %v1595, 0.2
          %v1668 = vmul.f32 %v1596, 0.2
          %v1669 = vmul.f32 %v1597, 0.2
          %v1670 = vmul.f32 %v1598, 0.2
          %v1671 = vmul.f32 %v1599, 0.2
          %v1672 = vmul.f32 %v1600, 0.2
          %v1673 = vmul.f32 %v1601, 0.2
          %v1674 = vmul.f32 %v1602, 0.2
          %v1675 = vmul.f32 %v1603, 0.2
          %v1676 = vmul.f32 %v1604, 0.2
          %v1677 = vmul.f32 %v1605, 0.2
          %v1678 = vmul.f32 %v1606, 0.2
          %v1679 = vmul.f32 %v1607, 0.2
          %v1680 = vmul.f32 %v1608, 0.2
          %v1681 = vmul.f32 %v1609, 0.2
          %v1682 = vmul.f32 %v1610, 0.2
          %v1683 = vmul.f32 %v1611, 0.2
          %v1684 = vmul.f32 %v1612, 0.2
          %v1685 = vmul.f32 %v1613, 0.2
          %v1686 = vmul.f32 %v1614, 0.2
          %v1687 = vmul.f32 %v1615, 0.2
          %v1688 = vmul.f32 %v1616, 0.2
          %v1689 = vmul.f32 %v1617, 0.2
          %v1690 = vmul.f32 %v1618, 0.2
          %v1691 = vmul.f32 %v1619, 0.2
          %v1692 = vmul.f32 %v1620, 0.2
          %v1693 = vmul.f32 %v1621, 0.2
          %v1694 = vmul.f32 %v1622, 0.2
          %v1695 = vsel %vm1623, %v1587, %v1659
          %v1696 = vsel %vm1624, %v1588, %v1660
          %v1697 = vsel %vm1625, %v1589, %v1661
          %v1698 = vsel %vm1626, %v1590, %v1662
          %v1699 = vsel %vm1627, %v1591, %v1663
          %v1700 = vsel %vm1628, %v1592, %v1664
          %v1701 = vsel %vm1629, %v1593, %v1665
          %v1702 = vsel %vm1630, %v1594, %v1666
          %v1703 = vsel %vm1631, %v1595, %v1667
          %v1704 = vsel %vm1632, %v1596, %v1668
          %v1705 = vsel %vm1633, %v1597, %v1669
          %v1706 = vsel %vm1634, %v1598, %v1670
          %v1707 = vsel %vm1635, %v1599, %v1671
          %v1708 = vsel %vm1636, %v1600, %v1672
          %v1709 = vsel %vm1637, %v1601, %v1673
          %v1710 = vsel %vm1638, %v1602, %v1674
          %v1711 = vsel %vm1639, %v1603, %v1675
          %v1712 = vsel %vm1640, %v1604, %v1676
          %v1713 = vsel %vm1641, %v1605, %v1677
          %v1714 = vsel %vm1642, %v1606, %v1678
          %v1715 = vsel %vm1643, %v1607, %v1679
          %v1716 = vsel %vm1644, %v1608, %v1680
          %v1717 = vsel %vm1645, %v1609, %v1681
          %v1718 = vsel %vm1646, %v1610, %v1682
          %v1719 = vsel %vm1647, %v1611, %v1683
          %v1720 = vsel %vm1648, %v1612, %v1684
          %v1721 = vsel %vm1649, %v1613, %v1685
          %v1722 = vsel %vm1650, %v1614, %v1686
          %v1723 = vsel %vm1651, %v1615, %v1687
          %v1724 = vsel %vm1652, %v1616, %v1688
          %v1725 = vsel %vm1653, %v1617, %v1689
          %v1726 = vsel %vm1654, %v1618, %v1690
          %v1727 = vsel %vm1655, %v1619, %v1691
          %v1728 = vsel %vm1656, %v1620, %v1692
          %v1729 = vsel %vm1657, %v1621, %v1693
          %v1730 = vsel %vm1658, %v1622, %v1694
          %v1731 = vpack.c.bf16 %v1696, %v1695
          %v1732 = vpack.c.bf16 %v1698, %v1697
          %v1733 = vpack.c.bf16 %v1700, %v1699
          %v1734 = vpack.c.bf16 %v1702, %v1701
          %v1735 = vpack.c.bf16 %v1704, %v1703
          %v1736 = vpack.c.bf16 %v1706, %v1705
          %v1737 = vpack.c.bf16 %v1708, %v1707
          %v1738 = vpack.c.bf16 %v1710, %v1709
          %v1739 = vpack.c.bf16 %v1712, %v1711
          %v1740 = vpack.c.bf16 %v1714, %v1713
          %v1741 = vpack.c.bf16 %v1716, %v1715
          %v1742 = vpack.c.bf16 %v1718, %v1717
          %v1743 = vpack.c.bf16 %v1720, %v1719
          %v1744 = vpack.c.bf16 %v1722, %v1721
          %v1745 = vpack.c.bf16 %v1724, %v1723
          %v1746 = vpack.c.bf16 %v1726, %v1725
          %v1747 = vpack.c.bf16 %v1728, %v1727
          %v1748 = vpack.c.bf16 %v1730, %v1729
          %1749 = vst [vmem:[%s358] sm:$0xff] %v1731
          %1750 = vst [vmem:[%s358 + $0x8] sm:$0xff] %v1732
          %1751 = vst [vmem:[%s358 + $0x10] sm:$0xff] %v1733
          %1752 = vst [vmem:[%s358 + $0x18] sm:$0xff] %v1734
          %1753 = vst [vmem:[%s358 + $0x20] sm:$0xff] %v1735
          %1754 = vst [vmem:[%s358 + $0x28] sm:$0xff] %v1736
          %1755 = vst [vmem:[%s358 + $0x30] sm:$0xff] %v1737
          %1756 = vst [vmem:[%s358 + $0x38] sm:$0xff] %v1738
          %1757 = vst [vmem:[%s358 + $0x40] sm:$0xff] %v1739
          %1758 = vst [vmem:[%s358 + $0x48] sm:$0xff] %v1740
          %1759 = vst [vmem:[%s358 + $0x50] sm:$0xff] %v1741
          %1760 = vst [vmem:[%s358 + $0x58] sm:$0xff] %v1742
          %1761 = vst [vmem:[%s358 + $0x60] sm:$0xff] %v1743
          %1762 = vst [vmem:[%s358 + $0x68] sm:$0xff] %v1744
          %1763 = vst [vmem:[%s358 + $0x70] sm:$0xff] %v1745
          %1764 = vst [vmem:[%s358 + $0x78] sm:$0xff] %v1746
          %1765 = vst [vmem:[%s358 + $0x80] sm:$0xff] %v1747
          %1766 = vst [vmem:[%s358 + $0x88] sm:$0xff] %v1748
        $region63: #{discriminator_forward.7} parent=50 // pred_fallthru
          _
        %s1767 = smul.u32 18, %s19
        %s1768 = smul.u32 2, %s20
        %p1769 = scmp.lt.s32.totalorder %s1767, 35
        %s1770 = scalar_select %p1769, %s1767, 35
        %p1771 = scmp.lt.s32.totalorder %s1768, 1
        %s1772 = scalar_select %p1771, %s1768, 1
        %s1773 = smul.addr %s1770, 2
        %s1774 = sadd.s32 %s1772, %s1773
        %s1775 = smul.addr %s1774, 4
        %s1776 = scalar_lea.vmem %s3, %s1775
        // Predicated region
        $region64: #{discriminator_forward.7} parent=50 // pred_check
          %p1777 = pneg %p135
        $region65: #{discriminator_forward.7} parent=50 // pred_check_branch
          %1779 = sbr.rel (%p1777) target = $region67
        $region66: #{discriminator_forward.7} parent=50 // pred_region
          %s1780 = smul.u32 18, %s19
          %s1781 = smul.u32 2, %s20
        $region67: #{discriminator_forward.7} parent=50 // pred_fallthru
          _
      $region51: #{discriminator_forward.7} parent=5 // pred_fallthru
        _
      %p1782 = scmp.le.s32.totalorder 2, %s9
      // Predicated region
      $region68: #{discriminator_forward.7} parent=5 // pred_check
        %p1783 = pneg %p1782
      $region69: #{discriminator_forward.7} parent=5 // pred_check_branch
        %1785 = sbr.rel (%p1783) target = $region71
      $region70: #{discriminator_forward.7} parent=5 // pred_region
        %s1786 = ssub.s32 %s9, 2
        // Predicated region
        $region72: #{discriminator_forward.7} parent=70 // pred_check
          %p1787 = pneg %p141
        $region73: #{discriminator_forward.7} parent=70 // pred_check_branch
          %1789 = sbr.rel (%p1787) target = $region75
        $region74: #{discriminator_forward.7} parent=70 // pred_region
          %s1790 = smul.u32 18, %s22
          %s1791 = smul.u32 2, %s23
          %p1792 = scmp.lt.s32.totalorder %s1790, 35
          %s1793 = scalar_select %p1792, %s1790, 35
          %p1794 = scmp.lt.s32.totalorder %s1791, 1
          %s1795 = scalar_select %p1794, %s1791, 1
          %s1796 = smul.addr %s1793, 2
          %s1797 = sadd.s32 %s1795, %s1796
          %s1798 = smul.addr %s1797, 4
          %s1799 = scalar_lea.vmem %s3, %s1798
        $region75: #{discriminator_forward.7} parent=70 // pred_fallthru
          _
      $region71: #{discriminator_forward.7} parent=5 // pred_fallthru
        _
    $region6: #{discriminator_forward.7} parent=1 // loop_footer
      %s13 = sadd.s32 1, %s9
    $region7: #{discriminator_forward.7} parent=1 // loop_footer_branch
      %8 = sbr.rel target = $region3
    $region8: #{discriminator_forward.7} parent=1 // loop_exit
      _

// kernel: discriminator_forward.8
$region0: #{discriminator_forward.8}
  #allocation0 [shape = 'u32[]', space=smem, size = 0x4, offset = 0x4, fixed_abs, tag = 'smem constant byte address 0x4 - core index']
  #allocation1 [shape = 'u32[72,128]{1,0:T(1,128)}', space=vmem, size = 0x9000, scoped, tag = 'internal scratch']
  #allocation2 [shape = 'f32[72,256]{1,0:T(8,128)}', space=vmem, size = 0x12000, scoped, tag = 'scratch operand']
  %s0 = inlined_call_operand.vmem [shape: bf16[72,4096], index: 0, kind: input, shape index: {}]
  %s1 = inlined_call_operand.vmem [shape: bf16[4096,512], index: 1, kind: input, shape index: {}]
  %s2 = inlined_call_operand.vmem [shape: f32[1,512], index: 2, kind: input, shape index: {}]
  %s3 = inlined_call_operand.vmem [shape: bf16[72,512], index: 3, kind: output, shape index: {}]
  %s4 = sld [smem:[#allocation0]]
  $region148: #{discriminator_forward.8} parent=0
    _
  %s6 = ssub.s32 1, %s4
  %s7 = scalar_select 0, %s6, %s4
  $region1: #{discriminator_forward.8} parent=0
    #allocation3 [shape = 'u8[147456]{0}', space=vmem, size = 0x24000, scoped, tag = 'input window, operand 0']
    #allocation4 [shape = 'u8[524288]{0}', space=vmem, size = 0x80000, scoped, tag = 'input window, operand 1']
    #allocation5 [shape = 'u8[73728]{0}', space=vmem, size = 0x12000, scoped, tag = 'output window, operand 0']
    loop: start=0, step=1, limit=18
    $region2: #{discriminator_forward.8} parent=1 // loop_pre_header
      _
    $region3: #{discriminator_forward.8} parent=1 // loop_header
      %s9 = sphi 0, %s13
      %p10 = scmp.ge.s32.totalorder %s9, 18
      %s16 = sphi 0, %s35
      %s17 = sphi 0, %s31
      %s18 = sphi 0, %s27
      %s19 = sphi 0, %s16
      %s20 = sphi 0, %s17
      %s21 = sphi 0, %s18
      %s22 = sphi 0, %s19
      %s23 = sphi 0, %s20
      %s24 = sphi 0, %s21
      %s40 = sphi 0, %s42
      %s43 = sphi 0, %s40
      %s44 = sphi 0, %s43
      %s60 = sphi 0, %s44
      %s68 = sphi 0, %s70
      %s71 = sphi 0, %s68
      %s72 = sphi 0, %s71
      %s88 = sphi 0, %s72
      %s94 = sphi 0, %s96
      %s97 = sphi 0, %s94
      %s98 = sphi 0, %s97
      %s114 = sphi 0, %s98
      %s122 = sphi 0, %s124
      %s125 = sphi 0, %s122
      %s126 = sphi 0, %s125
      %s142 = sphi 0, %s126
    $region4: #{discriminator_forward.8} parent=1 // loop_header_branch
      %12 = sbr.rel (%p10) target = $region8
    $region5: #{discriminator_forward.8} parent=1 // loop_body
      %s14 = ssub.s32 %s9, 1
      %s15 = ssub.s32 %s9, 2
      %s25 = sadd.s32 1, %s18
      %p26 = scmp.ge.s32.totalorder %s25, 8
      %s27 = scalar_select %p26, 0, %s25
      %s28 = sadd.s32 1, %s17
      %s29 = scalar_select %p26, %s28, %s17
      %p30 = scmp.ge.s32.totalorder %s29, 2
      %s31 = scalar_select %p30, 0, %s29
      %s32 = sadd.s32 1, %s16
      %s33 = scalar_select %p30, %s32, %s16
      %p34 = scmp.ge.s32.totalorder %s33, 1
      %s35 = scalar_select %p34, 0, %s33
      %s36 = ssub.s32 %s16, %s35
      %s37 = ssub.s32 %s18, %s27
      %s38 = sor.u32 %s36, %s37
      %p39 = scmp.eq.s32.totalorder %s38, 0
      %s41 = sadd.s32 %s40, 1
      %s42 = scalar_select %p39, %s40, %s41
      %p45 = pneg %p39
      %p46 = scmp.eq.s32.totalorder %s9, 15
      %p47 = por %p45, %p46
      %p48 = scmp.ne.s32.totalorder %s40, %s43
      %p49 = scmp.eq.s32.totalorder %s9, 0
      %p50 = por %p48, %p49
      %p51 = scmp.ne.s32.totalorder %s40, %s43
      %p52 = scmp.eq.s32.totalorder %s14, 15
      %p53 = por %p51, %p52
      %p54 = scmp.ne.s32.totalorder %s43, %s44
      %p55 = scmp.eq.s32.totalorder %s14, 0
      %p56 = por %p54, %p55
      %p57 = scmp.ne.s32.totalorder %s43, %s44
      %p58 = scmp.eq.s32.totalorder %s15, 15
      %p59 = por %p57, %p58
      %p61 = scmp.ne.s32.totalorder %s44, %s60
      %p62 = scmp.eq.s32.totalorder %s15, 0
      %p63 = por %p61, %p62
      %s64 = ssub.s32 %s18, %s27
      %s65 = ssub.s32 %s17, %s31
      %s66 = sor.u32 %s64, %s65
      %p67 = scmp.eq.s32.totalorder %s66, 0
      %s69 = sadd.s32 %s68, 1
      %s70 = scalar_select %p67, %s68, %s69
      %p73 = pneg %p67
      %p74 = scmp.eq.s32.totalorder %s9, 15
      %p75 = por %p73, %p74
      %p76 = scmp.ne.s32.totalorder %s68, %s71
      %p77 = scmp.eq.s32.totalorder %s9, 0
      %p78 = por %p76, %p77
      %p79 = scmp.ne.s32.totalorder %s68, %s71
      %p80 = scmp.eq.s32.totalorder %s14, 15
      %p81 = por %p79, %p80
      %p82 = scmp.ne.s32.totalorder %s71, %s72
      %p83 = scmp.eq.s32.totalorder %s14, 0
      %p84 = por %p82, %p83
      %p85 = scmp.ne.s32.totalorder %s71, %s72
      %p86 = scmp.eq.s32.totalorder %s15, 15
      %p87 = por %p85, %p86
      %p89 = scmp.ne.s32.totalorder %s72, %s88
      %p90 = scmp.eq.s32.totalorder %s15, 0
      %p91 = por %p89, %p90
      %s92 = ssub.s32 %s17, %s31
      %p93 = scmp.eq.s32.totalorder %s92, 0
      %s95 = sadd.s32 %s94, 1
      %s96 = scalar_select %p93, %s94, %s95
      %p99 = pneg %p93
      %p100 = scmp.eq.s32.totalorder %s9, 15
      %p101 = por %p99, %p100
      %p102 = scmp.ne.s32.totalorder %s94, %s97
      %p103 = scmp.eq.s32.totalorder %s9, 0
      %p104 = por %p102, %p103
      %p105 = scmp.ne.s32.totalorder %s94, %s97
      %p106 = scmp.eq.s32.totalorder %s14, 15
      %p107 = por %p105, %p106
      %p108 = scmp.ne.s32.totalorder %s97, %s98
      %p109 = scmp.eq.s32.totalorder %s14, 0
      %p110 = por %p108, %p109
      %p111 = scmp.ne.s32.totalorder %s97, %s98
      %p112 = scmp.eq.s32.totalorder %s15, 15
      %p113 = por %p111, %p112
      %p115 = scmp.ne.s32.totalorder %s98, %s114
      %p116 = scmp.eq.s32.totalorder %s15, 0
      %p117 = por %p115, %p116
      %s118 = ssub.s32 %s16, %s35
      %s119 = ssub.s32 %s17, %s31
      %s120 = sor.u32 %s118, %s119
      %p121 = scmp.eq.s32.totalorder %s120, 0
      %s123 = sadd.s32 %s122, 1
      %s124 = scalar_select %p121, %s122, %s123
      %p127 = pneg %p121
      %p128 = scmp.eq.s32.totalorder %s9, 15
      %p129 = por %p127, %p128
      %p130 = scmp.ne.s32.totalorder %s122, %s125
      %p131 = scmp.eq.s32.totalorder %s9, 0
      %p132 = por %p130, %p131
      %p133 = scmp.ne.s32.totalorder %s122, %s125
      %p134 = scmp.eq.s32.totalorder %s14, 15
      %p135 = por %p133, %p134
      %p136 = scmp.ne.s32.totalorder %s125, %s126
      %p137 = scmp.eq.s32.totalorder %s14, 0
      %p138 = por %p136, %p137
      %p139 = scmp.ne.s32.totalorder %s125, %s126
      %p140 = scmp.eq.s32.totalorder %s15, 15
      %p141 = por %p139, %p140
      %p143 = scmp.ne.s32.totalorder %s126, %s142
      %p144 = scmp.eq.s32.totalorder %s15, 0
      %p145 = por %p143, %p144
      %p146 = scmp.le.s32.totalorder 1, %s9
      %p147 = scmp.lt.s32.totalorder %s9, 17
      %p148 = pnand %p146, %p147
      %p149 = pneg %p148
      // Predicated region
      $region9: #{discriminator_forward.8} parent=5 // pred_check
        _
      $region10: #{discriminator_forward.8} parent=5 // pred_check_branch
        %151 = sbr.rel (%p148) target = $region12
      $region11: #{discriminator_forward.8} parent=5 // pred_region
        %s152 = ssub.s32 %s9, 1
      $region12: #{discriminator_forward.8} parent=5 // pred_fallthru
        _
      %p153 = scmp.lt.s32.totalorder %s9, 16
      // Predicated region
      $region13: #{discriminator_forward.8} parent=5 // pred_check
        %p154 = pneg %p153
      $region14: #{discriminator_forward.8} parent=5 // pred_check_branch
        %156 = sbr.rel (%p154) target = $region16
      $region15: #{discriminator_forward.8} parent=5 // pred_region
        // Predicated region
        $region17: #{discriminator_forward.8} parent=15 // pred_check
          %p157 = pneg %p50
        $region18: #{discriminator_forward.8} parent=15 // pred_check_branch
          %159 = sbr.rel (%p157) target = $region20
        $region19: #{discriminator_forward.8} parent=15 // pred_region
          %s160 = sand.u32 %s40, 1
          %s161 = sand.u32 %s40, 1
          %s162 = smul.addr %s161, 144
          %s163 = scalar_lea.vmem [#allocation3], %s162
          %s164 = smul.u32 9, %s16
          %s165 = smul.u32 4, %s18
          %s166 = smul.addr %s164, 32
          %s167 = sadd.s32 %s165, %s166
          %s168 = smul.addr %s167, 4
          %s169 = scalar_lea.vmem %s0, %s168
          // Predicated region
          $region21: #{discriminator_forward.8} parent=19 // pred_check
            _
          $region22: #{discriminator_forward.8} parent=19 // pred_check_branch
            %171 = sbr.rel (0) target = $region24
          $region23: #{discriminator_forward.8} parent=19 // pred_region
            // Predicated region
            $region25: #{discriminator_forward.8} parent=23 // pred_check
              _
            $region26: #{discriminator_forward.8} parent=23 // pred_check_branch
              %173 = sbr.rel (0) target = $region28
            $region27: #{discriminator_forward.8} parent=23 // pred_region
              loop: start=0, step=1, limit=1
              $region29: #{discriminator_forward.8} parent=27 // loop_pre_header
                _
              $region30: #{discriminator_forward.8} parent=27 // loop_header
                %s175 = sphi 0, %s179
                %p176 = scmp.ge.s32.totalorder %s175, 1
                %s180 = sphi %s169, %s169
                %s181 = sphi %s163, %s163
              $region31: #{discriminator_forward.8} parent=27 // loop_header_branch
                %178 = sbr.rel (%p176) target = $region35
              $region32: #{discriminator_forward.8} parent=27 // loop_body
                %v182 = vld [vmem:[%s180] sm:$0xff]
                %183 = vst [vmem:[%s181] sm:$0xff] %v182
                %v184 = vld [vmem:[%s180 + $0x8] sm:$0xff]
                %185 = vst [vmem:[%s181 + $0x8] sm:$0xff] %v184
                %v186 = vld [vmem:[%s180 + $0x80] sm:$0xff]
                %187 = vst [vmem:[%s181 + $0x10] sm:$0xff] %v186
                %v188 = vld [vmem:[%s180 + $0x88] sm:$0xff]
                %189 = vst [vmem:[%s181 + $0x18] sm:$0xff] %v188
                %v190 = vld [vmem:[%s180 + $0x100] sm:$0xff]
                %191 = vst [vmem:[%s181 + $0x20] sm:$0xff] %v190
                %v192 = vld [vmem:[%s180 + $0x108] sm:$0xff]
                %193 = vst [vmem:[%s181 + $0x28] sm:$0xff] %v192
                %v194 = vld [vmem:[%s180 + $0x180] sm:$0xff]
                %195 = vst [vmem:[%s181 + $0x30] sm:$0xff] %v194
                %v196 = vld [vmem:[%s180 + $0x188] sm:$0xff]
                %197 = vst [vmem:[%s181 + $0x38] sm:$0xff] %v196
                %v198 = vld [vmem:[%s180 + $0x200] sm:$0xff]
                %199 = vst [vmem:[%s181 + $0x40] sm:$0xff] %v198
                %v200 = vld [vmem:[%s180 + $0x208] sm:$0xff]
                %201 = vst [vmem:[%s181 + $0x48] sm:$0xff] %v200
                %v202 = vld [vmem:[%s180 + $0x280] sm:$0xff]
                %203 = vst [vmem:[%s181 + $0x50] sm:$0xff] %v202
                %v204 = vld [vmem:[%s180 + $0x288] sm:$0xff]
                %205 = vst [vmem:[%s181 + $0x58] sm:$0xff] %v204
                %v206 = vld [vmem:[%s180 + $0x300] sm:$0xff]
                %207 = vst [vmem:[%s181 + $0x60] sm:$0xff] %v206
                %v208 = vld [vmem:[%s180 + $0x308] sm:$0xff]
                %209 = vst [vmem:[%s181 + $0x68] sm:$0xff] %v208
                %v210 = vld [vmem:[%s180 + $0x380] sm:$0xff]
                %211 = vst [vmem:[%s181 + $0x70] sm:$0xff] %v210
                %v212 = vld [vmem:[%s180 + $0x388] sm:$0xff]
                %213 = vst [vmem:[%s181 + $0x78] sm:$0xff] %v212
                %v214 = vld [vmem:[%s180 + $0x400] sm:$0xff]
                %215 = vst [vmem:[%s181 + $0x80] sm:$0xff] %v214
                %v216 = vld [vmem:[%s180 + $0x408] sm:$0xff]
                %217 = vst [vmem:[%s181 + $0x88] sm:$0xff] %v216
              $region33: #{discriminator_forward.8} parent=27 // loop_footer
                %s179 = sadd.s32 1, %s175
              $region34: #{discriminator_forward.8} parent=27 // loop_footer_branch
                %174 = sbr.rel target = $region30
              $region35: #{discriminator_forward.8} parent=27 // loop_exit
                _
            $region28: #{discriminator_forward.8} parent=23 // pred_fallthru
              _
            // Predicated region
            $region36: #{discriminator_forward.8} parent=23 // pred_check
              _
            $region37: #{discriminator_forward.8} parent=23 // pred_check_branch
              %219 = sbr.rel target = $region39
            $region38: #{discriminator_forward.8} parent=23 // pred_region
              _
            $region39: #{discriminator_forward.8} parent=23 // pred_fallthru
              _
          $region24: #{discriminator_forward.8} parent=19 // pred_fallthru
            _
          %220 = vnop
        $region20: #{discriminator_forward.8} parent=15 // pred_fallthru
          _
        // Predicated region
        $region40: #{discriminator_forward.8} parent=15 // pred_check
          %p221 = pneg %p78
        $region41: #{discriminator_forward.8} parent=15 // pred_check_branch
          %223 = sbr.rel (%p221) target = $region43
        $region42: #{discriminator_forward.8} parent=15 // pred_region
          %s224 = sand.u32 %s68, 1
          %s225 = sand.u32 %s68, 1
          %s226 = smul.addr %s225, 512
          %s227 = scalar_lea.vmem [#allocation4], %s226
          %s228 = smul.u32 64, %s18
          %s229 = smul.u32 2, %s17
          %s230 = smul.addr %s228, 4
          %s231 = sadd.s32 %s229, %s230
          %s232 = smul.addr %s231, 4
          %s233 = scalar_lea.vmem %s1, %s232
          // Predicated region
          $region44: #{discriminator_forward.8} parent=42 // pred_check
            _
          $region45: #{discriminator_forward.8} parent=42 // pred_check_branch
            %235 = sbr.rel (0) target = $region47
          $region46: #{discriminator_forward.8} parent=42 // pred_region
            // Predicated region
            $region48: #{discriminator_forward.8} parent=46 // pred_check
              _
            $region49: #{discriminator_forward.8} parent=46 // pred_check_branch
              %237 = sbr.rel (0) target = $region51
            $region50: #{discriminator_forward.8} parent=46 // pred_region
              // Predicated region
              $region63: #{discriminator_forward.8} parent=50 // pred_check
                _
              $region64: #{discriminator_forward.8} parent=50 // pred_check_branch
                %379 = sbr.rel (0) target = $region66
              $region65: #{discriminator_forward.8} parent=50 // pred_region
                loop: start=0, step=1, limit=1
                $region67: #{discriminator_forward.8} parent=65 // loop_pre_header
                  _
                $region68: #{discriminator_forward.8} parent=65 // loop_header
                  %s381 = sphi 0, %s385
                  %p382 = scmp.ge.s32.totalorder %s381, 1
                  %s386 = sphi %s233, %s233
                  %s387 = sphi %s227, %s227
                $region69: #{discriminator_forward.8} parent=65 // loop_header_branch
                  %384 = sbr.rel (%p382) target = $region73
                $region70: #{discriminator_forward.8} parent=65 // loop_body
                  %v388 = vld [vmem:[%s386] sm:$0xff]
                  %389 = vst [vmem:[%s387] sm:$0xff] %v388
                  %v390 = vld [vmem:[%s386 + $0x10] sm:$0xff]
                  %391 = vst [vmem:[%s387 + $0x8] sm:$0xff] %v390
                  %v392 = vld [vmem:[%s386 + $0x20] sm:$0xff]
                  %393 = vst [vmem:[%s387 + $0x10] sm:$0xff] %v392
                  %v394 = vld [vmem:[%s386 + $0x30] sm:$0xff]
                  %395 = vst [vmem:[%s387 + $0x18] sm:$0xff] %v394
                  %v396 = vld [vmem:[%s386 + $0x40] sm:$0xff]
                  %397 = vst [vmem:[%s387 + $0x20] sm:$0xff] %v396
                  %v398 = vld [vmem:[%s386 + $0x50] sm:$0xff]
                  %399 = vst [vmem:[%s387 + $0x28] sm:$0xff] %v398
                  %v400 = vld [vmem:[%s386 + $0x60] sm:$0xff]
                  %401 = vst [vmem:[%s387 + $0x30] sm:$0xff] %v400
                  %v402 = vld [vmem:[%s386 + $0x70] sm:$0xff]
                  %403 = vst [vmem:[%s387 + $0x38] sm:$0xff] %v402
                  %v404 = vld [vmem:[%s386 + $0x80] sm:$0xff]
                  %405 = vst [vmem:[%s387 + $0x40] sm:$0xff] %v404
                  %v406 = vld [vmem:[%s386 + $0x90] sm:$0xff]
                  %407 = vst [vmem:[%s387 + $0x48] sm:$0xff] %v406
                  %v408 = vld [vmem:[%s386 + $0xa0] sm:$0xff]
                  %409 = vst [vmem:[%s387 + $0x50] sm:$0xff] %v408
                  %v410 = vld [vmem:[%s386 + $0xb0] sm:$0xff]
                  %411 = vst [vmem:[%s387 + $0x58] sm:$0xff] %v410
                  %v412 = vld [vmem:[%s386 + $0xc0] sm:$0xff]
                  %413 = vst [vmem:[%s387 + $0x60] sm:$0xff] %v412
                  %v414 = vld [vmem:[%s386 + $0xd0] sm:$0xff]
                  %415 = vst [vmem:[%s387 + $0x68] sm:$0xff] %v414
                  %v416 = vld [vmem:[%s386 + $0xe0] sm:$0xff]
                  %417 = vst [vmem:[%s387 + $0x70] sm:$0xff] %v416
                  %v418 = vld [vmem:[%s386 + $0xf0] sm:$0xff]
                  %419 = vst [vmem:[%s387 + $0x78] sm:$0xff] %v418
                  %v420 = vld [vmem:[%s386 + $0x100] sm:$0xff]
                  %421 = vst [vmem:[%s387 + $0x80] sm:$0xff] %v420
                  %v422 = vld [vmem:[%s386 + $0x110] sm:$0xff]
                  %423 = vst [vmem:[%s387 + $0x88] sm:$0xff] %v422
                  %v424 = vld [vmem:[%s386 + $0x120] sm:$0xff]
                  %425 = vst [vmem:[%s387 + $0x90] sm:$0xff] %v424
                  %v426 = vld [vmem:[%s386 + $0x130] sm:$0xff]
                  %427 = vst [vmem:[%s387 + $0x98] sm:$0xff] %v426
                  %v428 = vld [vmem:[%s386 + $0x140] sm:$0xff]
                  %429 = vst [vmem:[%s387 + $0xa0] sm:$0xff] %v428
                  %v430 = vld [vmem:[%s386 + $0x150] sm:$0xff]
                  %431 = vst [vmem:[%s387 + $0xa8] sm:$0xff] %v430
                  %v432 = vld [vmem:[%s386 + $0x160] sm:$0xff]
                  %433 = vst [vmem:[%s387 + $0xb0] sm:$0xff] %v432
                  %v434 = vld [vmem:[%s386 + $0x170] sm:$0xff]
                  %435 = vst [vmem:[%s387 + $0xb8] sm:$0xff] %v434
                  %v436 = vld [vmem:[%s386 + $0x180] sm:$0xff]
                  %437 = vst [vmem:[%s387 + $0xc0] sm:$0xff] %v436
                  %v438 = vld [vmem:[%s386 + $0x190] sm:$0xff]
                  %439 = vst [vmem:[%s387 + $0xc8] sm:$0xff] %v438
                  %v440 = vld [vmem:[%s386 + $0x1a0] sm:$0xff]
                  %441 = vst [vmem:[%s387 + $0xd0] sm:$0xff] %v440
                  %v442 = vld [vmem:[%s386 + $0x1b0] sm:$0xff]
                  %443 = vst [vmem:[%s387 + $0xd8] sm:$0xff] %v442
                  %v444 = vld [vmem:[%s386 + $0x1c0] sm:$0xff]
                  %445 = vst [vmem:[%s387 + $0xe0] sm:$0xff] %v444
                  %v446 = vld [vmem:[%s386 + $0x1d0] sm:$0xff]
                  %447 = vst [vmem:[%s387 + $0xe8] sm:$0xff] %v446
                  %v448 = vld [vmem:[%s386 + $0x1e0] sm:$0xff]
                  %449 = vst [vmem:[%s387 + $0xf0] sm:$0xff] %v448
                  %v450 = vld [vmem:[%s386 + $0x1f0] sm:$0xff]
                  %451 = vst [vmem:[%s387 + $0xf8] sm:$0xff] %v450
                  %v452 = vld [vmem:[%s386 + $0x200] sm:$0xff]
                  %453 = vst [vmem:[%s387 + $0x100] sm:$0xff] %v452
                  %v454 = vld [vmem:[%s386 + $0x210] sm:$0xff]
                  %455 = vst [vmem:[%s387 + $0x108] sm:$0xff] %v454
                  %v456 = vld [vmem:[%s386 + $0x220] sm:$0xff]
                  %457 = vst [vmem:[%s387 + $0x110] sm:$0xff] %v456
                  %v458 = vld [vmem:[%s386 + $0x230] sm:$0xff]
                  %459 = vst [vmem:[%s387 + $0x118] sm:$0xff] %v458
                  %v460 = vld [vmem:[%s386 + $0x240] sm:$0xff]
                  %461 = vst [vmem:[%s387 + $0x120] sm:$0xff] %v460
                  %v462 = vld [vmem:[%s386 + $0x250] sm:$0xff]
                  %463 = vst [vmem:[%s387 + $0x128] sm:$0xff] %v462
                  %v464 = vld [vmem:[%s386 + $0x260] sm:$0xff]
                  %465 = vst [vmem:[%s387 + $0x130] sm:$0xff] %v464
                  %v466 = vld [vmem:[%s386 + $0x270] sm:$0xff]
                  %467 = vst [vmem:[%s387 + $0x138] sm:$0xff] %v466
                  %v468 = vld [vmem:[%s386 + $0x280] sm:$0xff]
                  %469 = vst [vmem:[%s387 + $0x140] sm:$0xff] %v468
                  %v470 = vld [vmem:[%s386 + $0x290] sm:$0xff]
                  %471 = vst [vmem:[%s387 + $0x148] sm:$0xff] %v470
                  %v472 = vld [vmem:[%s386 + $0x2a0] sm:$0xff]
                  %473 = vst [vmem:[%s387 + $0x150] sm:$0xff] %v472
                  %v474 = vld [vmem:[%s386 + $0x2b0] sm:$0xff]
                  %475 = vst [vmem:[%s387 + $0x158] sm:$0xff] %v474
                  %v476 = vld [vmem:[%s386 + $0x2c0] sm:$0xff]
                  %477 = vst [vmem:[%s387 + $0x160] sm:$0xff] %v476
                  %v478 = vld [vmem:[%s386 + $0x2d0] sm:$0xff]
                  %479 = vst [vmem:[%s387 + $0x168] sm:$0xff] %v478
                  %v480 = vld [vmem:[%s386 + $0x2e0] sm:$0xff]
                  %481 = vst [vmem:[%s387 + $0x170] sm:$0xff] %v480
                  %v482 = vld [vmem:[%s386 + $0x2f0] sm:$0xff]
                  %483 = vst [vmem:[%s387 + $0x178] sm:$0xff] %v482
                  %v484 = vld [vmem:[%s386 + $0x300] sm:$0xff]
                  %485 = vst [vmem:[%s387 + $0x180] sm:$0xff] %v484
                  %v486 = vld [vmem:[%s386 + $0x310] sm:$0xff]
                  %487 = vst [vmem:[%s387 + $0x188] sm:$0xff] %v486
                  %v488 = vld [vmem:[%s386 + $0x320] sm:$0xff]
                  %489 = vst [vmem:[%s387 + $0x190] sm:$0xff] %v488
                  %v490 = vld [vmem:[%s386 + $0x330] sm:$0xff]
                  %491 = vst [vmem:[%s387 + $0x198] sm:$0xff] %v490
                  %v492 = vld [vmem:[%s386 + $0x340] sm:$0xff]
                  %493 = vst [vmem:[%s387 + $0x1a0] sm:$0xff] %v492
                  %v494 = vld [vmem:[%s386 + $0x350] sm:$0xff]
                  %495 = vst [vmem:[%s387 + $0x1a8] sm:$0xff] %v494
                  %v496 = vld [vmem:[%s386 + $0x360] sm:$0xff]
                  %497 = vst [vmem:[%s387 + $0x1b0] sm:$0xff] %v496
                  %v498 = vld [vmem:[%s386 + $0x370] sm:$0xff]
                  %499 = vst [vmem:[%s387 + $0x1b8] sm:$0xff] %v498
                  %v500 = vld [vmem:[%s386 + $0x380] sm:$0xff]
                  %501 = vst [vmem:[%s387 + $0x1c0] sm:$0xff] %v500
                  %v502 = vld [vmem:[%s386 + $0x390] sm:$0xff]
                  %503 = vst [vmem:[%s387 + $0x1c8] sm:$0xff] %v502
                  %v504 = vld [vmem:[%s386 + $0x3a0] sm:$0xff]
                  %505 = vst [vmem:[%s387 + $0x1d0] sm:$0xff] %v504
                  %v506 = vld [vmem:[%s386 + $0x3b0] sm:$0xff]
                  %507 = vst [vmem:[%s387 + $0x1d8] sm:$0xff] %v506
                  %v508 = vld [vmem:[%s386 + $0x3c0] sm:$0xff]
                  %509 = vst [vmem:[%s387 + $0x1e0] sm:$0xff] %v508
                  %v510 = vld [vmem:[%s386 + $0x3d0] sm:$0xff]
                  %511 = vst [vmem:[%s387 + $0x1e8] sm:$0xff] %v510
                  %v512 = vld [vmem:[%s386 + $0x3e0] sm:$0xff]
                  %513 = vst [vmem:[%s387 + $0x1f0] sm:$0xff] %v512
                  %v514 = vld [vmem:[%s386 + $0x3f0] sm:$0xff]
                  %515 = vst [vmem:[%s387 + $0x1f8] sm:$0xff] %v514
                $region71: #{discriminator_forward.8} parent=65 // loop_footer
                  %s385 = sadd.s32 1, %s381
                $region72: #{discriminator_forward.8} parent=65 // loop_footer_branch
                  %380 = sbr.rel target = $region68
                $region73: #{discriminator_forward.8} parent=65 // loop_exit
                  _
              $region66: #{discriminator_forward.8} parent=50 // pred_fallthru
                _
              // Predicated region
              $region74: #{discriminator_forward.8} parent=50 // pred_check
                _
              $region75: #{discriminator_forward.8} parent=50 // pred_check_branch
                %517 = sbr.rel target = $region77
              $region76: #{discriminator_forward.8} parent=50 // pred_region
                _
              $region77: #{discriminator_forward.8} parent=50 // pred_fallthru
                _
            $region51: #{discriminator_forward.8} parent=46 // pred_fallthru
              _
            // Predicated region
            $region52: #{discriminator_forward.8} parent=46 // pred_check
              _
            $region53: #{discriminator_forward.8} parent=46 // pred_check_branch
              %239 = sbr.rel target = $region55
            $region54: #{discriminator_forward.8} parent=46 // pred_region
              %s241 = ssub.s32 256, 1
              loop: start=0, step=1, limit=1
              $region56: #{discriminator_forward.8} parent=54 // loop_pre_header
                _
              $region57: #{discriminator_forward.8} parent=54 // loop_header
                %s243 = sphi 0, %s247
                %p244 = scmp.ge.s32.totalorder %s243, 1
                %s248 = sphi %s233, %s233
                %s249 = sphi %s227, %s227
              $region58: #{discriminator_forward.8} parent=54 // loop_header_branch
                %246 = sbr.rel (%p244) target = $region62
              $region59: #{discriminator_forward.8} parent=54 // loop_body
                %v250 = vld [vmem:[%s248] sm:%s241]
                %251 = vst [vmem:[%s249] sm:%s241] %v250
                %v252 = vld [vmem:[%s248 + $0x10] sm:%s241]
                %253 = vst [vmem:[%s249 + $0x8] sm:%s241] %v252
                %v254 = vld [vmem:[%s248 + $0x20] sm:%s241]
                %255 = vst [vmem:[%s249 + $0x10] sm:%s241] %v254
                %v256 = vld [vmem:[%s248 + $0x30] sm:%s241]
                %257 = vst [vmem:[%s249 + $0x18] sm:%s241] %v256
                %v258 = vld [vmem:[%s248 + $0x40] sm:%s241]
                %259 = vst [vmem:[%s249 + $0x20] sm:%s241] %v258
                %v260 = vld [vmem:[%s248 + $0x50] sm:%s241]
                %261 = vst [vmem:[%s249 + $0x28] sm:%s241] %v260
                %v262 = vld [vmem:[%s248 + $0x60] sm:%s241]
                %263 = vst [vmem:[%s249 + $0x30] sm:%s241] %v262
                %v264 = vld [vmem:[%s248 + $0x70] sm:%s241]
                %265 = vst [vmem:[%s249 + $0x38] sm:%s241] %v264
                %v266 = vld [vmem:[%s248 + $0x80] sm:%s241]
                %267 = vst [vmem:[%s249 + $0x40] sm:%s241] %v266
                %v268 = vld [vmem:[%s248 + $0x90] sm:%s241]
                %269 = vst [vmem:[%s249 + $0x48] sm:%s241] %v268
                %v270 = vld [vmem:[%s248 + $0xa0] sm:%s241]
                %271 = vst [vmem:[%s249 + $0x50] sm:%s241] %v270
                %v272 = vld [vmem:[%s248 + $0xb0] sm:%s241]
                %273 = vst [vmem:[%s249 + $0x58] sm:%s241] %v272
                %v274 = vld [vmem:[%s248 + $0xc0] sm:%s241]
                %275 = vst [vmem:[%s249 + $0x60] sm:%s241] %v274
                %v276 = vld [vmem:[%s248 + $0xd0] sm:%s241]
                %277 = vst [vmem:[%s249 + $0x68] sm:%s241] %v276
                %v278 = vld [vmem:[%s248 + $0xe0] sm:%s241]
                %279 = vst [vmem:[%s249 + $0x70] sm:%s241] %v278
                %v280 = vld [vmem:[%s248 + $0xf0] sm:%s241]
                %281 = vst [vmem:[%s249 + $0x78] sm:%s241] %v280
                %v282 = vld [vmem:[%s248 + $0x100] sm:%s241]
                %283 = vst [vmem:[%s249 + $0x80] sm:%s241] %v282
                %v284 = vld [vmem:[%s248 + $0x110] sm:%s241]
                %285 = vst [vmem:[%s249 + $0x88] sm:%s241] %v284
                %v286 = vld [vmem:[%s248 + $0x120] sm:%s241]
                %287 = vst [vmem:[%s249 + $0x90] sm:%s241] %v286
                %v288 = vld [vmem:[%s248 + $0x130] sm:%s241]
                %289 = vst [vmem:[%s249 + $0x98] sm:%s241] %v288
                %v290 = vld [vmem:[%s248 + $0x140] sm:%s241]
                %291 = vst [vmem:[%s249 + $0xa0] sm:%s241] %v290
                %v292 = vld [vmem:[%s248 + $0x150] sm:%s241]
                %293 = vst [vmem:[%s249 + $0xa8] sm:%s241] %v292
                %v294 = vld [vmem:[%s248 + $0x160] sm:%s241]
                %295 = vst [vmem:[%s249 + $0xb0] sm:%s241] %v294
                %v296 = vld [vmem:[%s248 + $0x170] sm:%s241]
                %297 = vst [vmem:[%s249 + $0xb8] sm:%s241] %v296
                %v298 = vld [vmem:[%s248 + $0x180] sm:%s241]
                %299 = vst [vmem:[%s249 + $0xc0] sm:%s241] %v298
                %v300 = vld [vmem:[%s248 + $0x190] sm:%s241]
                %301 = vst [vmem:[%s249 + $0xc8] sm:%s241] %v300
                %v302 = vld [vmem:[%s248 + $0x1a0] sm:%s241]
                %303 = vst [vmem:[%s249 + $0xd0] sm:%s241] %v302
                %v304 = vld [vmem:[%s248 + $0x1b0] sm:%s241]
                %305 = vst [vmem:[%s249 + $0xd8] sm:%s241] %v304
                %v306 = vld [vmem:[%s248 + $0x1c0] sm:%s241]
                %307 = vst [vmem:[%s249 + $0xe0] sm:%s241] %v306
                %v308 = vld [vmem:[%s248 + $0x1d0] sm:%s241]
                %309 = vst [vmem:[%s249 + $0xe8] sm:%s241] %v308
                %v310 = vld [vmem:[%s248 + $0x1e0] sm:%s241]
                %311 = vst [vmem:[%s249 + $0xf0] sm:%s241] %v310
                %v312 = vld [vmem:[%s248 + $0x1f0] sm:%s241]
                %313 = vst [vmem:[%s249 + $0xf8] sm:%s241] %v312
                %v314 = vld [vmem:[%s248 + $0x200] sm:%s241]
                %315 = vst [vmem:[%s249 + $0x100] sm:%s241] %v314
                %v316 = vld [vmem:[%s248 + $0x210] sm:%s241]
                %317 = vst [vmem:[%s249 + $0x108] sm:%s241] %v316
                %v318 = vld [vmem:[%s248 + $0x220] sm:%s241]
                %319 = vst [vmem:[%s249 + $0x110] sm:%s241] %v318
                %v320 = vld [vmem:[%s248 + $0x230] sm:%s241]
                %321 = vst [vmem:[%s249 + $0x118] sm:%s241] %v320
                %v322 = vld [vmem:[%s248 + $0x240] sm:%s241]
                %323 = vst [vmem:[%s249 + $0x120] sm:%s241] %v322
                %v324 = vld [vmem:[%s248 + $0x250] sm:%s241]
                %325 = vst [vmem:[%s249 + $0x128] sm:%s241] %v324
                %v326 = vld [vmem:[%s248 + $0x260] sm:%s241]
                %327 = vst [vmem:[%s249 + $0x130] sm:%s241] %v326
                %v328 = vld [vmem:[%s248 + $0x270] sm:%s241]
                %329 = vst [vmem:[%s249 + $0x138] sm:%s241] %v328
                %v330 = vld [vmem:[%s248 + $0x280] sm:%s241]
                %331 = vst [vmem:[%s249 + $0x140] sm:%s241] %v330
                %v332 = vld [vmem:[%s248 + $0x290] sm:%s241]
                %333 = vst [vmem:[%s249 + $0x148] sm:%s241] %v332
                %v334 = vld [vmem:[%s248 + $0x2a0] sm:%s241]
                %335 = vst [vmem:[%s249 + $0x150] sm:%s241] %v334
                %v336 = vld [vmem:[%s248 + $0x2b0] sm:%s241]
                %337 = vst [vmem:[%s249 + $0x158] sm:%s241] %v336
                %v338 = vld [vmem:[%s248 + $0x2c0] sm:%s241]
                %339 = vst [vmem:[%s249 + $0x160] sm:%s241] %v338
                %v340 = vld [vmem:[%s248 + $0x2d0] sm:%s241]
                %341 = vst [vmem:[%s249 + $0x168] sm:%s241] %v340
                %v342 = vld [vmem:[%s248 + $0x2e0] sm:%s241]
                %343 = vst [vmem:[%s249 + $0x170] sm:%s241] %v342
                %v344 = vld [vmem:[%s248 + $0x2f0] sm:%s241]
                %345 = vst [vmem:[%s249 + $0x178] sm:%s241] %v344
                %v346 = vld [vmem:[%s248 + $0x300] sm:%s241]
                %347 = vst [vmem:[%s249 + $0x180] sm:%s241] %v346
                %v348 = vld [vmem:[%s248 + $0x310] sm:%s241]
                %349 = vst [vmem:[%s249 + $0x188] sm:%s241] %v348
                %v350 = vld [vmem:[%s248 + $0x320] sm:%s241]
                %351 = vst [vmem:[%s249 + $0x190] sm:%s241] %v350
                %v352 = vld [vmem:[%s248 + $0x330] sm:%s241]
                %353 = vst [vmem:[%s249 + $0x198] sm:%s241] %v352
                %v354 = vld [vmem:[%s248 + $0x340] sm:%s241]
                %355 = vst [vmem:[%s249 + $0x1a0] sm:%s241] %v354
                %v356 = vld [vmem:[%s248 + $0x350] sm:%s241]
                %357 = vst [vmem:[%s249 + $0x1a8] sm:%s241] %v356
                %v358 = vld [vmem:[%s248 + $0x360] sm:%s241]
                %359 = vst [vmem:[%s249 + $0x1b0] sm:%s241] %v358
                %v360 = vld [vmem:[%s248 + $0x370] sm:%s241]
                %361 = vst [vmem:[%s249 + $0x1b8] sm:%s241] %v360
                %v362 = vld [vmem:[%s248 + $0x380] sm:%s241]
                %363 = vst [vmem:[%s249 + $0x1c0] sm:%s241] %v362
                %v364 = vld [vmem:[%s248 + $0x390] sm:%s241]
                %365 = vst [vmem:[%s249 + $0x1c8] sm:%s241] %v364
                %v366 = vld [vmem:[%s248 + $0x3a0] sm:%s241]
                %367 = vst [vmem:[%s249 + $0x1d0] sm:%s241] %v366
                %v368 = vld [vmem:[%s248 + $0x3b0] sm:%s241]
                %369 = vst [vmem:[%s249 + $0x1d8] sm:%s241] %v368
                %v370 = vld [vmem:[%s248 + $0x3c0] sm:%s241]
                %371 = vst [vmem:[%s249 + $0x1e0] sm:%s241] %v370
                %v372 = vld [vmem:[%s248 + $0x3d0] sm:%s241]
                %373 = vst [vmem:[%s249 + $0x1e8] sm:%s241] %v372
                %v374 = vld [vmem:[%s248 + $0x3e0] sm:%s241]
                %375 = vst [vmem:[%s249 + $0x1f0] sm:%s241] %v374
                %v376 = vld [vmem:[%s248 + $0x3f0] sm:%s241]
                %377 = vst [vmem:[%s249 + $0x1f8] sm:%s241] %v376
              $region60: #{discriminator_forward.8} parent=54 // loop_footer
                %s247 = sadd.s32 1, %s243
              $region61: #{discriminator_forward.8} parent=54 // loop_footer_branch
                %242 = sbr.rel target = $region57
              $region62: #{discriminator_forward.8} parent=54 // loop_exit
                _
            $region55: #{discriminator_forward.8} parent=46 // pred_fallthru
              _
          $region47: #{discriminator_forward.8} parent=42 // pred_fallthru
            _
          %518 = vnop
        $region43: #{discriminator_forward.8} parent=15 // pred_fallthru
          _
        // Predicated region
        $region78: #{discriminator_forward.8} parent=15 // pred_check
          %p519 = pneg %p104
        $region79: #{discriminator_forward.8} parent=15 // pred_check_branch
          %521 = sbr.rel (%p519) target = $region81
        $region80: #{discriminator_forward.8} parent=15 // pred_region
          %s522 = smul.u32 2, %s17
          %p523 = scmp.lt.s32.totalorder %s522, 3
          %s524 = scalar_select %p523, %s522, 3
          %s525 = scalar_lea.vmem %s2, %s524
          %s526 = smul.u32 2, %s17
        $region81: #{discriminator_forward.8} parent=15 // pred_fallthru
          _
      $region16: #{discriminator_forward.8} parent=5 // pred_fallthru
        _
      %p527 = scmp.le.s32.totalorder 1, %s9
      %p528 = scmp.lt.s32.totalorder %s9, 17
      %p529 = pnand %p527, %p528
      %p530 = pneg %p529
      // Predicated region
      $region82: #{discriminator_forward.8} parent=5 // pred_check
        _
      $region83: #{discriminator_forward.8} parent=5 // pred_check_branch
        %532 = sbr.rel (%p529) target = $region85
      $region84: #{discriminator_forward.8} parent=5 // pred_region
        %s533 = ssub.s32 %s9, 1
        %s534 = sand.u32 %s43, 1
        %s535 = sand.u32 %s43, 1
        %s536 = smul.addr %s535, 144
        %s537 = scalar_lea.vmem [#allocation3], %s536
        // Predicated region
        $region86: #{discriminator_forward.8} parent=84 // pred_check
          %p538 = pneg %p56
        $region87: #{discriminator_forward.8} parent=84 // pred_check_branch
          %540 = sbr.rel (%p538) target = $region89
        $region88: #{discriminator_forward.8} parent=84 // pred_region
          _
        $region89: #{discriminator_forward.8} parent=84 // pred_fallthru
          _
        %s541 = sand.u32 %s71, 1
        %s542 = sand.u32 %s71, 1
        %s543 = smul.addr %s542, 512
        %s544 = scalar_lea.vmem [#allocation4], %s543
        // Predicated region
        $region90: #{discriminator_forward.8} parent=84 // pred_check
          %p545 = pneg %p84
        $region91: #{discriminator_forward.8} parent=84 // pred_check_branch
          %547 = sbr.rel (%p545) target = $region93
        $region92: #{discriminator_forward.8} parent=84 // pred_region
          _
        $region93: #{discriminator_forward.8} parent=84 // pred_fallthru
          _
        %s548 = sand.u32 %s43, 1
        %s549 = sand.u32 %s43, 1
        %s550 = smul.addr %s549, 144
        %s551 = scalar_lea.vmem [#allocation3], %s550
        %p552 = pneg %p56
        %p553 = pneg %p53
        %s554 = sand.u32 %s71, 1
        %s555 = sand.u32 %s71, 1
        %s556 = smul.addr %s555, 512
        %s557 = scalar_lea.vmem [#allocation4], %s556
        %p558 = pneg %p84
        %p559 = pneg %p81
        %s560 = smul.u32 2, %s20
        %p561 = scmp.lt.s32.totalorder %s560, 3
        %s562 = scalar_select %p561, %s560, 3
        %s563 = scalar_lea.vmem %s2, %s562
        %p564 = pneg %p110
        %p565 = pneg %p107
        %p566 = pneg %p138
        %p567 = pneg %p135
        %s568 = sand.u32 %s125, 1
        %s569 = sand.u32 %s125, 1
        %s570 = smul.addr %s569, 72
        %s571 = scalar_lea.vmem [#allocation5], %s570
        %s572 = smul.u32 9, %s19
        %s573 = smul.u32 4, %s21
        %s574 = smul.u32 64, %s21
        %s575 = smul.u32 2, %s20
        %s576 = smul.u32 2, %s20
        %p577 = scmp.lt.s32.totalorder %s576, 3
        %s578 = scalar_select %p577, %s576, 3
        %s579 = scalar_lea.vmem %s2, %s578
        %s580 = smul.u32 2, %s20
        %s581 = smul.u32 9, %s19
        %s582 = smul.u32 2, %s20
        %p583 = scmp.eq.s32.totalorder %s21, 0
        // Predicated region
        $region94: #{discriminator_forward.8} parent=84 // pred_check
          %p584 = pneg %p583
        $region95: #{discriminator_forward.8} parent=84 // pred_check_branch
          %586 = sbr.rel (%p584) target = $region97
        $region96: #{discriminator_forward.8} parent=84 // pred_region
          %587 = vst [vmem:[#allocation2] sm:$0xff] 0.0
          %588 = vst [vmem:[#allocation2 + $0x8] sm:$0xff] 0.0
          %589 = vst [vmem:[#allocation2 + $0x10] sm:$0xff] 0.0
          %590 = vst [vmem:[#allocation2 + $0x18] sm:$0xff] 0.0
          %591 = vst [vmem:[#allocation2 + $0x20] sm:$0xff] 0.0
          %592 = vst [vmem:[#allocation2 + $0x28] sm:$0xff] 0.0
          %593 = vst [vmem:[#allocation2 + $0x30] sm:$0xff] 0.0
          %594 = vst [vmem:[#allocation2 + $0x38] sm:$0xff] 0.0
          %595 = vst [vmem:[#allocation2 + $0x40] sm:$0xff] 0.0
          %596 = vst [vmem:[#allocation2 + $0x48] sm:$0xff] 0.0
          %597 = vst [vmem:[#allocation2 + $0x50] sm:$0xff] 0.0
          %598 = vst [vmem:[#allocation2 + $0x58] sm:$0xff] 0.0
          %599 = vst [vmem:[#allocation2 + $0x60] sm:$0xff] 0.0
          %600 = vst [vmem:[#allocation2 + $0x68] sm:$0xff] 0.0
          %601 = vst [vmem:[#allocation2 + $0x70] sm:$0xff] 0.0
          %602 = vst [vmem:[#allocation2 + $0x78] sm:$0xff] 0.0
          %603 = vst [vmem:[#allocation2 + $0x80] sm:$0xff] 0.0
          %604 = vst [vmem:[#allocation2 + $0x88] sm:$0xff] 0.0
        $region97: #{discriminator_forward.8} parent=84 // pred_fallthru
          _
        %v605 = vld [vmem:[#allocation2] sm:$0xff]
        %v606 = vld [vmem:[#allocation2 + $0x8] sm:$0xff]
        %v607 = vld [vmem:[#allocation2 + $0x10] sm:$0xff]
        %v608 = vld [vmem:[#allocation2 + $0x18] sm:$0xff]
        %v609 = vld [vmem:[#allocation2 + $0x20] sm:$0xff]
        %v610 = vld [vmem:[#allocation2 + $0x28] sm:$0xff]
        %v611 = vld [vmem:[#allocation2 + $0x30] sm:$0xff]
        %v612 = vld [vmem:[#allocation2 + $0x38] sm:$0xff]
        %v613 = vld [vmem:[#allocation2 + $0x40] sm:$0xff]
        %v614 = vld [vmem:[#allocation2 + $0x48] sm:$0xff]
        %v615 = vld [vmem:[#allocation2 + $0x50] sm:$0xff]
        %v616 = vld [vmem:[#allocation2 + $0x58] sm:$0xff]
        %v617 = vld [vmem:[#allocation2 + $0x60] sm:$0xff]
        %v618 = vld [vmem:[#allocation2 + $0x68] sm:$0xff]
        %v619 = vld [vmem:[#allocation2 + $0x70] sm:$0xff]
        %v620 = vld [vmem:[#allocation2 + $0x78] sm:$0xff]
        %v621 = vld [vmem:[#allocation2 + $0x80] sm:$0xff]
        %v622 = vld [vmem:[#allocation2 + $0x88] sm:$0xff]
        %v623 = vld [vmem:[%s537] sm:$0xff]
        %v624 = vld [vmem:[%s537 + $0x8] sm:$0xff]
        %v625 = vld [vmem:[%s537 + $0x10] sm:$0xff]
        %v626 = vld [vmem:[%s537 + $0x18] sm:$0xff]
        %v627 = vld [vmem:[%s537 + $0x20] sm:$0xff]
        %v628 = vld [vmem:[%s537 + $0x28] sm:$0xff]
        %v629 = vld [vmem:[%s537 + $0x30] sm:$0xff]
        %v630 = vld [vmem:[%s537 + $0x38] sm:$0xff]
        %v631 = vld [vmem:[%s537 + $0x40] sm:$0xff]
        %v632 = vld [vmem:[%s537 + $0x48] sm:$0xff]
        %v633 = vld [vmem:[%s537 + $0x50] sm:$0xff]
        %v634 = vld [vmem:[%s537 + $0x58] sm:$0xff]
        %v635 = vld [vmem:[%s537 + $0x60] sm:$0xff]
        %v636 = vld [vmem:[%s537 + $0x68] sm:$0xff]
        %v637 = vld [vmem:[%s537 + $0x70] sm:$0xff]
        %v638 = vld [vmem:[%s537 + $0x78] sm:$0xff]
        %v639 = vld [vmem:[%s537 + $0x80] sm:$0xff]
        %v640 = vld [vmem:[%s537 + $0x88] sm:$0xff]
        %v641 = vld [vmem:[%s544] sm:$0xff]
        %v642 = vld [vmem:[%s544 + $0x8] sm:$0xff]
        %v643 = vld [vmem:[%s544 + $0x10] sm:$0xff]
        %v644 = vld [vmem:[%s544 + $0x18] sm:$0xff]
        %v645 = vld [vmem:[%s544 + $0x20] sm:$0xff]
        %v646 = vld [vmem:[%s544 + $0x28] sm:$0xff]
        %v647 = vld [vmem:[%s544 + $0x30] sm:$0xff]
        %v648 = vld [vmem:[%s544 + $0x38] sm:$0xff]
        %v649 = vld [vmem:[%s544 + $0x40] sm:$0xff]
        %v650 = vld [vmem:[%s544 + $0x48] sm:$0xff]
        %v651 = vld [vmem:[%s544 + $0x50] sm:$0xff]
        %v652 = vld [vmem:[%s544 + $0x58] sm:$0xff]
        %v653 = vld [vmem:[%s544 + $0x60] sm:$0xff]
        %v654 = vld [vmem:[%s544 + $0x68] sm:$0xff]
        %v655 = vld [vmem:[%s544 + $0x70] sm:$0xff]
        %v656 = vld [vmem:[%s544 + $0x78] sm:$0xff]
        %v657 = vld [vmem:[%s544 + $0x80] sm:$0xff]
        %v658 = vld [vmem:[%s544 + $0x88] sm:$0xff]
        %v659 = vld [vmem:[%s544 + $0x90] sm:$0xff]
        %v660 = vld [vmem:[%s544 + $0x98] sm:$0xff]
        %v661 = vld [vmem:[%s544 + $0xa0] sm:$0xff]
        %v662 = vld [vmem:[%s544 + $0xa8] sm:$0xff]
        %v663 = vld [vmem:[%s544 + $0xb0] sm:$0xff]
        %v664 = vld [vmem:[%s544 + $0xb8] sm:$0xff]
        %v665 = vld [vmem:[%s544 + $0xc0] sm:$0xff]
        %v666 = vld [vmem:[%s544 + $0xc8] sm:$0xff]
        %v667 = vld [vmem:[%s544 + $0xd0] sm:$0xff]
        %v668 = vld [vmem:[%s544 + $0xd8] sm:$0xff]
        %v669 = vld [vmem:[%s544 + $0xe0] sm:$0xff]
        %v670 = vld [vmem:[%s544 + $0xe8] sm:$0xff]
        %v671 = vld [vmem:[%s544 + $0xf0] sm:$0xff]
        %v672 = vld [vmem:[%s544 + $0xf8] sm:$0xff]
        %v673 = vld [vmem:[%s544 + $0x100] sm:$0xff]
        %v674 = vld [vmem:[%s544 + $0x108] sm:$0xff]
        %v675 = vld [vmem:[%s544 + $0x110] sm:$0xff]
        %v676 = vld [vmem:[%s544 + $0x118] sm:$0xff]
        %v677 = vld [vmem:[%s544 + $0x120] sm:$0xff]
        %v678 = vld [vmem:[%s544 + $0x128] sm:$0xff]
        %v679 = vld [vmem:[%s544 + $0x130] sm:$0xff]
        %v680 = vld [vmem:[%s544 + $0x138] sm:$0xff]
        %v681 = vld [vmem:[%s544 + $0x140] sm:$0xff]
        %v682 = vld [vmem:[%s544 + $0x148] sm:$0xff]
        %v683 = vld [vmem:[%s544 + $0x150] sm:$0xff]
        %v684 = vld [vmem:[%s544 + $0x158] sm:$0xff]
        %v685 = vld [vmem:[%s544 + $0x160] sm:$0xff]
        %v686 = vld [vmem:[%s544 + $0x168] sm:$0xff]
        %v687 = vld [vmem:[%s544 + $0x170] sm:$0xff]
        %v688 = vld [vmem:[%s544 + $0x178] sm:$0xff]
        %v689 = vld [vmem:[%s544 + $0x180] sm:$0xff]
        %v690 = vld [vmem:[%s544 + $0x188] sm:$0xff]
        %v691 = vld [vmem:[%s544 + $0x190] sm:$0xff]
        %v692 = vld [vmem:[%s544 + $0x198] sm:$0xff]
        %v693 = vld [vmem:[%s544 + $0x1a0] sm:$0xff]
        %v694 = vld [vmem:[%s544 + $0x1a8] sm:$0xff]
        %v695 = vld [vmem:[%s544 + $0x1b0] sm:$0xff]
        %v696 = vld [vmem:[%s544 + $0x1b8] sm:$0xff]
        %v697 = vld [vmem:[%s544 + $0x1c0] sm:$0xff]
        %v698 = vld [vmem:[%s544 + $0x1c8] sm:$0xff]
        %v699 = vld [vmem:[%s544 + $0x1d0] sm:$0xff]
        %v700 = vld [vmem:[%s544 + $0x1d8] sm:$0xff]
        %v701 = vld [vmem:[%s544 + $0x1e0] sm:$0xff]
        %v702 = vld [vmem:[%s544 + $0x1e8] sm:$0xff]
        %v703 = vld [vmem:[%s544 + $0x1f0] sm:$0xff]
        %v704 = vld [vmem:[%s544 + $0x1f8] sm:$0xff]
        %v723 = vunpack.c.l.b16 %v623
        %v724 = vunpack.c.h.b16 %v623
        %v725 = vunpack.c.l.b16 %v624
        %v726 = vunpack.c.h.b16 %v624
        %v727 = vunpack.c.l.b16 %v625
        %v728 = vunpack.c.h.b16 %v625
        %v729 = vunpack.c.l.b16 %v626
        %v730 = vunpack.c.h.b16 %v626
        %v731 = vunpack.c.l.b16 %v627
        %v732 = vunpack.c.h.b16 %v627
        %v733 = vunpack.c.l.b16 %v628
        %v734 = vunpack.c.h.b16 %v628
        %v735 = vunpack.c.l.b16 %v629
        %v736 = vunpack.c.h.b16 %v629
        %v737 = vunpack.c.l.b16 %v630
        %v738 = vunpack.c.h.b16 %v630
        %v739 = vunpack.c.l.b16 %v631
        %v740 = vunpack.c.h.b16 %v631
        %v741 = vunpack.c.l.b16 %v632
        %v742 = vunpack.c.h.b16 %v632
        %v743 = vunpack.c.l.b16 %v633
        %v744 = vunpack.c.h.b16 %v633
        %v745 = vunpack.c.l.b16 %v634
        %v746 = vunpack.c.h.b16 %v634
        %v747 = vunpack.c.l.b16 %v635
        %v748 = vunpack.c.h.b16 %v635
        %v749 = vunpack.c.l.b16 %v636
        %v750 = vunpack.c.h.b16 %v636
        %v751 = vunpack.c.l.b16 %v637
        %v752 = vunpack.c.h.b16 %v637
        %v753 = vunpack.c.l.b16 %v638
        %v754 = vunpack.c.h.b16 %v638
        %v755 = vunpack.c.l.b16 %v639
        %v756 = vunpack.c.h.b16 %v639
        %v757 = vunpack.c.l.b16 %v640
        %v758 = vunpack.c.h.b16 %v640
        %v759 = vpack.c.b16 %v727, %v723
        %v760 = vpack.c.b16 %v728, %v724
        %v761 = vpack.c.b16 %v729, %v725
        %v762 = vpack.c.b16 %v730, %v726
        %v763 = vpack.c.b16 %v735, %v731
        %v764 = vpack.c.b16 %v736, %v732
        %v765 = vpack.c.b16 %v737, %v733
        %v766 = vpack.c.b16 %v738, %v734
        %v767 = vpack.c.b16 %v743, %v739
        %v768 = vpack.c.b16 %v744, %v740
        %v769 = vpack.c.b16 %v745, %v741
        %v770 = vpack.c.b16 %v746, %v742
        %v771 = vpack.c.b16 %v751, %v747
        %v772 = vpack.c.b16 %v752, %v748
        %v773 = vpack.c.b16 %v753, %v749
        %v774 = vpack.c.b16 %v754, %v750
        %v775 = vpack.c.b16 %v755, %v755
        %v776 = vpack.c.b16 %v756, %v756
        %v777 = vpack.c.b16 %v757, %v757
        %v778 = vpack.c.b16 %v758, %v758
        %v863 = vunpack.c.l.b16 %v641
        %v864 = vunpack.c.h.b16 %v641
        %v865 = vunpack.c.l.b16 %v642
        %v866 = vunpack.c.h.b16 %v642
        %v867 = vunpack.c.l.b16 %v643
        %v868 = vunpack.c.h.b16 %v643
        %v869 = vunpack.c.l.b16 %v644
        %v870 = vunpack.c.h.b16 %v644
        %v871 = vunpack.c.l.b16 %v645
        %v872 = vunpack.c.h.b16 %v645
        %v873 = vunpack.c.l.b16 %v646
        %v874 = vunpack.c.h.b16 %v646
        %v875 = vunpack.c.l.b16 %v647
        %v876 = vunpack.c.h.b16 %v647
        %v877 = vunpack.c.l.b16 %v648
        %v878 = vunpack.c.h.b16 %v648
        %v879 = vunpack.c.l.b16 %v649
        %v880 = vunpack.c.h.b16 %v649
        %v881 = vunpack.c.l.b16 %v650
        %v882 = vunpack.c.h.b16 %v650
        %v883 = vunpack.c.l.b16 %v651
        %v884 = vunpack.c.h.b16 %v651
        %v885 = vunpack.c.l.b16 %v652
        %v886 = vunpack.c.h.b16 %v652
        %v887 = vunpack.c.l.b16 %v653
        %v888 = vunpack.c.h.b16 %v653
        %v889 = vunpack.c.l.b16 %v654
        %v890 = vunpack.c.h.b16 %v654
        %v891 = vunpack.c.l.b16 %v655
        %v892 = vunpack.c.h.b16 %v655
        %v893 = vunpack.c.l.b16 %v656
        %v894 = vunpack.c.h.b16 %v656
        %v895 = vunpack.c.l.b16 %v657
        %v896 = vunpack.c.h.b16 %v657
        %v897 = vunpack.c.l.b16 %v658
        %v898 = vunpack.c.h.b16 %v658
        %v899 = vunpack.c.l.b16 %v659
        %v900 = vunpack.c.h.b16 %v659
        %v901 = vunpack.c.l.b16 %v660
        %v902 = vunpack.c.h.b16 %v660
        %v903 = vunpack.c.l.b16 %v661
        %v904 = vunpack.c.h.b16 %v661
        %v905 = vunpack.c.l.b16 %v662
        %v906 = vunpack.c.h.b16 %v662
        %v907 = vunpack.c.l.b16 %v663
        %v908 = vunpack.c.h.b16 %v663
        %v909 = vunpack.c.l.b16 %v664
        %v910 = vunpack.c.h.b16 %v664
        %v911 = vunpack.c.l.b16 %v665
        %v912 = vunpack.c.h.b16 %v665
        %v913 = vunpack.c.l.b16 %v666
        %v914 = vunpack.c.h.b16 %v666
        %v915 = vunpack.c.l.b16 %v667
        %v916 = vunpack.c.h.b16 %v667
        %v917 = vunpack.c.l.b16 %v668
        %v918 = vunpack.c.h.b16 %v668
        %v919 = vunpack.c.l.b16 %v669
        %v920 = vunpack.c.h.b16 %v669
        %v921 = vunpack.c.l.b16 %v670
        %v922 = vunpack.c.h.b16 %v670
        %v923 = vunpack.c.l.b16 %v671
        %v924 = vunpack.c.h.b16 %v671
        %v925 = vunpack.c.l.b16 %v672
        %v926 = vunpack.c.h.b16 %v672
        %v927 = vunpack.c.l.b16 %v673
        %v928 = vunpack.c.h.b16 %v673
        %v929 = vunpack.c.l.b16 %v674
        %v930 = vunpack.c.h.b16 %v674
        %v931 = vunpack.c.l.b16 %v675
        %v932 = vunpack.c.h.b16 %v675
        %v933 = vunpack.c.l.b16 %v676
        %v934 = vunpack.c.h.b16 %v676
        %v935 = vunpack.c.l.b16 %v677
        %v936 = vunpack.c.h.b16 %v677
        %v937 = vunpack.c.l.b16 %v678
        %v938 = vunpack.c.h.b16 %v678
        %v939 = vunpack.c.l.b16 %v679
        %v940 = vunpack.c.h.b16 %v679
        %v941 = vunpack.c.l.b16 %v680
        %v942 = vunpack.c.h.b16 %v680
        %v943 = vunpack.c.l.b16 %v681
        %v944 = vunpack.c.h.b16 %v681
        %v945 = vunpack.c.l.b16 %v682
        %v946 = vunpack.c.h.b16 %v682
        %v947 = vunpack.c.l.b16 %v683
        %v948 = vunpack.c.h.b16 %v683
        %v949 = vunpack.c.l.b16 %v684
        %v950 = vunpack.c.h.b16 %v684
        %v951 = vunpack.c.l.b16 %v685
        %v952 = vunpack.c.h.b16 %v685
        %v953 = vunpack.c.l.b16 %v686
        %v954 = vunpack.c.h.b16 %v686
        %v955 = vunpack.c.l.b16 %v687
        %v956 = vunpack.c.h.b16 %v687
        %v957 = vunpack.c.l.b16 %v688
        %v958 = vunpack.c.h.b16 %v688
        %v959 = vunpack.c.l.b16 %v689
        %v960 = vunpack.c.h.b16 %v689
        %v961 = vunpack.c.l.b16 %v690
        %v962 = vunpack.c.h.b16 %v690
        %v963 = vunpack.c.l.b16 %v691
        %v964 = vunpack.c.h.b16 %v691
        %v965 = vunpack.c.l.b16 %v692
        %v966 = vunpack.c.h.b16 %v692
        %v967 = vunpack.c.l.b16 %v693
        %v968 = vunpack.c.h.b16 %v693
        %v969 = vunpack.c.l.b16 %v694
        %v970 = vunpack.c.h.b16 %v694
        %v971 = vunpack.c.l.b16 %v695
        %v972 = vunpack.c.h.b16 %v695
        %v973 = vunpack.c.l.b16 %v696
        %v974 = vunpack.c.h.b16 %v696
        %v975 = vunpack.c.l.b16 %v697
        %v976 = vunpack.c.h.b16 %v697
        %v977 = vunpack.c.l.b16 %v698
        %v978 = vunpack.c.h.b16 %v698
        %v979 = vunpack.c.l.b16 %v699
        %v980 = vunpack.c.h.b16 %v699
        %v981 = vunpack.c.l.b16 %v700
        %v982 = vunpack.c.h.b16 %v700
        %v983 = vunpack.c.l.b16 %v701
        %v984 = vunpack.c.h.b16 %v701
        %v985 = vunpack.c.l.b16 %v702
        %v986 = vunpack.c.h.b16 %v702
        %v987 = vunpack.c.l.b16 %v703
        %v988 = vunpack.c.h.b16 %v703
        %v989 = vunpack.c.l.b16 %v704
        %v990 = vunpack.c.h.b16 %v704
        %v991 = vpack.c.b16 %v865, %v863
        %v992 = vpack.c.b16 %v866, %v864
        %v993 = vpack.c.b16 %v869, %v867
        %v994 = vpack.c.b16 %v870, %v868
        %v995 = vpack.c.b16 %v873, %v871
        %v996 = vpack.c.b16 %v874, %v872
        %v997 = vpack.c.b16 %v877, %v875
        %v998 = vpack.c.b16 %v878, %v876
        %v999 = vpack.c.b16 %v881, %v879
        %v1000 = vpack.c.b16 %v882, %v880
        %v1001 = vpack.c.b16 %v885, %v883
        %v1002 = vpack.c.b16 %v886, %v884
        %v1003 = vpack.c.b16 %v889, %v887
        %v1004 = vpack.c.b16 %v890, %v888
        %v1005 = vpack.c.b16 %v893, %v891
        %v1006 = vpack.c.b16 %v894, %v892
        %v1007 = vpack.c.b16 %v897, %v895
        %v1008 = vpack.c.b16 %v898, %v896
        %v1009 = vpack.c.b16 %v901, %v899
        %v1010 = vpack.c.b16 %v902, %v900
        %v1011 = vpack.c.b16 %v905, %v903
        %v1012 = vpack.c.b16 %v906, %v904
        %v1013 = vpack.c.b16 %v909, %v907
        %v1014 = vpack.c.b16 %v910, %v908
        %v1015 = vpack.c.b16 %v913, %v911
        %v1016 = vpack.c.b16 %v914, %v912
        %v1017 = vpack.c.b16 %v917, %v915
        %v1018 = vpack.c.b16 %v918, %v916
        %v1019 = vpack.c.b16 %v921, %v919
        %v1020 = vpack.c.b16 %v922, %v920
        %v1021 = vpack.c.b16 %v925, %v923
        %v1022 = vpack.c.b16 %v926, %v924
        %v1023 = vpack.c.b16 %v929, %v927
        %v1024 = vpack.c.b16 %v930, %v928
        %v1025 = vpack.c.b16 %v933, %v931
        %v1026 = vpack.c.b16 %v934, %v932
        %v1027 = vpack.c.b16 %v937, %v935
        %v1028 = vpack.c.b16 %v938, %v936
        %v1029 = vpack.c.b16 %v941, %v939
        %v1030 = vpack.c.b16 %v942, %v940
        %v1031 = vpack.c.b16 %v945, %v943
        %v1032 = vpack.c.b16 %v946, %v944
        %v1033 = vpack.c.b16 %v949, %v947
        %v1034 = vpack.c.b16 %v950, %v948
        %v1035 = vpack.c.b16 %v953, %v951
        %v1036 = vpack.c.b16 %v954, %v952
        %v1037 = vpack.c.b16 %v957, %v955
        %v1038 = vpack.c.b16 %v958, %v956
        %v1039 = vpack.c.b16 %v961, %v959
        %v1040 = vpack.c.b16 %v962, %v960
        %v1041 = vpack.c.b16 %v965, %v963
        %v1042 = vpack.c.b16 %v966, %v964
        %v1043 = vpack.c.b16 %v969, %v967
        %v1044 = vpack.c.b16 %v970, %v968
        %v1045 = vpack.c.b16 %v973, %v971
        %v1046 = vpack.c.b16 %v974, %v972
        %v1047 = vpack.c.b16 %v977, %v975
        %v1048 = vpack.c.b16 %v978, %v976
        %v1049 = vpack.c.b16 %v981, %v979
        %v1050 = vpack.c.b16 %v982, %v980
        %v1051 = vpack.c.b16 %v985, %v983
        %v1052 = vpack.c.b16 %v986, %v984
        %v1053 = vpack.c.b16 %v989, %v987
        %v1054 = vpack.c.b16 %v990, %v988
        %1119 = vmatpush.bf16.msra.mxu0 %v1005
        %1120 = vmatpush.bf16.msra.mxu0 %v1003
        %1121 = vmatpush.bf16.msra.mxu0 %v1001
        %1122 = vmatpush.bf16.msra.mxu0 %v999
        %1123 = vmatpush.bf16.msra.mxu0 %v997
        %1124 = vmatpush.bf16.msra.mxu0 %v995
        %1125 = vmatpush.bf16.msra.mxu0 %v993
        %1126 = vmatpush.bf16.msra.mxu0 %v991
        %1127 = vmatmul.bf16.gmra.mxu0 %v759
        %v1128 = vpop.f32.mrf.mxu0
        %v1129 = vadd.f32 0.0, %v1128
        %v1130 = vpop.f32.mrf.mxu0
        %v1131 = vadd.f32 0.0, %v1130
        %1132 = vmatmul.bf16.gmra.mxu0 %v763
        %v1133 = vpop.f32.mrf.mxu0
        %v1134 = vadd.f32 0.0, %v1133
        %v1135 = vpop.f32.mrf.mxu0
        %v1136 = vadd.f32 0.0, %v1135
        %1137 = vmatmul.bf16.gmra.mxu0 %v767
        %v1138 = vpop.f32.mrf.mxu0
        %v1139 = vadd.f32 0.0, %v1138
        %v1140 = vpop.f32.mrf.mxu0
        %v1141 = vadd.f32 0.0, %v1140
        %1142 = vmatmul.bf16.gmra.mxu0 %v771
        %v1143 = vpop.f32.mrf.mxu0
        %v1144 = vadd.f32 0.0, %v1143
        %v1145 = vpop.f32.mrf.mxu0
        %v1146 = vadd.f32 0.0, %v1145
        %1147 = vmatmul.bf16.gmra.mxu0 %v775
        %v1148 = vpop.f32.mrf.mxu0
        %v1149 = vadd.f32 0.0, %v1148
        %v1150 = vpop.f32.mrf.mxu0
        %1151 = vdwg.mxu0
        %1152 = vmatpush.bf16.msra.mxu0 %v1021
        %1153 = vmatpush.bf16.msra.mxu0 %v1019
        %1154 = vmatpush.bf16.msra.mxu0 %v1017
        %1155 = vmatpush.bf16.msra.mxu0 %v1015
        %1156 = vmatpush.bf16.msra.mxu0 %v1013
        %1157 = vmatpush.bf16.msra.mxu0 %v1011
        %1158 = vmatpush.bf16.msra.mxu0 %v1009
        %1159 = vmatpush.bf16.msra.mxu0 %v1007
        %1160 = vmatmul.bf16.gmra.mxu0 %v760
        %v1161 = vpop.f32.mrf.mxu0
        %v1162 = vadd.f32 %v1129, %v1161
        %v1163 = vpop.f32.mrf.mxu0
        %v1164 = vadd.f32 %v1131, %v1163
        %1165 = vmatmul.bf16.gmra.mxu0 %v764
        %v1166 = vpop.f32.mrf.mxu0
        %v1167 = vadd.f32 %v1134, %v1166
        %v1168 = vpop.f32.mrf.mxu0
        %v1169 = vadd.f32 %v1136, %v1168
        %1170 = vmatmul.bf16.gmra.mxu0 %v768
        %v1171 = vpop.f32.mrf.mxu0
        %v1172 = vadd.f32 %v1139, %v1171
        %v1173 = vpop.f32.mrf.mxu0
        %v1174 = vadd.f32 %v1141, %v1173
        %1175 = vmatmul.bf16.gmra.mxu0 %v772
        %v1176 = vpop.f32.mrf.mxu0
        %v1177 = vadd.f32 %v1144, %v1176
        %v1178 = vpop.f32.mrf.mxu0
        %v1179 = vadd.f32 %v1146, %v1178
        %1180 = vmatmul.bf16.gmra.mxu0 %v776
        %v1181 = vpop.f32.mrf.mxu0
        %v1182 = vadd.f32 %v1149, %v1181
        %v1183 = vpop.f32.mrf.mxu0
        %1184 = vdwg.mxu0
        %1185 = vmatpush.bf16.msra.mxu0 %v1037
        %1186 = vmatpush.bf16.msra.mxu0 %v1035
        %1187 = vmatpush.bf16.msra.mxu0 %v1033
        %1188 = vmatpush.bf16.msra.mxu0 %v1031
        %1189 = vmatpush.bf16.msra.mxu0 %v1029
        %1190 = vmatpush.bf16.msra.mxu0 %v1027
        %1191 = vmatpush.bf16.msra.mxu0 %v1025
        %1192 = vmatpush.bf16.msra.mxu0 %v1023
        %1193 = vmatmul.bf16.gmra.mxu0 %v761
        %v1194 = vpop.f32.mrf.mxu0
        %v1195 = vadd.f32 %v1162, %v1194
        %v1196 = vpop.f32.mrf.mxu0
        %v1197 = vadd.f32 %v1164, %v1196
        %1198 = vmatmul.bf16.gmra.mxu0 %v765
        %v1199 = vpop.f32.mrf.mxu0
        %v1200 = vadd.f32 %v1167, %v1199
        %v1201 = vpop.f32.mrf.mxu0
        %v1202 = vadd.f32 %v1169, %v1201
        %1203 = vmatmul.bf16.gmra.mxu0 %v769
        %v1204 = vpop.f32.mrf.mxu0
        %v1205 = vadd.f32 %v1172, %v1204
        %v1206 = vpop.f32.mrf.mxu0
        %v1207 = vadd.f32 %v1174, %v1206
        %1208 = vmatmul.bf16.gmra.mxu0 %v773
        %v1209 = vpop.f32.mrf.mxu0
        %v1210 = vadd.f32 %v1177, %v1209
        %v1211 = vpop.f32.mrf.mxu0
        %v1212 = vadd.f32 %v1179, %v1211
        %1213 = vmatmul.bf16.gmra.mxu0 %v777
        %v1214 = vpop.f32.mrf.mxu0
        %v1215 = vadd.f32 %v1182, %v1214
        %v1216 = vpop.f32.mrf.mxu0
        %1217 = vdwg.mxu0
        %1218 = vmatpush.bf16.msra.mxu0 %v1053
        %1219 = vmatpush.bf16.msra.mxu0 %v1051
        %1220 = vmatpush.bf16.msra.mxu0 %v1049
        %1221 = vmatpush.bf16.msra.mxu0 %v1047
        %1222 = vmatpush.bf16.msra.mxu0 %v1045
        %1223 = vmatpush.bf16.msra.mxu0 %v1043
        %1224 = vmatpush.bf16.msra.mxu0 %v1041
        %1225 = vmatpush.bf16.msra.mxu0 %v1039
        %1226 = vmatmul.bf16.gmra.mxu0 %v762
        %v1227 = vpop.f32.mrf.mxu0
        %v1228 = vadd.f32 %v1195, %v1227
        %v1229 = vpop.f32.mrf.mxu0
        %v1230 = vadd.f32 %v1197, %v1229
        %1231 = vmatmul.bf16.gmra.mxu0 %v766
        %v1232 = vpop.f32.mrf.mxu0
        %v1233 = vadd.f32 %v1200, %v1232
        %v1234 = vpop.f32.mrf.mxu0
        %v1235 = vadd.f32 %v1202, %v1234
        %1236 = vmatmul.bf16.gmra.mxu0 %v770
        %v1237 = vpop.f32.mrf.mxu0
        %v1238 = vadd.f32 %v1205, %v1237
        %v1239 = vpop.f32.mrf.mxu0
        %v1240 = vadd.f32 %v1207, %v1239
        %1241 = vmatmul.bf16.gmra.mxu0 %v774
        %v1242 = vpop.f32.mrf.mxu0
        %v1243 = vadd.f32 %v1210, %v1242
        %v1244 = vpop.f32.mrf.mxu0
        %v1245 = vadd.f32 %v1212, %v1244
        %1246 = vmatmul.bf16.gmra.mxu0 %v778
        %v1247 = vpop.f32.mrf.mxu0
        %v1248 = vadd.f32 %v1215, %v1247
        %v1249 = vpop.f32.mrf.mxu0
        %1250 = vdwg.mxu0
        %1251 = vmatpush.bf16.msra.mxu0 %v1006
        %1252 = vmatpush.bf16.msra.mxu0 %v1004
        %1253 = vmatpush.bf16.msra.mxu0 %v1002
        %1254 = vmatpush.bf16.msra.mxu0 %v1000
        %1255 = vmatpush.bf16.msra.mxu0 %v998
        %1256 = vmatpush.bf16.msra.mxu0 %v996
        %1257 = vmatpush.bf16.msra.mxu0 %v994
        %1258 = vmatpush.bf16.msra.mxu0 %v992
        %1259 = vmatmul.bf16.gmra.mxu0 %v759
        %v1260 = vpop.f32.mrf.mxu0
        %v1261 = vadd.f32 0.0, %v1260
        %v1262 = vpop.f32.mrf.mxu0
        %v1263 = vadd.f32 0.0, %v1262
        %1264 = vmatmul.bf16.gmra.mxu0 %v763
        %v1265 = vpop.f32.mrf.mxu0
        %v1266 = vadd.f32 0.0, %v1265
        %v1267 = vpop.f32.mrf.mxu0
        %v1268 = vadd.f32 0.0, %v1267
        %1269 = vmatmul.bf16.gmra.mxu0 %v767
        %v1270 = vpop.f32.mrf.mxu0
        %v1271 = vadd.f32 0.0, %v1270
        %v1272 = vpop.f32.mrf.mxu0
        %v1273 = vadd.f32 0.0, %v1272
        %1274 = vmatmul.bf16.gmra.mxu0 %v771
        %v1275 = vpop.f32.mrf.mxu0
        %v1276 = vadd.f32 0.0, %v1275
        %v1277 = vpop.f32.mrf.mxu0
        %v1278 = vadd.f32 0.0, %v1277
        %1279 = vmatmul.bf16.gmra.mxu0 %v775
        %v1280 = vpop.f32.mrf.mxu0
        %v1281 = vadd.f32 0.0, %v1280
        %v1282 = vpop.f32.mrf.mxu0
        %1283 = vdwg.mxu0
        %1284 = vmatpush.bf16.msra.mxu0 %v1022
        %1285 = vmatpush.bf16.msra.mxu0 %v1020
        %1286 = vmatpush.bf16.msra.mxu0 %v1018
        %1287 = vmatpush.bf16.msra.mxu0 %v1016
        %1288 = vmatpush.bf16.msra.mxu0 %v1014
        %1289 = vmatpush.bf16.msra.mxu0 %v1012
        %1290 = vmatpush.bf16.msra.mxu0 %v1010
        %1291 = vmatpush.bf16.msra.mxu0 %v1008
        %1292 = vmatmul.bf16.gmra.mxu0 %v760
        %v1293 = vpop.f32.mrf.mxu0
        %v1294 = vadd.f32 %v1261, %v1293
        %v1295 = vpop.f32.mrf.mxu0
        %v1296 = vadd.f32 %v1263, %v1295
        %1297 = vmatmul.bf16.gmra.mxu0 %v764
        %v1298 = vpop.f32.mrf.mxu0
        %v1299 = vadd.f32 %v1266, %v1298
        %v1300 = vpop.f32.mrf.mxu0
        %v1301 = vadd.f32 %v1268, %v1300
        %1302 = vmatmul.bf16.gmra.mxu0 %v768
        %v1303 = vpop.f32.mrf.mxu0
        %v1304 = vadd.f32 %v1271, %v1303
        %v1305 = vpop.f32.mrf.mxu0
        %v1306 = vadd.f32 %v1273, %v1305
        %1307 = vmatmul.bf16.gmra.mxu0 %v772
        %v1308 = vpop.f32.mrf.mxu0
        %v1309 = vadd.f32 %v1276, %v1308
        %v1310 = vpop.f32.mrf.mxu0
        %v1311 = vadd.f32 %v1278, %v1310
        %1312 = vmatmul.bf16.gmra.mxu0 %v776
        %v1313 = vpop.f32.mrf.mxu0
        %v1314 = vadd.f32 %v1281, %v1313
        %v1315 = vpop.f32.mrf.mxu0
        %1316 = vdwg.mxu0
        %1317 = vmatpush.bf16.msra.mxu0 %v1038
        %1318 = vmatpush.bf16.msra.mxu0 %v1036
        %1319 = vmatpush.bf16.msra.mxu0 %v1034
        %1320 = vmatpush.bf16.msra.mxu0 %v1032
        %1321 = vmatpush.bf16.msra.mxu0 %v1030
        %1322 = vmatpush.bf16.msra.mxu0 %v1028
        %1323 = vmatpush.bf16.msra.mxu0 %v1026
        %1324 = vmatpush.bf16.msra.mxu0 %v1024
        %1325 = vmatmul.bf16.gmra.mxu0 %v761
        %v1326 = vpop.f32.mrf.mxu0
        %v1327 = vadd.f32 %v1294, %v1326
        %v1328 = vpop.f32.mrf.mxu0
        %v1329 = vadd.f32 %v1296, %v1328
        %1330 = vmatmul.bf16.gmra.mxu0 %v765
        %v1331 = vpop.f32.mrf.mxu0
        %v1332 = vadd.f32 %v1299, %v1331
        %v1333 = vpop.f32.mrf.mxu0
        %v1334 = vadd.f32 %v1301, %v1333
        %1335 = vmatmul.bf16.gmra.mxu0 %v769
        %v1336 = vpop.f32.mrf.mxu0
        %v1337 = vadd.f32 %v1304, %v1336
        %v1338 = vpop.f32.mrf.mxu0
        %v1339 = vadd.f32 %v1306, %v1338
        %1340 = vmatmul.bf16.gmra.mxu0 %v773
        %v1341 = vpop.f32.mrf.mxu0
        %v1342 = vadd.f32 %v1309, %v1341
        %v1343 = vpop.f32.mrf.mxu0
        %v1344 = vadd.f32 %v1311, %v1343
        %1345 = vmatmul.bf16.gmra.mxu0 %v777
        %v1346 = vpop.f32.mrf.mxu0
        %v1347 = vadd.f32 %v1314, %v1346
        %v1348 = vpop.f32.mrf.mxu0
        %1349 = vdwg.mxu0
        %1350 = vmatpush.bf16.msra.mxu0 %v1054
        %1351 = vmatpush.bf16.msra.mxu0 %v1052
        %1352 = vmatpush.bf16.msra.mxu0 %v1050
        %1353 = vmatpush.bf16.msra.mxu0 %v1048
        %1354 = vmatpush.bf16.msra.mxu0 %v1046
        %1355 = vmatpush.bf16.msra.mxu0 %v1044
        %1356 = vmatpush.bf16.msra.mxu0 %v1042
        %1357 = vmatpush.bf16.msra.mxu0 %v1040
        %1358 = vmatmul.bf16.gmra.mxu0 %v762
        %v1359 = vpop.f32.mrf.mxu0
        %v1360 = vadd.f32 %v1327, %v1359
        %v1361 = vpop.f32.mrf.mxu0
        %v1362 = vadd.f32 %v1329, %v1361
        %1363 = vmatmul.bf16.gmra.mxu0 %v766
        %v1364 = vpop.f32.mrf.mxu0
        %v1365 = vadd.f32 %v1332, %v1364
        %v1366 = vpop.f32.mrf.mxu0
        %v1367 = vadd.f32 %v1334, %v1366
        %1368 = vmatmul.bf16.gmra.mxu0 %v770
        %v1369 = vpop.f32.mrf.mxu0
        %v1370 = vadd.f32 %v1337, %v1369
        %v1371 = vpop.f32.mrf.mxu0
        %v1372 = vadd.f32 %v1339, %v1371
        %1373 = vmatmul.bf16.gmra.mxu0 %v774
        %v1374 = vpop.f32.mrf.mxu0
        %v1375 = vadd.f32 %v1342, %v1374
        %v1376 = vpop.f32.mrf.mxu0
        %v1377 = vadd.f32 %v1344, %v1376
        %1378 = vmatmul.bf16.gmra.mxu0 %v778
        %v1379 = vpop.f32.mrf.mxu0
        %v1380 = vadd.f32 %v1347, %v1379
        %v1381 = vpop.f32.mrf.mxu0
        %1382 = vdwg.mxu0
        %v1383 = vadd.f32 %v605, %v1228
        %v1384 = vadd.f32 %v606, %v1360
        %v1385 = vadd.f32 %v607, %v1230
        %v1386 = vadd.f32 %v608, %v1362
        %v1387 = vadd.f32 %v609, %v1233
        %v1388 = vadd.f32 %v610, %v1365
        %v1389 = vadd.f32 %v611, %v1235
        %v1390 = vadd.f32 %v612, %v1367
        %v1391 = vadd.f32 %v613, %v1238
        %v1392 = vadd.f32 %v614, %v1370
        %v1393 = vadd.f32 %v615, %v1240
        %v1394 = vadd.f32 %v616, %v1372
        %v1395 = vadd.f32 %v617, %v1243
        %v1396 = vadd.f32 %v618, %v1375
        %v1397 = vadd.f32 %v619, %v1245
        %v1398 = vadd.f32 %v620, %v1377
        %v1399 = vadd.f32 %v621, %v1248
        %v1400 = vadd.f32 %v622, %v1380
        %1401 = vst [vmem:[#allocation2] sm:$0xff] %v1383
        %1402 = vst [vmem:[#allocation2 + $0x8] sm:$0xff] %v1384
        %1403 = vst [vmem:[#allocation2 + $0x10] sm:$0xff] %v1385
        %1404 = vst [vmem:[#allocation2 + $0x18] sm:$0xff] %v1386
        %1405 = vst [vmem:[#allocation2 + $0x20] sm:$0xff] %v1387
        %1406 = vst [vmem:[#allocation2 + $0x28] sm:$0xff] %v1388
        %1407 = vst [vmem:[#allocation2 + $0x30] sm:$0xff] %v1389
        %1408 = vst [vmem:[#allocation2 + $0x38] sm:$0xff] %v1390
        %1409 = vst [vmem:[#allocation2 + $0x40] sm:$0xff] %v1391
        %1410 = vst [vmem:[#allocation2 + $0x48] sm:$0xff] %v1392
        %1411 = vst [vmem:[#allocation2 + $0x50] sm:$0xff] %v1393
        %1412 = vst [vmem:[#allocation2 + $0x58] sm:$0xff] %v1394
        %1413 = vst [vmem:[#allocation2 + $0x60] sm:$0xff] %v1395
        %1414 = vst [vmem:[#allocation2 + $0x68] sm:$0xff] %v1396
        %1415 = vst [vmem:[#allocation2 + $0x70] sm:$0xff] %v1397
        %1416 = vst [vmem:[#allocation2 + $0x78] sm:$0xff] %v1398
        %1417 = vst [vmem:[#allocation2 + $0x80] sm:$0xff] %v1399
        %1418 = vst [vmem:[#allocation2 + $0x88] sm:$0xff] %v1400
        %p1419 = scmp.eq.s32.totalorder %s21, 7
        // Predicated region
        $region98: #{discriminator_forward.8} parent=84 // pred_check
          %p1420 = pneg %p1419
        $region99: #{discriminator_forward.8} parent=84 // pred_check_branch
          %1422 = sbr.rel (%p1420) target = $region101
        $region100: #{discriminator_forward.8} parent=84 // pred_region
          %v1423 = vld [vmem:[#allocation2] sm:$0xff]
          %v1424 = vld [vmem:[#allocation2 + $0x8] sm:$0xff]
          %v1425 = vld [vmem:[#allocation2 + $0x10] sm:$0xff]
          %v1426 = vld [vmem:[#allocation2 + $0x18] sm:$0xff]
          %v1427 = vld [vmem:[#allocation2 + $0x20] sm:$0xff]
          %v1428 = vld [vmem:[#allocation2 + $0x28] sm:$0xff]
          %v1429 = vld [vmem:[#allocation2 + $0x30] sm:$0xff]
          %v1430 = vld [vmem:[#allocation2 + $0x38] sm:$0xff]
          %v1431 = vld [vmem:[#allocation2 + $0x40] sm:$0xff]
          %v1432 = vld [vmem:[#allocation2 + $0x48] sm:$0xff]
          %v1433 = vld [vmem:[#allocation2 + $0x50] sm:$0xff]
          %v1434 = vld [vmem:[#allocation2 + $0x58] sm:$0xff]
          %v1435 = vld [vmem:[#allocation2 + $0x60] sm:$0xff]
          %v1436 = vld [vmem:[#allocation2 + $0x68] sm:$0xff]
          %v1437 = vld [vmem:[#allocation2 + $0x70] sm:$0xff]
          %v1438 = vld [vmem:[#allocation2 + $0x78] sm:$0xff]
          %v1439 = vld [vmem:[#allocation2 + $0x80] sm:$0xff]
          %v1440 = vld [vmem:[#allocation2 + $0x88] sm:$0xff]
          %v1441 = vld [vmem:[%s579] sm:$0x3]
          %v1443 = vperm.slane %v1441, 0
          %v1444 = vperm.slane %v1441, 1
          %v1447 = vadd.f32 %v1423, %v1443
          %v1448 = vadd.f32 %v1424, %v1444
          %v1449 = vadd.f32 %v1425, %v1443
          %v1450 = vadd.f32 %v1426, %v1444
          %v1451 = vadd.f32 %v1427, %v1443
          %v1452 = vadd.f32 %v1428, %v1444
          %v1453 = vadd.f32 %v1429, %v1443
          %v1454 = vadd.f32 %v1430, %v1444
          %v1455 = vadd.f32 %v1431, %v1443
          %v1456 = vadd.f32 %v1432, %v1444
          %v1457 = vadd.f32 %v1433, %v1443
          %v1458 = vadd.f32 %v1434, %v1444
          %v1459 = vadd.f32 %v1435, %v1443
          %v1460 = vadd.f32 %v1436, %v1444
          %v1461 = vadd.f32 %v1437, %v1443
          %v1462 = vadd.f32 %v1438, %v1444
          %v1463 = vadd.f32 %v1439, %v1443
          %v1464 = vadd.f32 %v1440, %v1444
          %vm1465 = vcmp.ge.f32.partialorder %v1447, 0.0
          %vm1466 = vcmp.ge.f32.partialorder %v1448, 0.0
          %vm1467 = vcmp.ge.f32.partialorder %v1449, 0.0
          %vm1468 = vcmp.ge.f32.partialorder %v1450, 0.0
          %vm1469 = vcmp.ge.f32.partialorder %v1451, 0.0
          %vm1470 = vcmp.ge.f32.partialorder %v1452, 0.0
          %vm1471 = vcmp.ge.f32.partialorder %v1453, 0.0
          %vm1472 = vcmp.ge.f32.partialorder %v1454, 0.0
          %vm1473 = vcmp.ge.f32.partialorder %v1455, 0.0
          %vm1474 = vcmp.ge.f32.partialorder %v1456, 0.0
          %vm1475 = vcmp.ge.f32.partialorder %v1457, 0.0
          %vm1476 = vcmp.ge.f32.partialorder %v1458, 0.0
          %vm1477 = vcmp.ge.f32.partialorder %v1459, 0.0
          %vm1478 = vcmp.ge.f32.partialorder %v1460, 0.0
          %vm1479 = vcmp.ge.f32.partialorder %v1461, 0.0
          %vm1480 = vcmp.ge.f32.partialorder %v1462, 0.0
          %vm1481 = vcmp.ge.f32.partialorder %v1463, 0.0
          %vm1482 = vcmp.ge.f32.partialorder %v1464, 0.0
          %v1483 = vmul.f32 %v1447, 0.2
          %v1484 = vmul.f32 %v1448, 0.2
          %v1485 = vmul.f32 %v1449, 0.2
          %v1486 = vmul.f32 %v1450, 0.2
          %v1487 = vmul.f32 %v1451, 0.2
          %v1488 = vmul.f32 %v1452, 0.2
          %v1489 = vmul.f32 %v1453, 0.2
          %v1490 = vmul.f32 %v1454, 0.2
          %v1491 = vmul.f32 %v1455, 0.2
          %v1492 = vmul.f32 %v1456, 0.2
          %v1493 = vmul.f32 %v1457, 0.2
          %v1494 = vmul.f32 %v1458, 0.2
          %v1495 = vmul.f32 %v1459, 0.2
          %v1496 = vmul.f32 %v1460, 0.2
          %v1497 = vmul.f32 %v1461, 0.2
          %v1498 = vmul.f32 %v1462, 0.2
          %v1499 = vmul.f32 %v1463, 0.2
          %v1500 = vmul.f32 %v1464, 0.2
          %v1501 = vsel %vm1465, %v1447, %v1483
          %v1502 = vsel %vm1466, %v1448, %v1484
          %v1503 = vsel %vm1467, %v1449, %v1485
          %v1504 = vsel %vm1468, %v1450, %v1486
          %v1505 = vsel %vm1469, %v1451, %v1487
          %v1506 = vsel %vm1470, %v1452, %v1488
          %v1507 = vsel %vm1471, %v1453, %v1489
          %v1508 = vsel %vm1472, %v1454, %v1490
          %v1509 = vsel %vm1473, %v1455, %v1491
          %v1510 = vsel %vm1474, %v1456, %v1492
          %v1511 = vsel %vm1475, %v1457, %v1493
          %v1512 = vsel %vm1476, %v1458, %v1494
          %v1513 = vsel %vm1477, %v1459, %v1495
          %v1514 = vsel %vm1478, %v1460, %v1496
          %v1515 = vsel %vm1479, %v1461, %v1497
          %v1516 = vsel %vm1480, %v1462, %v1498
          %v1517 = vsel %vm1481, %v1463, %v1499
          %v1518 = vsel %vm1482, %v1464, %v1500
          %v1519 = vpack.c.bf16 %v1502, %v1501
          %v1520 = vpack.c.bf16 %v1504, %v1503
          %v1521 = vpack.c.bf16 %v1506, %v1505
          %v1522 = vpack.c.bf16 %v1508, %v1507
          %v1523 = vpack.c.bf16 %v1510, %v1509
          %v1524 = vpack.c.bf16 %v1512, %v1511
          %v1525 = vpack.c.bf16 %v1514, %v1513
          %v1526 = vpack.c.bf16 %v1516, %v1515
          %v1527 = vpack.c.bf16 %v1518, %v1517
          %1528 = vst [vmem:[%s571] sm:$0xff] %v1519
          %1529 = vst [vmem:[%s571 + $0x8] sm:$0xff] %v1520
          %1530 = vst [vmem:[%s571 + $0x10] sm:$0xff] %v1521
          %1531 = vst [vmem:[%s571 + $0x18] sm:$0xff] %v1522
          %1532 = vst [vmem:[%s571 + $0x20] sm:$0xff] %v1523
          %1533 = vst [vmem:[%s571 + $0x28] sm:$0xff] %v1524
          %1534 = vst [vmem:[%s571 + $0x30] sm:$0xff] %v1525
          %1535 = vst [vmem:[%s571 + $0x38] sm:$0xff] %v1526
          %1536 = vst [vmem:[%s571 + $0x40] sm:$0xff] %v1527
        $region101: #{discriminator_forward.8} parent=84 // pred_fallthru
          _
        %s1537 = sand.u32 %s125, 1
        %s1538 = sand.u32 %s125, 1
        %s1539 = smul.addr %s1538, 72
        %s1540 = scalar_lea.vmem [#allocation5], %s1539
        // Predicated region
        $region102: #{discriminator_forward.8} parent=84 // pred_check
          %p1541 = pneg %p135
        $region103: #{discriminator_forward.8} parent=84 // pred_check_branch
          %1543 = sbr.rel (%p1541) target = $region105
        $region104: #{discriminator_forward.8} parent=84 // pred_region
          %s1544 = smul.u32 9, %s19
          %s1545 = smul.u32 2, %s20
          %s1546 = smul.addr %s1544, 4
          %s1547 = sadd.s32 %s1545, %s1546
          %s1548 = smul.addr %s1547, 4
          %s1549 = scalar_lea.vmem %s3, %s1548
          // Predicated region
          $region106: #{discriminator_forward.8} parent=104 // pred_check
            _
          $region107: #{discriminator_forward.8} parent=104 // pred_check_branch
            %1551 = sbr.rel (0) target = $region109
          $region108: #{discriminator_forward.8} parent=104 // pred_region
            // Predicated region
            $region110: #{discriminator_forward.8} parent=108 // pred_check
              _
            $region111: #{discriminator_forward.8} parent=108 // pred_check_branch
              %1553 = sbr.rel (0) target = $region113
            $region112: #{discriminator_forward.8} parent=108 // pred_region
              // Predicated region
              $region125: #{discriminator_forward.8} parent=112 // pred_check
                _
              $region126: #{discriminator_forward.8} parent=112 // pred_check_branch
                %1585 = sbr.rel (0) target = $region128
              $region127: #{discriminator_forward.8} parent=112 // pred_region
                loop: start=0, step=1, limit=1
                $region129: #{discriminator_forward.8} parent=127 // loop_pre_header
                  _
                $region130: #{discriminator_forward.8} parent=127 // loop_header
                  %s1587 = sphi 0, %s1591
                  %p1588 = scmp.ge.s32.totalorder %s1587, 1
                  %s1592 = sphi %s1540, %s1540
                  %s1593 = sphi %s1549, %s1549
                $region131: #{discriminator_forward.8} parent=127 // loop_header_branch
                  %1590 = sbr.rel (%p1588) target = $region135
                $region132: #{discriminator_forward.8} parent=127 // loop_body
                  %v1594 = vld [vmem:[%s1592] sm:$0xff]
                  %1595 = vst [vmem:[%s1593] sm:$0xff] %v1594
                  %v1596 = vld [vmem:[%s1592 + $0x8] sm:$0xff]
                  %1597 = vst [vmem:[%s1593 + $0x10] sm:$0xff] %v1596
                  %v1598 = vld [vmem:[%s1592 + $0x10] sm:$0xff]
                  %1599 = vst [vmem:[%s1593 + $0x20] sm:$0xff] %v1598
                  %v1600 = vld [vmem:[%s1592 + $0x18] sm:$0xff]
                  %1601 = vst [vmem:[%s1593 + $0x30] sm:$0xff] %v1600
                  %v1602 = vld [vmem:[%s1592 + $0x20] sm:$0xff]
                  %1603 = vst [vmem:[%s1593 + $0x40] sm:$0xff] %v1602
                  %v1604 = vld [vmem:[%s1592 + $0x28] sm:$0xff]
                  %1605 = vst [vmem:[%s1593 + $0x50] sm:$0xff] %v1604
                  %v1606 = vld [vmem:[%s1592 + $0x30] sm:$0xff]
                  %1607 = vst [vmem:[%s1593 + $0x60] sm:$0xff] %v1606
                  %v1608 = vld [vmem:[%s1592 + $0x38] sm:$0xff]
                  %1609 = vst [vmem:[%s1593 + $0x70] sm:$0xff] %v1608
                  %v1610 = vld [vmem:[%s1592 + $0x40] sm:$0xff]
                  %1611 = vst [vmem:[%s1593 + $0x80] sm:$0xff] %v1610
                $region133: #{discriminator_forward.8} parent=127 // loop_footer
                  %s1591 = sadd.s32 1, %s1587
                $region134: #{discriminator_forward.8} parent=127 // loop_footer_branch
                  %1586 = sbr.rel target = $region130
                $region135: #{discriminator_forward.8} parent=127 // loop_exit
                  _
              $region128: #{discriminator_forward.8} parent=112 // pred_fallthru
                _
              // Predicated region
              $region136: #{discriminator_forward.8} parent=112 // pred_check
                _
              $region137: #{discriminator_forward.8} parent=112 // pred_check_branch
                %1613 = sbr.rel target = $region139
              $region138: #{discriminator_forward.8} parent=112 // pred_region
                _
              $region139: #{discriminator_forward.8} parent=112 // pred_fallthru
                _
            $region113: #{discriminator_forward.8} parent=108 // pred_fallthru
              _
            // Predicated region
            $region114: #{discriminator_forward.8} parent=108 // pred_check
              _
            $region115: #{discriminator_forward.8} parent=108 // pred_check_branch
              %1555 = sbr.rel target = $region117
            $region116: #{discriminator_forward.8} parent=108 // pred_region
              %s1557 = ssub.s32 256, 1
              loop: start=0, step=1, limit=1
              $region118: #{discriminator_forward.8} parent=116 // loop_pre_header
                _
              $region119: #{discriminator_forward.8} parent=116 // loop_header
                %s1559 = sphi 0, %s1563
                %p1560 = scmp.ge.s32.totalorder %s1559, 1
                %s1564 = sphi %s1540, %s1540
                %s1565 = sphi %s1549, %s1549
              $region120: #{discriminator_forward.8} parent=116 // loop_header_branch
                %1562 = sbr.rel (%p1560) target = $region124
              $region121: #{discriminator_forward.8} parent=116 // loop_body
                %v1566 = vld [vmem:[%s1564] sm:%s1557]
                %1567 = vst [vmem:[%s1565] sm:%s1557] %v1566
                %v1568 = vld [vmem:[%s1564 + $0x8] sm:%s1557]
                %1569 = vst [vmem:[%s1565 + $0x10] sm:%s1557] %v1568
                %v1570 = vld [vmem:[%s1564 + $0x10] sm:%s1557]
                %1571 = vst [vmem:[%s1565 + $0x20] sm:%s1557] %v1570
                %v1572 = vld [vmem:[%s1564 + $0x18] sm:%s1557]
                %1573 = vst [vmem:[%s1565 + $0x30] sm:%s1557] %v1572
                %v1574 = vld [vmem:[%s1564 + $0x20] sm:%s1557]
                %1575 = vst [vmem:[%s1565 + $0x40] sm:%s1557] %v1574
                %v1576 = vld [vmem:[%s1564 + $0x28] sm:%s1557]
                %1577 = vst [vmem:[%s1565 + $0x50] sm:%s1557] %v1576
                %v1578 = vld [vmem:[%s1564 + $0x30] sm:%s1557]
                %1579 = vst [vmem:[%s1565 + $0x60] sm:%s1557] %v1578
                %v1580 = vld [vmem:[%s1564 + $0x38] sm:%s1557]
                %1581 = vst [vmem:[%s1565 + $0x70] sm:%s1557] %v1580
                %v1582 = vld [vmem:[%s1564 + $0x40] sm:%s1557]
                %1583 = vst [vmem:[%s1565 + $0x80] sm:%s1557] %v1582
              $region122: #{discriminator_forward.8} parent=116 // loop_footer
                %s1563 = sadd.s32 1, %s1559
              $region123: #{discriminator_forward.8} parent=116 // loop_footer_branch
                %1558 = sbr.rel target = $region119
              $region124: #{discriminator_forward.8} parent=116 // loop_exit
                _
            $region117: #{discriminator_forward.8} parent=108 // pred_fallthru
              _
          $region109: #{discriminator_forward.8} parent=104 // pred_fallthru
            _
          %1614 = vnop
        $region105: #{discriminator_forward.8} parent=84 // pred_fallthru
          _
      $region85: #{discriminator_forward.8} parent=5 // pred_fallthru
        _
      %p1615 = scmp.le.s32.totalorder 2, %s9
      // Predicated region
      $region140: #{discriminator_forward.8} parent=5 // pred_check
        %p1616 = pneg %p1615
      $region141: #{discriminator_forward.8} parent=5 // pred_check_branch
        %1618 = sbr.rel (%p1616) target = $region143
      $region142: #{discriminator_forward.8} parent=5 // pred_region
        %s1619 = ssub.s32 %s9, 2
        // Predicated region
        $region144: #{discriminator_forward.8} parent=142 // pred_check
          %p1620 = pneg %p141
        $region145: #{discriminator_forward.8} parent=142 // pred_check_branch
          %1622 = sbr.rel (%p1620) target = $region147
        $region146: #{discriminator_forward.8} parent=142 // pred_region
          %s1623 = sand.u32 %s126, 1
          %s1624 = sand.u32 %s126, 1
          %s1625 = smul.addr %s1624, 72
          %s1626 = scalar_lea.vmem [#allocation5], %s1625
        $region147: #{discriminator_forward.8} parent=142 // pred_fallthru
          _
      $region143: #{discriminator_forward.8} parent=5 // pred_fallthru
        _
    $region6: #{discriminator_forward.8} parent=1 // loop_footer
      %s13 = sadd.s32 1, %s9
    $region7: #{discriminator_forward.8} parent=1 // loop_footer_branch
      %8 = sbr.rel target = $region3
    $region8: #{discriminator_forward.8} parent=1 // loop_exit
      _

// kernel: discriminator_forward.9
$region0: #{discriminator_forward.9}
  #allocation0 [shape = 'u32[]', space=smem, size = 0x4, offset = 0x4, fixed_abs, tag = 'smem constant byte address 0x4 - core index']
  #allocation1 [shape = 'u32[72,128]{1,0:T(1,128)}', space=vmem, size = 0x9000, scoped, tag = 'internal scratch']
  #allocation2 [shape = 'f32[8,256]{1,0:T(8,128)}', space=vmem, size = 0x2000, scoped, tag = 'scratch operand']
  %s0 = inlined_call_operand.vmem [shape: bf16[8,18432], index: 0, kind: input, shape index: {}]
  %s1 = inlined_call_operand.vmem [shape: bf16[18432,256], index: 1, kind: input, shape index: {}]
  %s2 = inlined_call_operand.vmem [shape: bf16[256,1024], index: 2, kind: input, shape index: {}]
  %s3 = inlined_call_operand.vmem [shape: f32[1,1024], index: 3, kind: input, shape index: {}]
  %s4 = inlined_call_operand.vmem [shape: f32[8,256], index: 4, kind: output, shape index: {0}]
  %s5 = inlined_call_operand.vmem [shape: f32[8,1024], index: 5, kind: output, shape index: {1}]
  %6 = xla_tuple %s4, %s5
  %s7 = sld [smem:[#allocation0]]
  $region65: #{discriminator_forward.9} parent=0
    _
  %s9 = ssub.s32 1, %s7
  %s10 = scalar_select 0, %s9, %s7
  loop: start=0, step=1, limit=38
  $region2: #{discriminator_forward.9} parent=0 // loop_pre_header
    _
  $region3: #{discriminator_forward.9} parent=0 // loop_header
    %s12 = sphi 0, %s16
    %p13 = scmp.ge.s32.totalorder %s12, 38
    %s22 = sphi 0, %s24
    %s25 = sphi 0, %s22
    %s26 = sphi 0, %s25
    %s42 = sphi 0, %s26
    %s48 = sphi 0, %s50
    %s51 = sphi 0, %s48
    %s52 = sphi 0, %s51
    %s68 = sphi 0, %s52
    %s72 = sphi 0, %s72
    %s74 = sphi 0, %s72
    %s75 = sphi 0, %s74
    %s89 = sphi 0, %s75
    %s93 = sphi 0, %s93
    %s95 = sphi 0, %s93
    %s96 = sphi 0, %s95
    %s110 = sphi 0, %s96
    %s114 = sphi 0, %s114
    %s116 = sphi 0, %s114
    %s117 = sphi 0, %s116
    %s131 = sphi 0, %s117
    %s135 = sphi 0, %s135
    %s137 = sphi 0, %s135
    %s138 = sphi 0, %s137
    %s152 = sphi 0, %s138
  $region4: #{discriminator_forward.9} parent=0 // loop_header_branch
    %15 = sbr.rel (%p13) target = $region8
  $region5: #{discriminator_forward.9} parent=0 // loop_body
    %s17 = ssub.s32 %s12, 1
    %s18 = ssub.s32 %s12, 2
    %s19 = sadd.s32 %s12, 1
    %s20 = ssub.s32 %s12, %s19
    %p21 = scmp.eq.s32.totalorder %s20, 0
    %s23 = sadd.s32 %s22, 1
    %s24 = scalar_select %p21, %s22, %s23
    %p27 = pneg %p21
    %p28 = scmp.eq.s32.totalorder %s12, 35
    %p29 = por %p27, %p28
    %p30 = scmp.ne.s32.totalorder %s22, %s25
    %p31 = scmp.eq.s32.totalorder %s12, 0
    %p32 = por %p30, %p31
    %p33 = scmp.ne.s32.totalorder %s22, %s25
    %p34 = scmp.eq.s32.totalorder %s17, 35
    %p35 = por %p33, %p34
    %p36 = scmp.ne.s32.totalorder %s25, %s26
    %p37 = scmp.eq.s32.totalorder %s17, 0
    %p38 = por %p36, %p37
    %p39 = scmp.ne.s32.totalorder %s25, %s26
    %p40 = scmp.eq.s32.totalorder %s18, 35
    %p41 = por %p39, %p40
    %p43 = scmp.ne.s32.totalorder %s26, %s42
    %p44 = scmp.eq.s32.totalorder %s18, 0
    %p45 = por %p43, %p44
    %s46 = ssub.s32 %s12, %s19
    %p47 = scmp.eq.s32.totalorder %s46, 0
    %s49 = sadd.s32 %s48, 1
    %s50 = scalar_select %p47, %s48, %s49
    %p53 = pneg %p47
    %p54 = scmp.eq.s32.totalorder %s12, 35
    %p55 = por %p53, %p54
    %p56 = scmp.ne.s32.totalorder %s48, %s51
    %p57 = scmp.eq.s32.totalorder %s12, 0
    %p58 = por %p56, %p57
    %p59 = scmp.ne.s32.totalorder %s48, %s51
    %p60 = scmp.eq.s32.totalorder %s17, 35
    %p61 = por %p59, %p60
    %p62 = scmp.ne.s32.totalorder %s51, %s52
    %p63 = scmp.eq.s32.totalorder %s17, 0
    %p64 = por %p62, %p63
    %p65 = scmp.ne.s32.totalorder %s51, %s52
    %p66 = scmp.eq.s32.totalorder %s18, 35
    %p67 = por %p65, %p66
    %p69 = scmp.ne.s32.totalorder %s52, %s68
    %p70 = scmp.eq.s32.totalorder %s18, 0
    %p71 = por %p69, %p70
    %s73 = sadd.s32 %s72, 1
    %p76 = scmp.eq.s32.totalorder %s12, 35
    %p77 = scmp.ne.s32.totalorder %s72, %s74
    %p78 = scmp.eq.s32.totalorder %s12, 0
    %p79 = por %p77, %p78
    %p80 = scmp.ne.s32.totalorder %s72, %s74
    %p81 = scmp.eq.s32.totalorder %s17, 35
    %p82 = por %p80, %p81
    %p83 = scmp.ne.s32.totalorder %s74, %s75
    %p84 = scmp.eq.s32.totalorder %s17, 0
    %p85 = por %p83, %p84
    %p86 = scmp.ne.s32.totalorder %s74, %s75
    %p87 = scmp.eq.s32.totalorder %s18, 35
    %p88 = por %p86, %p87
    %p90 = scmp.ne.s32.totalorder %s75, %s89
    %p91 = scmp.eq.s32.totalorder %s18, 0
    %p92 = por %p90, %p91
    %s94 = sadd.s32 %s93, 1
    %p97 = scmp.eq.s32.totalorder %s12, 35
    %p98 = scmp.ne.s32.totalorder %s93, %s95
    %p99 = scmp.eq.s32.totalorder %s12, 0
    %p100 = por %p98, %p99
    %p101 = scmp.ne.s32.totalorder %s93, %s95
    %p102 = scmp.eq.s32.totalorder %s17, 35
    %p103 = por %p101, %p102
    %p104 = scmp.ne.s32.totalorder %s95, %s96
    %p105 = scmp.eq.s32.totalorder %s17, 0
    %p106 = por %p104, %p105
    %p107 = scmp.ne.s32.totalorder %s95, %s96
    %p108 = scmp.eq.s32.totalorder %s18, 35
    %p109 = por %p107, %p108
    %p111 = scmp.ne.s32.totalorder %s96, %s110
    %p112 = scmp.eq.s32.totalorder %s18, 0
    %p113 = por %p111, %p112
    %s115 = sadd.s32 %s114, 1
    %p118 = scmp.eq.s32.totalorder %s12, 35
    %p119 = scmp.ne.s32.totalorder %s114, %s116
    %p120 = scmp.eq.s32.totalorder %s12, 0
    %p121 = por %p119, %p120
    %p122 = scmp.ne.s32.totalorder %s114, %s116
    %p123 = scmp.eq.s32.totalorder %s17, 35
    %p124 = por %p122, %p123
    %p125 = scmp.ne.s32.totalorder %s116, %s117
    %p126 = scmp.eq.s32.totalorder %s17, 0
    %p127 = por %p125, %p126
    %p128 = scmp.ne.s32.totalorder %s116, %s117
    %p129 = scmp.eq.s32.totalorder %s18, 35
    %p130 = por %p128, %p129
    %p132 = scmp.ne.s32.totalorder %s117, %s131
    %p133 = scmp.eq.s32.totalorder %s18, 0
    %p134 = por %p132, %p133
    %s136 = sadd.s32 %s135, 1
    %p139 = scmp.eq.s32.totalorder %s12, 35
    %p140 = scmp.ne.s32.totalorder %s135, %s137
    %p141 = scmp.eq.s32.totalorder %s12, 0
    %p142 = por %p140, %p141
    %p143 = scmp.ne.s32.totalorder %s135, %s137
    %p144 = scmp.eq.s32.totalorder %s17, 35
    %p145 = por %p143, %p144
    %p146 = scmp.ne.s32.totalorder %s137, %s138
    %p147 = scmp.eq.s32.totalorder %s17, 0
    %p148 = por %p146, %p147
    %p149 = scmp.ne.s32.totalorder %s137, %s138
    %p150 = scmp.eq.s32.totalorder %s18, 35
    %p151 = por %p149, %p150
    %p153 = scmp.ne.s32.totalorder %s138, %s152
    %p154 = scmp.eq.s32.totalorder %s18, 0
    %p155 = por %p153, %p154
    %p156 = scmp.le.s32.totalorder 1, %s12
    %p157 = scmp.lt.s32.totalorder %s12, 37
    %p158 = pnand %p156, %p157
    %p159 = pneg %p158
    // Predicated region
    $region9: #{discriminator_forward.9} parent=5 // pred_check
      _
    $region10: #{discriminator_forward.9} parent=5 // pred_check_branch
      %161 = sbr.rel (%p158) target = $region12
    $region11: #{discriminator_forward.9} parent=5 // pred_region
      %s162 = ssub.s32 %s12, 1
      // Predicated region
      $region13: #{discriminator_forward.9} parent=11 // pred_check
        %p163 = pneg %p85
      $region14: #{discriminator_forward.9} parent=11 // pred_check_branch
        %165 = sbr.rel (%p163) target = $region16
      $region15: #{discriminator_forward.9} parent=11 // pred_region
        _
      $region16: #{discriminator_forward.9} parent=11 // pred_fallthru
        _
      // Predicated region
      $region17: #{discriminator_forward.9} parent=11 // pred_check
        %p166 = pneg %p106
      $region18: #{discriminator_forward.9} parent=11 // pred_check_branch
        %168 = sbr.rel (%p166) target = $region20
      $region19: #{discriminator_forward.9} parent=11 // pred_region
        _
      $region20: #{discriminator_forward.9} parent=11 // pred_fallthru
        _
    $region12: #{discriminator_forward.9} parent=5 // pred_fallthru
      _
    %p169 = scmp.lt.s32.totalorder %s12, 36
    // Predicated region
    $region21: #{discriminator_forward.9} parent=5 // pred_check
      %p170 = pneg %p169
    $region22: #{discriminator_forward.9} parent=5 // pred_check_branch
      %172 = sbr.rel (%p170) target = $region24
    $region23: #{discriminator_forward.9} parent=5 // pred_region
      // Predicated region
      $region25: #{discriminator_forward.9} parent=23 // pred_check
        %p173 = pneg %p32
      $region26: #{discriminator_forward.9} parent=23 // pred_check_branch
        %175 = sbr.rel (%p173) target = $region28
      $region27: #{discriminator_forward.9} parent=23 // pred_region
        %s176 = smul.u32 4, %s12
        %p177 = scmp.lt.s32.totalorder %s176, 143
        %s178 = scalar_select %p177, %s176, 143
        %s179 = smul.addr %s178, 4
        %s180 = scalar_lea.vmem %s0, %s179
        %s181 = smul.u32 4, %s12
      $region28: #{discriminator_forward.9} parent=23 // pred_fallthru
        _
      // Predicated region
      $region29: #{discriminator_forward.9} parent=23 // pred_check
        %p182 = pneg %p58
      $region30: #{discriminator_forward.9} parent=23 // pred_check_branch
        %184 = sbr.rel (%p182) target = $region32
      $region31: #{discriminator_forward.9} parent=23 // pred_region
        %s185 = smul.u32 64, %s12
        %p186 = scmp.lt.s32.totalorder %s185, 2303
        %s187 = scalar_select %p186, %s185, 2303
        %s188 = smul.addr %s187, 2
        %s189 = smul.addr %s188, 4
        %s190 = scalar_lea.vmem %s1, %s189
        %s191 = smul.u32 64, %s12
      $region32: #{discriminator_forward.9} parent=23 // pred_fallthru
        _
    $region24: #{discriminator_forward.9} parent=5 // pred_fallthru
      _
    %p192 = scmp.le.s32.totalorder 1, %s12
    %p193 = scmp.lt.s32.totalorder %s12, 37
    %p194 = pnand %p192, %p193
    %p195 = pneg %p194
    // Predicated region
    $region33: #{discriminator_forward.9} parent=5 // pred_check
      _
    $region34: #{discriminator_forward.9} parent=5 // pred_check_branch
      %197 = sbr.rel (%p194) target = $region36
    $region35: #{discriminator_forward.9} parent=5 // pred_region
      %s198 = ssub.s32 %s12, 1
      %s199 = smul.u32 4, %s17
      %p200 = scmp.lt.s32.totalorder %s199, 143
      %s201 = scalar_select %p200, %s199, 143
      %s202 = smul.addr %s201, 4
      %s203 = scalar_lea.vmem %s0, %s202
      %p204 = pneg %p38
      %p205 = pneg %p35
      %s206 = smul.u32 64, %s17
      %p207 = scmp.lt.s32.totalorder %s206, 2303
      %s208 = scalar_select %p207, %s206, 2303
      %s209 = smul.addr %s208, 2
      %s210 = smul.addr %s209, 4
      %s211 = scalar_lea.vmem %s1, %s210
      %p212 = pneg %p64
      %p213 = pneg %p61
      %p214 = pneg %p85
      %p215 = pneg %p82
      %p216 = pneg %p106
      %p217 = pneg %p103
      %p218 = pneg %p127
      %p219 = pneg %p124
      %p220 = pneg %p148
      %p221 = pneg %p145
      %s222 = smul.u32 4, %s17
      %p223 = scmp.lt.s32.totalorder %s222, 143
      %s224 = scalar_select %p223, %s222, 143
      %s225 = smul.addr %s224, 4
      %s226 = scalar_lea.vmem %s0, %s225
      %s227 = smul.u32 4, %s17
      %s228 = smul.u32 64, %s17
      %p229 = scmp.lt.s32.totalorder %s228, 2303
      %s230 = scalar_select %p229, %s228, 2303
      %s231 = smul.addr %s230, 2
      %s232 = smul.addr %s231, 4
      %s233 = scalar_lea.vmem %s1, %s232
      %s234 = smul.u32 64, %s17
      %p235 = scmp.eq.s32.totalorder %s17, 0
      // Predicated region
      $region37: #{discriminator_forward.9} parent=35 // pred_check
        %p236 = pneg %p235
      $region38: #{discriminator_forward.9} parent=35 // pred_check_branch
        %238 = sbr.rel (%p236) target = $region40
      $region39: #{discriminator_forward.9} parent=35 // pred_region
        %239 = vst [vmem:[#allocation2] sm:$0xff] 0.0
        %240 = vst [vmem:[#allocation2 + $0x8] sm:$0xff] 0.0
      $region40: #{discriminator_forward.9} parent=35 // pred_fallthru
        _
      %v241 = vld [vmem:[#allocation2] sm:$0xff]
      %v242 = vld [vmem:[#allocation2 + $0x8] sm:$0xff]
      %v243 = vld [vmem:[%s226] sm:$0xff]
      %v244 = vld [vmem:[%s226 + $0x8] sm:$0xff]
      %v245 = vld [vmem:[%s233] sm:$0xff]
      %v246 = vld [vmem:[%s233 + $0x8] sm:$0xff]
      %v247 = vld [vmem:[%s233 + $0x10] sm:$0xff]
      %v248 = vld [vmem:[%s233 + $0x18] sm:$0xff]
      %v249 = vld [vmem:[%s233 + $0x20] sm:$0xff]
      %v250 = vld [vmem:[%s233 + $0x28] sm:$0xff]
      %v251 = vld [vmem:[%s233 + $0x30] sm:$0xff]
      %v252 = vld [vmem:[%s233 + $0x38] sm:$0xff]
      %v253 = vld [vmem:[%s233 + $0x40] sm:$0xff]
      %v254 = vld [vmem:[%s233 + $0x48] sm:$0xff]
      %v255 = vld [vmem:[%s233 + $0x50] sm:$0xff]
      %v256 = vld [vmem:[%s233 + $0x58] sm:$0xff]
      %v257 = vld [vmem:[%s233 + $0x60] sm:$0xff]
      %v258 = vld [vmem:[%s233 + $0x68] sm:$0xff]
      %v259 = vld [vmem:[%s233 + $0x70] sm:$0xff]
      %v260 = vld [vmem:[%s233 + $0x78] sm:$0xff]
      %v261 = vld [vmem:[%s233 + $0x80] sm:$0xff]
      %v262 = vld [vmem:[%s233 + $0x88] sm:$0xff]
      %v263 = vld [vmem:[%s233 + $0x90] sm:$0xff]
      %v264 = vld [vmem:[%s233 + $0x98] sm:$0xff]
      %v265 = vld [vmem:[%s233 + $0xa0] sm:$0xff]
      %v266 = vld [vmem:[%s233 + $0xa8] sm:$0xff]
      %v267 = vld [vmem:[%s233 + $0xb0] sm:$0xff]
      %v268 = vld [vmem:[%s233 + $0xb8] sm:$0xff]
      %v269 = vld [vmem:[%s233 + $0xc0] sm:$0xff]
      %v270 = vld [vmem:[%s233 + $0xc8] sm:$0xff]
      %v271 = vld [vmem:[%s233 + $0xd0] sm:$0xff]
      %v272 = vld [vmem:[%s233 + $0xd8] sm:$0xff]
      %v273 = vld [vmem:[%s233 + $0xe0] sm:$0xff]
      %v274 = vld [vmem:[%s233 + $0xe8] sm:$0xff]
      %v275 = vld [vmem:[%s233 + $0xf0] sm:$0xff]
      %v276 = vld [vmem:[%s233 + $0xf8] sm:$0xff]
      %v277 = vld [vmem:[%s233 + $0x100] sm:$0xff]
      %v278 = vld [vmem:[%s233 + $0x108] sm:$0xff]
      %v279 = vld [vmem:[%s233 + $0x110] sm:$0xff]
      %v280 = vld [vmem:[%s233 + $0x118] sm:$0xff]
      %v281 = vld [vmem:[%s233 + $0x120] sm:$0xff]
      %v282 = vld [vmem:[%s233 + $0x128] sm:$0xff]
      %v283 = vld [vmem:[%s233 + $0x130] sm:$0xff]
      %v284 = vld [vmem:[%s233 + $0x138] sm:$0xff]
      %v285 = vld [vmem:[%s233 + $0x140] sm:$0xff]
      %v286 = vld [vmem:[%s233 + $0x148] sm:$0xff]
      %v287 = vld [vmem:[%s233 + $0x150] sm:$0xff]
      %v288 = vld [vmem:[%s233 + $0x158] sm:$0xff]
      %v289 = vld [vmem:[%s233 + $0x160] sm:$0xff]
      %v290 = vld [vmem:[%s233 + $0x168] sm:$0xff]
      %v291 = vld [vmem:[%s233 + $0x170] sm:$0xff]
      %v292 = vld [vmem:[%s233 + $0x178] sm:$0xff]
      %v293 = vld [vmem:[%s233 + $0x180] sm:$0xff]
      %v294 = vld [vmem:[%s233 + $0x188] sm:$0xff]
      %v295 = vld [vmem:[%s233 + $0x190] sm:$0xff]
      %v296 = vld [vmem:[%s233 + $0x198] sm:$0xff]
      %v297 = vld [vmem:[%s233 + $0x1a0] sm:$0xff]
      %v298 = vld [vmem:[%s233 + $0x1a8] sm:$0xff]
      %v299 = vld [vmem:[%s233 + $0x1b0] sm:$0xff]
      %v300 = vld [vmem:[%s233 + $0x1b8] sm:$0xff]
      %v301 = vld [vmem:[%s233 + $0x1c0] sm:$0xff]
      %v302 = vld [vmem:[%s233 + $0x1c8] sm:$0xff]
      %v303 = vld [vmem:[%s233 + $0x1d0] sm:$0xff]
      %v304 = vld [vmem:[%s233 + $0x1d8] sm:$0xff]
      %v305 = vld [vmem:[%s233 + $0x1e0] sm:$0xff]
      %v306 = vld [vmem:[%s233 + $0x1e8] sm:$0xff]
      %v307 = vld [vmem:[%s233 + $0x1f0] sm:$0xff]
      %v308 = vld [vmem:[%s233 + $0x1f8] sm:$0xff]
      %v311 = vunpack.c.l.b16 %v243
      %v312 = vunpack.c.h.b16 %v243
      %v313 = vunpack.c.l.b16 %v244
      %v314 = vunpack.c.h.b16 %v244
      %v315 = vpack.c.b16 %v311, %v311
      %v316 = vpack.c.b16 %v312, %v312
      %v317 = vpack.c.b16 %v313, %v313
      %v318 = vpack.c.b16 %v314, %v314
      %v387 = vunpack.c.l.b16 %v245
      %v388 = vunpack.c.h.b16 %v245
      %v389 = vunpack.c.l.b16 %v246
      %v390 = vunpack.c.h.b16 %v246
      %v391 = vunpack.c.l.b16 %v247
      %v392 = vunpack.c.h.b16 %v247
      %v393 = vunpack.c.l.b16 %v248
      %v394 = vunpack.c.h.b16 %v248
      %v395 = vunpack.c.l.b16 %v249
      %v396 = vunpack.c.h.b16 %v249
      %v397 = vunpack.c.l.b16 %v250
      %v398 = vunpack.c.h.b16 %v250
      %v399 = vunpack.c.l.b16 %v251
      %v400 = vunpack.c.h.b16 %v251
      %v401 = vunpack.c.l.b16 %v252
      %v402 = vunpack.c.h.b16 %v252
      %v403 = vunpack.c.l.b16 %v253
      %v404 = vunpack.c.h.b16 %v253
      %v405 = vunpack.c.l.b16 %v254
      %v406 = vunpack.c.h.b16 %v254
      %v407 = vunpack.c.l.b16 %v255
      %v408 = vunpack.c.h.b16 %v255
      %v409 = vunpack.c.l.b16 %v256
      %v410 = vunpack.c.h.b16 %v256
      %v411 = vunpack.c.l.b16 %v257
      %v412 = vunpack.c.h.b16 %v257
      %v413 = vunpack.c.l.b16 %v258
      %v414 = vunpack.c.h.b16 %v258
      %v415 = vunpack.c.l.b16 %v259
      %v416 = vunpack.c.h.b16 %v259
      %v417 = vunpack.c.l.b16 %v260
      %v418 = vunpack.c.h.b16 %v260
      %v419 = vunpack.c.l.b16 %v261
      %v420 = vunpack.c.h.b16 %v261
      %v421 = vunpack.c.l.b16 %v262
      %v422 = vunpack.c.h.b16 %v262
      %v423 = vunpack.c.l.b16 %v263
      %v424 = vunpack.c.h.b16 %v263
      %v425 = vunpack.c.l.b16 %v264
      %v426 = vunpack.c.h.b16 %v264
      %v427 = vunpack.c.l.b16 %v265
      %v428 = vunpack.c.h.b16 %v265
      %v429 = vunpack.c.l.b16 %v266
      %v430 = vunpack.c.h.b16 %v266
      %v431 = vunpack.c.l.b16 %v267
      %v432 = vunpack.c.h.b16 %v267
      %v433 = vunpack.c.l.b16 %v268
      %v434 = vunpack.c.h.b16 %v268
      %v435 = vunpack.c.l.b16 %v269
      %v436 = vunpack.c.h.b16 %v269
      %v437 = vunpack.c.l.b16 %v270
      %v438 = vunpack.c.h.b16 %v270
      %v439 = vunpack.c.l.b16 %v271
      %v440 = vunpack.c.h.b16 %v271
      %v441 = vunpack.c.l.b16 %v272
      %v442 = vunpack.c.h.b16 %v272
      %v443 = vunpack.c.l.b16 %v273
      %v444 = vunpack.c.h.b16 %v273
      %v445 = vunpack.c.l.b16 %v274
      %v446 = vunpack.c.h.b16 %v274
      %v447 = vunpack.c.l.b16 %v275
      %v448 = vunpack.c.h.b16 %v275
      %v449 = vunpack.c.l.b16 %v276
      %v450 = vunpack.c.h.b16 %v276
      %v451 = vunpack.c.l.b16 %v277
      %v452 = vunpack.c.h.b16 %v277
      %v453 = vunpack.c.l.b16 %v278
      %v454 = vunpack.c.h.b16 %v278
      %v455 = vunpack.c.l.b16 %v279
      %v456 = vunpack.c.h.b16 %v279
      %v457 = vunpack.c.l.b16 %v280
      %v458 = vunpack.c.h.b16 %v280
      %v459 = vunpack.c.l.b16 %v281
      %v460 = vunpack.c.h.b16 %v281
      %v461 = vunpack.c.l.b16 %v282
      %v462 = vunpack.c.h.b16 %v282
      %v463 = vunpack.c.l.b16 %v283
      %v464 = vunpack.c.h.b16 %v283
      %v465 = vunpack.c.l.b16 %v284
      %v466 = vunpack.c.h.b16 %v284
      %v467 = vunpack.c.l.b16 %v285
      %v468 = vunpack.c.h.b16 %v285
      %v469 = vunpack.c.l.b16 %v286
      %v470 = vunpack.c.h.b16 %v286
      %v471 = vunpack.c.l.b16 %v287
      %v472 = vunpack.c.h.b16 %v287
      %v473 = vunpack.c.l.b16 %v288
      %v474 = vunpack.c.h.b16 %v288
      %v475 = vunpack.c.l.b16 %v289
      %v476 = vunpack.c.h.b16 %v289
      %v477 = vunpack.c.l.b16 %v290
      %v478 = vunpack.c.h.b16 %v290
      %v479 = vunpack.c.l.b16 %v291
      %v480 = vunpack.c.h.b16 %v291
      %v481 = vunpack.c.l.b16 %v292
      %v482 = vunpack.c.h.b16 %v292
      %v483 = vunpack.c.l.b16 %v293
      %v484 = vunpack.c.h.b16 %v293
      %v485 = vunpack.c.l.b16 %v294
      %v486 = vunpack.c.h.b16 %v294
      %v487 = vunpack.c.l.b16 %v295
      %v488 = vunpack.c.h.b16 %v295
      %v489 = vunpack.c.l.b16 %v296
      %v490 = vunpack.c.h.b16 %v296
      %v491 = vunpack.c.l.b16 %v297
      %v492 = vunpack.c.h.b16 %v297
      %v493 = vunpack.c.l.b16 %v298
      %v494 = vunpack.c.h.b16 %v298
      %v495 = vunpack.c.l.b16 %v299
      %v496 = vunpack.c.h.b16 %v299
      %v497 = vunpack.c.l.b16 %v300
      %v498 = vunpack.c.h.b16 %v300
      %v499 = vunpack.c.l.b16 %v301
      %v500 = vunpack.c.h.b16 %v301
      %v501 = vunpack.c.l.b16 %v302
      %v502 = vunpack.c.h.b16 %v302
      %v503 = vunpack.c.l.b16 %v303
      %v504 = vunpack.c.h.b16 %v303
      %v505 = vunpack.c.l.b16 %v304
      %v506 = vunpack.c.h.b16 %v304
      %v507 = vunpack.c.l.b16 %v305
      %v508 = vunpack.c.h.b16 %v305
      %v509 = vunpack.c.l.b16 %v306
      %v510 = vunpack.c.h.b16 %v306
      %v511 = vunpack.c.l.b16 %v307
      %v512 = vunpack.c.h.b16 %v307
      %v513 = vunpack.c.l.b16 %v308
      %v514 = vunpack.c.h.b16 %v308
      %v515 = vpack.c.b16 %v389, %v387
      %v516 = vpack.c.b16 %v390, %v388
      %v517 = vpack.c.b16 %v393, %v391
      %v518 = vpack.c.b16 %v394, %v392
      %v519 = vpack.c.b16 %v397, %v395
      %v520 = vpack.c.b16 %v398, %v396
      %v521 = vpack.c.b16 %v401, %v399
      %v522 = vpack.c.b16 %v402, %v400
      %v523 = vpack.c.b16 %v405, %v403
      %v524 = vpack.c.b16 %v406, %v404
      %v525 = vpack.c.b16 %v409, %v407
      %v526 = vpack.c.b16 %v410, %v408
      %v527 = vpack.c.b16 %v413, %v411
      %v528 = vpack.c.b16 %v414, %v412
      %v529 = vpack.c.b16 %v417, %v415
      %v530 = vpack.c.b16 %v418, %v416
      %v531 = vpack.c.b16 %v421, %v419
      %v532 = vpack.c.b16 %v422, %v420
      %v533 = vpack.c.b16 %v425, %v423
      %v534 = vpack.c.b16 %v426, %v424
      %v535 = vpack.c.b16 %v429, %v427
      %v536 = vpack.c.b16 %v430, %v428
      %v537 = vpack.c.b16 %v433, %v431
      %v538 = vpack.c.b16 %v434, %v432
      %v539 = vpack.c.b16 %v437, %v435
      %v540 = vpack.c.b16 %v438, %v436
      %v541 = vpack.c.b16 %v441, %v439
      %v542 = vpack.c.b16 %v442, %v440
      %v543 = vpack.c.b16 %v445, %v443
      %v544 = vpack.c.b16 %v446, %v444
      %v545 = vpack.c.b16 %v449, %v447
      %v546 = vpack.c.b16 %v450, %v448
      %v547 = vpack.c.b16 %v453, %v451
      %v548 = vpack.c.b16 %v454, %v452
      %v549 = vpack.c.b16 %v457, %v455
      %v550 = vpack.c.b16 %v458, %v456
      %v551 = vpack.c.b16 %v461, %v459
      %v552 = vpack.c.b16 %v462, %v460
      %v553 = vpack.c.b16 %v465, %v463
      %v554 = vpack.c.b16 %v466, %v464
      %v555 = vpack.c.b16 %v469, %v467
      %v556 = vpack.c.b16 %v470, %v468
      %v557 = vpack.c.b16 %v473, %v471
      %v558 = vpack.c.b16 %v474, %v472
      %v559 = vpack.c.b16 %v477, %v475
      %v560 = vpack.c.b16 %v478, %v476
      %v561 = vpack.c.b16 %v481, %v479
      %v562 = vpack.c.b16 %v482, %v480
      %v563 = vpack.c.b16 %v485, %v483
      %v564 = vpack.c.b16 %v486, %v484
      %v565 = vpack.c.b16 %v489, %v487
      %v566 = vpack.c.b16 %v490, %v488
      %v567 = vpack.c.b16 %v493, %v491
      %v568 = vpack.c.b16 %v494, %v492
      %v569 = vpack.c.b16 %v497, %v495
      %v570 = vpack.c.b16 %v498, %v496
      %v571 = vpack.c.b16 %v501, %v499
      %v572 = vpack.c.b16 %v502, %v500
      %v573 = vpack.c.b16 %v505, %v503
      %v574 = vpack.c.b16 %v506, %v504
      %v575 = vpack.c.b16 %v509, %v507
      %v576 = vpack.c.b16 %v510, %v508
      %v577 = vpack.c.b16 %v513, %v511
      %v578 = vpack.c.b16 %v514, %v512
      %643 = vmatpush.bf16.msra.mxu0 %v529
      %644 = vmatpush.bf16.msra.mxu0 %v527
      %645 = vmatpush.bf16.msra.mxu0 %v525
      %646 = vmatpush.bf16.msra.mxu0 %v523
      %647 = vmatpush.bf16.msra.mxu0 %v521
      %648 = vmatpush.bf16.msra.mxu0 %v519
      %649 = vmatpush.bf16.msra.mxu0 %v517
      %650 = vmatpush.bf16.msra.mxu0 %v515
      %651 = vmatmul.bf16.gmra.mxu0 %v315
      %v652 = vpop.f32.mrf.mxu0
      %v653 = vadd.f32 0.0, %v652
      %v654 = vpop.f32.mrf.mxu0
      %655 = vdwg.mxu0
      %656 = vmatpush.bf16.msra.mxu0 %v545
      %657 = vmatpush.bf16.msra.mxu0 %v543
      %658 = vmatpush.bf16.msra.mxu0 %v541
      %659 = vmatpush.bf16.msra.mxu0 %v539
      %660 = vmatpush.bf16.msra.mxu0 %v537
      %661 = vmatpush.bf16.msra.mxu0 %v535
      %662 = vmatpush.bf16.msra.mxu0 %v533
      %663 = vmatpush.bf16.msra.mxu0 %v531
      %664 = vmatmul.bf16.gmra.mxu0 %v316
      %v665 = vpop.f32.mrf.mxu0
      %v666 = vadd.f32 %v653, %v665
      %v667 = vpop.f32.mrf.mxu0
      %668 = vdwg.mxu0
      %669 = vmatpush.bf16.msra.mxu0 %v561
      %670 = vmatpush.bf16.msra.mxu0 %v559
      %671 = vmatpush.bf16.msra.mxu0 %v557
      %672 = vmatpush.bf16.msra.mxu0 %v555
      %673 = vmatpush.bf16.msra.mxu0 %v553
      %674 = vmatpush.bf16.msra.mxu0 %v551
      %675 = vmatpush.bf16.msra.mxu0 %v549
      %676 = vmatpush.bf16.msra.mxu0 %v547
      %677 = vmatmul.bf16.gmra.mxu0 %v317
      %v678 = vpop.f32.mrf.mxu0
      %v679 = vadd.f32 %v666, %v678
      %v680 = vpop.f32.mrf.mxu0
      %681 = vdwg.mxu0
      %682 = vmatpush.bf16.msra.mxu0 %v577
      %683 = vmatpush.bf16.msra.mxu0 %v575
      %684 = vmatpush.bf16.msra.mxu0 %v573
      %685 = vmatpush.bf16.msra.mxu0 %v571
      %686 = vmatpush.bf16.msra.mxu0 %v569
      %687 = vmatpush.bf16.msra.mxu0 %v567
      %688 = vmatpush.bf16.msra.mxu0 %v565
      %689 = vmatpush.bf16.msra.mxu0 %v563
      %690 = vmatmul.bf16.gmra.mxu0 %v318
      %v691 = vpop.f32.mrf.mxu0
      %v692 = vadd.f32 %v679, %v691
      %v693 = vpop.f32.mrf.mxu0
      %694 = vdwg.mxu0
      %695 = vmatpush.bf16.msra.mxu0 %v530
      %696 = vmatpush.bf16.msra.mxu0 %v528
      %697 = vmatpush.bf16.msra.mxu0 %v526
      %698 = vmatpush.bf16.msra.mxu0 %v524
      %699 = vmatpush.bf16.msra.mxu0 %v522
      %700 = vmatpush.bf16.msra.mxu0 %v520
      %701 = vmatpush.bf16.msra.mxu0 %v518
      %702 = vmatpush.bf16.msra.mxu0 %v516
      %703 = vmatmul.bf16.gmra.mxu0 %v315
      %v704 = vpop.f32.mrf.mxu0
      %v705 = vadd.f32 0.0, %v704
      %v706 = vpop.f32.mrf.mxu0
      %707 = vdwg.mxu0
      %708 = vmatpush.bf16.msra.mxu0 %v546
      %709 = vmatpush.bf16.msra.mxu0 %v544
      %710 = vmatpush.bf16.msra.mxu0 %v542
      %711 = vmatpush.bf16.msra.mxu0 %v540
      %712 = vmatpush.bf16.msra.mxu0 %v538
      %713 = vmatpush.bf16.msra.mxu0 %v536
      %714 = vmatpush.bf16.msra.mxu0 %v534
      %715 = vmatpush.bf16.msra.mxu0 %v532
      %716 = vmatmul.bf16.gmra.mxu0 %v316
      %v717 = vpop.f32.mrf.mxu0
      %v718 = vadd.f32 %v705, %v717
      %v719 = vpop.f32.mrf.mxu0
      %720 = vdwg.mxu0
      %721 = vmatpush.bf16.msra.mxu0 %v562
      %722 = vmatpush.bf16.msra.mxu0 %v560
      %723 = vmatpush.bf16.msra.mxu0 %v558
      %724 = vmatpush.bf16.msra.mxu0 %v556
      %725 = vmatpush.bf16.msra.mxu0 %v554
      %726 = vmatpush.bf16.msra.mxu0 %v552
      %727 = vmatpush.bf16.msra.mxu0 %v550
      %728 = vmatpush.bf16.msra.mxu0 %v548
      %729 = vmatmul.bf16.gmra.mxu0 %v317
      %v730 = vpop.f32.mrf.mxu0
      %v731 = vadd.f32 %v718, %v730
      %v732 = vpop.f32.mrf.mxu0
      %733 = vdwg.mxu0
      %734 = vmatpush.bf16.msra.mxu0 %v578
      %735 = vmatpush.bf16.msra.mxu0 %v576
      %736 = vmatpush.bf16.msra.mxu0 %v574
      %737 = vmatpush.bf16.msra.mxu0 %v572
      %738 = vmatpush.bf16.msra.mxu0 %v570
      %739 = vmatpush.bf16.msra.mxu0 %v568
      %740 = vmatpush.bf16.msra.mxu0 %v566
      %741 = vmatpush.bf16.msra.mxu0 %v564
      %742 = vmatmul.bf16.gmra.mxu0 %v318
      %v743 = vpop.f32.mrf.mxu0
      %v744 = vadd.f32 %v731, %v743
      %v745 = vpop.f32.mrf.mxu0
      %746 = vdwg.mxu0
      %v747 = vadd.f32 %v241, %v692
      %v748 = vadd.f32 %v242, %v744
      %749 = vst [vmem:[#allocation2] sm:$0xff] %v747
      %750 = vst [vmem:[#allocation2 + $0x8] sm:$0xff] %v748
      %p751 = scmp.eq.s32.totalorder %s17, 35
      // Predicated region
      $region41: #{discriminator_forward.9} parent=35 // pred_check
        %p752 = pneg %p751
      $region42: #{discriminator_forward.9} parent=35 // pred_check_branch
        %754 = sbr.rel (%p752) target = $region44
      $region43: #{discriminator_forward.9} parent=35 // pred_region
        %v755 = vld [vmem:[#allocation2] sm:$0xff]
        %v756 = vld [vmem:[#allocation2 + $0x8] sm:$0xff]
        %757 = vst [vmem:[%s4] sm:$0xff] %v755
        %758 = vst [vmem:[%s4 + $0x8] sm:$0xff] %v756
        %v759 = vpack.c.bf16 %v755, %v755
        %v760 = vpack.c.bf16 %v756, %v756
        %v761 = vld [vmem:[%s2] sm:$0xff]
        %v762 = vld [vmem:[%s2 + $0x8] sm:$0xff]
        %v763 = vld [vmem:[%s2 + $0x10] sm:$0xff]
        %v764 = vld [vmem:[%s2 + $0x18] sm:$0xff]
        %v765 = vld [vmem:[%s2 + $0x20] sm:$0xff]
        %v766 = vld [vmem:[%s2 + $0x28] sm:$0xff]
        %v767 = vld [vmem:[%s2 + $0x30] sm:$0xff]
        %v768 = vld [vmem:[%s2 + $0x38] sm:$0xff]
        %v769 = vld [vmem:[%s2 + $0x40] sm:$0xff]
        %v770 = vld [vmem:[%s2 + $0x48] sm:$0xff]
        %v771 = vld [vmem:[%s2 + $0x50] sm:$0xff]
        %v772 = vld [vmem:[%s2 + $0x58] sm:$0xff]
        %v773 = vld [vmem:[%s2 + $0x60] sm:$0xff]
        %v774 = vld [vmem:[%s2 + $0x68] sm:$0xff]
        %v775 = vld [vmem:[%s2 + $0x70] sm:$0xff]
        %v776 = vld [vmem:[%s2 + $0x78] sm:$0xff]
        %v777 = vld [vmem:[%s2 + $0x80] sm:$0xff]
        %v778 = vld [vmem:[%s2 + $0x88] sm:$0xff]
        %v779 = vld [vmem:[%s2 + $0x90] sm:$0xff]
        %v780 = vld [vmem:[%s2 + $0x98] sm:$0xff]
        %v781 = vld [vmem:[%s2 + $0xa0] sm:$0xff]
        %v782 = vld [vmem:[%s2 + $0xa8] sm:$0xff]
        %v783 = vld [vmem:[%s2 + $0xb0] sm:$0xff]
        %v784 = vld [vmem:[%s2 + $0xb8] sm:$0xff]
        %v785 = vld [vmem:[%s2 + $0xc0] sm:$0xff]
        %v786 = vld [vmem:[%s2 + $0xc8] sm:$0xff]
        %v787 = vld [vmem:[%s2 + $0xd0] sm:$0xff]
        %v788 = vld [vmem:[%s2 + $0xd8] sm:$0xff]
        %v789 = vld [vmem:[%s2 + $0xe0] sm:$0xff]
        %v790 = vld [vmem:[%s2 + $0xe8] sm:$0xff]
        %v791 = vld [vmem:[%s2 + $0xf0] sm:$0xff]
        %v792 = vld [vmem:[%s2 + $0xf8] sm:$0xff]
        %v793 = vld [vmem:[%s2 + $0x100] sm:$0xff]
        %v794 = vld [vmem:[%s2 + $0x108] sm:$0xff]
        %v795 = vld [vmem:[%s2 + $0x110] sm:$0xff]
        %v796 = vld [vmem:[%s2 + $0x118] sm:$0xff]
        %v797 = vld [vmem:[%s2 + $0x120] sm:$0xff]
        %v798 = vld [vmem:[%s2 + $0x128] sm:$0xff]
        %v799 = vld [vmem:[%s2 + $0x130] sm:$0xff]
        %v800 = vld [vmem:[%s2 + $0x138] sm:$0xff]
        %v801 = vld [vmem:[%s2 + $0x140] sm:$0xff]
        %v802 = vld [vmem:[%s2 + $0x148] sm:$0xff]
        %v803 = vld [vmem:[%s2 + $0x150] sm:$0xff]
        %v804 = vld [vmem:[%s2 + $0x158] sm:$0xff]
        %v805 = vld [vmem:[%s2 + $0x160] sm:$0xff]
        %v806 = vld [vmem:[%s2 + $0x168] sm:$0xff]
        %v807 = vld [vmem:[%s2 + $0x170] sm:$0xff]
        %v808 = vld [vmem:[%s2 + $0x178] sm:$0xff]
        %v809 = vld [vmem:[%s2 + $0x180] sm:$0xff]
        %v810 = vld [vmem:[%s2 + $0x188] sm:$0xff]
        %v811 = vld [vmem:[%s2 + $0x190] sm:$0xff]
        %v812 = vld [vmem:[%s2 + $0x198] sm:$0xff]
        %v813 = vld [vmem:[%s2 + $0x1a0] sm:$0xff]
        %v814 = vld [vmem:[%s2 + $0x1a8] sm:$0xff]
        %v815 = vld [vmem:[%s2 + $0x1b0] sm:$0xff]
        %v816 = vld [vmem:[%s2 + $0x1b8] sm:$0xff]
        %v817 = vld [vmem:[%s2 + $0x1c0] sm:$0xff]
        %v818 = vld [vmem:[%s2 + $0x1c8] sm:$0xff]
        %v819 = vld [vmem:[%s2 + $0x1d0] sm:$0xff]
        %v820 = vld [vmem:[%s2 + $0x1d8] sm:$0xff]
        %v821 = vld [vmem:[%s2 + $0x1e0] sm:$0xff]
        %v822 = vld [vmem:[%s2 + $0x1e8] sm:$0xff]
        %v823 = vld [vmem:[%s2 + $0x1f0] sm:$0xff]
        %v824 = vld [vmem:[%s2 + $0x1f8] sm:$0xff]
        %v825 = vld [vmem:[%s2 + $0x200] sm:$0xff]
        %v826 = vld [vmem:[%s2 + $0x208] sm:$0xff]
        %v827 = vld [vmem:[%s2 + $0x210] sm:$0xff]
        %v828 = vld [vmem:[%s2 + $0x218] sm:$0xff]
        %v829 = vld [vmem:[%s2 + $0x220] sm:$0xff]
        %v830 = vld [vmem:[%s2 + $0x228] sm:$0xff]
        %v831 = vld [vmem:[%s2 + $0x230] sm:$0xff]
        %v832 = vld [vmem:[%s2 + $0x238] sm:$0xff]
        %v833 = vld [vmem:[%s2 + $0x240] sm:$0xff]
        %v834 = vld [vmem:[%s2 + $0x248] sm:$0xff]
        %v835 = vld [vmem:[%s2 + $0x250] sm:$0xff]
        %v836 = vld [vmem:[%s2 + $0x258] sm:$0xff]
        %v837 = vld [vmem:[%s2 + $0x260] sm:$0xff]
        %v838 = vld [vmem:[%s2 + $0x268] sm:$0xff]
        %v839 = vld [vmem:[%s2 + $0x270] sm:$0xff]
        %v840 = vld [vmem:[%s2 + $0x278] sm:$0xff]
        %v841 = vld [vmem:[%s2 + $0x280] sm:$0xff]
        %v842 = vld [vmem:[%s2 + $0x288] sm:$0xff]
        %v843 = vld [vmem:[%s2 + $0x290] sm:$0xff]
        %v844 = vld [vmem:[%s2 + $0x298] sm:$0xff]
        %v845 = vld [vmem:[%s2 + $0x2a0] sm:$0xff]
        %v846 = vld [vmem:[%s2 + $0x2a8] sm:$0xff]
        %v847 = vld [vmem:[%s2 + $0x2b0] sm:$0xff]
        %v848 = vld [vmem:[%s2 + $0x2b8] sm:$0xff]
        %v849 = vld [vmem:[%s2 + $0x2c0] sm:$0xff]
        %v850 = vld [vmem:[%s2 + $0x2c8] sm:$0xff]
        %v851 = vld [vmem:[%s2 + $0x2d0] sm:$0xff]
        %v852 = vld [vmem:[%s2 + $0x2d8] sm:$0xff]
        %v853 = vld [vmem:[%s2 + $0x2e0] sm:$0xff]
        %v854 = vld [vmem:[%s2 + $0x2e8] sm:$0xff]
        %v855 = vld [vmem:[%s2 + $0x2f0] sm:$0xff]
        %v856 = vld [vmem:[%s2 + $0x2f8] sm:$0xff]
        %v857 = vld [vmem:[%s2 + $0x300] sm:$0xff]
        %v858 = vld [vmem:[%s2 + $0x308] sm:$0xff]
        %v859 = vld [vmem:[%s2 + $0x310] sm:$0xff]
        %v860 = vld [vmem:[%s2 + $0x318] sm:$0xff]
        %v861 = vld [vmem:[%s2 + $0x320] sm:$0xff]
        %v862 = vld [vmem:[%s2 + $0x328] sm:$0xff]
        %v863 = vld [vmem:[%s2 + $0x330] sm:$0xff]
        %v864 = vld [vmem:[%s2 + $0x338] sm:$0xff]
        %v865 = vld [vmem:[%s2 + $0x340] sm:$0xff]
        %v866 = vld [vmem:[%s2 + $0x348] sm:$0xff]
        %v867 = vld [vmem:[%s2 + $0x350] sm:$0xff]
        %v868 = vld [vmem:[%s2 + $0x358] sm:$0xff]
        %v869 = vld [vmem:[%s2 + $0x360] sm:$0xff]
        %v870 = vld [vmem:[%s2 + $0x368] sm:$0xff]
        %v871 = vld [vmem:[%s2 + $0x370] sm:$0xff]
        %v872 = vld [vmem:[%s2 + $0x378] sm:$0xff]
        %v873 = vld [vmem:[%s2 + $0x380] sm:$0xff]
        %v874 = vld [vmem:[%s2 + $0x388] sm:$0xff]
        %v875 = vld [vmem:[%s2 + $0x390] sm:$0xff]
        %v876 = vld [vmem:[%s2 + $0x398] sm:$0xff]
        %v877 = vld [vmem:[%s2 + $0x3a0] sm:$0xff]
        %v878 = vld [vmem:[%s2 + $0x3a8] sm:$0xff]
        %v879 = vld [vmem:[%s2 + $0x3b0] sm:$0xff]
        %v880 = vld [vmem:[%s2 + $0x3b8] sm:$0xff]
        %v881 = vld [vmem:[%s2 + $0x3c0] sm:$0xff]
        %v882 = vld [vmem:[%s2 + $0x3c8] sm:$0xff]
        %v883 = vld [vmem:[%s2 + $0x3d0] sm:$0xff]
        %v884 = vld [vmem:[%s2 + $0x3d8] sm:$0xff]
        %v885 = vld [vmem:[%s2 + $0x3e0] sm:$0xff]
        %v886 = vld [vmem:[%s2 + $0x3e8] sm:$0xff]
        %v887 = vld [vmem:[%s2 + $0x3f0] sm:$0xff]
        %v888 = vld [vmem:[%s2 + $0x3f8] sm:$0xff]
        %v889 = vld [vmem:[%s3] sm:$0xff]
        %v891 = vperm.slane %v889, 0
        %v892 = vperm.slane %v889, 1
        %v893 = vperm.slane %v889, 2
        %v894 = vperm.slane %v889, 3
        %v895 = vperm.slane %v889, 4
        %v896 = vperm.slane %v889, 5
        %v897 = vperm.slane %v889, 6
        %v898 = vperm.slane %v889, 7
        %v1035 = vunpack.c.l.b16 %v761
        %v1036 = vunpack.c.h.b16 %v761
        %v1037 = vunpack.c.l.b16 %v762
        %v1038 = vunpack.c.h.b16 %v762
        %v1039 = vunpack.c.l.b16 %v763
        %v1040 = vunpack.c.h.b16 %v763
        %v1041 = vunpack.c.l.b16 %v764
        %v1042 = vunpack.c.h.b16 %v764
        %v1043 = vunpack.c.l.b16 %v765
        %v1044 = vunpack.c.h.b16 %v765
        %v1045 = vunpack.c.l.b16 %v766
        %v1046 = vunpack.c.h.b16 %v766
        %v1047 = vunpack.c.l.b16 %v767
        %v1048 = vunpack.c.h.b16 %v767
        %v1049 = vunpack.c.l.b16 %v768
        %v1050 = vunpack.c.h.b16 %v768
        %v1051 = vunpack.c.l.b16 %v769
        %v1052 = vunpack.c.h.b16 %v769
        %v1053 = vunpack.c.l.b16 %v770
        %v1054 = vunpack.c.h.b16 %v770
        %v1055 = vunpack.c.l.b16 %v771
        %v1056 = vunpack.c.h.b16 %v771
        %v1057 = vunpack.c.l.b16 %v772
        %v1058 = vunpack.c.h.b16 %v772
        %v1059 = vunpack.c.l.b16 %v773
        %v1060 = vunpack.c.h.b16 %v773
        %v1061 = vunpack.c.l.b16 %v774
        %v1062 = vunpack.c.h.b16 %v774
        %v1063 = vunpack.c.l.b16 %v775
        %v1064 = vunpack.c.h.b16 %v775
        %v1065 = vunpack.c.l.b16 %v776
        %v1066 = vunpack.c.h.b16 %v776
        %v1067 = vunpack.c.l.b16 %v777
        %v1068 = vunpack.c.h.b16 %v777
        %v1069 = vunpack.c.l.b16 %v778
        %v1070 = vunpack.c.h.b16 %v778
        %v1071 = vunpack.c.l.b16 %v779
        %v1072 = vunpack.c.h.b16 %v779
        %v1073 = vunpack.c.l.b16 %v780
        %v1074 = vunpack.c.h.b16 %v780
        %v1075 = vunpack.c.l.b16 %v781
        %v1076 = vunpack.c.h.b16 %v781
        %v1077 = vunpack.c.l.b16 %v782
        %v1078 = vunpack.c.h.b16 %v782
        %v1079 = vunpack.c.l.b16 %v783
        %v1080 = vunpack.c.h.b16 %v783
        %v1081 = vunpack.c.l.b16 %v784
        %v1082 = vunpack.c.h.b16 %v784
        %v1083 = vunpack.c.l.b16 %v785
        %v1084 = vunpack.c.h.b16 %v785
        %v1085 = vunpack.c.l.b16 %v786
        %v1086 = vunpack.c.h.b16 %v786
        %v1087 = vunpack.c.l.b16 %v787
        %v1088 = vunpack.c.h.b16 %v787
        %v1089 = vunpack.c.l.b16 %v788
        %v1090 = vunpack.c.h.b16 %v788
        %v1091 = vunpack.c.l.b16 %v789
        %v1092 = vunpack.c.h.b16 %v789
        %v1093 = vunpack.c.l.b16 %v790
        %v1094 = vunpack.c.h.b16 %v790
        %v1095 = vunpack.c.l.b16 %v791
        %v1096 = vunpack.c.h.b16 %v791
        %v1097 = vunpack.c.l.b16 %v792
        %v1098 = vunpack.c.h.b16 %v792
        %v1099 = vunpack.c.l.b16 %v793
        %v1100 = vunpack.c.h.b16 %v793
        %v1101 = vunpack.c.l.b16 %v794
        %v1102 = vunpack.c.h.b16 %v794
        %v1103 = vunpack.c.l.b16 %v795
        %v1104 = vunpack.c.h.b16 %v795
        %v1105 = vunpack.c.l.b16 %v796
        %v1106 = vunpack.c.h.b16 %v796
        %v1107 = vunpack.c.l.b16 %v797
        %v1108 = vunpack.c.h.b16 %v797
        %v1109 = vunpack.c.l.b16 %v798
        %v1110 = vunpack.c.h.b16 %v798
        %v1111 = vunpack.c.l.b16 %v799
        %v1112 = vunpack.c.h.b16 %v799
        %v1113 = vunpack.c.l.b16 %v800
        %v1114 = vunpack.c.h.b16 %v800
        %v1115 = vunpack.c.l.b16 %v801
        %v1116 = vunpack.c.h.b16 %v801
        %v1117 = vunpack.c.l.b16 %v802
        %v1118 = vunpack.c.h.b16 %v802
        %v1119 = vunpack.c.l.b16 %v803
        %v1120 = vunpack.c.h.b16 %v803
        %v1121 = vunpack.c.l.b16 %v804
        %v1122 = vunpack.c.h.b16 %v804
        %v1123 = vunpack.c.l.b16 %v805
        %v1124 = vunpack.c.h.b16 %v805
        %v1125 = vunpack.c.l.b16 %v806
        %v1126 = vunpack.c.h.b16 %v806
        %v1127 = vunpack.c.l.b16 %v807
        %v1128 = vunpack.c.h.b16 %v807
        %v1129 = vunpack.c.l.b16 %v808
        %v1130 = vunpack.c.h.b16 %v808
        %v1131 = vunpack.c.l.b16 %v809
        %v1132 = vunpack.c.h.b16 %v809
        %v1133 = vunpack.c.l.b16 %v810
        %v1134 = vunpack.c.h.b16 %v810
        %v1135 = vunpack.c.l.b16 %v811
        %v1136 = vunpack.c.h.b16 %v811
        %v1137 = vunpack.c.l.b16 %v812
        %v1138 = vunpack.c.h.b16 %v812
        %v1139 = vunpack.c.l.b16 %v813
        %v1140 = vunpack.c.h.b16 %v813
        %v1141 = vunpack.c.l.b16 %v814
        %v1142 = vunpack.c.h.b16 %v814
        %v1143 = vunpack.c.l.b16 %v815
        %v1144 = vunpack.c.h.b16 %v815
        %v1145 = vunpack.c.l.b16 %v816
        %v1146 = vunpack.c.h.b16 %v816
        %v1147 = vunpack.c.l.b16 %v817
        %v1148 = vunpack.c.h.b16 %v817
        %v1149 = vunpack.c.l.b16 %v818
        %v1150 = vunpack.c.h.b16 %v818
        %v1151 = vunpack.c.l.b16 %v819
        %v1152 = vunpack.c.h.b16 %v819
        %v1153 = vunpack.c.l.b16 %v820
        %v1154 = vunpack.c.h.b16 %v820
        %v1155 = vunpack.c.l.b16 %v821
        %v1156 = vunpack.c.h.b16 %v821
        %v1157 = vunpack.c.l.b16 %v822
        %v1158 = vunpack.c.h.b16 %v822
        %v1159 = vunpack.c.l.b16 %v823
        %v1160 = vunpack.c.h.b16 %v823
        %v1161 = vunpack.c.l.b16 %v824
        %v1162 = vunpack.c.h.b16 %v824
        %v1163 = vunpack.c.l.b16 %v825
        %v1164 = vunpack.c.h.b16 %v825
        %v1165 = vunpack.c.l.b16 %v826
        %v1166 = vunpack.c.h.b16 %v826
        %v1167 = vunpack.c.l.b16 %v827
        %v1168 = vunpack.c.h.b16 %v827
        %v1169 = vunpack.c.l.b16 %v828
        %v1170 = vunpack.c.h.b16 %v828
        %v1171 = vunpack.c.l.b16 %v829
        %v1172 = vunpack.c.h.b16 %v829
        %v1173 = vunpack.c.l.b16 %v830
        %v1174 = vunpack.c.h.b16 %v830
        %v1175 = vunpack.c.l.b16 %v831
        %v1176 = vunpack.c.h.b16 %v831
        %v1177 = vunpack.c.l.b16 %v832
        %v1178 = vunpack.c.h.b16 %v832
        %v1179 = vunpack.c.l.b16 %v833
        %v1180 = vunpack.c.h.b16 %v833
        %v1181 = vunpack.c.l.b16 %v834
        %v1182 = vunpack.c.h.b16 %v834
        %v1183 = vunpack.c.l.b16 %v835
        %v1184 = vunpack.c.h.b16 %v835
        %v1185 = vunpack.c.l.b16 %v836
        %v1186 = vunpack.c.h.b16 %v836
        %v1187 = vunpack.c.l.b16 %v837
        %v1188 = vunpack.c.h.b16 %v837
        %v1189 = vunpack.c.l.b16 %v838
        %v1190 = vunpack.c.h.b16 %v838
        %v1191 = vunpack.c.l.b16 %v839
        %v1192 = vunpack.c.h.b16 %v839
        %v1193 = vunpack.c.l.b16 %v840
        %v1194 = vunpack.c.h.b16 %v840
        %v1195 = vunpack.c.l.b16 %v841
        %v1196 = vunpack.c.h.b16 %v841
        %v1197 = vunpack.c.l.b16 %v842
        %v1198 = vunpack.c.h.b16 %v842
        %v1199 = vunpack.c.l.b16 %v843
        %v1200 = vunpack.c.h.b16 %v843
        %v1201 = vunpack.c.l.b16 %v844
        %v1202 = vunpack.c.h.b16 %v844
        %v1203 = vunpack.c.l.b16 %v845
        %v1204 = vunpack.c.h.b16 %v845
        %v1205 = vunpack.c.l.b16 %v846
        %v1206 = vunpack.c.h.b16 %v846
        %v1207 = vunpack.c.l.b16 %v847
        %v1208 = vunpack.c.h.b16 %v847
        %v1209 = vunpack.c.l.b16 %v848
        %v1210 = vunpack.c.h.b16 %v848
        %v1211 = vunpack.c.l.b16 %v849
        %v1212 = vunpack.c.h.b16 %v849
        %v1213 = vunpack.c.l.b16 %v850
        %v1214 = vunpack.c.h.b16 %v850
        %v1215 = vunpack.c.l.b16 %v851
        %v1216 = vunpack.c.h.b16 %v851
        %v1217 = vunpack.c.l.b16 %v852
        %v1218 = vunpack.c.h.b16 %v852
        %v1219 = vunpack.c.l.b16 %v853
        %v1220 = vunpack.c.h.b16 %v853
        %v1221 = vunpack.c.l.b16 %v854
        %v1222 = vunpack.c.h.b16 %v854
        %v1223 = vunpack.c.l.b16 %v855
        %v1224 = vunpack.c.h.b16 %v855
        %v1225 = vunpack.c.l.b16 %v856
        %v1226 = vunpack.c.h.b16 %v856
        %v1227 = vunpack.c.l.b16 %v857
        %v1228 = vunpack.c.h.b16 %v857
        %v1229 = vunpack.c.l.b16 %v858
        %v1230 = vunpack.c.h.b16 %v858
        %v1231 = vunpack.c.l.b16 %v859
        %v1232 = vunpack.c.h.b16 %v859
        %v1233 = vunpack.c.l.b16 %v860
        %v1234 = vunpack.c.h.b16 %v860
        %v1235 = vunpack.c.l.b16 %v861
        %v1236 = vunpack.c.h.b16 %v861
        %v1237 = vunpack.c.l.b16 %v862
        %v1238 = vunpack.c.h.b16 %v862
        %v1239 = vunpack.c.l.b16 %v863
        %v1240 = vunpack.c.h.b16 %v863
        %v1241 = vunpack.c.l.b16 %v864
        %v1242 = vunpack.c.h.b16 %v864
        %v1243 = vunpack.c.l.b16 %v865
        %v1244 = vunpack.c.h.b16 %v865
        %v1245 = vunpack.c.l.b16 %v866
        %v1246 = vunpack.c.h.b16 %v866
        %v1247 = vunpack.c.l.b16 %v867
        %v1248 = vunpack.c.h.b16 %v867
        %v1249 = vunpack.c.l.b16 %v868
        %v1250 = vunpack.c.h.b16 %v868
        %v1251 = vunpack.c.l.b16 %v869
        %v1252 = vunpack.c.h.b16 %v869
        %v1253 = vunpack.c.l.b16 %v870
        %v1254 = vunpack.c.h.b16 %v870
        %v1255 = vunpack.c.l.b16 %v871
        %v1256 = vunpack.c.h.b16 %v871
        %v1257 = vunpack.c.l.b16 %v872
        %v1258 = vunpack.c.h.b16 %v872
        %v1259 = vunpack.c.l.b16 %v873
        %v1260 = vunpack.c.h.b16 %v873
        %v1261 = vunpack.c.l.b16 %v874
        %v1262 = vunpack.c.h.b16 %v874
        %v1263 = vunpack.c.l.b16 %v875
        %v1264 = vunpack.c.h.b16 %v875
        %v1265 = vunpack.c.l.b16 %v876
        %v1266 = vunpack.c.h.b16 %v876
        %v1267 = vunpack.c.l.b16 %v877
        %v1268 = vunpack.c.h.b16 %v877
        %v1269 = vunpack.c.l.b16 %v878
        %v1270 = vunpack.c.h.b16 %v878
        %v1271 = vunpack.c.l.b16 %v879
        %v1272 = vunpack.c.h.b16 %v879
        %v1273 = vunpack.c.l.b16 %v880
        %v1274 = vunpack.c.h.b16 %v880
        %v1275 = vunpack.c.l.b16 %v881
        %v1276 = vunpack.c.h.b16 %v881
        %v1277 = vunpack.c.l.b16 %v882
        %v1278 = vunpack.c.h.b16 %v882
        %v1279 = vunpack.c.l.b16 %v883
        %v1280 = vunpack.c.h.b16 %v883
        %v1281 = vunpack.c.l.b16 %v884
        %v1282 = vunpack.c.h.b16 %v884
        %v1283 = vunpack.c.l.b16 %v885
        %v1284 = vunpack.c.h.b16 %v885
        %v1285 = vunpack.c.l.b16 %v886
        %v1286 = vunpack.c.h.b16 %v886
        %v1287 = vunpack.c.l.b16 %v887
        %v1288 = vunpack.c.h.b16 %v887
        %v1289 = vunpack.c.l.b16 %v888
        %v1290 = vunpack.c.h.b16 %v888
        %v1291 = vpack.c.b16 %v1043, %v1035
        %v1292 = vpack.c.b16 %v1044, %v1036
        %v1293 = vpack.c.b16 %v1045, %v1037
        %v1294 = vpack.c.b16 %v1046, %v1038
        %v1295 = vpack.c.b16 %v1047, %v1039
        %v1296 = vpack.c.b16 %v1048, %v1040
        %v1297 = vpack.c.b16 %v1049, %v1041
        %v1298 = vpack.c.b16 %v1050, %v1042
        %v1299 = vpack.c.b16 %v1059, %v1051
        %v1300 = vpack.c.b16 %v1060, %v1052
        %v1301 = vpack.c.b16 %v1061, %v1053
        %v1302 = vpack.c.b16 %v1062, %v1054
        %v1303 = vpack.c.b16 %v1063, %v1055
        %v1304 = vpack.c.b16 %v1064, %v1056
        %v1305 = vpack.c.b16 %v1065, %v1057
        %v1306 = vpack.c.b16 %v1066, %v1058
        %v1307 = vpack.c.b16 %v1075, %v1067
        %v1308 = vpack.c.b16 %v1076, %v1068
        %v1309 = vpack.c.b16 %v1077, %v1069
        %v1310 = vpack.c.b16 %v1078, %v1070
        %v1311 = vpack.c.b16 %v1079, %v1071
        %v1312 = vpack.c.b16 %v1080, %v1072
        %v1313 = vpack.c.b16 %v1081, %v1073
        %v1314 = vpack.c.b16 %v1082, %v1074
        %v1315 = vpack.c.b16 %v1091, %v1083
        %v1316 = vpack.c.b16 %v1092, %v1084
        %v1317 = vpack.c.b16 %v1093, %v1085
        %v1318 = vpack.c.b16 %v1094, %v1086
        %v1319 = vpack.c.b16 %v1095, %v1087
        %v1320 = vpack.c.b16 %v1096, %v1088
        %v1321 = vpack.c.b16 %v1097, %v1089
        %v1322 = vpack.c.b16 %v1098, %v1090
        %v1323 = vpack.c.b16 %v1107, %v1099
        %v1324 = vpack.c.b16 %v1108, %v1100
        %v1325 = vpack.c.b16 %v1109, %v1101
        %v1326 = vpack.c.b16 %v1110, %v1102
        %v1327 = vpack.c.b16 %v1111, %v1103
        %v1328 = vpack.c.b16 %v1112, %v1104
        %v1329 = vpack.c.b16 %v1113, %v1105
        %v1330 = vpack.c.b16 %v1114, %v1106
        %v1331 = vpack.c.b16 %v1123, %v1115
        %v1332 = vpack.c.b16 %v1124, %v1116
        %v1333 = vpack.c.b16 %v1125, %v1117
        %v1334 = vpack.c.b16 %v1126, %v1118
        %v1335 = vpack.c.b16 %v1127, %v1119
        %v1336 = vpack.c.b16 %v1128, %v1120
        %v1337 = vpack.c.b16 %v1129, %v1121
        %v1338 = vpack.c.b16 %v1130, %v1122
        %v1339 = vpack.c.b16 %v1139, %v1131
        %v1340 = vpack.c.b16 %v1140, %v1132
        %v1341 = vpack.c.b16 %v1141, %v1133
        %v1342 = vpack.c.b16 %v1142, %v1134
        %v1343 = vpack.c.b16 %v1143, %v1135
        %v1344 = vpack.c.b16 %v1144, %v1136
        %v1345 = vpack.c.b16 %v1145, %v1137
        %v1346 = vpack.c.b16 %v1146, %v1138
        %v1347 = vpack.c.b16 %v1155, %v1147
        %v1348 = vpack.c.b16 %v1156, %v1148
        %v1349 = vpack.c.b16 %v1157, %v1149
        %v1350 = vpack.c.b16 %v1158, %v1150
        %v1351 = vpack.c.b16 %v1159, %v1151
        %v1352 = vpack.c.b16 %v1160, %v1152
        %v1353 = vpack.c.b16 %v1161, %v1153
        %v1354 = vpack.c.b16 %v1162, %v1154
        %v1355 = vpack.c.b16 %v1171, %v1163
        %v1356 = vpack.c.b16 %v1172, %v1164
        %v1357 = vpack.c.b16 %v1173, %v1165
        %v1358 = vpack.c.b16 %v1174, %v1166
        %v1359 = vpack.c.b16 %v1175, %v1167
        %v1360 = vpack.c.b16 %v1176, %v1168
        %v1361 = vpack.c.b16 %v1177, %v1169
        %v1362 = vpack.c.b16 %v1178, %v1170
        %v1363 = vpack.c.b16 %v1187, %v1179
        %v1364 = vpack.c.b16 %v1188, %v1180
        %v1365 = vpack.c.b16 %v1189, %v1181
        %v1366 = vpack.c.b16 %v1190, %v1182
        %v1367 = vpack.c.b16 %v1191, %v1183
        %v1368 = vpack.c.b16 %v1192, %v1184
        %v1369 = vpack.c.b16 %v1193, %v1185
        %v1370 = vpack.c.b16 %v1194, %v1186
        %v1371 = vpack.c.b16 %v1203, %v1195
        %v1372 = vpack.c.b16 %v1204, %v1196
        %v1373 = vpack.c.b16 %v1205, %v1197
        %v1374 = vpack.c.b16 %v1206, %v1198
        %v1375 = vpack.c.b16 %v1207, %v1199
        %v1376 = vpack.c.b16 %v1208, %v1200
        %v1377 = vpack.c.b16 %v1209, %v1201
        %v1378 = vpack.c.b16 %v1210, %v1202
        %v1379 = vpack.c.b16 %v1219, %v1211
        %v1380 = vpack.c.b16 %v1220, %v1212
        %v1381 = vpack.c.b16 %v1221, %v1213
        %v1382 = vpack.c.b16 %v1222, %v1214
        %v1383 = vpack.c.b16 %v1223, %v1215
        %v1384 = vpack.c.b16 %v1224, %v1216
        %v1385 = vpack.c.b16 %v1225, %v1217
        %v1386 = vpack.c.b16 %v1226, %v1218
        %v1387 = vpack.c.b16 %v1235, %v1227
        %v1388 = vpack.c.b16 %v1236, %v1228
        %v1389 = vpack.c.b16 %v1237, %v1229
        %v1390 = vpack.c.b16 %v1238, %v1230
        %v1391 = vpack.c.b16 %v1239, %v1231
        %v1392 = vpack.c.b16 %v1240, %v1232
        %v1393 = vpack.c.b16 %v1241, %v1233
        %v1394 = vpack.c.b16 %v1242, %v1234
        %v1395 = vpack.c.b16 %v1251, %v1243
        %v1396 = vpack.c.b16 %v1252, %v1244
        %v1397 = vpack.c.b16 %v1253, %v1245
        %v1398 = vpack.c.b16 %v1254, %v1246
        %v1399 = vpack.c.b16 %v1255, %v1247
        %v1400 = vpack.c.b16 %v1256, %v1248
        %v1401 = vpack.c.b16 %v1257, %v1249
        %v1402 = vpack.c.b16 %v1258, %v1250
        %v1403 = vpack.c.b16 %v1267, %v1259
        %v1404 = vpack.c.b16 %v1268, %v1260
        %v1405 = vpack.c.b16 %v1269, %v1261
        %v1406 = vpack.c.b16 %v1270, %v1262
        %v1407 = vpack.c.b16 %v1271, %v1263
        %v1408 = vpack.c.b16 %v1272, %v1264
        %v1409 = vpack.c.b16 %v1273, %v1265
        %v1410 = vpack.c.b16 %v1274, %v1266
        %v1411 = vpack.c.b16 %v1283, %v1275
        %v1412 = vpack.c.b16 %v1284, %v1276
        %v1413 = vpack.c.b16 %v1285, %v1277
        %v1414 = vpack.c.b16 %v1286, %v1278
        %v1415 = vpack.c.b16 %v1287, %v1279
        %v1416 = vpack.c.b16 %v1288, %v1280
        %v1417 = vpack.c.b16 %v1289, %v1281
        %v1418 = vpack.c.b16 %v1290, %v1282
        %1547 = vmatpush.bf16.msra.mxu0 %v1347
        %1548 = vmatpush.bf16.msra.mxu0 %v1339
        %1549 = vmatpush.bf16.msra.mxu0 %v1331
        %1550 = vmatpush.bf16.msra.mxu0 %v1323
        %1551 = vmatpush.bf16.msra.mxu0 %v1315
        %1552 = vmatpush.bf16.msra.mxu0 %v1307
        %1553 = vmatpush.bf16.msra.mxu0 %v1299
        %1554 = vmatpush.bf16.msra.mxu0 %v1291
        %1555 = vmatmul.bf16.gmra.mxu0 %v759
        %v1556 = vpop.f32.mrf.mxu0
        %v1557 = vadd.f32 %v891, %v1556
        %v1558 = vpop.f32.mrf.mxu0
        %1559 = vdwg.mxu0
        %1560 = vmatpush.bf16.msra.mxu0 %v1411
        %1561 = vmatpush.bf16.msra.mxu0 %v1403
        %1562 = vmatpush.bf16.msra.mxu0 %v1395
        %1563 = vmatpush.bf16.msra.mxu0 %v1387
        %1564 = vmatpush.bf16.msra.mxu0 %v1379
        %1565 = vmatpush.bf16.msra.mxu0 %v1371
        %1566 = vmatpush.bf16.msra.mxu0 %v1363
        %1567 = vmatpush.bf16.msra.mxu0 %v1355
        %1568 = vmatmul.bf16.gmra.mxu0 %v760
        %v1569 = vpop.f32.mrf.mxu0
        %v1570 = vadd.f32 %v1557, %v1569
        %v1571 = vpop.f32.mrf.mxu0
        %1572 = vdwg.mxu0
        %1573 = vmatpush.bf16.msra.mxu0 %v1348
        %1574 = vmatpush.bf16.msra.mxu0 %v1340
        %1575 = vmatpush.bf16.msra.mxu0 %v1332
        %1576 = vmatpush.bf16.msra.mxu0 %v1324
        %1577 = vmatpush.bf16.msra.mxu0 %v1316
        %1578 = vmatpush.bf16.msra.mxu0 %v1308
        %1579 = vmatpush.bf16.msra.mxu0 %v1300
        %1580 = vmatpush.bf16.msra.mxu0 %v1292
        %1581 = vmatmul.bf16.gmra.mxu0 %v759
        %v1582 = vpop.f32.mrf.mxu0
        %v1583 = vadd.f32 %v892, %v1582
        %v1584 = vpop.f32.mrf.mxu0
        %1585 = vdwg.mxu0
        %1586 = vmatpush.bf16.msra.mxu0 %v1412
        %1587 = vmatpush.bf16.msra.mxu0 %v1404
        %1588 = vmatpush.bf16.msra.mxu0 %v1396
        %1589 = vmatpush.bf16.msra.mxu0 %v1388
        %1590 = vmatpush.bf16.msra.mxu0 %v1380
        %1591 = vmatpush.bf16.msra.mxu0 %v1372
        %1592 = vmatpush.bf16.msra.mxu0 %v1364
        %1593 = vmatpush.bf16.msra.mxu0 %v1356
        %1594 = vmatmul.bf16.gmra.mxu0 %v760
        %v1595 = vpop.f32.mrf.mxu0
        %v1596 = vadd.f32 %v1583, %v1595
        %v1597 = vpop.f32.mrf.mxu0
        %1598 = vdwg.mxu0
        %1599 = vmatpush.bf16.msra.mxu0 %v1349
        %1600 = vmatpush.bf16.msra.mxu0 %v1341
        %1601 = vmatpush.bf16.msra.mxu0 %v1333
        %1602 = vmatpush.bf16.msra.mxu0 %v1325
        %1603 = vmatpush.bf16.msra.mxu0 %v1317
        %1604 = vmatpush.bf16.msra.mxu0 %v1309
        %1605 = vmatpush.bf16.msra.mxu0 %v1301
        %1606 = vmatpush.bf16.msra.mxu0 %v1293
        %1607 = vmatmul.bf16.gmra.mxu0 %v759
        %v1608 = vpop.f32.mrf.mxu0
        %v1609 = vadd.f32 %v893, %v1608
        %v1610 = vpop.f32.mrf.mxu0
        %1611 = vdwg.mxu0
        %1612 = vmatpush.bf16.msra.mxu0 %v1413
        %1613 = vmatpush.bf16.msra.mxu0 %v1405
        %1614 = vmatpush.bf16.msra.mxu0 %v1397
        %1615 = vmatpush.bf16.msra.mxu0 %v1389
        %1616 = vmatpush.bf16.msra.mxu0 %v1381
        %1617 = vmatpush.bf16.msra.mxu0 %v1373
        %1618 = vmatpush.bf16.msra.mxu0 %v1365
        %1619 = vmatpush.bf16.msra.mxu0 %v1357
        %1620 = vmatmul.bf16.gmra.mxu0 %v760
        %v1621 = vpop.f32.mrf.mxu0
        %v1622 = vadd.f32 %v1609, %v1621
        %v1623 = vpop.f32.mrf.mxu0
        %1624 = vdwg.mxu0
        %1625 = vmatpush.bf16.msra.mxu0 %v1350
        %1626 = vmatpush.bf16.msra.mxu0 %v1342
        %1627 = vmatpush.bf16.msra.mxu0 %v1334
        %1628 = vmatpush.bf16.msra.mxu0 %v1326
        %1629 = vmatpush.bf16.msra.mxu0 %v1318
        %1630 = vmatpush.bf16.msra.mxu0 %v1310
        %1631 = vmatpush.bf16.msra.mxu0 %v1302
        %1632 = vmatpush.bf16.msra.mxu0 %v1294
        %1633 = vmatmul.bf16.gmra.mxu0 %v759
        %v1634 = vpop.f32.mrf.mxu0
        %v1635 = vadd.f32 %v894, %v1634
        %v1636 = vpop.f32.mrf.mxu0
        %1637 = vdwg.mxu0
        %1638 = vmatpush.bf16.msra.mxu0 %v1414
        %1639 = vmatpush.bf16.msra.mxu0 %v1406
        %1640 = vmatpush.bf16.msra.mxu0 %v1398
        %1641 = vmatpush.bf16.msra.mxu0 %v1390
        %1642 = vmatpush.bf16.msra.mxu0 %v1382
        %1643 = vmatpush.bf16.msra.mxu0 %v1374
        %1644 = vmatpush.bf16.msra.mxu0 %v1366
        %1645 = vmatpush.bf16.msra.mxu0 %v1358
        %1646 = vmatmul.bf16.gmra.mxu0 %v760
        %v1647 = vpop.f32.mrf.mxu0
        %v1648 = vadd.f32 %v1635, %v1647
        %v1649 = vpop.f32.mrf.mxu0
        %1650 = vdwg.mxu0
        %1651 = vmatpush.bf16.msra.mxu0 %v1351
        %1652 = vmatpush.bf16.msra.mxu0 %v1343
        %1653 = vmatpush.bf16.msra.mxu0 %v1335
        %1654 = vmatpush.bf16.msra.mxu0 %v1327
        %1655 = vmatpush.bf16.msra.mxu0 %v1319
        %1656 = vmatpush.bf16.msra.mxu0 %v1311
        %1657 = vmatpush.bf16.msra.mxu0 %v1303
        %1658 = vmatpush.bf16.msra.mxu0 %v1295
        %1659 = vmatmul.bf16.gmra.mxu0 %v759
        %v1660 = vpop.f32.mrf.mxu0
        %v1661 = vadd.f32 %v895, %v1660
        %v1662 = vpop.f32.mrf.mxu0
        %1663 = vdwg.mxu0
        %1664 = vmatpush.bf16.msra.mxu0 %v1415
        %1665 = vmatpush.bf16.msra.mxu0 %v1407
        %1666 = vmatpush.bf16.msra.mxu0 %v1399
        %1667 = vmatpush.bf16.msra.mxu0 %v1391
        %1668 = vmatpush.bf16.msra.mxu0 %v1383
        %1669 = vmatpush.bf16.msra.mxu0 %v1375
        %1670 = vmatpush.bf16.msra.mxu0 %v1367
        %1671 = vmatpush.bf16.msra.mxu0 %v1359
        %1672 = vmatmul.bf16.gmra.mxu0 %v760
        %v1673 = vpop.f32.mrf.mxu0
        %v1674 = vadd.f32 %v1661, %v1673
        %v1675 = vpop.f32.mrf.mxu0
        %1676 = vdwg.mxu0
        %1677 = vmatpush.bf16.msra.mxu0 %v1352
        %1678 = vmatpush.bf16.msra.mxu0 %v1344
        %1679 = vmatpush.bf16.msra.mxu0 %v1336
        %1680 = vmatpush.bf16.msra.mxu0 %v1328
        %1681 = vmatpush.bf16.msra.mxu0 %v1320
        %1682 = vmatpush.bf16.msra.mxu0 %v1312
        %1683 = vmatpush.bf16.msra.mxu0 %v1304
        %1684 = vmatpush.bf16.msra.mxu0 %v1296
        %1685 = vmatmul.bf16.gmra.mxu0 %v759
        %v1686 = vpop.f32.mrf.mxu0
        %v1687 = vadd.f32 %v896, %v1686
        %v1688 = vpop.f32.mrf.mxu0
        %1689 = vdwg.mxu0
        %1690 = vmatpush.bf16.msra.mxu0 %v1416
        %1691 = vmatpush.bf16.msra.mxu0 %v1408
        %1692 = vmatpush.bf16.msra.mxu0 %v1400
        %1693 = vmatpush.bf16.msra.mxu0 %v1392
        %1694 = vmatpush.bf16.msra.mxu0 %v1384
        %1695 = vmatpush.bf16.msra.mxu0 %v1376
        %1696 = vmatpush.bf16.msra.mxu0 %v1368
        %1697 = vmatpush.bf16.msra.mxu0 %v1360
        %1698 = vmatmul.bf16.gmra.mxu0 %v760
        %v1699 = vpop.f32.mrf.mxu0
        %v1700 = vadd.f32 %v1687, %v1699
        %v1701 = vpop.f32.mrf.mxu0
        %1702 = vdwg.mxu0
        %1703 = vmatpush.bf16.msra.mxu0 %v1353
        %1704 = vmatpush.bf16.msra.mxu0 %v1345
        %1705 = vmatpush.bf16.msra.mxu0 %v1337
        %1706 = vmatpush.bf16.msra.mxu0 %v1329
        %1707 = vmatpush.bf16.msra.mxu0 %v1321
        %1708 = vmatpush.bf16.msra.mxu0 %v1313
        %1709 = vmatpush.bf16.msra.mxu0 %v1305
        %1710 = vmatpush.bf16.msra.mxu0 %v1297
        %1711 = vmatmul.bf16.gmra.mxu0 %v759
        %v1712 = vpop.f32.mrf.mxu0
        %v1713 = vadd.f32 %v897, %v1712
        %v1714 = vpop.f32.mrf.mxu0
        %1715 = vdwg.mxu0
        %1716 = vmatpush.bf16.msra.mxu0 %v1417
        %1717 = vmatpush.bf16.msra.mxu0 %v1409
        %1718 = vmatpush.bf16.msra.mxu0 %v1401
        %1719 = vmatpush.bf16.msra.mxu0 %v1393
        %1720 = vmatpush.bf16.msra.mxu0 %v1385
        %1721 = vmatpush.bf16.msra.mxu0 %v1377
        %1722 = vmatpush.bf16.msra.mxu0 %v1369
        %1723 = vmatpush.bf16.msra.mxu0 %v1361
        %1724 = vmatmul.bf16.gmra.mxu0 %v760
        %v1725 = vpop.f32.mrf.mxu0
        %v1726 = vadd.f32 %v1713, %v1725
        %v1727 = vpop.f32.mrf.mxu0
        %1728 = vdwg.mxu0
        %1729 = vmatpush.bf16.msra.mxu0 %v1354
        %1730 = vmatpush.bf16.msra.mxu0 %v1346
        %1731 = vmatpush.bf16.msra.mxu0 %v1338
        %1732 = vmatpush.bf16.msra.mxu0 %v1330
        %1733 = vmatpush.bf16.msra.mxu0 %v1322
        %1734 = vmatpush.bf16.msra.mxu0 %v1314
        %1735 = vmatpush.bf16.msra.mxu0 %v1306
        %1736 = vmatpush.bf16.msra.mxu0 %v1298
        %1737 = vmatmul.bf16.gmra.mxu0 %v759
        %v1738 = vpop.f32.mrf.mxu0
        %v1739 = vadd.f32 %v898, %v1738
        %v1740 = vpop.f32.mrf.mxu0
        %1741 = vdwg.mxu0
        %1742 = vmatpush.bf16.msra.mxu0 %v1418
        %1743 = vmatpush.bf16.msra.mxu0 %v1410
        %1744 = vmatpush.bf16.msra.mxu0 %v1402
        %1745 = vmatpush.bf16.msra.mxu0 %v1394
        %1746 = vmatpush.bf16.msra.mxu0 %v1386
        %1747 = vmatpush.bf16.msra.mxu0 %v1378
        %1748 = vmatpush.bf16.msra.mxu0 %v1370
        %1749 = vmatpush.bf16.msra.mxu0 %v1362
        %1750 = vmatmul.bf16.gmra.mxu0 %v760
        %v1751 = vpop.f32.mrf.mxu0
        %v1752 = vadd.f32 %v1739, %v1751
        %v1753 = vpop.f32.mrf.mxu0
        %1754 = vdwg.mxu0
        %1755 = vst [vmem:[%s5] sm:$0xff] %v1570
        %1756 = vst [vmem:[%s5 + $0x8] sm:$0xff] %v1596
        %1757 = vst [vmem:[%s5 + $0x10] sm:$0xff] %v1622
        %1758 = vst [vmem:[%s5 + $0x18] sm:$0xff] %v1648
        %1759 = vst [vmem:[%s5 + $0x20] sm:$0xff] %v1674
        %1760 = vst [vmem:[%s5 + $0x28] sm:$0xff] %v1700
        %1761 = vst [vmem:[%s5 + $0x30] sm:$0xff] %v1726
        %1762 = vst [vmem:[%s5 + $0x38] sm:$0xff] %v1752
      $region44: #{discriminator_forward.9} parent=35 // pred_fallthru
        _
      // Predicated region
      $region45: #{discriminator_forward.9} parent=35 // pred_check
        %p1763 = pneg %p124
      $region46: #{discriminator_forward.9} parent=35 // pred_check_branch
        %1765 = sbr.rel (%p1763) target = $region48
      $region47: #{discriminator_forward.9} parent=35 // pred_region
        _
      $region48: #{discriminator_forward.9} parent=35 // pred_fallthru
        _
      // Predicated region
      $region49: #{discriminator_forward.9} parent=35 // pred_check
        %p1766 = pneg %p145
      $region50: #{discriminator_forward.9} parent=35 // pred_check_branch
        %1768 = sbr.rel (%p1766) target = $region52
      $region51: #{discriminator_forward.9} parent=35 // pred_region
        _
      $region52: #{discriminator_forward.9} parent=35 // pred_fallthru
        _
      // Predicated region
      $region53: #{discriminator_forward.9} parent=35 // pred_check
        %p1769 = pneg %p124
      $region54: #{discriminator_forward.9} parent=35 // pred_check_branch
        %1771 = sbr.rel (%p1769) target = $region56
      $region55: #{discriminator_forward.9} parent=35 // pred_region
        _
      $region56: #{discriminator_forward.9} parent=35 // pred_fallthru
        _
      // Predicated region
      $region57: #{discriminator_forward.9} parent=35 // pred_check
        %p1772 = pneg %p145
      $region58: #{discriminator_forward.9} parent=35 // pred_check_branch
        %1774 = sbr.rel (%p1772) target = $region60
      $region59: #{discriminator_forward.9} parent=35 // pred_region
        _
      $region60: #{discriminator_forward.9} parent=35 // pred_fallthru
        _
    $region36: #{discriminator_forward.9} parent=5 // pred_fallthru
      _
    %p1775 = scmp.le.s32.totalorder 2, %s12
    // Predicated region
    $region61: #{discriminator_forward.9} parent=5 // pred_check
      %p1776 = pneg %p1775
    $region62: #{discriminator_forward.9} parent=5 // pred_check_branch
      %1778 = sbr.rel (%p1776) target = $region64
    $region63: #{discriminator_forward.9} parent=5 // pred_region
      %s1779 = ssub.s32 %s12, 2
    $region64: #{discriminator_forward.9} parent=5 // pred_fallthru
      _
  $region6: #{discriminator_forward.9} parent=0 // loop_footer
    %s16 = sadd.s32 1, %s12
  $region7: #{discriminator_forward.9} parent=0 // loop_footer_branch
    %11 = sbr.rel target = $region3
  $region8: #{discriminator_forward.9} parent=0 // loop_exit
    _

</llo_original>
